<compile_context>
chip_gen: v7x
topology: tpu7x:2x2x1
jax: 0.10.0
libtpu: 0.0.40
codegen_flags: <defaults>
</compile_context>

<pallas_src>
import functools

import jax
import jax.numpy as jnp
from jax.experimental import pallas as pl
from jax.experimental.pallas import tpu as pltpu

ALPHA = 0.2        # LeakyReLU negative slope
LN_EPS = 1e-5      # torch.nn.LayerNorm default eps
NEG_BIG = -9.0e15  # attention mask value (matches reference)


# ----------------------------------------------------------------------------
# In-kernel building blocks (operate on traced values, called from kernel body)
# ----------------------------------------------------------------------------
def _attention(wh, adj_big, a1, a2, *, alpha):
    """Masked graph attention over a block-diagonal adjacency.  wh: (R, F)."""
    # column form Wh @ a1 on the VPU
    wh1 = jnp.sum(wh * a1, axis=1, keepdims=True)                      # (R, 1)
    # row form Wh @ a2 produced directly in lane orientation (no relayout)
    wh2 = jax.lax.dot_general(a2, wh, (((1,), (1,)), ((), ())),
                              preferred_element_type=jnp.float32)      # (1, R)
    e = wh1 + wh2                                                      # (R, R)
    e = jnp.where(e > 0, e, alpha * e)                                 # LeakyReLU
    att = jnp.where(adj_big > 0, e, NEG_BIG)                           # mask
    att = jnp.exp(att - jnp.max(att, axis=1, keepdims=True))           # softmax(dim=1)
    att = att * pl.reciprocal(jnp.sum(att, axis=1, keepdims=True), approx=True)
    return jnp.dot(att, wh, preferred_element_type=jnp.float32)        # (R, F)


def _gat(xb, adj_big, w_all, a_heads, out_w, out_a, *, nheads, nhid, nclass, alpha):
    """Fused GAT module (all heads + out_att) on one (R, Fin) slab."""
    fin = xb.shape[1]
    if fin == 1:
        wh_all = xb * w_all               # K=1 projection: VPU broadcast multiply
    else:
        wh_all = jnp.dot(xb, w_all, preferred_element_type=jnp.float32)
    wh_o = None
    for h in range(nheads):               # static unroll, heads are tiny
        wh = wh_all[:, h * nhid:(h + 1) * nhid]
        a_h = a_heads[h:h + 1, :]
        hp = _attention(wh, adj_big, a_h[:, 0:nhid], a_h[:, nhid:2 * nhid],
                        alpha=alpha)
        hp = jnp.where(hp > 0, hp, jnp.exp(jnp.minimum(hp, 0.0)) - 1.0)  # ELU
        # head-concat + out_att projection as a sum of per-head partial matmuls
        part = jnp.dot(hp, out_w[h], preferred_element_type=jnp.float32)
        wh_o = part if wh_o is None else wh_o + part
    # out_att layer (concat=False: no ELU)
    return _attention(wh_o, adj_big, out_a[:, 0:nclass], out_a[:, nclass:2 * nclass],
                      alpha=alpha)


def _lstm(x_seq, h0, c0, w_ih, w_hh, bias, *, hidden, seq_len, rows, last_only):
    """Single-layer LSTM over canonical rows (time-major within the slab)."""
    h, c = h0, c0
    hs = []
    for t in range(seq_len):              # static unroll, T is small
        xt = x_seq[t * rows:(t + 1) * rows, :]
        g = (jnp.dot(xt, w_ih, preferred_element_type=jnp.float32)
             + jnp.dot(h, w_hh, preferred_element_type=jnp.float32) + bias)
        i_g = jax.nn.sigmoid(g[:, 0:hidden])
        f_g = jax.nn.sigmoid(g[:, hidden:2 * hidden])
        g_g = jnp.tanh(g[:, 2 * hidden:3 * hidden])
        o_g = jax.nn.sigmoid(g[:, 3 * hidden:4 * hidden])
        c = f_g * c + i_g * g_g
        h = o_g * jnp.tanh(c)
        if not last_only:
            hs.append(h)
    if last_only:
        return h
    return jnp.concatenate(hs, axis=0)    # (seq_len*rows, hidden), (t, n) order


def _residual_ln(x_in, lstm_h, wc, bc, gamma, beta, *, eps):
    """1x1-conv residual + ReLU(add) + LayerNorm over the feature axis."""
    fin = x_in.shape[1]
    if fin == 1:
        res = x_in * wc + bc              # K=1 1x1 conv on the VPU
    else:
        res = jnp.dot(x_in, wc, preferred_element_type=jnp.float32) + bc
    y = jnp.maximum(res + lstm_h, 0.0)
    mu = jnp.mean(y, axis=1, keepdims=True)
    var = jnp.mean((y - mu) * (y - mu), axis=1, keepdims=True)
    return (y - mu) * jax.lax.rsqrt(var + eps) * gamma + beta


# ----------------------------------------------------------------------------
# Fused per-block kernel: GAT + LSTM + residual/ReLU/LayerNorm (all timesteps).
# ----------------------------------------------------------------------------
def _block_kernel(x_ref, adj_ref, w_all_ref, a_heads_ref, out_w_ref, out_a_ref,
                  wih_ref, whh_ref, lb_ref, h0_ref, c0_ref,
                  wc_ref, bc_ref, gamma_ref, beta_ref, o_ref,
                  *, n, t, nheads, nhid, nclass, hidden, alpha, eps):
    xb = x_ref[0]                                                  # (T*N, Fin)
    spatial = _gat(xb, adj_ref[...], w_all_ref[...], a_heads_ref[...],
                   out_w_ref[...], out_a_ref[...],
                   nheads=nheads, nhid=nhid, nclass=nclass, alpha=alpha)
    lstm = _lstm(spatial, h0_ref[0], c0_ref[0], wih_ref[...], whh_ref[...],
                 lb_ref[...], hidden=hidden, seq_len=t, rows=n, last_only=False)
    o_ref[0] = _residual_ln(xb, lstm, wc_ref[...], bc_ref[...],
                            gamma_ref[...], beta_ref[...], eps=eps)


# ----------------------------------------------------------------------------
# Fused final-block + tail kernel: only t = T-1 survives out[..., -1], so the
# epilogue / Vcap / Infin / Outfin chain runs on the last-timestep rows only.
# ----------------------------------------------------------------------------
def _block_tail_kernel(x_ref, adj_ref, w_all_ref, a_heads_ref, out_w_ref, out_a_ref,
                       wih_ref, whh_ref, lb_ref, h0_ref, c0_ref,
                       wc_ref, bc_ref, gamma_ref, beta_ref,
                       x2_ref, vcap_wt_ref, vcap_b_ref,
                       infin_w_ref, infin_b_ref, outfin_wt_ref, outfin_b_ref,
                       o_ref,
                       *, n, t, nheads, nhid, nclass, hidden, alpha, eps):
    xb = x_ref[0]                                                  # (T*N, Fin)
    spatial = _gat(xb, adj_ref[...], w_all_ref[...], a_heads_ref[...],
                   out_w_ref[...], out_a_ref[...],
                   nheads=nheads, nhid=nhid, nclass=nclass, alpha=alpha)
    h_last = _lstm(spatial, h0_ref[0], c0_ref[0], wih_ref[...], whh_ref[...],
                   lb_ref[...], hidden=hidden, seq_len=t, rows=n, last_only=True)
    x_last = xb[(t - 1) * n:t * n, :]                              # last timestep rows
    x1 = _residual_ln(x_last, h_last, wc_ref[...], bc_ref[...],
                      gamma_ref[...], beta_ref[...], eps=eps)      # (N, hidden)
    # TODO(synk): VcapModel stand-in -- per-row linear 2 -> 1 on the VPU.
    vcap = (jnp.sum(x2_ref[0] * vcap_wt_ref[...], axis=1, keepdims=True)
            + vcap_b_ref[...])                                     # (N, 1)
    # Infin 9 -> 10 without a lane-axis concat: split W rows ([0:hidden] | [hidden]).
    y = (jnp.dot(x1, infin_w_ref[0:hidden, :], preferred_element_type=jnp.float32)
         + vcap * infin_w_ref[hidden:hidden + 1, :]
         + infin_b_ref[...])
    y = jnp.maximum(y, 0.0)                                        # (N, 10)
    # Outfin 10 -> 1 as a VPU multiply-reduce.
    o_ref[0] = (jnp.sum(y * outfin_wt_ref[...], axis=1, keepdims=True)
                + outfin_b_ref[...])                               # (N, 1)


# ----------------------------------------------------------------------------
# pallas_call wrappers
# ----------------------------------------------------------------------------
def _const_spec(a):
    return pl.BlockSpec(a.shape, lambda b, _nd=a.ndim: (0,) * _nd)


def _block_shapes(p, x1):
    g, l = p["gat"], p["lstm"]
    nheads, nhid2 = g["a_heads"].shape
    return dict(fin=x1.shape[2], nheads=nheads, nhid=nhid2 // 2,
                nclass=g["out_w"].shape[-1], hidden=l["whh"].shape[0])


def _run_block(x1, adj_big, p, *, n, t):
    B, R, _ = x1.shape
    s = _block_shapes(p, x1)
    g, l = p["gat"], p["lstm"]
    kern = functools.partial(_block_kernel, n=n, t=t, nheads=s["nheads"],
                             nhid=s["nhid"], nclass=s["nclass"],
                             hidden=s["hidden"], alpha=ALPHA, eps=LN_EPS)
    return pl.pallas_call(
        kern,
        out_shape=jax.ShapeDtypeStruct((B, R, s["hidden"]), jnp.float32),
        grid=(B,),
        in_specs=[
            pl.BlockSpec((1, R, s["fin"]), lambda b: (b, 0, 0)),
            _const_spec(adj_big),
            _const_spec(g["w_all"]), _const_spec(g["a_heads"]),
            _const_spec(g["out_w"]), _const_spec(g["out_a"]),
            _const_spec(l["wih"]), _const_spec(l["whh"]), _const_spec(l["b"]),
            pl.BlockSpec((1, n, s["hidden"]), lambda b: (b, 0, 0)),
            pl.BlockSpec((1, n, s["hidden"]), lambda b: (b, 0, 0)),
            _const_spec(p["wc"]), _const_spec(p["bc"]),
            _const_spec(p["gamma"]), _const_spec(p["beta"]),
        ],
        out_specs=pl.BlockSpec((1, R, s["hidden"]), lambda b: (b, 0, 0)),
        compiler_params=pltpu.CompilerParams(dimension_semantics=("parallel",)),
    )(x1, adj_big, g["w_all"], g["a_heads"], g["out_w"], g["out_a"],
      l["wih"], l["whh"], l["b"], l["h0"], l["c0"],
      p["wc"], p["bc"], p["gamma"], p["beta"])


def _run_block_tail(x1, adj_big, p, x2_last, tail, *, n, t):
    B, R, _ = x1.shape
    s = _block_shapes(p, x1)
    g, l = p["gat"], p["lstm"]
    kern = functools.partial(_block_tail_kernel, n=n, t=t, nheads=s["nheads"],
                             nhid=s["nhid"], nclass=s["nclass"],
                             hidden=s["hidden"], alpha=ALPHA, eps=LN_EPS)
    return pl.pallas_call(
        kern,
        out_shape=jax.ShapeDtypeStruct((B, n, 1), jnp.float32),
        grid=(B,),
        in_specs=[
            pl.BlockSpec((1, R, s["fin"]), lambda b: (b, 0, 0)),
            _const_spec(adj_big),
            _const_spec(g["w_all"]), _const_spec(g["a_heads"]),
            _const_spec(g["out_w"]), _const_spec(g["out_a"]),
            _const_spec(l["wih"]), _const_spec(l["whh"]), _const_spec(l["b"]),
            pl.BlockSpec((1, n, s["hidden"]), lambda b: (b, 0, 0)),
            pl.BlockSpec((1, n, s["hidden"]), lambda b: (b, 0, 0)),
            _const_spec(p["wc"]), _const_spec(p["bc"]),
            _const_spec(p["gamma"]), _const_spec(p["beta"]),
            pl.BlockSpec((1, n, 2), lambda b: (b, 0, 0)),
            _const_spec(tail["vcap_Wt"]), _const_spec(tail["vcap_b"]),
            _const_spec(tail["infin_W"]), _const_spec(tail["infin_b"]),
            _const_spec(tail["outfin_Wt"]), _const_spec(tail["outfin_b"]),
        ],
        out_specs=pl.BlockSpec((1, n, 1), lambda b: (b, 0, 0)),
        compiler_params=pltpu.CompilerParams(dimension_semantics=("parallel",)),
    )(x1, adj_big, g["w_all"], g["a_heads"], g["out_w"], g["out_a"],
      l["wih"], l["whh"], l["b"], l["h0"], l["c0"],
      p["wc"], p["bc"], p["gamma"], p["beta"],
      x2_last, tail["vcap_Wt"], tail["vcap_b"],
      tail["infin_W"], tail["infin_b"], tail["outfin_Wt"], tail["outfin_b"])


# ----------------------------------------------------------------------------
# Full model forward
# ----------------------------------------------------------------------------
def gat_lstm_vcap_forward(x, adj, params):
    # x: (B, N, F_in >= 3, T) -> (B, N, 1)
    B, N, _, T = x.shape
    # canonical layout: (B, T*N, F), rows ordered (time, vertex), features last
    x1 = jnp.transpose(x[:, :, 0:1, :], (0, 3, 1, 2)).reshape(B, T * N, 1)
    x2_last = x[:, :, 1:3, T - 1]                                  # (B, N, 2)
    # block-diagonal adjacency covering all T graph slices of one model batch
    adj_big = jnp.kron(jnp.eye(T, dtype=adj.dtype), adj)           # (T*N, T*N)
    for p in params["blocks"][:-1]:
        x1 = _run_block(x1, adj_big, p, n=N, t=T)                  # (B, T*N, lstm_out)
    return _run_block_tail(x1, adj_big, params["blocks"][-1], x2_last, params,
                           n=N, t=T)                               # (B, N, 1)


# ----------------------------------------------------------------------------
# Deterministic parameter construction (shapes from the module __init__).
# ----------------------------------------------------------------------------
def init_params(key, *, B, N, nb_block=2, in_channels=1, hid_feature=4,
                out_feature=4, nheads=2, lstm_out=8):
    keys = iter(jax.random.split(key, 512))

    def rnd(shape, scale=0.1):
        return jax.random.normal(next(keys), shape, jnp.float32) * scale

    def gat_params(nfeat, nhid, nclass, heads):
        return {
            "w_all": rnd((nfeat, heads * nhid)),       # stacked head projections
            "a_heads": rnd((heads, 2 * nhid)),         # per-head attention vectors
            "out_w": rnd((heads, nhid, nclass)),       # out_att W, split per head
            "out_a": rnd((1, 2 * nclass)),
        }

    def lstm_params(in_size, hidden):
        return {
            "wih": rnd((in_size, 4 * hidden)),         # W_ih^T
            "whh": rnd((hidden, 4 * hidden)),          # W_hh^T
            "b": rnd((1, 4 * hidden)),                 # b_ih + b_hh
            "h0": rnd((B, N, hidden), 1.0),            # deterministic "randn" states
            "c0": rnd((B, N, hidden), 1.0),
        }

    def block_params(in_ch, hid, out_f, heads, lout):
        return {
            "gat": gat_params(in_ch, hid, out_f, heads),
            "lstm": lstm_params(out_f, lout),
            "wc": rnd((in_ch, lout)),                  # 1x1 conv weight (transposed)
            "bc": rnd((1, lout)),
            "gamma": jnp.ones((1, lout), jnp.float32),
            "beta": jnp.zeros((1, lout), jnp.float32),
        }

    blocks = [block_params(in_channels, hid_feature, out_feature, nheads, lstm_out)]
    for _ in range(nb_block - 1):
        blocks.append(block_params(lstm_out, 8, 2 * out_feature, nheads, 8))

    return {
        "blocks": blocks,
        "vcap_Wt": rnd((1, 2)), "vcap_b": rnd((1, 1)),
        "infin_W": rnd((9, 10)), "infin_b": rnd((1, 10)),
        "outfin_Wt": rnd((1, 10)), "outfin_b": rnd((1, 1)),
    }


if __name__ == "__main__":
    key = jax.random.PRNGKey(0)
    kx, kadj, kparam = jax.random.split(key, 3)

    B, N, F_in, T = 2, 16, 3, 4
    x = jax.random.normal(kx, (B, N, F_in, T), jnp.float32)
    adj = (jax.random.uniform(kadj, (N, N)) > 0.5).astype(jnp.float32)
    adj = adj.at[jnp.arange(N), jnp.arange(N)].set(1.0)   # self loops

    params = init_params(kparam, B=B, N=N, nb_block=2, in_channels=1,
                         hid_feature=4, out_feature=4, nheads=2, lstm_out=8)

    fwd = jax.jit(lambda xx: gat_lstm_vcap_forward(xx, adj, params))
    out = jax.block_until_ready(fwd(x))

    assert out.shape == (B, N, 1), out.shape
    assert bool(jnp.all(jnp.isfinite(out)))
    print("KERNEL_OK")
</pallas_src>

<mosaic_0001>
module attributes {stable_mosaic.version = 11 : i64} {
  func.func @_block_tail_kernel(%arg0: i32, %arg1: memref<1x64x8xf32, #tpu.memory_space<vmem>>, %arg2: memref<64x64xf32, #tpu.memory_space<vmem>>, %arg3: memref<8x16xf32, #tpu.memory_space<vmem>>, %arg4: memref<2x16xf32, #tpu.memory_space<vmem>>, %arg5: memref<2x8x8xf32, #tpu.memory_space<vmem>>, %arg6: memref<1x16xf32, #tpu.memory_space<vmem>>, %arg7: memref<8x32xf32, #tpu.memory_space<vmem>>, %arg8: memref<8x32xf32, #tpu.memory_space<vmem>>, %arg9: memref<1x32xf32, #tpu.memory_space<vmem>>, %arg10: memref<1x16x8xf32, #tpu.memory_space<vmem>>, %arg11: memref<1x16x8xf32, #tpu.memory_space<vmem>>, %arg12: memref<8x8xf32, #tpu.memory_space<vmem>>, %arg13: memref<1x8xf32, #tpu.memory_space<vmem>>, %arg14: memref<1x8xf32, #tpu.memory_space<vmem>>, %arg15: memref<1x8xf32, #tpu.memory_space<vmem>>, %arg16: memref<1x16x2xf32, #tpu.memory_space<vmem>>, %arg17: memref<1x2xf32, #tpu.memory_space<vmem>>, %arg18: memref<1x1xf32, #tpu.memory_space<vmem>>, %arg19: memref<9x10xf32, #tpu.memory_space<vmem>>, %arg20: memref<1x10xf32, #tpu.memory_space<vmem>>, %arg21: memref<1x10xf32, #tpu.memory_space<vmem>>, %arg22: memref<1x1xf32, #tpu.memory_space<vmem>>, %arg23: memref<1x16x1xf32, #tpu.memory_space<vmem>>) attributes {dimension_semantics = [#tpu.dimension_semantics<parallel>], iteration_bounds = array<i64: 2>, scalar_prefetch = 0 : i64, scratch_operands = 0 : i64, tpu.core_type = #tpu.core_type<tc>, window_params = [{transform_indices = @transform_0, window_bounds = array<i64: 1, 64, 8>}, {pipeline_mode = #tpu.pipeline_mode<synchronous>, transform_indices = @transform_1, window_bounds = array<i64: 64, 64>}, {pipeline_mode = #tpu.pipeline_mode<synchronous>, transform_indices = @transform_2, window_bounds = array<i64: 8, 16>}, {pipeline_mode = #tpu.pipeline_mode<synchronous>, transform_indices = @transform_3, window_bounds = array<i64: 2, 16>}, {pipeline_mode = #tpu.pipeline_mode<synchronous>, transform_indices = @transform_4, window_bounds = array<i64: 2, 8, 8>}, {pipeline_mode = #tpu.pipeline_mode<synchronous>, transform_indices = @transform_5, window_bounds = array<i64: 1, 16>}, {pipeline_mode = #tpu.pipeline_mode<synchronous>, transform_indices = @transform_6, window_bounds = array<i64: 8, 32>}, {pipeline_mode = #tpu.pipeline_mode<synchronous>, transform_indices = @transform_7, window_bounds = array<i64: 8, 32>}, {pipeline_mode = #tpu.pipeline_mode<synchronous>, transform_indices = @transform_8, window_bounds = array<i64: 1, 32>}, {transform_indices = @transform_9, window_bounds = array<i64: 1, 16, 8>}, {transform_indices = @transform_10, window_bounds = array<i64: 1, 16, 8>}, {pipeline_mode = #tpu.pipeline_mode<synchronous>, transform_indices = @transform_11, window_bounds = array<i64: 8, 8>}, {pipeline_mode = #tpu.pipeline_mode<synchronous>, transform_indices = @transform_12, window_bounds = array<i64: 1, 8>}, {pipeline_mode = #tpu.pipeline_mode<synchronous>, transform_indices = @transform_13, window_bounds = array<i64: 1, 8>}, {pipeline_mode = #tpu.pipeline_mode<synchronous>, transform_indices = @transform_14, window_bounds = array<i64: 1, 8>}, {transform_indices = @transform_15, window_bounds = array<i64: 1, 16, 2>}, {pipeline_mode = #tpu.pipeline_mode<synchronous>, transform_indices = @transform_16, window_bounds = array<i64: 1, 2>}, {pipeline_mode = #tpu.pipeline_mode<synchronous>, transform_indices = @transform_17, window_bounds = array<i64: 1, 1>}, {pipeline_mode = #tpu.pipeline_mode<synchronous>, transform_indices = @transform_18, window_bounds = array<i64: 9, 10>}, {pipeline_mode = #tpu.pipeline_mode<synchronous>, transform_indices = @transform_19, window_bounds = array<i64: 1, 10>}, {pipeline_mode = #tpu.pipeline_mode<synchronous>, transform_indices = @transform_20, window_bounds = array<i64: 1, 10>}, {pipeline_mode = #tpu.pipeline_mode<synchronous>, transform_indices = @transform_21, window_bounds = array<i64: 1, 1>}, {transform_indices = @transform_22, window_bounds = array<i64: 1, 16, 1>}]} {
    %c0 = arith.constant 0 : index
    %c0_0 = arith.constant 0 : index
    %c0_1 = arith.constant 0 : index
    %0 = vector.load %arg1[%c0, %c0_0, %c0_1] : memref<1x64x8xf32, #tpu.memory_space<vmem>>, vector<1x64x8xf32>
    %1 = vector.shape_cast %0 : vector<1x64x8xf32> to vector<64x8xf32>
    %c0_2 = arith.constant 0 : index
    %c0_3 = arith.constant 0 : index
    %2 = vector.load %arg2[%c0_2, %c0_3] : memref<64x64xf32, #tpu.memory_space<vmem>>, vector<64x64xf32>
    %c0_4 = arith.constant 0 : index
    %c0_5 = arith.constant 0 : index
    %3 = vector.load %arg3[%c0_4, %c0_5] : memref<8x16xf32, #tpu.memory_space<vmem>>, vector<8x16xf32>
    %c0_6 = arith.constant 0 : index
    %c0_7 = arith.constant 0 : index
    %4 = vector.load %arg4[%c0_6, %c0_7] : memref<2x16xf32, #tpu.memory_space<vmem>>, vector<2x16xf32>
    %c0_8 = arith.constant 0 : index
    %c0_9 = arith.constant 0 : index
    %c0_10 = arith.constant 0 : index
    %5 = vector.load %arg5[%c0_8, %c0_9, %c0_10] : memref<2x8x8xf32, #tpu.memory_space<vmem>>, vector<2x8x8xf32>
    %c0_11 = arith.constant 0 : index
    %c0_12 = arith.constant 0 : index
    %6 = vector.load %arg6[%c0_11, %c0_12] : memref<1x16xf32, #tpu.memory_space<vmem>>, vector<1x16xf32>
    %cst = arith.constant dense<0.000000e+00> : vector<64x16xf32>
    %7 = tpu.matmul %1, %3, %cst {dimension_numbers = #tpu.dot_dimension_numbers<[1], [0], [0], [1], [0, 0, 1, 1], [], []>} : vector<64x8xf32>, vector<8x16xf32>, vector<64x16xf32> -> vector<64x16xf32>
    %8 = vector.extract_strided_slice %7 {offsets = [0, 0], sizes = [64, 8], strides = [1, 1]} : vector<64x16xf32> to vector<64x8xf32>
    %9 = vector.extract_strided_slice %4 {offsets = [0, 0], sizes = [1, 16], strides = [1, 1]} : vector<2x16xf32> to vector<1x16xf32>
    %10 = vector.extract_strided_slice %9 {offsets = [0, 0], sizes = [1, 8], strides = [1, 1]} : vector<1x16xf32> to vector<1x8xf32>
    %11 = vector.extract_strided_slice %9 {offsets = [0, 8], sizes = [1, 8], strides = [1, 1]} : vector<1x16xf32> to vector<1x8xf32>
    %12 = vector.broadcast %10 : vector<1x8xf32> to vector<64x8xf32>
    %13 = arith.mulf %8, %12 : vector<64x8xf32>
    %cst_13 = arith.constant dense<0.000000e+00> : vector<64xf32>
    %14 = vector.multi_reduction <add>, %13, %cst_13 [1] : vector<64x8xf32> to vector<64xf32>
    %15 = vector.shape_cast %14 : vector<64xf32> to vector<64x1xf32>
    %cst_14 = arith.constant dense<0.000000e+00> : vector<1x64xf32>
    %16 = tpu.matmul %11, %8, %cst_14 {dimension_numbers = #tpu.dot_dimension_numbers<[1], [1], [0], [0], [0, 0, 1, 0], [], []>} : vector<1x8xf32>, vector<64x8xf32>, vector<1x64xf32> -> vector<1x64xf32>
    %17 = vector.broadcast %15 : vector<64x1xf32> to vector<64x64xf32>
    %18 = vector.broadcast %16 : vector<1x64xf32> to vector<64x64xf32>
    %19 = arith.addf %17, %18 : vector<64x64xf32>
    %cst_15 = arith.constant 0.000000e+00 : f32
    %20 = vector.broadcast %cst_15 : f32 to vector<64x64xf32>
    %21 = arith.cmpf ogt, %19, %20 : vector<64x64xf32>
    %cst_16 = arith.constant 2.000000e-01 : f32
    %22 = vector.broadcast %cst_16 : f32 to vector<64x64xf32>
    %23 = arith.mulf %22, %19 : vector<64x64xf32>
    %24 = arith.select %21, %19, %23 : vector<64x64xi1>, vector<64x64xf32>
    %cst_17 = arith.constant 0.000000e+00 : f32
    %25 = vector.broadcast %cst_17 : f32 to vector<64x64xf32>
    %26 = arith.cmpf ogt, %2, %25 : vector<64x64xf32>
    %cst_18 = arith.constant -9.000000e+15 : f32
    %27 = vector.broadcast %cst_18 : f32 to vector<64x64xf32>
    %28 = arith.select %26, %24, %27 : vector<64x64xi1>, vector<64x64xf32>
    %cst_19 = arith.constant dense<0xFF800000> : vector<64xf32>
    %29 = vector.multi_reduction <maximumf>, %28, %cst_19 [1] : vector<64x64xf32> to vector<64xf32>
    %30 = vector.shape_cast %29 : vector<64xf32> to vector<64x1xf32>
    %31 = vector.broadcast %30 : vector<64x1xf32> to vector<64x64xf32>
    %32 = arith.subf %28, %31 : vector<64x64xf32>
    %33 = math.exp %32 : vector<64x64xf32>
    %cst_20 = arith.constant dense<0.000000e+00> : vector<64xf32>
    %34 = vector.multi_reduction <add>, %33, %cst_20 [1] : vector<64x64xf32> to vector<64xf32>
    %35 = vector.shape_cast %34 : vector<64xf32> to vector<64x1xf32>
    %36 = tpu.reciprocal %35 {approx = true} : vector<64x1xf32> -> vector<64x1xf32>
    %37 = vector.broadcast %36 : vector<64x1xf32> to vector<64x64xf32>
    %38 = arith.mulf %33, %37 : vector<64x64xf32>
    %cst_21 = arith.constant dense<0.000000e+00> : vector<64x8xf32>
    %39 = tpu.matmul %38, %8, %cst_21 {dimension_numbers = #tpu.dot_dimension_numbers<[1], [0], [0], [1], [0, 0, 1, 1], [], []>} : vector<64x64xf32>, vector<64x8xf32>, vector<64x8xf32> -> vector<64x8xf32>
    %cst_22 = arith.constant 0.000000e+00 : f32
    %40 = vector.broadcast %cst_22 : f32 to vector<64x8xf32>
    %41 = arith.cmpf ogt, %39, %40 : vector<64x8xf32>
    %cst_23 = arith.constant 0.000000e+00 : f32
    %42 = vector.broadcast %cst_23 : f32 to vector<64x8xf32>
    %43 = arith.minimumf %39, %42 : vector<64x8xf32>
    %44 = math.exp %43 : vector<64x8xf32>
    %cst_24 = arith.constant 1.000000e+00 : f32
    %45 = vector.broadcast %cst_24 : f32 to vector<64x8xf32>
    %46 = arith.subf %44, %45 : vector<64x8xf32>
    %47 = arith.select %41, %39, %46 : vector<64x8xi1>, vector<64x8xf32>
    %48 = vector.extract_strided_slice %5 {offsets = [0, 0, 0], sizes = [1, 8, 8], strides = [1, 1, 1]} : vector<2x8x8xf32> to vector<1x8x8xf32>
    %49 = vector.shape_cast %48 : vector<1x8x8xf32> to vector<8x8xf32>
    %cst_25 = arith.constant dense<0.000000e+00> : vector<64x8xf32>
    %50 = tpu.matmul %47, %49, %cst_25 {dimension_numbers = #tpu.dot_dimension_numbers<[1], [0], [0], [1], [0, 0, 1, 1], [], []>} : vector<64x8xf32>, vector<8x8xf32>, vector<64x8xf32> -> vector<64x8xf32>
    %51 = vector.extract_strided_slice %7 {offsets = [0, 8], sizes = [64, 8], strides = [1, 1]} : vector<64x16xf32> to vector<64x8xf32>
    %52 = vector.extract_strided_slice %4 {offsets = [1, 0], sizes = [1, 16], strides = [1, 1]} : vector<2x16xf32> to vector<1x16xf32>
    %53 = vector.extract_strided_slice %52 {offsets = [0, 0], sizes = [1, 8], strides = [1, 1]} : vector<1x16xf32> to vector<1x8xf32>
    %54 = vector.extract_strided_slice %52 {offsets = [0, 8], sizes = [1, 8], strides = [1, 1]} : vector<1x16xf32> to vector<1x8xf32>
    %55 = vector.broadcast %53 : vector<1x8xf32> to vector<64x8xf32>
    %56 = arith.mulf %51, %55 : vector<64x8xf32>
    %cst_26 = arith.constant dense<0.000000e+00> : vector<64xf32>
    %57 = vector.multi_reduction <add>, %56, %cst_26 [1] : vector<64x8xf32> to vector<64xf32>
    %58 = vector.shape_cast %57 : vector<64xf32> to vector<64x1xf32>
    %cst_27 = arith.constant dense<0.000000e+00> : vector<1x64xf32>
    %59 = tpu.matmul %54, %51, %cst_27 {dimension_numbers = #tpu.dot_dimension_numbers<[1], [1], [0], [0], [0, 0, 1, 0], [], []>} : vector<1x8xf32>, vector<64x8xf32>, vector<1x64xf32> -> vector<1x64xf32>
    %60 = vector.broadcast %58 : vector<64x1xf32> to vector<64x64xf32>
    %61 = vector.broadcast %59 : vector<1x64xf32> to vector<64x64xf32>
    %62 = arith.addf %60, %61 : vector<64x64xf32>
    %cst_28 = arith.constant 0.000000e+00 : f32
    %63 = vector.broadcast %cst_28 : f32 to vector<64x64xf32>
    %64 = arith.cmpf ogt, %62, %63 : vector<64x64xf32>
    %cst_29 = arith.constant 2.000000e-01 : f32
    %65 = vector.broadcast %cst_29 : f32 to vector<64x64xf32>
    %66 = arith.mulf %65, %62 : vector<64x64xf32>
    %67 = arith.select %64, %62, %66 : vector<64x64xi1>, vector<64x64xf32>
    %cst_30 = arith.constant 0.000000e+00 : f32
    %68 = vector.broadcast %cst_30 : f32 to vector<64x64xf32>
    %69 = arith.cmpf ogt, %2, %68 : vector<64x64xf32>
    %cst_31 = arith.constant -9.000000e+15 : f32
    %70 = vector.broadcast %cst_31 : f32 to vector<64x64xf32>
    %71 = arith.select %69, %67, %70 : vector<64x64xi1>, vector<64x64xf32>
    %cst_32 = arith.constant dense<0xFF800000> : vector<64xf32>
    %72 = vector.multi_reduction <maximumf>, %71, %cst_32 [1] : vector<64x64xf32> to vector<64xf32>
    %73 = vector.shape_cast %72 : vector<64xf32> to vector<64x1xf32>
    %74 = vector.broadcast %73 : vector<64x1xf32> to vector<64x64xf32>
    %75 = arith.subf %71, %74 : vector<64x64xf32>
    %76 = math.exp %75 : vector<64x64xf32>
    %cst_33 = arith.constant dense<0.000000e+00> : vector<64xf32>
    %77 = vector.multi_reduction <add>, %76, %cst_33 [1] : vector<64x64xf32> to vector<64xf32>
    %78 = vector.shape_cast %77 : vector<64xf32> to vector<64x1xf32>
    %79 = tpu.reciprocal %78 {approx = true} : vector<64x1xf32> -> vector<64x1xf32>
    %80 = vector.broadcast %79 : vector<64x1xf32> to vector<64x64xf32>
    %81 = arith.mulf %76, %80 : vector<64x64xf32>
    %cst_34 = arith.constant dense<0.000000e+00> : vector<64x8xf32>
    %82 = tpu.matmul %81, %51, %cst_34 {dimension_numbers = #tpu.dot_dimension_numbers<[1], [0], [0], [1], [0, 0, 1, 1], [], []>} : vector<64x64xf32>, vector<64x8xf32>, vector<64x8xf32> -> vector<64x8xf32>
    %cst_35 = arith.constant 0.000000e+00 : f32
    %83 = vector.broadcast %cst_35 : f32 to vector<64x8xf32>
    %84 = arith.cmpf ogt, %82, %83 : vector<64x8xf32>
    %cst_36 = arith.constant 0.000000e+00 : f32
    %85 = vector.broadcast %cst_36 : f32 to vector<64x8xf32>
    %86 = arith.minimumf %82, %85 : vector<64x8xf32>
    %87 = math.exp %86 : vector<64x8xf32>
    %cst_37 = arith.constant 1.000000e+00 : f32
    %88 = vector.broadcast %cst_37 : f32 to vector<64x8xf32>
    %89 = arith.subf %87, %88 : vector<64x8xf32>
    %90 = arith.select %84, %82, %89 : vector<64x8xi1>, vector<64x8xf32>
    %91 = vector.extract_strided_slice %5 {offsets = [1, 0, 0], sizes = [1, 8, 8], strides = [1, 1, 1]} : vector<2x8x8xf32> to vector<1x8x8xf32>
    %92 = vector.shape_cast %91 : vector<1x8x8xf32> to vector<8x8xf32>
    %cst_38 = arith.constant dense<0.000000e+00> : vector<64x8xf32>
    %93 = tpu.matmul %90, %92, %cst_38 {dimension_numbers = #tpu.dot_dimension_numbers<[1], [0], [0], [1], [0, 0, 1, 1], [], []>} : vector<64x8xf32>, vector<8x8xf32>, vector<64x8xf32> -> vector<64x8xf32>
    %94 = arith.addf %50, %93 : vector<64x8xf32>
    %95 = vector.extract_strided_slice %6 {offsets = [0, 0], sizes = [1, 8], strides = [1, 1]} : vector<1x16xf32> to vector<1x8xf32>
    %96 = vector.extract_strided_slice %6 {offsets = [0, 8], sizes = [1, 8], strides = [1, 1]} : vector<1x16xf32> to vector<1x8xf32>
    %97 = vector.broadcast %95 : vector<1x8xf32> to vector<64x8xf32>
    %98 = arith.mulf %94, %97 : vector<64x8xf32>
    %cst_39 = arith.constant dense<0.000000e+00> : vector<64xf32>
    %99 = vector.multi_reduction <add>, %98, %cst_39 [1] : vector<64x8xf32> to vector<64xf32>
    %100 = vector.shape_cast %99 : vector<64xf32> to vector<64x1xf32>
    %cst_40 = arith.constant dense<0.000000e+00> : vector<1x64xf32>
    %101 = tpu.matmul %96, %94, %cst_40 {dimension_numbers = #tpu.dot_dimension_numbers<[1], [1], [0], [0], [0, 0, 1, 0], [], []>} : vector<1x8xf32>, vector<64x8xf32>, vector<1x64xf32> -> vector<1x64xf32>
    %102 = vector.broadcast %100 : vector<64x1xf32> to vector<64x64xf32>
    %103 = vector.broadcast %101 : vector<1x64xf32> to vector<64x64xf32>
    %104 = arith.addf %102, %103 : vector<64x64xf32>
    %cst_41 = arith.constant 0.000000e+00 : f32
    %105 = vector.broadcast %cst_41 : f32 to vector<64x64xf32>
    %106 = arith.cmpf ogt, %104, %105 : vector<64x64xf32>
    %cst_42 = arith.constant 2.000000e-01 : f32
    %107 = vector.broadcast %cst_42 : f32 to vector<64x64xf32>
    %108 = arith.mulf %107, %104 : vector<64x64xf32>
    %109 = arith.select %106, %104, %108 : vector<64x64xi1>, vector<64x64xf32>
    %cst_43 = arith.constant 0.000000e+00 : f32
    %110 = vector.broadcast %cst_43 : f32 to vector<64x64xf32>
    %111 = arith.cmpf ogt, %2, %110 : vector<64x64xf32>
    %cst_44 = arith.constant -9.000000e+15 : f32
    %112 = vector.broadcast %cst_44 : f32 to vector<64x64xf32>
    %113 = arith.select %111, %109, %112 : vector<64x64xi1>, vector<64x64xf32>
    %cst_45 = arith.constant dense<0xFF800000> : vector<64xf32>
    %114 = vector.multi_reduction <maximumf>, %113, %cst_45 [1] : vector<64x64xf32> to vector<64xf32>
    %115 = vector.shape_cast %114 : vector<64xf32> to vector<64x1xf32>
    %116 = vector.broadcast %115 : vector<64x1xf32> to vector<64x64xf32>
    %117 = arith.subf %113, %116 : vector<64x64xf32>
    %118 = math.exp %117 : vector<64x64xf32>
    %cst_46 = arith.constant dense<0.000000e+00> : vector<64xf32>
    %119 = vector.multi_reduction <add>, %118, %cst_46 [1] : vector<64x64xf32> to vector<64xf32>
    %120 = vector.shape_cast %119 : vector<64xf32> to vector<64x1xf32>
    %121 = tpu.reciprocal %120 {approx = true} : vector<64x1xf32> -> vector<64x1xf32>
    %122 = vector.broadcast %121 : vector<64x1xf32> to vector<64x64xf32>
    %123 = arith.mulf %118, %122 : vector<64x64xf32>
    %cst_47 = arith.constant dense<0.000000e+00> : vector<64x8xf32>
    %124 = tpu.matmul %123, %94, %cst_47 {dimension_numbers = #tpu.dot_dimension_numbers<[1], [0], [0], [1], [0, 0, 1, 1], [], []>} : vector<64x64xf32>, vector<64x8xf32>, vector<64x8xf32> -> vector<64x8xf32>
    %c0_48 = arith.constant 0 : index
    %c0_49 = arith.constant 0 : index
    %c0_50 = arith.constant 0 : index
    %125 = vector.load %arg10[%c0_48, %c0_49, %c0_50] : memref<1x16x8xf32, #tpu.memory_space<vmem>>, vector<1x16x8xf32>
    %126 = vector.shape_cast %125 : vector<1x16x8xf32> to vector<16x8xf32>
    %c0_51 = arith.constant 0 : index
    %c0_52 = arith.constant 0 : index
    %c0_53 = arith.constant 0 : index
    %127 = vector.load %arg11[%c0_51, %c0_52, %c0_53] : memref<1x16x8xf32, #tpu.memory_space<vmem>>, vector<1x16x8xf32>
    %128 = vector.shape_cast %127 : vector<1x16x8xf32> to vector<16x8xf32>
    %c0_54 = arith.constant 0 : index
    %c0_55 = arith.constant 0 : index
    %129 = vector.load %arg7[%c0_54, %c0_55] : memref<8x32xf32, #tpu.memory_space<vmem>>, vector<8x32xf32>
    %c0_56 = arith.constant 0 : index
    %c0_57 = arith.constant 0 : index
    %130 = vector.load %arg8[%c0_56, %c0_57] : memref<8x32xf32, #tpu.memory_space<vmem>>, vector<8x32xf32>
    %c0_58 = arith.constant 0 : index
    %c0_59 = arith.constant 0 : index
    %131 = vector.load %arg9[%c0_58, %c0_59] : memref<1x32xf32, #tpu.memory_space<vmem>>, vector<1x32xf32>
    %132 = vector.extract_strided_slice %124 {offsets = [0, 0], sizes = [16, 8], strides = [1, 1]} : vector<64x8xf32> to vector<16x8xf32>
    %cst_60 = arith.constant dense<0.000000e+00> : vector<16x32xf32>
    %133 = tpu.matmul %132, %129, %cst_60 {dimension_numbers = #tpu.dot_dimension_numbers<[1], [0], [0], [1], [0, 0, 1, 1], [], []>} : vector<16x8xf32>, vector<8x32xf32>, vector<16x32xf32> -> vector<16x32xf32>
    %cst_61 = arith.constant dense<0.000000e+00> : vector<16x32xf32>
    %134 = tpu.matmul %126, %130, %cst_61 {dimension_numbers = #tpu.dot_dimension_numbers<[1], [0], [0], [1], [0, 0, 1, 1], [], []>} : vector<16x8xf32>, vector<8x32xf32>, vector<16x32xf32> -> vector<16x32xf32>
    %135 = arith.addf %133, %134 : vector<16x32xf32>
    %136 = vector.broadcast %131 : vector<1x32xf32> to vector<16x32xf32>
    %137 = arith.addf %135, %136 : vector<16x32xf32>
    %138 = vector.extract_strided_slice %137 {offsets = [0, 0], sizes = [16, 8], strides = [1, 1]} : vector<16x32xf32> to vector<16x8xf32>
    %139 = arith.negf %138 : vector<16x8xf32>
    %140 = math.exp %139 : vector<16x8xf32>
    %cst_62 = arith.constant 1.000000e+00 : f32
    %141 = vector.broadcast %cst_62 : f32 to vector<16x8xf32>
    %142 = arith.addf %141, %140 : vector<16x8xf32>
    %143 = arith.divf %141, %142 : vector<16x8xf32>
    %144 = vector.extract_strided_slice %137 {offsets = [0, 8], sizes = [16, 8], strides = [1, 1]} : vector<16x32xf32> to vector<16x8xf32>
    %145 = arith.negf %144 : vector<16x8xf32>
    %146 = math.exp %145 : vector<16x8xf32>
    %cst_63 = arith.constant 1.000000e+00 : f32
    %147 = vector.broadcast %cst_63 : f32 to vector<16x8xf32>
    %148 = arith.addf %147, %146 : vector<16x8xf32>
    %149 = arith.divf %147, %148 : vector<16x8xf32>
    %150 = vector.extract_strided_slice %137 {offsets = [0, 16], sizes = [16, 8], strides = [1, 1]} : vector<16x32xf32> to vector<16x8xf32>
    %151 = math.tanh %150 : vector<16x8xf32>
    %152 = vector.extract_strided_slice %137 {offsets = [0, 24], sizes = [16, 8], strides = [1, 1]} : vector<16x32xf32> to vector<16x8xf32>
    %153 = arith.negf %152 : vector<16x8xf32>
    %154 = math.exp %153 : vector<16x8xf32>
    %cst_64 = arith.constant 1.000000e+00 : f32
    %155 = vector.broadcast %cst_64 : f32 to vector<16x8xf32>
    %156 = arith.addf %155, %154 : vector<16x8xf32>
    %157 = arith.divf %155, %156 : vector<16x8xf32>
    %158 = arith.mulf %149, %128 : vector<16x8xf32>
    %159 = arith.mulf %143, %151 : vector<16x8xf32>
    %160 = arith.addf %158, %159 : vector<16x8xf32>
    %161 = math.tanh %160 : vector<16x8xf32>
    %162 = arith.mulf %157, %161 : vector<16x8xf32>
    %163 = vector.extract_strided_slice %124 {offsets = [16, 0], sizes = [16, 8], strides = [1, 1]} : vector<64x8xf32> to vector<16x8xf32>
    %cst_65 = arith.constant dense<0.000000e+00> : vector<16x32xf32>
    %164 = tpu.matmul %163, %129, %cst_65 {dimension_numbers = #tpu.dot_dimension_numbers<[1], [0], [0], [1], [0, 0, 1, 1], [], []>} : vector<16x8xf32>, vector<8x32xf32>, vector<16x32xf32> -> vector<16x32xf32>
    %cst_66 = arith.constant dense<0.000000e+00> : vector<16x32xf32>
    %165 = tpu.matmul %162, %130, %cst_66 {dimension_numbers = #tpu.dot_dimension_numbers<[1], [0], [0], [1], [0, 0, 1, 1], [], []>} : vector<16x8xf32>, vector<8x32xf32>, vector<16x32xf32> -> vector<16x32xf32>
    %166 = arith.addf %164, %165 : vector<16x32xf32>
    %167 = vector.broadcast %131 : vector<1x32xf32> to vector<16x32xf32>
    %168 = arith.addf %166, %167 : vector<16x32xf32>
    %169 = vector.extract_strided_slice %168 {offsets = [0, 0], sizes = [16, 8], strides = [1, 1]} : vector<16x32xf32> to vector<16x8xf32>
    %170 = arith.negf %169 : vector<16x8xf32>
    %171 = math.exp %170 : vector<16x8xf32>
    %cst_67 = arith.constant 1.000000e+00 : f32
    %172 = vector.broadcast %cst_67 : f32 to vector<16x8xf32>
    %173 = arith.addf %172, %171 : vector<16x8xf32>
    %174 = arith.divf %172, %173 : vector<16x8xf32>
    %175 = vector.extract_strided_slice %168 {offsets = [0, 8], sizes = [16, 8], strides = [1, 1]} : vector<16x32xf32> to vector<16x8xf32>
    %176 = arith.negf %175 : vector<16x8xf32>
    %177 = math.exp %176 : vector<16x8xf32>
    %cst_68 = arith.constant 1.000000e+00 : f32
    %178 = vector.broadcast %cst_68 : f32 to vector<16x8xf32>
    %179 = arith.addf %178, %177 : vector<16x8xf32>
    %180 = arith.divf %178, %179 : vector<16x8xf32>
    %181 = vector.extract_strided_slice %168 {offsets = [0, 16], sizes = [16, 8], strides = [1, 1]} : vector<16x32xf32> to vector<16x8xf32>
    %182 = math.tanh %181 : vector<16x8xf32>
    %183 = vector.extract_strided_slice %168 {offsets = [0, 24], sizes = [16, 8], strides = [1, 1]} : vector<16x32xf32> to vector<16x8xf32>
    %184 = arith.negf %183 : vector<16x8xf32>
    %185 = math.exp %184 : vector<16x8xf32>
    %cst_69 = arith.constant 1.000000e+00 : f32
    %186 = vector.broadcast %cst_69 : f32 to vector<16x8xf32>
    %187 = arith.addf %186, %185 : vector<16x8xf32>
    %188 = arith.divf %186, %187 : vector<16x8xf32>
    %189 = arith.mulf %180, %160 : vector<16x8xf32>
    %190 = arith.mulf %174, %182 : vector<16x8xf32>
    %191 = arith.addf %189, %190 : vector<16x8xf32>
    %192 = math.tanh %191 : vector<16x8xf32>
    %193 = arith.mulf %188, %192 : vector<16x8xf32>
    %194 = vector.extract_strided_slice %124 {offsets = [32, 0], sizes = [16, 8], strides = [1, 1]} : vector<64x8xf32> to vector<16x8xf32>
    %cst_70 = arith.constant dense<0.000000e+00> : vector<16x32xf32>
    %195 = tpu.matmul %194, %129, %cst_70 {dimension_numbers = #tpu.dot_dimension_numbers<[1], [0], [0], [1], [0, 0, 1, 1], [], []>} : vector<16x8xf32>, vector<8x32xf32>, vector<16x32xf32> -> vector<16x32xf32>
    %cst_71 = arith.constant dense<0.000000e+00> : vector<16x32xf32>
    %196 = tpu.matmul %193, %130, %cst_71 {dimension_numbers = #tpu.dot_dimension_numbers<[1], [0], [0], [1], [0, 0, 1, 1], [], []>} : vector<16x8xf32>, vector<8x32xf32>, vector<16x32xf32> -> vector<16x32xf32>
    %197 = arith.addf %195, %196 : vector<16x32xf32>
    %198 = vector.broadcast %131 : vector<1x32xf32> to vector<16x32xf32>
    %199 = arith.addf %197, %198 : vector<16x32xf32>
    %200 = vector.extract_strided_slice %199 {offsets = [0, 0], sizes = [16, 8], strides = [1, 1]} : vector<16x32xf32> to vector<16x8xf32>
    %201 = arith.negf %200 : vector<16x8xf32>
    %202 = math.exp %201 : vector<16x8xf32>
    %cst_72 = arith.constant 1.000000e+00 : f32
    %203 = vector.broadcast %cst_72 : f32 to vector<16x8xf32>
    %204 = arith.addf %203, %202 : vector<16x8xf32>
    %205 = arith.divf %203, %204 : vector<16x8xf32>
    %206 = vector.extract_strided_slice %199 {offsets = [0, 8], sizes = [16, 8], strides = [1, 1]} : vector<16x32xf32> to vector<16x8xf32>
    %207 = arith.negf %206 : vector<16x8xf32>
    %208 = math.exp %207 : vector<16x8xf32>
    %cst_73 = arith.constant 1.000000e+00 : f32
    %209 = vector.broadcast %cst_73 : f32 to vector<16x8xf32>
    %210 = arith.addf %209, %208 : vector<16x8xf32>
    %211 = arith.divf %209, %210 : vector<16x8xf32>
    %212 = vector.extract_strided_slice %199 {offsets = [0, 16], sizes = [16, 8], strides = [1, 1]} : vector<16x32xf32> to vector<16x8xf32>
    %213 = math.tanh %212 : vector<16x8xf32>
    %214 = vector.extract_strided_slice %199 {offsets = [0, 24], sizes = [16, 8], strides = [1, 1]} : vector<16x32xf32> to vector<16x8xf32>
    %215 = arith.negf %214 : vector<16x8xf32>
    %216 = math.exp %215 : vector<16x8xf32>
    %cst_74 = arith.constant 1.000000e+00 : f32
    %217 = vector.broadcast %cst_74 : f32 to vector<16x8xf32>
    %218 = arith.addf %217, %216 : vector<16x8xf32>
    %219 = arith.divf %217, %218 : vector<16x8xf32>
    %220 = arith.mulf %211, %191 : vector<16x8xf32>
    %221 = arith.mulf %205, %213 : vector<16x8xf32>
    %222 = arith.addf %220, %221 : vector<16x8xf32>
    %223 = math.tanh %222 : vector<16x8xf32>
    %224 = arith.mulf %219, %223 : vector<16x8xf32>
    %225 = vector.extract_strided_slice %124 {offsets = [48, 0], sizes = [16, 8], strides = [1, 1]} : vector<64x8xf32> to vector<16x8xf32>
    %cst_75 = arith.constant dense<0.000000e+00> : vector<16x32xf32>
    %226 = tpu.matmul %225, %129, %cst_75 {dimension_numbers = #tpu.dot_dimension_numbers<[1], [0], [0], [1], [0, 0, 1, 1], [], []>} : vector<16x8xf32>, vector<8x32xf32>, vector<16x32xf32> -> vector<16x32xf32>
    %cst_76 = arith.constant dense<0.000000e+00> : vector<16x32xf32>
    %227 = tpu.matmul %224, %130, %cst_76 {dimension_numbers = #tpu.dot_dimension_numbers<[1], [0], [0], [1], [0, 0, 1, 1], [], []>} : vector<16x8xf32>, vector<8x32xf32>, vector<16x32xf32> -> vector<16x32xf32>
    %228 = arith.addf %226, %227 : vector<16x32xf32>
    %229 = vector.broadcast %131 : vector<1x32xf32> to vector<16x32xf32>
    %230 = arith.addf %228, %229 : vector<16x32xf32>
    %231 = vector.extract_strided_slice %230 {offsets = [0, 0], sizes = [16, 8], strides = [1, 1]} : vector<16x32xf32> to vector<16x8xf32>
    %232 = arith.negf %231 : vector<16x8xf32>
    %233 = math.exp %232 : vector<16x8xf32>
    %cst_77 = arith.constant 1.000000e+00 : f32
    %234 = vector.broadcast %cst_77 : f32 to vector<16x8xf32>
    %235 = arith.addf %234, %233 : vector<16x8xf32>
    %236 = arith.divf %234, %235 : vector<16x8xf32>
    %237 = vector.extract_strided_slice %230 {offsets = [0, 8], sizes = [16, 8], strides = [1, 1]} : vector<16x32xf32> to vector<16x8xf32>
    %238 = arith.negf %237 : vector<16x8xf32>
    %239 = math.exp %238 : vector<16x8xf32>
    %cst_78 = arith.constant 1.000000e+00 : f32
    %240 = vector.broadcast %cst_78 : f32 to vector<16x8xf32>
    %241 = arith.addf %240, %239 : vector<16x8xf32>
    %242 = arith.divf %240, %241 : vector<16x8xf32>
    %243 = vector.extract_strided_slice %230 {offsets = [0, 16], sizes = [16, 8], strides = [1, 1]} : vector<16x32xf32> to vector<16x8xf32>
    %244 = math.tanh %243 : vector<16x8xf32>
    %245 = vector.extract_strided_slice %230 {offsets = [0, 24], sizes = [16, 8], strides = [1, 1]} : vector<16x32xf32> to vector<16x8xf32>
    %246 = arith.negf %245 : vector<16x8xf32>
    %247 = math.exp %246 : vector<16x8xf32>
    %cst_79 = arith.constant 1.000000e+00 : f32
    %248 = vector.broadcast %cst_79 : f32 to vector<16x8xf32>
    %249 = arith.addf %248, %247 : vector<16x8xf32>
    %250 = arith.divf %248, %249 : vector<16x8xf32>
    %251 = arith.mulf %242, %222 : vector<16x8xf32>
    %252 = arith.mulf %236, %244 : vector<16x8xf32>
    %253 = arith.addf %251, %252 : vector<16x8xf32>
    %254 = math.tanh %253 : vector<16x8xf32>
    %255 = arith.mulf %250, %254 : vector<16x8xf32>
    %256 = vector.extract_strided_slice %1 {offsets = [48, 0], sizes = [16, 8], strides = [1, 1]} : vector<64x8xf32> to vector<16x8xf32>
    %c0_80 = arith.constant 0 : index
    %c0_81 = arith.constant 0 : index
    %257 = vector.load %arg12[%c0_80, %c0_81] : memref<8x8xf32, #tpu.memory_space<vmem>>, vector<8x8xf32>
    %c0_82 = arith.constant 0 : index
    %c0_83 = arith.constant 0 : index
    %258 = vector.load %arg13[%c0_82, %c0_83] : memref<1x8xf32, #tpu.memory_space<vmem>>, vector<1x8xf32>
    %c0_84 = arith.constant 0 : index
    %c0_85 = arith.constant 0 : index
    %259 = vector.load %arg14[%c0_84, %c0_85] : memref<1x8xf32, #tpu.memory_space<vmem>>, vector<1x8xf32>
    %c0_86 = arith.constant 0 : index
    %c0_87 = arith.constant 0 : index
    %260 = vector.load %arg15[%c0_86, %c0_87] : memref<1x8xf32, #tpu.memory_space<vmem>>, vector<1x8xf32>
    %cst_88 = arith.constant dense<0.000000e+00> : vector<16x8xf32>
    %261 = tpu.matmul %256, %257, %cst_88 {dimension_numbers = #tpu.dot_dimension_numbers<[1], [0], [0], [1], [0, 0, 1, 1], [], []>} : vector<16x8xf32>, vector<8x8xf32>, vector<16x8xf32> -> vector<16x8xf32>
    %262 = vector.broadcast %258 : vector<1x8xf32> to vector<16x8xf32>
    %263 = arith.addf %261, %262 : vector<16x8xf32>
    %264 = arith.addf %263, %255 : vector<16x8xf32>
    %cst_89 = arith.constant 0.000000e+00 : f32
    %265 = vector.broadcast %cst_89 : f32 to vector<16x8xf32>
    %266 = arith.maximumf %264, %265 : vector<16x8xf32>
    %cst_90 = arith.constant dense<0.000000e+00> : vector<16xf32>
    %267 = vector.multi_reduction <add>, %266, %cst_90 [1] : vector<16x8xf32> to vector<16xf32>
    %268 = vector.shape_cast %267 : vector<16xf32> to vector<16x1xf32>
    %cst_91 = arith.constant 8.000000e+00 : f32
    %269 = vector.broadcast %cst_91 : f32 to vector<16x1xf32>
    %270 = arith.divf %268, %269 : vector<16x1xf32>
    %271 = vector.broadcast %270 : vector<16x1xf32> to vector<16x8xf32>
    %272 = arith.subf %266, %271 : vector<16x8xf32>
    %273 = vector.broadcast %270 : vector<16x1xf32> to vector<16x8xf32>
    %274 = arith.subf %266, %273 : vector<16x8xf32>
    %275 = arith.mulf %272, %274 : vector<16x8xf32>
    %cst_92 = arith.constant dense<0.000000e+00> : vector<16xf32>
    %276 = vector.multi_reduction <add>, %275, %cst_92 [1] : vector<16x8xf32> to vector<16xf32>
    %277 = vector.shape_cast %276 : vector<16xf32> to vector<16x1xf32>
    %cst_93 = arith.constant 8.000000e+00 : f32
    %278 = vector.broadcast %cst_93 : f32 to vector<16x1xf32>
    %279 = arith.divf %277, %278 : vector<16x1xf32>
    %280 = vector.broadcast %270 : vector<16x1xf32> to vector<16x8xf32>
    %281 = arith.subf %266, %280 : vector<16x8xf32>
    %cst_94 = arith.constant 9.99999974E-6 : f32
    %282 = vector.broadcast %cst_94 : f32 to vector<16x1xf32>
    %283 = arith.addf %279, %282 : vector<16x1xf32>
    %284 = math.rsqrt %283 : vector<16x1xf32>
    %285 = vector.broadcast %284 : vector<16x1xf32> to vector<16x8xf32>
    %286 = arith.mulf %281, %285 : vector<16x8xf32>
    %287 = vector.broadcast %259 : vector<1x8xf32> to vector<16x8xf32>
    %288 = arith.mulf %286, %287 : vector<16x8xf32>
    %289 = vector.broadcast %260 : vector<1x8xf32> to vector<16x8xf32>
    %290 = arith.addf %288, %289 : vector<16x8xf32>
    %c0_95 = arith.constant 0 : index
    %c0_96 = arith.constant 0 : index
    %c0_97 = arith.constant 0 : index
    %291 = vector.load %arg16[%c0_95, %c0_96, %c0_97] : memref<1x16x2xf32, #tpu.memory_space<vmem>>, vector<1x16x2xf32>
    %292 = vector.shape_cast %291 : vector<1x16x2xf32> to vector<16x2xf32>
    %c0_98 = arith.constant 0 : index
    %c0_99 = arith.constant 0 : index
    %293 = vector.load %arg17[%c0_98, %c0_99] : memref<1x2xf32, #tpu.memory_space<vmem>>, vector<1x2xf32>
    %294 = vector.broadcast %293 : vector<1x2xf32> to vector<16x2xf32>
    %295 = arith.mulf %292, %294 : vector<16x2xf32>
    %cst_100 = arith.constant dense<0.000000e+00> : vector<16xf32>
    %296 = vector.multi_reduction <add>, %295, %cst_100 [1] : vector<16x2xf32> to vector<16xf32>
    %297 = vector.shape_cast %296 : vector<16xf32> to vector<16x1xf32>
    %c0_101 = arith.constant 0 : index
    %c0_102 = arith.constant 0 : index
    %298 = vector.load %arg18[%c0_101, %c0_102] : memref<1x1xf32, #tpu.memory_space<vmem>>, vector<1x1xf32>
    %299 = vector.broadcast %298 : vector<1x1xf32> to vector<16x1xf32>
    %300 = arith.addf %297, %299 : vector<16x1xf32>
    %c0_103 = arith.constant 0 : index
    %c0_104 = arith.constant 0 : index
    %301 = vector.load %arg19[%c0_103, %c0_104] : memref<9x10xf32, #tpu.memory_space<vmem>>, vector<8x10xf32>
    %cst_105 = arith.constant dense<0.000000e+00> : vector<16x10xf32>
    %302 = tpu.matmul %290, %301, %cst_105 {dimension_numbers = #tpu.dot_dimension_numbers<[1], [0], [0], [1], [0, 0, 1, 1], [], []>} : vector<16x8xf32>, vector<8x10xf32>, vector<16x10xf32> -> vector<16x10xf32>
    %c8 = arith.constant 8 : index
    %c0_106 = arith.constant 0 : index
    %303 = vector.load %arg19[%c8, %c0_106] : memref<9x10xf32, #tpu.memory_space<vmem>>, vector<1x10xf32>
    %304 = vector.broadcast %300 : vector<16x1xf32> to vector<16x10xf32>
    %305 = vector.broadcast %303 : vector<1x10xf32> to vector<16x10xf32>
    %306 = arith.mulf %304, %305 : vector<16x10xf32>
    %307 = arith.addf %302, %306 : vector<16x10xf32>
    %c0_107 = arith.constant 0 : index
    %c0_108 = arith.constant 0 : index
    %308 = vector.load %arg20[%c0_107, %c0_108] : memref<1x10xf32, #tpu.memory_space<vmem>>, vector<1x10xf32>
    %309 = vector.broadcast %308 : vector<1x10xf32> to vector<16x10xf32>
    %310 = arith.addf %307, %309 : vector<16x10xf32>
    %cst_109 = arith.constant 0.000000e+00 : f32
    %311 = vector.broadcast %cst_109 : f32 to vector<16x10xf32>
    %312 = arith.maximumf %310, %311 : vector<16x10xf32>
    %c0_110 = arith.constant 0 : index
    %c0_111 = arith.constant 0 : index
    %313 = vector.load %arg21[%c0_110, %c0_111] : memref<1x10xf32, #tpu.memory_space<vmem>>, vector<1x10xf32>
    %314 = vector.broadcast %313 : vector<1x10xf32> to vector<16x10xf32>
    %315 = arith.mulf %312, %314 : vector<16x10xf32>
    %cst_112 = arith.constant dense<0.000000e+00> : vector<16xf32>
    %316 = vector.multi_reduction <add>, %315, %cst_112 [1] : vector<16x10xf32> to vector<16xf32>
    %317 = vector.shape_cast %316 : vector<16xf32> to vector<16x1xf32>
    %c0_113 = arith.constant 0 : index
    %c0_114 = arith.constant 0 : index
    %318 = vector.load %arg22[%c0_113, %c0_114] : memref<1x1xf32, #tpu.memory_space<vmem>>, vector<1x1xf32>
    %319 = vector.broadcast %318 : vector<1x1xf32> to vector<16x1xf32>
    %320 = arith.addf %317, %319 : vector<16x1xf32>
    %c0_115 = arith.constant 0 : index
    %c0_116 = arith.constant 0 : index
    %c0_117 = arith.constant 0 : index
    %321 = vector.load %arg23[%c0_115, %c0_116, %c0_117] : memref<1x16x1xf32, #tpu.memory_space<vmem>>, vector<1x16x1xf32>
    %322 = vector.shape_cast %321 : vector<1x16x1xf32> to vector<16x1xf32>
    %323 = vector.shape_cast %320 : vector<16x1xf32> to vector<1x16x1xf32>
    tpu.vector_store %arg23[%c0_115, %c0_116, %c0_117], %323 {strides = array<i32>} : memref<1x16x1xf32, #tpu.memory_space<vmem>>, vector<1x16x1xf32>,
    return
  }
  func.func @transform_0(%arg0: i32) -> (i32, i32, i32) {
    %c0_i32 = arith.constant 0 : i32
    %c0_i32_0 = arith.constant 0 : i32
    %c0_i32_1 = arith.constant 0 : i32
    return %arg0, %c0_i32, %c0_i32_0 : i32, i32, i32
  }
  func.func @transform_1(%arg0: i32) -> (i32, i32) {
    %c0_i32 = arith.constant 0 : i32
    %c0_i32_0 = arith.constant 0 : i32
    %c0_i32_1 = arith.constant 0 : i32
    return %c0_i32, %c0_i32_0 : i32, i32
  }
  func.func @transform_2(%arg0: i32) -> (i32, i32) {
    %c0_i32 = arith.constant 0 : i32
    %c0_i32_0 = arith.constant 0 : i32
    %c0_i32_1 = arith.constant 0 : i32
    return %c0_i32, %c0_i32_0 : i32, i32
  }
  func.func @transform_3(%arg0: i32) -> (i32, i32) {
    %c0_i32 = arith.constant 0 : i32
    %c0_i32_0 = arith.constant 0 : i32
    %c0_i32_1 = arith.constant 0 : i32
    return %c0_i32, %c0_i32_0 : i32, i32
  }
  func.func @transform_4(%arg0: i32) -> (i32, i32, i32) {
    %c0_i32 = arith.constant 0 : i32
    %c0_i32_0 = arith.constant 0 : i32
    %c0_i32_1 = arith.constant 0 : i32
    %c0_i32_2 = arith.constant 0 : i32
    return %c0_i32, %c0_i32_0, %c0_i32_1 : i32, i32, i32
  }
  func.func @transform_5(%arg0: i32) -> (i32, i32) {
    %c0_i32 = arith.constant 0 : i32
    %c0_i32_0 = arith.constant 0 : i32
    %c0_i32_1 = arith.constant 0 : i32
    return %c0_i32, %c0_i32_0 : i32, i32
  }
  func.func @transform_6(%arg0: i32) -> (i32, i32) {
    %c0_i32 = arith.constant 0 : i32
    %c0_i32_0 = arith.constant 0 : i32
    %c0_i32_1 = arith.constant 0 : i32
    return %c0_i32, %c0_i32_0 : i32, i32
  }
  func.func @transform_7(%arg0: i32) -> (i32, i32) {
    %c0_i32 = arith.constant 0 : i32
    %c0_i32_0 = arith.constant 0 : i32
    %c0_i32_1 = arith.constant 0 : i32
    return %c0_i32, %c0_i32_0 : i32, i32
  }
  func.func @transform_8(%arg0: i32) -> (i32, i32) {
    %c0_i32 = arith.constant 0 : i32
    %c0_i32_0 = arith.constant 0 : i32
    %c0_i32_1 = arith.constant 0 : i32
    return %c0_i32, %c0_i32_0 : i32, i32
  }
  func.func @transform_9(%arg0: i32) -> (i32, i32, i32) {
    %c0_i32 = arith.constant 0 : i32
    %c0_i32_0 = arith.constant 0 : i32
    %c0_i32_1 = arith.constant 0 : i32
    return %arg0, %c0_i32, %c0_i32_0 : i32, i32, i32
  }
  func.func @transform_10(%arg0: i32) -> (i32, i32, i32) {
    %c0_i32 = arith.constant 0 : i32
    %c0_i32_0 = arith.constant 0 : i32
    %c0_i32_1 = arith.constant 0 : i32
    return %arg0, %c0_i32, %c0_i32_0 : i32, i32, i32
  }
  func.func @transform_11(%arg0: i32) -> (i32, i32) {
    %c0_i32 = arith.constant 0 : i32
    %c0_i32_0 = arith.constant 0 : i32
    %c0_i32_1 = arith.constant 0 : i32
    return %c0_i32, %c0_i32_0 : i32, i32
  }
  func.func @transform_12(%arg0: i32) -> (i32, i32) {
    %c0_i32 = arith.constant 0 : i32
    %c0_i32_0 = arith.constant 0 : i32
    %c0_i32_1 = arith.constant 0 : i32
    return %c0_i32, %c0_i32_0 : i32, i32
  }
  func.func @transform_13(%arg0: i32) -> (i32, i32) {
    %c0_i32 = arith.constant 0 : i32
    %c0_i32_0 = arith.constant 0 : i32
    %c0_i32_1 = arith.constant 0 : i32
    return %c0_i32, %c0_i32_0 : i32, i32
  }
  func.func @transform_14(%arg0: i32) -> (i32, i32) {
    %c0_i32 = arith.constant 0 : i32
    %c0_i32_0 = arith.constant 0 : i32
    %c0_i32_1 = arith.constant 0 : i32
    return %c0_i32, %c0_i32_0 : i32, i32
  }
  func.func @transform_15(%arg0: i32) -> (i32, i32, i32) {
    %c0_i32 = arith.constant 0 : i32
    %c0_i32_0 = arith.constant 0 : i32
    %c0_i32_1 = arith.constant 0 : i32
    return %arg0, %c0_i32, %c0_i32_0 : i32, i32, i32
  }
  func.func @transform_16(%arg0: i32) -> (i32, i32) {
    %c0_i32 = arith.constant 0 : i32
    %c0_i32_0 = arith.constant 0 : i32
    %c0_i32_1 = arith.constant 0 : i32
    return %c0_i32, %c0_i32_0 : i32, i32
  }
  func.func @transform_17(%arg0: i32) -> (i32, i32) {
    %c0_i32 = arith.constant 0 : i32
    %c0_i32_0 = arith.constant 0 : i32
    %c0_i32_1 = arith.constant 0 : i32
    return %c0_i32, %c0_i32_0 : i32, i32
  }
  func.func @transform_18(%arg0: i32) -> (i32, i32) {
    %c0_i32 = arith.constant 0 : i32
    %c0_i32_0 = arith.constant 0 : i32
    %c0_i32_1 = arith.constant 0 : i32
    return %c0_i32, %c0_i32_0 : i32, i32
  }
  func.func @transform_19(%arg0: i32) -> (i32, i32) {
    %c0_i32 = arith.constant 0 : i32
    %c0_i32_0 = arith.constant 0 : i32
    %c0_i32_1 = arith.constant 0 : i32
    return %c0_i32, %c0_i32_0 : i32, i32
  }
  func.func @transform_20(%arg0: i32) -> (i32, i32) {
    %c0_i32 = arith.constant 0 : i32
    %c0_i32_0 = arith.constant 0 : i32
    %c0_i32_1 = arith.constant 0 : i32
    return %c0_i32, %c0_i32_0 : i32, i32
  }
  func.func @transform_21(%arg0: i32) -> (i32, i32) {
    %c0_i32 = arith.constant 0 : i32
    %c0_i32_0 = arith.constant 0 : i32
    %c0_i32_1 = arith.constant 0 : i32
    return %c0_i32, %c0_i32_0 : i32, i32
  }
  func.func @transform_22(%arg0: i32) -> (i32, i32, i32) {
    %c0_i32 = arith.constant 0 : i32
    %c0_i32_0 = arith.constant 0 : i32
    %c0_i32_1 = arith.constant 0 : i32
    return %arg0, %c0_i32, %c0_i32_0 : i32, i32, i32
  }
}

module attributes {stable_mosaic.version = 11 : i64} {
  func.func @_block_kernel(%arg0: i32, %arg1: memref<1x64x1xf32, #tpu.memory_space<vmem>>, %arg2: memref<64x64xf32, #tpu.memory_space<vmem>>, %arg3: memref<1x8xf32, #tpu.memory_space<vmem>>, %arg4: memref<2x8xf32, #tpu.memory_space<vmem>>, %arg5: memref<2x4x4xf32, #tpu.memory_space<vmem>>, %arg6: memref<1x8xf32, #tpu.memory_space<vmem>>, %arg7: memref<4x32xf32, #tpu.memory_space<vmem>>, %arg8: memref<8x32xf32, #tpu.memory_space<vmem>>, %arg9: memref<1x32xf32, #tpu.memory_space<vmem>>, %arg10: memref<1x16x8xf32, #tpu.memory_space<vmem>>, %arg11: memref<1x16x8xf32, #tpu.memory_space<vmem>>, %arg12: memref<1x8xf32, #tpu.memory_space<vmem>>, %arg13: memref<1x8xf32, #tpu.memory_space<vmem>>, %arg14: memref<1x8xf32, #tpu.memory_space<vmem>>, %arg15: memref<1x8xf32, #tpu.memory_space<vmem>>, %arg16: memref<1x64x8xf32, #tpu.memory_space<vmem>>) attributes {dimension_semantics = [#tpu.dimension_semantics<parallel>], iteration_bounds = array<i64: 2>, scalar_prefetch = 0 : i64, scratch_operands = 0 : i64, tpu.core_type = #tpu.core_type<tc>, window_params = [{transform_indices = @transform_0, window_bounds = array<i64: 1, 64, 1>}, {pipeline_mode = #tpu.pipeline_mode<synchronous>, transform_indices = @transform_1, window_bounds = array<i64: 64, 64>}, {pipeline_mode = #tpu.pipeline_mode<synchronous>, transform_indices = @transform_2, window_bounds = array<i64: 1, 8>}, {pipeline_mode = #tpu.pipeline_mode<synchronous>, transform_indices = @transform_3, window_bounds = array<i64: 2, 8>}, {pipeline_mode = #tpu.pipeline_mode<synchronous>, transform_indices = @transform_4, window_bounds = array<i64: 2, 4, 4>}, {pipeline_mode = #tpu.pipeline_mode<synchronous>, transform_indices = @transform_5, window_bounds = array<i64: 1, 8>}, {pipeline_mode = #tpu.pipeline_mode<synchronous>, transform_indices = @transform_6, window_bounds = array<i64: 4, 32>}, {pipeline_mode = #tpu.pipeline_mode<synchronous>, transform_indices = @transform_7, window_bounds = array<i64: 8, 32>}, {pipeline_mode = #tpu.pipeline_mode<synchronous>, transform_indices = @transform_8, window_bounds = array<i64: 1, 32>}, {transform_indices = @transform_9, window_bounds = array<i64: 1, 16, 8>}, {transform_indices = @transform_10, window_bounds = array<i64: 1, 16, 8>}, {pipeline_mode = #tpu.pipeline_mode<synchronous>, transform_indices = @transform_11, window_bounds = array<i64: 1, 8>}, {pipeline_mode = #tpu.pipeline_mode<synchronous>, transform_indices = @transform_12, window_bounds = array<i64: 1, 8>}, {pipeline_mode = #tpu.pipeline_mode<synchronous>, transform_indices = @transform_13, window_bounds = array<i64: 1, 8>}, {pipeline_mode = #tpu.pipeline_mode<synchronous>, transform_indices = @transform_14, window_bounds = array<i64: 1, 8>}, {transform_indices = @transform_15, window_bounds = array<i64: 1, 64, 8>}]} {
    %c0 = arith.constant 0 : index
    %c0_0 = arith.constant 0 : index
    %c0_1 = arith.constant 0 : index
    %0 = vector.load %arg1[%c0, %c0_0, %c0_1] : memref<1x64x1xf32, #tpu.memory_space<vmem>>, vector<1x64x1xf32>
    %1 = vector.shape_cast %0 : vector<1x64x1xf32> to vector<64x1xf32>
    %c0_2 = arith.constant 0 : index
    %c0_3 = arith.constant 0 : index
    %2 = vector.load %arg2[%c0_2, %c0_3] : memref<64x64xf32, #tpu.memory_space<vmem>>, vector<64x64xf32>
    %c0_4 = arith.constant 0 : index
    %c0_5 = arith.constant 0 : index
    %3 = vector.load %arg3[%c0_4, %c0_5] : memref<1x8xf32, #tpu.memory_space<vmem>>, vector<1x8xf32>
    %c0_6 = arith.constant 0 : index
    %c0_7 = arith.constant 0 : index
    %4 = vector.load %arg4[%c0_6, %c0_7] : memref<2x8xf32, #tpu.memory_space<vmem>>, vector<2x8xf32>
    %c0_8 = arith.constant 0 : index
    %c0_9 = arith.constant 0 : index
    %c0_10 = arith.constant 0 : index
    %5 = vector.load %arg5[%c0_8, %c0_9, %c0_10] : memref<2x4x4xf32, #tpu.memory_space<vmem>>, vector<2x4x4xf32>
    %c0_11 = arith.constant 0 : index
    %c0_12 = arith.constant 0 : index
    %6 = vector.load %arg6[%c0_11, %c0_12] : memref<1x8xf32, #tpu.memory_space<vmem>>, vector<1x8xf32>
    %7 = vector.broadcast %1 : vector<64x1xf32> to vector<64x8xf32>
    %8 = vector.broadcast %3 : vector<1x8xf32> to vector<64x8xf32>
    %9 = arith.mulf %7, %8 : vector<64x8xf32>
    %10 = vector.extract_strided_slice %9 {offsets = [0, 0], sizes = [64, 4], strides = [1, 1]} : vector<64x8xf32> to vector<64x4xf32>
    %11 = vector.extract_strided_slice %4 {offsets = [0, 0], sizes = [1, 8], strides = [1, 1]} : vector<2x8xf32> to vector<1x8xf32>
    %12 = vector.extract_strided_slice %11 {offsets = [0, 0], sizes = [1, 4], strides = [1, 1]} : vector<1x8xf32> to vector<1x4xf32>
    %13 = vector.extract_strided_slice %11 {offsets = [0, 4], sizes = [1, 4], strides = [1, 1]} : vector<1x8xf32> to vector<1x4xf32>
    %14 = vector.broadcast %12 : vector<1x4xf32> to vector<64x4xf32>
    %15 = arith.mulf %10, %14 : vector<64x4xf32>
    %cst = arith.constant dense<0.000000e+00> : vector<64xf32>
    %16 = vector.multi_reduction <add>, %15, %cst [1] : vector<64x4xf32> to vector<64xf32>
    %17 = vector.shape_cast %16 : vector<64xf32> to vector<64x1xf32>
    %cst_13 = arith.constant dense<0.000000e+00> : vector<1x64xf32>
    %18 = tpu.matmul %13, %10, %cst_13 {dimension_numbers = #tpu.dot_dimension_numbers<[1], [1], [0], [0], [0, 0, 1, 0], [], []>} : vector<1x4xf32>, vector<64x4xf32>, vector<1x64xf32> -> vector<1x64xf32>
    %19 = vector.broadcast %17 : vector<64x1xf32> to vector<64x64xf32>
    %20 = vector.broadcast %18 : vector<1x64xf32> to vector<64x64xf32>
    %21 = arith.addf %19, %20 : vector<64x64xf32>
    %cst_14 = arith.constant 0.000000e+00 : f32
    %22 = vector.broadcast %cst_14 : f32 to vector<64x64xf32>
    %23 = arith.cmpf ogt, %21, %22 : vector<64x64xf32>
    %cst_15 = arith.constant 2.000000e-01 : f32
    %24 = vector.broadcast %cst_15 : f32 to vector<64x64xf32>
    %25 = arith.mulf %24, %21 : vector<64x64xf32>
    %26 = arith.select %23, %21, %25 : vector<64x64xi1>, vector<64x64xf32>
    %cst_16 = arith.constant 0.000000e+00 : f32
    %27 = vector.broadcast %cst_16 : f32 to vector<64x64xf32>
    %28 = arith.cmpf ogt, %2, %27 : vector<64x64xf32>
    %cst_17 = arith.constant -9.000000e+15 : f32
    %29 = vector.broadcast %cst_17 : f32 to vector<64x64xf32>
    %30 = arith.select %28, %26, %29 : vector<64x64xi1>, vector<64x64xf32>
    %cst_18 = arith.constant dense<0xFF800000> : vector<64xf32>
    %31 = vector.multi_reduction <maximumf>, %30, %cst_18 [1] : vector<64x64xf32> to vector<64xf32>
    %32 = vector.shape_cast %31 : vector<64xf32> to vector<64x1xf32>
    %33 = vector.broadcast %32 : vector<64x1xf32> to vector<64x64xf32>
    %34 = arith.subf %30, %33 : vector<64x64xf32>
    %35 = math.exp %34 : vector<64x64xf32>
    %cst_19 = arith.constant dense<0.000000e+00> : vector<64xf32>
    %36 = vector.multi_reduction <add>, %35, %cst_19 [1] : vector<64x64xf32> to vector<64xf32>
    %37 = vector.shape_cast %36 : vector<64xf32> to vector<64x1xf32>
    %38 = tpu.reciprocal %37 {approx = true} : vector<64x1xf32> -> vector<64x1xf32>
    %39 = vector.broadcast %38 : vector<64x1xf32> to vector<64x64xf32>
    %40 = arith.mulf %35, %39 : vector<64x64xf32>
    %cst_20 = arith.constant dense<0.000000e+00> : vector<64x4xf32>
    %41 = tpu.matmul %40, %10, %cst_20 {dimension_numbers = #tpu.dot_dimension_numbers<[1], [0], [0], [1], [0, 0, 1, 1], [], []>} : vector<64x64xf32>, vector<64x4xf32>, vector<64x4xf32> -> vector<64x4xf32>
    %cst_21 = arith.constant 0.000000e+00 : f32
    %42 = vector.broadcast %cst_21 : f32 to vector<64x4xf32>
    %43 = arith.cmpf ogt, %41, %42 : vector<64x4xf32>
    %cst_22 = arith.constant 0.000000e+00 : f32
    %44 = vector.broadcast %cst_22 : f32 to vector<64x4xf32>
    %45 = arith.minimumf %41, %44 : vector<64x4xf32>
    %46 = math.exp %45 : vector<64x4xf32>
    %cst_23 = arith.constant 1.000000e+00 : f32
    %47 = vector.broadcast %cst_23 : f32 to vector<64x4xf32>
    %48 = arith.subf %46, %47 : vector<64x4xf32>
    %49 = arith.select %43, %41, %48 : vector<64x4xi1>, vector<64x4xf32>
    %50 = vector.extract_strided_slice %5 {offsets = [0, 0, 0], sizes = [1, 4, 4], strides = [1, 1, 1]} : vector<2x4x4xf32> to vector<1x4x4xf32>
    %51 = vector.shape_cast %50 : vector<1x4x4xf32> to vector<4x4xf32>
    %cst_24 = arith.constant dense<0.000000e+00> : vector<64x4xf32>
    %52 = tpu.matmul %49, %51, %cst_24 {dimension_numbers = #tpu.dot_dimension_numbers<[1], [0], [0], [1], [0, 0, 1, 1], [], []>} : vector<64x4xf32>, vector<4x4xf32>, vector<64x4xf32> -> vector<64x4xf32>
    %53 = vector.extract_strided_slice %9 {offsets = [0, 4], sizes = [64, 4], strides = [1, 1]} : vector<64x8xf32> to vector<64x4xf32>
    %54 = vector.extract_strided_slice %4 {offsets = [1, 0], sizes = [1, 8], strides = [1, 1]} : vector<2x8xf32> to vector<1x8xf32>
    %55 = vector.extract_strided_slice %54 {offsets = [0, 0], sizes = [1, 4], strides = [1, 1]} : vector<1x8xf32> to vector<1x4xf32>
    %56 = vector.extract_strided_slice %54 {offsets = [0, 4], sizes = [1, 4], strides = [1, 1]} : vector<1x8xf32> to vector<1x4xf32>
    %57 = vector.broadcast %55 : vector<1x4xf32> to vector<64x4xf32>
    %58 = arith.mulf %53, %57 : vector<64x4xf32>
    %cst_25 = arith.constant dense<0.000000e+00> : vector<64xf32>
    %59 = vector.multi_reduction <add>, %58, %cst_25 [1] : vector<64x4xf32> to vector<64xf32>
    %60 = vector.shape_cast %59 : vector<64xf32> to vector<64x1xf32>
    %cst_26 = arith.constant dense<0.000000e+00> : vector<1x64xf32>
    %61 = tpu.matmul %56, %53, %cst_26 {dimension_numbers = #tpu.dot_dimension_numbers<[1], [1], [0], [0], [0, 0, 1, 0], [], []>} : vector<1x4xf32>, vector<64x4xf32>, vector<1x64xf32> -> vector<1x64xf32>
    %62 = vector.broadcast %60 : vector<64x1xf32> to vector<64x64xf32>
    %63 = vector.broadcast %61 : vector<1x64xf32> to vector<64x64xf32>
    %64 = arith.addf %62, %63 : vector<64x64xf32>
    %cst_27 = arith.constant 0.000000e+00 : f32
    %65 = vector.broadcast %cst_27 : f32 to vector<64x64xf32>
    %66 = arith.cmpf ogt, %64, %65 : vector<64x64xf32>
    %cst_28 = arith.constant 2.000000e-01 : f32
    %67 = vector.broadcast %cst_28 : f32 to vector<64x64xf32>
    %68 = arith.mulf %67, %64 : vector<64x64xf32>
    %69 = arith.select %66, %64, %68 : vector<64x64xi1>, vector<64x64xf32>
    %cst_29 = arith.constant 0.000000e+00 : f32
    %70 = vector.broadcast %cst_29 : f32 to vector<64x64xf32>
    %71 = arith.cmpf ogt, %2, %70 : vector<64x64xf32>
    %cst_30 = arith.constant -9.000000e+15 : f32
    %72 = vector.broadcast %cst_30 : f32 to vector<64x64xf32>
    %73 = arith.select %71, %69, %72 : vector<64x64xi1>, vector<64x64xf32>
    %cst_31 = arith.constant dense<0xFF800000> : vector<64xf32>
    %74 = vector.multi_reduction <maximumf>, %73, %cst_31 [1] : vector<64x64xf32> to vector<64xf32>
    %75 = vector.shape_cast %74 : vector<64xf32> to vector<64x1xf32>
    %76 = vector.broadcast %75 : vector<64x1xf32> to vector<64x64xf32>
    %77 = arith.subf %73, %76 : vector<64x64xf32>
    %78 = math.exp %77 : vector<64x64xf32>
    %cst_32 = arith.constant dense<0.000000e+00> : vector<64xf32>
    %79 = vector.multi_reduction <add>, %78, %cst_32 [1] : vector<64x64xf32> to vector<64xf32>
    %80 = vector.shape_cast %79 : vector<64xf32> to vector<64x1xf32>
    %81 = tpu.reciprocal %80 {approx = true} : vector<64x1xf32> -> vector<64x1xf32>
    %82 = vector.broadcast %81 : vector<64x1xf32> to vector<64x64xf32>
    %83 = arith.mulf %78, %82 : vector<64x64xf32>
    %cst_33 = arith.constant dense<0.000000e+00> : vector<64x4xf32>
    %84 = tpu.matmul %83, %53, %cst_33 {dimension_numbers = #tpu.dot_dimension_numbers<[1], [0], [0], [1], [0, 0, 1, 1], [], []>} : vector<64x64xf32>, vector<64x4xf32>, vector<64x4xf32> -> vector<64x4xf32>
    %cst_34 = arith.constant 0.000000e+00 : f32
    %85 = vector.broadcast %cst_34 : f32 to vector<64x4xf32>
    %86 = arith.cmpf ogt, %84, %85 : vector<64x4xf32>
    %cst_35 = arith.constant 0.000000e+00 : f32
    %87 = vector.broadcast %cst_35 : f32 to vector<64x4xf32>
    %88 = arith.minimumf %84, %87 : vector<64x4xf32>
    %89 = math.exp %88 : vector<64x4xf32>
    %cst_36 = arith.constant 1.000000e+00 : f32
    %90 = vector.broadcast %cst_36 : f32 to vector<64x4xf32>
    %91 = arith.subf %89, %90 : vector<64x4xf32>
    %92 = arith.select %86, %84, %91 : vector<64x4xi1>, vector<64x4xf32>
    %93 = vector.extract_strided_slice %5 {offsets = [1, 0, 0], sizes = [1, 4, 4], strides = [1, 1, 1]} : vector<2x4x4xf32> to vector<1x4x4xf32>
    %94 = vector.shape_cast %93 : vector<1x4x4xf32> to vector<4x4xf32>
    %cst_37 = arith.constant dense<0.000000e+00> : vector<64x4xf32>
    %95 = tpu.matmul %92, %94, %cst_37 {dimension_numbers = #tpu.dot_dimension_numbers<[1], [0], [0], [1], [0, 0, 1, 1], [], []>} : vector<64x4xf32>, vector<4x4xf32>, vector<64x4xf32> -> vector<64x4xf32>
    %96 = arith.addf %52, %95 : vector<64x4xf32>
    %97 = vector.extract_strided_slice %6 {offsets = [0, 0], sizes = [1, 4], strides = [1, 1]} : vector<1x8xf32> to vector<1x4xf32>
    %98 = vector.extract_strided_slice %6 {offsets = [0, 4], sizes = [1, 4], strides = [1, 1]} : vector<1x8xf32> to vector<1x4xf32>
    %99 = vector.broadcast %97 : vector<1x4xf32> to vector<64x4xf32>
    %100 = arith.mulf %96, %99 : vector<64x4xf32>
    %cst_38 = arith.constant dense<0.000000e+00> : vector<64xf32>
    %101 = vector.multi_reduction <add>, %100, %cst_38 [1] : vector<64x4xf32> to vector<64xf32>
    %102 = vector.shape_cast %101 : vector<64xf32> to vector<64x1xf32>
    %cst_39 = arith.constant dense<0.000000e+00> : vector<1x64xf32>
    %103 = tpu.matmul %98, %96, %cst_39 {dimension_numbers = #tpu.dot_dimension_numbers<[1], [1], [0], [0], [0, 0, 1, 0], [], []>} : vector<1x4xf32>, vector<64x4xf32>, vector<1x64xf32> -> vector<1x64xf32>
    %104 = vector.broadcast %102 : vector<64x1xf32> to vector<64x64xf32>
    %105 = vector.broadcast %103 : vector<1x64xf32> to vector<64x64xf32>
    %106 = arith.addf %104, %105 : vector<64x64xf32>
    %cst_40 = arith.constant 0.000000e+00 : f32
    %107 = vector.broadcast %cst_40 : f32 to vector<64x64xf32>
    %108 = arith.cmpf ogt, %106, %107 : vector<64x64xf32>
    %cst_41 = arith.constant 2.000000e-01 : f32
    %109 = vector.broadcast %cst_41 : f32 to vector<64x64xf32>
    %110 = arith.mulf %109, %106 : vector<64x64xf32>
    %111 = arith.select %108, %106, %110 : vector<64x64xi1>, vector<64x64xf32>
    %cst_42 = arith.constant 0.000000e+00 : f32
    %112 = vector.broadcast %cst_42 : f32 to vector<64x64xf32>
    %113 = arith.cmpf ogt, %2, %112 : vector<64x64xf32>
    %cst_43 = arith.constant -9.000000e+15 : f32
    %114 = vector.broadcast %cst_43 : f32 to vector<64x64xf32>
    %115 = arith.select %113, %111, %114 : vector<64x64xi1>, vector<64x64xf32>
    %cst_44 = arith.constant dense<0xFF800000> : vector<64xf32>
    %116 = vector.multi_reduction <maximumf>, %115, %cst_44 [1] : vector<64x64xf32> to vector<64xf32>
    %117 = vector.shape_cast %116 : vector<64xf32> to vector<64x1xf32>
    %118 = vector.broadcast %117 : vector<64x1xf32> to vector<64x64xf32>
    %119 = arith.subf %115, %118 : vector<64x64xf32>
    %120 = math.exp %119 : vector<64x64xf32>
    %cst_45 = arith.constant dense<0.000000e+00> : vector<64xf32>
    %121 = vector.multi_reduction <add>, %120, %cst_45 [1] : vector<64x64xf32> to vector<64xf32>
    %122 = vector.shape_cast %121 : vector<64xf32> to vector<64x1xf32>
    %123 = tpu.reciprocal %122 {approx = true} : vector<64x1xf32> -> vector<64x1xf32>
    %124 = vector.broadcast %123 : vector<64x1xf32> to vector<64x64xf32>
    %125 = arith.mulf %120, %124 : vector<64x64xf32>
    %cst_46 = arith.constant dense<0.000000e+00> : vector<64x4xf32>
    %126 = tpu.matmul %125, %96, %cst_46 {dimension_numbers = #tpu.dot_dimension_numbers<[1], [0], [0], [1], [0, 0, 1, 1], [], []>} : vector<64x64xf32>, vector<64x4xf32>, vector<64x4xf32> -> vector<64x4xf32>
    %c0_47 = arith.constant 0 : index
    %c0_48 = arith.constant 0 : index
    %c0_49 = arith.constant 0 : index
    %127 = vector.load %arg10[%c0_47, %c0_48, %c0_49] : memref<1x16x8xf32, #tpu.memory_space<vmem>>, vector<1x16x8xf32>
    %128 = vector.shape_cast %127 : vector<1x16x8xf32> to vector<16x8xf32>
    %c0_50 = arith.constant 0 : index
    %c0_51 = arith.constant 0 : index
    %c0_52 = arith.constant 0 : index
    %129 = vector.load %arg11[%c0_50, %c0_51, %c0_52] : memref<1x16x8xf32, #tpu.memory_space<vmem>>, vector<1x16x8xf32>
    %130 = vector.shape_cast %129 : vector<1x16x8xf32> to vector<16x8xf32>
    %c0_53 = arith.constant 0 : index
    %c0_54 = arith.constant 0 : index
    %131 = vector.load %arg7[%c0_53, %c0_54] : memref<4x32xf32, #tpu.memory_space<vmem>>, vector<4x32xf32>
    %c0_55 = arith.constant 0 : index
    %c0_56 = arith.constant 0 : index
    %132 = vector.load %arg8[%c0_55, %c0_56] : memref<8x32xf32, #tpu.memory_space<vmem>>, vector<8x32xf32>
    %c0_57 = arith.constant 0 : index
    %c0_58 = arith.constant 0 : index
    %133 = vector.load %arg9[%c0_57, %c0_58] : memref<1x32xf32, #tpu.memory_space<vmem>>, vector<1x32xf32>
    %134 = vector.extract_strided_slice %126 {offsets = [0, 0], sizes = [16, 4], strides = [1, 1]} : vector<64x4xf32> to vector<16x4xf32>
    %cst_59 = arith.constant dense<0.000000e+00> : vector<16x32xf32>
    %135 = tpu.matmul %134, %131, %cst_59 {dimension_numbers = #tpu.dot_dimension_numbers<[1], [0], [0], [1], [0, 0, 1, 1], [], []>} : vector<16x4xf32>, vector<4x32xf32>, vector<16x32xf32> -> vector<16x32xf32>
    %cst_60 = arith.constant dense<0.000000e+00> : vector<16x32xf32>
    %136 = tpu.matmul %128, %132, %cst_60 {dimension_numbers = #tpu.dot_dimension_numbers<[1], [0], [0], [1], [0, 0, 1, 1], [], []>} : vector<16x8xf32>, vector<8x32xf32>, vector<16x32xf32> -> vector<16x32xf32>
    %137 = arith.addf %135, %136 : vector<16x32xf32>
    %138 = vector.broadcast %133 : vector<1x32xf32> to vector<16x32xf32>
    %139 = arith.addf %137, %138 : vector<16x32xf32>
    %140 = vector.extract_strided_slice %139 {offsets = [0, 0], sizes = [16, 8], strides = [1, 1]} : vector<16x32xf32> to vector<16x8xf32>
    %141 = arith.negf %140 : vector<16x8xf32>
    %142 = math.exp %141 : vector<16x8xf32>
    %cst_61 = arith.constant 1.000000e+00 : f32
    %143 = vector.broadcast %cst_61 : f32 to vector<16x8xf32>
    %144 = arith.addf %143, %142 : vector<16x8xf32>
    %145 = arith.divf %143, %144 : vector<16x8xf32>
    %146 = vector.extract_strided_slice %139 {offsets = [0, 8], sizes = [16, 8], strides = [1, 1]} : vector<16x32xf32> to vector<16x8xf32>
    %147 = arith.negf %146 : vector<16x8xf32>
    %148 = math.exp %147 : vector<16x8xf32>
    %cst_62 = arith.constant 1.000000e+00 : f32
    %149 = vector.broadcast %cst_62 : f32 to vector<16x8xf32>
    %150 = arith.addf %149, %148 : vector<16x8xf32>
    %151 = arith.divf %149, %150 : vector<16x8xf32>
    %152 = vector.extract_strided_slice %139 {offsets = [0, 16], sizes = [16, 8], strides = [1, 1]} : vector<16x32xf32> to vector<16x8xf32>
    %153 = math.tanh %152 : vector<16x8xf32>
    %154 = vector.extract_strided_slice %139 {offsets = [0, 24], sizes = [16, 8], strides = [1, 1]} : vector<16x32xf32> to vector<16x8xf32>
    %155 = arith.negf %154 : vector<16x8xf32>
    %156 = math.exp %155 : vector<16x8xf32>
    %cst_63 = arith.constant 1.000000e+00 : f32
    %157 = vector.broadcast %cst_63 : f32 to vector<16x8xf32>
    %158 = arith.addf %157, %156 : vector<16x8xf32>
    %159 = arith.divf %157, %158 : vector<16x8xf32>
    %160 = arith.mulf %151, %130 : vector<16x8xf32>
    %161 = arith.mulf %145, %153 : vector<16x8xf32>
    %162 = arith.addf %160, %161 : vector<16x8xf32>
    %163 = math.tanh %162 : vector<16x8xf32>
    %164 = arith.mulf %159, %163 : vector<16x8xf32>
    %165 = vector.extract_strided_slice %126 {offsets = [16, 0], sizes = [16, 4], strides = [1, 1]} : vector<64x4xf32> to vector<16x4xf32>
    %cst_64 = arith.constant dense<0.000000e+00> : vector<16x32xf32>
    %166 = tpu.matmul %165, %131, %cst_64 {dimension_numbers = #tpu.dot_dimension_numbers<[1], [0], [0], [1], [0, 0, 1, 1], [], []>} : vector<16x4xf32>, vector<4x32xf32>, vector<16x32xf32> -> vector<16x32xf32>
    %cst_65 = arith.constant dense<0.000000e+00> : vector<16x32xf32>
    %167 = tpu.matmul %164, %132, %cst_65 {dimension_numbers = #tpu.dot_dimension_numbers<[1], [0], [0], [1], [0, 0, 1, 1], [], []>} : vector<16x8xf32>, vector<8x32xf32>, vector<16x32xf32> -> vector<16x32xf32>
    %168 = arith.addf %166, %167 : vector<16x32xf32>
    %169 = vector.broadcast %133 : vector<1x32xf32> to vector<16x32xf32>
    %170 = arith.addf %168, %169 : vector<16x32xf32>
    %171 = vector.extract_strided_slice %170 {offsets = [0, 0], sizes = [16, 8], strides = [1, 1]} : vector<16x32xf32> to vector<16x8xf32>
    %172 = arith.negf %171 : vector<16x8xf32>
    %173 = math.exp %172 : vector<16x8xf32>
    %cst_66 = arith.constant 1.000000e+00 : f32
    %174 = vector.broadcast %cst_66 : f32 to vector<16x8xf32>
    %175 = arith.addf %174, %173 : vector<16x8xf32>
    %176 = arith.divf %174, %175 : vector<16x8xf32>
    %177 = vector.extract_strided_slice %170 {offsets = [0, 8], sizes = [16, 8], strides = [1, 1]} : vector<16x32xf32> to vector<16x8xf32>
    %178 = arith.negf %177 : vector<16x8xf32>
    %179 = math.exp %178 : vector<16x8xf32>
    %cst_67 = arith.constant 1.000000e+00 : f32
    %180 = vector.broadcast %cst_67 : f32 to vector<16x8xf32>
    %181 = arith.addf %180, %179 : vector<16x8xf32>
    %182 = arith.divf %180, %181 : vector<16x8xf32>
    %183 = vector.extract_strided_slice %170 {offsets = [0, 16], sizes = [16, 8], strides = [1, 1]} : vector<16x32xf32> to vector<16x8xf32>
    %184 = math.tanh %183 : vector<16x8xf32>
    %185 = vector.extract_strided_slice %170 {offsets = [0, 24], sizes = [16, 8], strides = [1, 1]} : vector<16x32xf32> to vector<16x8xf32>
    %186 = arith.negf %185 : vector<16x8xf32>
    %187 = math.exp %186 : vector<16x8xf32>
    %cst_68 = arith.constant 1.000000e+00 : f32
    %188 = vector.broadcast %cst_68 : f32 to vector<16x8xf32>
    %189 = arith.addf %188, %187 : vector<16x8xf32>
    %190 = arith.divf %188, %189 : vector<16x8xf32>
    %191 = arith.mulf %182, %162 : vector<16x8xf32>
    %192 = arith.mulf %176, %184 : vector<16x8xf32>
    %193 = arith.addf %191, %192 : vector<16x8xf32>
    %194 = math.tanh %193 : vector<16x8xf32>
    %195 = arith.mulf %190, %194 : vector<16x8xf32>
    %196 = vector.extract_strided_slice %126 {offsets = [32, 0], sizes = [16, 4], strides = [1, 1]} : vector<64x4xf32> to vector<16x4xf32>
    %cst_69 = arith.constant dense<0.000000e+00> : vector<16x32xf32>
    %197 = tpu.matmul %196, %131, %cst_69 {dimension_numbers = #tpu.dot_dimension_numbers<[1], [0], [0], [1], [0, 0, 1, 1], [], []>} : vector<16x4xf32>, vector<4x32xf32>, vector<16x32xf32> -> vector<16x32xf32>
    %cst_70 = arith.constant dense<0.000000e+00> : vector<16x32xf32>
    %198 = tpu.matmul %195, %132, %cst_70 {dimension_numbers = #tpu.dot_dimension_numbers<[1], [0], [0], [1], [0, 0, 1, 1], [], []>} : vector<16x8xf32>, vector<8x32xf32>, vector<16x32xf32> -> vector<16x32xf32>
    %199 = arith.addf %197, %198 : vector<16x32xf32>
    %200 = vector.broadcast %133 : vector<1x32xf32> to vector<16x32xf32>
    %201 = arith.addf %199, %200 : vector<16x32xf32>
    %202 = vector.extract_strided_slice %201 {offsets = [0, 0], sizes = [16, 8], strides = [1, 1]} : vector<16x32xf32> to vector<16x8xf32>
    %203 = arith.negf %202 : vector<16x8xf32>
    %204 = math.exp %203 : vector<16x8xf32>
    %cst_71 = arith.constant 1.000000e+00 : f32
    %205 = vector.broadcast %cst_71 : f32 to vector<16x8xf32>
    %206 = arith.addf %205, %204 : vector<16x8xf32>
    %207 = arith.divf %205, %206 : vector<16x8xf32>
    %208 = vector.extract_strided_slice %201 {offsets = [0, 8], sizes = [16, 8], strides = [1, 1]} : vector<16x32xf32> to vector<16x8xf32>
    %209 = arith.negf %208 : vector<16x8xf32>
    %210 = math.exp %209 : vector<16x8xf32>
    %cst_72 = arith.constant 1.000000e+00 : f32
    %211 = vector.broadcast %cst_72 : f32 to vector<16x8xf32>
    %212 = arith.addf %211, %210 : vector<16x8xf32>
    %213 = arith.divf %211, %212 : vector<16x8xf32>
    %214 = vector.extract_strided_slice %201 {offsets = [0, 16], sizes = [16, 8], strides = [1, 1]} : vector<16x32xf32> to vector<16x8xf32>
    %215 = math.tanh %214 : vector<16x8xf32>
    %216 = vector.extract_strided_slice %201 {offsets = [0, 24], sizes = [16, 8], strides = [1, 1]} : vector<16x32xf32> to vector<16x8xf32>
    %217 = arith.negf %216 : vector<16x8xf32>
    %218 = math.exp %217 : vector<16x8xf32>
    %cst_73 = arith.constant 1.000000e+00 : f32
    %219 = vector.broadcast %cst_73 : f32 to vector<16x8xf32>
    %220 = arith.addf %219, %218 : vector<16x8xf32>
    %221 = arith.divf %219, %220 : vector<16x8xf32>
    %222 = arith.mulf %213, %193 : vector<16x8xf32>
    %223 = arith.mulf %207, %215 : vector<16x8xf32>
    %224 = arith.addf %222, %223 : vector<16x8xf32>
    %225 = math.tanh %224 : vector<16x8xf32>
    %226 = arith.mulf %221, %225 : vector<16x8xf32>
    %227 = vector.extract_strided_slice %126 {offsets = [48, 0], sizes = [16, 4], strides = [1, 1]} : vector<64x4xf32> to vector<16x4xf32>
    %cst_74 = arith.constant dense<0.000000e+00> : vector<16x32xf32>
    %228 = tpu.matmul %227, %131, %cst_74 {dimension_numbers = #tpu.dot_dimension_numbers<[1], [0], [0], [1], [0, 0, 1, 1], [], []>} : vector<16x4xf32>, vector<4x32xf32>, vector<16x32xf32> -> vector<16x32xf32>
    %cst_75 = arith.constant dense<0.000000e+00> : vector<16x32xf32>
    %229 = tpu.matmul %226, %132, %cst_75 {dimension_numbers = #tpu.dot_dimension_numbers<[1], [0], [0], [1], [0, 0, 1, 1], [], []>} : vector<16x8xf32>, vector<8x32xf32>, vector<16x32xf32> -> vector<16x32xf32>
    %230 = arith.addf %228, %229 : vector<16x32xf32>
    %231 = vector.broadcast %133 : vector<1x32xf32> to vector<16x32xf32>
    %232 = arith.addf %230, %231 : vector<16x32xf32>
    %233 = vector.extract_strided_slice %232 {offsets = [0, 0], sizes = [16, 8], strides = [1, 1]} : vector<16x32xf32> to vector<16x8xf32>
    %234 = arith.negf %233 : vector<16x8xf32>
    %235 = math.exp %234 : vector<16x8xf32>
    %cst_76 = arith.constant 1.000000e+00 : f32
    %236 = vector.broadcast %cst_76 : f32 to vector<16x8xf32>
    %237 = arith.addf %236, %235 : vector<16x8xf32>
    %238 = arith.divf %236, %237 : vector<16x8xf32>
    %239 = vector.extract_strided_slice %232 {offsets = [0, 8], sizes = [16, 8], strides = [1, 1]} : vector<16x32xf32> to vector<16x8xf32>
    %240 = arith.negf %239 : vector<16x8xf32>
    %241 = math.exp %240 : vector<16x8xf32>
    %cst_77 = arith.constant 1.000000e+00 : f32
    %242 = vector.broadcast %cst_77 : f32 to vector<16x8xf32>
    %243 = arith.addf %242, %241 : vector<16x8xf32>
    %244 = arith.divf %242, %243 : vector<16x8xf32>
    %245 = vector.extract_strided_slice %232 {offsets = [0, 16], sizes = [16, 8], strides = [1, 1]} : vector<16x32xf32> to vector<16x8xf32>
    %246 = math.tanh %245 : vector<16x8xf32>
    %247 = vector.extract_strided_slice %232 {offsets = [0, 24], sizes = [16, 8], strides = [1, 1]} : vector<16x32xf32> to vector<16x8xf32>
    %248 = arith.negf %247 : vector<16x8xf32>
    %249 = math.exp %248 : vector<16x8xf32>
    %cst_78 = arith.constant 1.000000e+00 : f32
    %250 = vector.broadcast %cst_78 : f32 to vector<16x8xf32>
    %251 = arith.addf %250, %249 : vector<16x8xf32>
    %252 = arith.divf %250, %251 : vector<16x8xf32>
    %253 = arith.mulf %244, %224 : vector<16x8xf32>
    %254 = arith.mulf %238, %246 : vector<16x8xf32>
    %255 = arith.addf %253, %254 : vector<16x8xf32>
    %256 = math.tanh %255 : vector<16x8xf32>
    %257 = arith.mulf %252, %256 : vector<16x8xf32>
    %258 = tpu.concatenate %164, %195, %226, %257 in 0 : vector<16x8xf32>, vector<16x8xf32>, vector<16x8xf32>, vector<16x8xf32> -> vector<64x8xf32>
    %c0_79 = arith.constant 0 : index
    %c0_80 = arith.constant 0 : index
    %259 = vector.load %arg12[%c0_79, %c0_80] : memref<1x8xf32, #tpu.memory_space<vmem>>, vector<1x8xf32>
    %c0_81 = arith.constant 0 : index
    %c0_82 = arith.constant 0 : index
    %260 = vector.load %arg13[%c0_81, %c0_82] : memref<1x8xf32, #tpu.memory_space<vmem>>, vector<1x8xf32>
    %c0_83 = arith.constant 0 : index
    %c0_84 = arith.constant 0 : index
    %261 = vector.load %arg14[%c0_83, %c0_84] : memref<1x8xf32, #tpu.memory_space<vmem>>, vector<1x8xf32>
    %c0_85 = arith.constant 0 : index
    %c0_86 = arith.constant 0 : index
    %262 = vector.load %arg15[%c0_85, %c0_86] : memref<1x8xf32, #tpu.memory_space<vmem>>, vector<1x8xf32>
    %263 = vector.broadcast %1 : vector<64x1xf32> to vector<64x8xf32>
    %264 = vector.broadcast %259 : vector<1x8xf32> to vector<64x8xf32>
    %265 = arith.mulf %263, %264 : vector<64x8xf32>
    %266 = vector.broadcast %260 : vector<1x8xf32> to vector<64x8xf32>
    %267 = arith.addf %265, %266 : vector<64x8xf32>
    %268 = arith.addf %267, %258 : vector<64x8xf32>
    %cst_87 = arith.constant 0.000000e+00 : f32
    %269 = vector.broadcast %cst_87 : f32 to vector<64x8xf32>
    %270 = arith.maximumf %268, %269 : vector<64x8xf32>
    %cst_88 = arith.constant dense<0.000000e+00> : vector<64xf32>
    %271 = vector.multi_reduction <add>, %270, %cst_88 [1] : vector<64x8xf32> to vector<64xf32>
    %272 = vector.shape_cast %271 : vector<64xf32> to vector<64x1xf32>
    %cst_89 = arith.constant 8.000000e+00 : f32
    %273 = vector.broadcast %cst_89 : f32 to vector<64x1xf32>
    %274 = arith.divf %272, %273 : vector<64x1xf32>
    %275 = vector.broadcast %274 : vector<64x1xf32> to vector<64x8xf32>
    %276 = arith.subf %270, %275 : vector<64x8xf32>
    %277 = vector.broadcast %274 : vector<64x1xf32> to vector<64x8xf32>
    %278 = arith.subf %270, %277 : vector<64x8xf32>
    %279 = arith.mulf %276, %278 : vector<64x8xf32>
    %cst_90 = arith.constant dense<0.000000e+00> : vector<64xf32>
    %280 = vector.multi_reduction <add>, %279, %cst_90 [1] : vector<64x8xf32> to vector<64xf32>
    %281 = vector.shape_cast %280 : vector<64xf32> to vector<64x1xf32>
    %cst_91 = arith.constant 8.000000e+00 : f32
    %282 = vector.broadcast %cst_91 : f32 to vector<64x1xf32>
    %283 = arith.divf %281, %282 : vector<64x1xf32>
    %284 = vector.broadcast %274 : vector<64x1xf32> to vector<64x8xf32>
    %285 = arith.subf %270, %284 : vector<64x8xf32>
    %cst_92 = arith.constant 9.99999974E-6 : f32
    %286 = vector.broadcast %cst_92 : f32 to vector<64x1xf32>
    %287 = arith.addf %283, %286 : vector<64x1xf32>
    %288 = math.rsqrt %287 : vector<64x1xf32>
    %289 = vector.broadcast %288 : vector<64x1xf32> to vector<64x8xf32>
    %290 = arith.mulf %285, %289 : vector<64x8xf32>
    %291 = vector.broadcast %261 : vector<1x8xf32> to vector<64x8xf32>
    %292 = arith.mulf %290, %291 : vector<64x8xf32>
    %293 = vector.broadcast %262 : vector<1x8xf32> to vector<64x8xf32>
    %294 = arith.addf %292, %293 : vector<64x8xf32>
    %c0_93 = arith.constant 0 : index
    %c0_94 = arith.constant 0 : index
    %c0_95 = arith.constant 0 : index
    %295 = vector.load %arg16[%c0_93, %c0_94, %c0_95] : memref<1x64x8xf32, #tpu.memory_space<vmem>>, vector<1x64x8xf32>
    %296 = vector.shape_cast %295 : vector<1x64x8xf32> to vector<64x8xf32>
    %297 = vector.shape_cast %294 : vector<64x8xf32> to vector<1x64x8xf32>
    tpu.vector_store %arg16[%c0_93, %c0_94, %c0_95], %297 {strides = array<i32>} : memref<1x64x8xf32, #tpu.memory_space<vmem>>, vector<1x64x8xf32>,
    return
  }
  func.func @transform_0(%arg0: i32) -> (i32, i32, i32) {
    %c0_i32 = arith.constant 0 : i32
    %c0_i32_0 = arith.constant 0 : i32
    %c0_i32_1 = arith.constant 0 : i32
    return %arg0, %c0_i32, %c0_i32_0 : i32, i32, i32
  }
  func.func @transform_1(%arg0: i32) -> (i32, i32) {
    %c0_i32 = arith.constant 0 : i32
    %c0_i32_0 = arith.constant 0 : i32
    %c0_i32_1 = arith.constant 0 : i32
    return %c0_i32, %c0_i32_0 : i32, i32
  }
  func.func @transform_2(%arg0: i32) -> (i32, i32) {
    %c0_i32 = arith.constant 0 : i32
    %c0_i32_0 = arith.constant 0 : i32
    %c0_i32_1 = arith.constant 0 : i32
    return %c0_i32, %c0_i32_0 : i32, i32
  }
  func.func @transform_3(%arg0: i32) -> (i32, i32) {
    %c0_i32 = arith.constant 0 : i32
    %c0_i32_0 = arith.constant 0 : i32
    %c0_i32_1 = arith.constant 0 : i32
    return %c0_i32, %c0_i32_0 : i32, i32
  }
  func.func @transform_4(%arg0: i32) -> (i32, i32, i32) {
    %c0_i32 = arith.constant 0 : i32
    %c0_i32_0 = arith.constant 0 : i32
    %c0_i32_1 = arith.constant 0 : i32
    %c0_i32_2 = arith.constant 0 : i32
    return %c0_i32, %c0_i32_0, %c0_i32_1 : i32, i32, i32
  }
  func.func @transform_5(%arg0: i32) -> (i32, i32) {
    %c0_i32 = arith.constant 0 : i32
    %c0_i32_0 = arith.constant 0 : i32
    %c0_i32_1 = arith.constant 0 : i32
    return %c0_i32, %c0_i32_0 : i32, i32
  }
  func.func @transform_6(%arg0: i32) -> (i32, i32) {
    %c0_i32 = arith.constant 0 : i32
    %c0_i32_0 = arith.constant 0 : i32
    %c0_i32_1 = arith.constant 0 : i32
    return %c0_i32, %c0_i32_0 : i32, i32
  }
  func.func @transform_7(%arg0: i32) -> (i32, i32) {
    %c0_i32 = arith.constant 0 : i32
    %c0_i32_0 = arith.constant 0 : i32
    %c0_i32_1 = arith.constant 0 : i32
    return %c0_i32, %c0_i32_0 : i32, i32
  }
  func.func @transform_8(%arg0: i32) -> (i32, i32) {
    %c0_i32 = arith.constant 0 : i32
    %c0_i32_0 = arith.constant 0 : i32
    %c0_i32_1 = arith.constant 0 : i32
    return %c0_i32, %c0_i32_0 : i32, i32
  }
  func.func @transform_9(%arg0: i32) -> (i32, i32, i32) {
    %c0_i32 = arith.constant 0 : i32
    %c0_i32_0 = arith.constant 0 : i32
    %c0_i32_1 = arith.constant 0 : i32
    return %arg0, %c0_i32, %c0_i32_0 : i32, i32, i32
  }
  func.func @transform_10(%arg0: i32) -> (i32, i32, i32) {
    %c0_i32 = arith.constant 0 : i32
    %c0_i32_0 = arith.constant 0 : i32
    %c0_i32_1 = arith.constant 0 : i32
    return %arg0, %c0_i32, %c0_i32_0 : i32, i32, i32
  }
  func.func @transform_11(%arg0: i32) -> (i32, i32) {
    %c0_i32 = arith.constant 0 : i32
    %c0_i32_0 = arith.constant 0 : i32
    %c0_i32_1 = arith.constant 0 : i32
    return %c0_i32, %c0_i32_0 : i32, i32
  }
  func.func @transform_12(%arg0: i32) -> (i32, i32) {
    %c0_i32 = arith.constant 0 : i32
    %c0_i32_0 = arith.constant 0 : i32
    %c0_i32_1 = arith.constant 0 : i32
    return %c0_i32, %c0_i32_0 : i32, i32
  }
  func.func @transform_13(%arg0: i32) -> (i32, i32) {
    %c0_i32 = arith.constant 0 : i32
    %c0_i32_0 = arith.constant 0 : i32
    %c0_i32_1 = arith.constant 0 : i32
    return %c0_i32, %c0_i32_0 : i32, i32
  }
  func.func @transform_14(%arg0: i32) -> (i32, i32) {
    %c0_i32 = arith.constant 0 : i32
    %c0_i32_0 = arith.constant 0 : i32
    %c0_i32_1 = arith.constant 0 : i32
    return %c0_i32, %c0_i32_0 : i32, i32
  }
  func.func @transform_15(%arg0: i32) -> (i32, i32, i32) {
    %c0_i32 = arith.constant 0 : i32
    %c0_i32_0 = arith.constant 0 : i32
    %c0_i32_1 = arith.constant 0 : i32
    return %arg0, %c0_i32, %c0_i32_0 : i32, i32, i32
  }
}

</mosaic_0001>

<llo_original>
// kernel: _lambda_.2
$region0: #{_lambda_.2}
  #allocation0 [shape = 'u32[]', space=smem, size = 0x4, offset = 0x4, fixed_abs, tag = 'smem constant byte address 0x4 - core index']
  #allocation1 [shape = 'u32[144,128]{1,0:T(1,128)}', space=vmem, size = 0x12000, scoped, tag = 'internal scratch']
  %s0 = inlined_call_operand.vmem [shape: f32[2,64,1], index: 0, kind: input, shape index: {}]
  %s1 = inlined_call_operand.vmem [shape: f32[64,64], index: 1, kind: input, shape index: {}]
  %s2 = inlined_call_operand.vmem [shape: f32[1,8], index: 2, kind: input, shape index: {}]
  %s3 = inlined_call_operand.vmem [shape: f32[2,8], index: 3, kind: input, shape index: {}]
  %s4 = inlined_call_operand.vmem [shape: f32[2,4,4], index: 4, kind: input, shape index: {}]
  %s5 = inlined_call_operand.vmem [shape: f32[1,8], index: 5, kind: input, shape index: {}]
  %s6 = inlined_call_operand.vmem [shape: f32[4,32], index: 6, kind: input, shape index: {}]
  %s7 = inlined_call_operand.vmem [shape: f32[8,32], index: 7, kind: input, shape index: {}]
  %s8 = inlined_call_operand.vmem [shape: f32[1,32], index: 8, kind: input, shape index: {}]
  %s9 = inlined_call_operand.vmem [shape: f32[2,16,8], index: 9, kind: input, shape index: {}]
  %s10 = inlined_call_operand.vmem [shape: f32[2,16,8], index: 10, kind: input, shape index: {}]
  %s11 = inlined_call_operand.vmem [shape: f32[1,8], index: 11, kind: input, shape index: {}]
  %s12 = inlined_call_operand.vmem [shape: f32[1,8], index: 12, kind: input, shape index: {}]
  %s13 = inlined_call_operand.vmem [shape: f32[1,8], index: 13, kind: input, shape index: {}]
  %s14 = inlined_call_operand.vmem [shape: f32[1,8], index: 14, kind: input, shape index: {}]
  %s15 = inlined_call_operand.vmem [shape: f32[2,64,8], index: 15, kind: output, shape index: {}]
  %s16 = sld [smem:[#allocation0]]
  $region93: #{_lambda_.2} parent=0
    _
  %s18 = ssub.s32 1, %s16
  %s19 = scalar_select 0, %s18, %s16
  loop: start=0, step=1, limit=4
  $region2: #{_lambda_.2} parent=0 // loop_pre_header
    _
  $region3: #{_lambda_.2} parent=0 // loop_header
    %s21 = sphi 0, %s25
    %p22 = scmp.ge.s32.totalorder %s21, 4
    %s31 = sphi 0, %s33
    %s34 = sphi 0, %s31
    %s35 = sphi 0, %s34
    %s51 = sphi 0, %s35
    %s55 = sphi 0, %s55
    %s57 = sphi 0, %s55
    %s58 = sphi 0, %s57
    %s72 = sphi 0, %s58
    %s76 = sphi 0, %s76
    %s78 = sphi 0, %s76
    %s79 = sphi 0, %s78
    %s93 = sphi 0, %s79
    %s97 = sphi 0, %s97
    %s99 = sphi 0, %s97
    %s100 = sphi 0, %s99
    %s114 = sphi 0, %s100
    %s118 = sphi 0, %s118
    %s120 = sphi 0, %s118
    %s121 = sphi 0, %s120
    %s135 = sphi 0, %s121
    %s139 = sphi 0, %s139
    %s141 = sphi 0, %s139
    %s142 = sphi 0, %s141
    %s156 = sphi 0, %s142
    %s160 = sphi 0, %s160
    %s162 = sphi 0, %s160
    %s163 = sphi 0, %s162
    %s177 = sphi 0, %s163
    %s181 = sphi 0, %s181
    %s183 = sphi 0, %s181
    %s184 = sphi 0, %s183
    %s198 = sphi 0, %s184
    %s202 = sphi 0, %s202
    %s204 = sphi 0, %s202
    %s205 = sphi 0, %s204
    %s219 = sphi 0, %s205
    %s225 = sphi 0, %s227
    %s228 = sphi 0, %s225
    %s229 = sphi 0, %s228
    %s245 = sphi 0, %s229
    %s251 = sphi 0, %s253
    %s254 = sphi 0, %s251
    %s255 = sphi 0, %s254
    %s271 = sphi 0, %s255
    %s275 = sphi 0, %s275
    %s277 = sphi 0, %s275
    %s278 = sphi 0, %s277
    %s292 = sphi 0, %s278
    %s296 = sphi 0, %s296
    %s298 = sphi 0, %s296
    %s299 = sphi 0, %s298
    %s313 = sphi 0, %s299
    %s317 = sphi 0, %s317
    %s319 = sphi 0, %s317
    %s320 = sphi 0, %s319
    %s334 = sphi 0, %s320
    %s338 = sphi 0, %s338
    %s340 = sphi 0, %s338
    %s341 = sphi 0, %s340
    %s355 = sphi 0, %s341
    %s361 = sphi 0, %s363
    %s364 = sphi 0, %s361
    %s365 = sphi 0, %s364
    %s381 = sphi 0, %s365
  $region4: #{_lambda_.2} parent=0 // loop_header_branch
    %24 = sbr.rel (%p22) target = $region8
  $region5: #{_lambda_.2} parent=0 // loop_body
    %s26 = ssub.s32 %s21, 1
    %s27 = ssub.s32 %s21, 2
    %s28 = sadd.s32 %s21, 1
    %s29 = ssub.s32 %s21, %s28
    %p30 = scmp.eq.s32.totalorder %s29, 0
    %s32 = sadd.s32 %s31, 1
    %s33 = scalar_select %p30, %s31, %s32
    %p36 = pneg %p30
    %p37 = scmp.eq.s32.totalorder %s21, 1
    %p38 = por %p36, %p37
    %p39 = scmp.ne.s32.totalorder %s31, %s34
    %p40 = scmp.eq.s32.totalorder %s21, 0
    %p41 = por %p39, %p40
    %p42 = scmp.ne.s32.totalorder %s31, %s34
    %p43 = scmp.eq.s32.totalorder %s26, 1
    %p44 = por %p42, %p43
    %p45 = scmp.ne.s32.totalorder %s34, %s35
    %p46 = scmp.eq.s32.totalorder %s26, 0
    %p47 = por %p45, %p46
    %p48 = scmp.ne.s32.totalorder %s34, %s35
    %p49 = scmp.eq.s32.totalorder %s27, 1
    %p50 = por %p48, %p49
    %p52 = scmp.ne.s32.totalorder %s35, %s51
    %p53 = scmp.eq.s32.totalorder %s27, 0
    %p54 = por %p52, %p53
    %s56 = sadd.s32 %s55, 1
    %p59 = scmp.eq.s32.totalorder %s21, 1
    %p60 = scmp.ne.s32.totalorder %s55, %s57
    %p61 = scmp.eq.s32.totalorder %s21, 0
    %p62 = por %p60, %p61
    %p63 = scmp.ne.s32.totalorder %s55, %s57
    %p64 = scmp.eq.s32.totalorder %s26, 1
    %p65 = por %p63, %p64
    %p66 = scmp.ne.s32.totalorder %s57, %s58
    %p67 = scmp.eq.s32.totalorder %s26, 0
    %p68 = por %p66, %p67
    %p69 = scmp.ne.s32.totalorder %s57, %s58
    %p70 = scmp.eq.s32.totalorder %s27, 1
    %p71 = por %p69, %p70
    %p73 = scmp.ne.s32.totalorder %s58, %s72
    %p74 = scmp.eq.s32.totalorder %s27, 0
    %p75 = por %p73, %p74
    %s77 = sadd.s32 %s76, 1
    %p80 = scmp.eq.s32.totalorder %s21, 1
    %p81 = scmp.ne.s32.totalorder %s76, %s78
    %p82 = scmp.eq.s32.totalorder %s21, 0
    %p83 = por %p81, %p82
    %p84 = scmp.ne.s32.totalorder %s76, %s78
    %p85 = scmp.eq.s32.totalorder %s26, 1
    %p86 = por %p84, %p85
    %p87 = scmp.ne.s32.totalorder %s78, %s79
    %p88 = scmp.eq.s32.totalorder %s26, 0
    %p89 = por %p87, %p88
    %p90 = scmp.ne.s32.totalorder %s78, %s79
    %p91 = scmp.eq.s32.totalorder %s27, 1
    %p92 = por %p90, %p91
    %p94 = scmp.ne.s32.totalorder %s79, %s93
    %p95 = scmp.eq.s32.totalorder %s27, 0
    %p96 = por %p94, %p95
    %s98 = sadd.s32 %s97, 1
    %p101 = scmp.eq.s32.totalorder %s21, 1
    %p102 = scmp.ne.s32.totalorder %s97, %s99
    %p103 = scmp.eq.s32.totalorder %s21, 0
    %p104 = por %p102, %p103
    %p105 = scmp.ne.s32.totalorder %s97, %s99
    %p106 = scmp.eq.s32.totalorder %s26, 1
    %p107 = por %p105, %p106
    %p108 = scmp.ne.s32.totalorder %s99, %s100
    %p109 = scmp.eq.s32.totalorder %s26, 0
    %p110 = por %p108, %p109
    %p111 = scmp.ne.s32.totalorder %s99, %s100
    %p112 = scmp.eq.s32.totalorder %s27, 1
    %p113 = por %p111, %p112
    %p115 = scmp.ne.s32.totalorder %s100, %s114
    %p116 = scmp.eq.s32.totalorder %s27, 0
    %p117 = por %p115, %p116
    %s119 = sadd.s32 %s118, 1
    %p122 = scmp.eq.s32.totalorder %s21, 1
    %p123 = scmp.ne.s32.totalorder %s118, %s120
    %p124 = scmp.eq.s32.totalorder %s21, 0
    %p125 = por %p123, %p124
    %p126 = scmp.ne.s32.totalorder %s118, %s120
    %p127 = scmp.eq.s32.totalorder %s26, 1
    %p128 = por %p126, %p127
    %p129 = scmp.ne.s32.totalorder %s120, %s121
    %p130 = scmp.eq.s32.totalorder %s26, 0
    %p131 = por %p129, %p130
    %p132 = scmp.ne.s32.totalorder %s120, %s121
    %p133 = scmp.eq.s32.totalorder %s27, 1
    %p134 = por %p132, %p133
    %p136 = scmp.ne.s32.totalorder %s121, %s135
    %p137 = scmp.eq.s32.totalorder %s27, 0
    %p138 = por %p136, %p137
    %s140 = sadd.s32 %s139, 1
    %p143 = scmp.eq.s32.totalorder %s21, 1
    %p144 = scmp.ne.s32.totalorder %s139, %s141
    %p145 = scmp.eq.s32.totalorder %s21, 0
    %p146 = por %p144, %p145
    %p147 = scmp.ne.s32.totalorder %s139, %s141
    %p148 = scmp.eq.s32.totalorder %s26, 1
    %p149 = por %p147, %p148
    %p150 = scmp.ne.s32.totalorder %s141, %s142
    %p151 = scmp.eq.s32.totalorder %s26, 0
    %p152 = por %p150, %p151
    %p153 = scmp.ne.s32.totalorder %s141, %s142
    %p154 = scmp.eq.s32.totalorder %s27, 1
    %p155 = por %p153, %p154
    %p157 = scmp.ne.s32.totalorder %s142, %s156
    %p158 = scmp.eq.s32.totalorder %s27, 0
    %p159 = por %p157, %p158
    %s161 = sadd.s32 %s160, 1
    %p164 = scmp.eq.s32.totalorder %s21, 1
    %p165 = scmp.ne.s32.totalorder %s160, %s162
    %p166 = scmp.eq.s32.totalorder %s21, 0
    %p167 = por %p165, %p166
    %p168 = scmp.ne.s32.totalorder %s160, %s162
    %p169 = scmp.eq.s32.totalorder %s26, 1
    %p170 = por %p168, %p169
    %p171 = scmp.ne.s32.totalorder %s162, %s163
    %p172 = scmp.eq.s32.totalorder %s26, 0
    %p173 = por %p171, %p172
    %p174 = scmp.ne.s32.totalorder %s162, %s163
    %p175 = scmp.eq.s32.totalorder %s27, 1
    %p176 = por %p174, %p175
    %p178 = scmp.ne.s32.totalorder %s163, %s177
    %p179 = scmp.eq.s32.totalorder %s27, 0
    %p180 = por %p178, %p179
    %s182 = sadd.s32 %s181, 1
    %p185 = scmp.eq.s32.totalorder %s21, 1
    %p186 = scmp.ne.s32.totalorder %s181, %s183
    %p187 = scmp.eq.s32.totalorder %s21, 0
    %p188 = por %p186, %p187
    %p189 = scmp.ne.s32.totalorder %s181, %s183
    %p190 = scmp.eq.s32.totalorder %s26, 1
    %p191 = por %p189, %p190
    %p192 = scmp.ne.s32.totalorder %s183, %s184
    %p193 = scmp.eq.s32.totalorder %s26, 0
    %p194 = por %p192, %p193
    %p195 = scmp.ne.s32.totalorder %s183, %s184
    %p196 = scmp.eq.s32.totalorder %s27, 1
    %p197 = por %p195, %p196
    %p199 = scmp.ne.s32.totalorder %s184, %s198
    %p200 = scmp.eq.s32.totalorder %s27, 0
    %p201 = por %p199, %p200
    %s203 = sadd.s32 %s202, 1
    %p206 = scmp.eq.s32.totalorder %s21, 1
    %p207 = scmp.ne.s32.totalorder %s202, %s204
    %p208 = scmp.eq.s32.totalorder %s21, 0
    %p209 = por %p207, %p208
    %p210 = scmp.ne.s32.totalorder %s202, %s204
    %p211 = scmp.eq.s32.totalorder %s26, 1
    %p212 = por %p210, %p211
    %p213 = scmp.ne.s32.totalorder %s204, %s205
    %p214 = scmp.eq.s32.totalorder %s26, 0
    %p215 = por %p213, %p214
    %p216 = scmp.ne.s32.totalorder %s204, %s205
    %p217 = scmp.eq.s32.totalorder %s27, 1
    %p218 = por %p216, %p217
    %p220 = scmp.ne.s32.totalorder %s205, %s219
    %p221 = scmp.eq.s32.totalorder %s27, 0
    %p222 = por %p220, %p221
    %s223 = ssub.s32 %s21, %s28
    %p224 = scmp.eq.s32.totalorder %s223, 0
    %s226 = sadd.s32 %s225, 1
    %s227 = scalar_select %p224, %s225, %s226
    %p230 = pneg %p224
    %p231 = scmp.eq.s32.totalorder %s21, 1
    %p232 = por %p230, %p231
    %p233 = scmp.ne.s32.totalorder %s225, %s228
    %p234 = scmp.eq.s32.totalorder %s21, 0
    %p235 = por %p233, %p234
    %p236 = scmp.ne.s32.totalorder %s225, %s228
    %p237 = scmp.eq.s32.totalorder %s26, 1
    %p238 = por %p236, %p237
    %p239 = scmp.ne.s32.totalorder %s228, %s229
    %p240 = scmp.eq.s32.totalorder %s26, 0
    %p241 = por %p239, %p240
    %p242 = scmp.ne.s32.totalorder %s228, %s229
    %p243 = scmp.eq.s32.totalorder %s27, 1
    %p244 = por %p242, %p243
    %p246 = scmp.ne.s32.totalorder %s229, %s245
    %p247 = scmp.eq.s32.totalorder %s27, 0
    %p248 = por %p246, %p247
    %s249 = ssub.s32 %s21, %s28
    %p250 = scmp.eq.s32.totalorder %s249, 0
    %s252 = sadd.s32 %s251, 1
    %s253 = scalar_select %p250, %s251, %s252
    %p256 = pneg %p250
    %p257 = scmp.eq.s32.totalorder %s21, 1
    %p258 = por %p256, %p257
    %p259 = scmp.ne.s32.totalorder %s251, %s254
    %p260 = scmp.eq.s32.totalorder %s21, 0
    %p261 = por %p259, %p260
    %p262 = scmp.ne.s32.totalorder %s251, %s254
    %p263 = scmp.eq.s32.totalorder %s26, 1
    %p264 = por %p262, %p263
    %p265 = scmp.ne.s32.totalorder %s254, %s255
    %p266 = scmp.eq.s32.totalorder %s26, 0
    %p267 = por %p265, %p266
    %p268 = scmp.ne.s32.totalorder %s254, %s255
    %p269 = scmp.eq.s32.totalorder %s27, 1
    %p270 = por %p268, %p269
    %p272 = scmp.ne.s32.totalorder %s255, %s271
    %p273 = scmp.eq.s32.totalorder %s27, 0
    %p274 = por %p272, %p273
    %s276 = sadd.s32 %s275, 1
    %p279 = scmp.eq.s32.totalorder %s21, 1
    %p280 = scmp.ne.s32.totalorder %s275, %s277
    %p281 = scmp.eq.s32.totalorder %s21, 0
    %p282 = por %p280, %p281
    %p283 = scmp.ne.s32.totalorder %s275, %s277
    %p284 = scmp.eq.s32.totalorder %s26, 1
    %p285 = por %p283, %p284
    %p286 = scmp.ne.s32.totalorder %s277, %s278
    %p287 = scmp.eq.s32.totalorder %s26, 0
    %p288 = por %p286, %p287
    %p289 = scmp.ne.s32.totalorder %s277, %s278
    %p290 = scmp.eq.s32.totalorder %s27, 1
    %p291 = por %p289, %p290
    %p293 = scmp.ne.s32.totalorder %s278, %s292
    %p294 = scmp.eq.s32.totalorder %s27, 0
    %p295 = por %p293, %p294
    %s297 = sadd.s32 %s296, 1
    %p300 = scmp.eq.s32.totalorder %s21, 1
    %p301 = scmp.ne.s32.totalorder %s296, %s298
    %p302 = scmp.eq.s32.totalorder %s21, 0
    %p303 = por %p301, %p302
    %p304 = scmp.ne.s32.totalorder %s296, %s298
    %p305 = scmp.eq.s32.totalorder %s26, 1
    %p306 = por %p304, %p305
    %p307 = scmp.ne.s32.totalorder %s298, %s299
    %p308 = scmp.eq.s32.totalorder %s26, 0
    %p309 = por %p307, %p308
    %p310 = scmp.ne.s32.totalorder %s298, %s299
    %p311 = scmp.eq.s32.totalorder %s27, 1
    %p312 = por %p310, %p311
    %p314 = scmp.ne.s32.totalorder %s299, %s313
    %p315 = scmp.eq.s32.totalorder %s27, 0
    %p316 = por %p314, %p315
    %s318 = sadd.s32 %s317, 1
    %p321 = scmp.eq.s32.totalorder %s21, 1
    %p322 = scmp.ne.s32.totalorder %s317, %s319
    %p323 = scmp.eq.s32.totalorder %s21, 0
    %p324 = por %p322, %p323
    %p325 = scmp.ne.s32.totalorder %s317, %s319
    %p326 = scmp.eq.s32.totalorder %s26, 1
    %p327 = por %p325, %p326
    %p328 = scmp.ne.s32.totalorder %s319, %s320
    %p329 = scmp.eq.s32.totalorder %s26, 0
    %p330 = por %p328, %p329
    %p331 = scmp.ne.s32.totalorder %s319, %s320
    %p332 = scmp.eq.s32.totalorder %s27, 1
    %p333 = por %p331, %p332
    %p335 = scmp.ne.s32.totalorder %s320, %s334
    %p336 = scmp.eq.s32.totalorder %s27, 0
    %p337 = por %p335, %p336
    %s339 = sadd.s32 %s338, 1
    %p342 = scmp.eq.s32.totalorder %s21, 1
    %p343 = scmp.ne.s32.totalorder %s338, %s340
    %p344 = scmp.eq.s32.totalorder %s21, 0
    %p345 = por %p343, %p344
    %p346 = scmp.ne.s32.totalorder %s338, %s340
    %p347 = scmp.eq.s32.totalorder %s26, 1
    %p348 = por %p346, %p347
    %p349 = scmp.ne.s32.totalorder %s340, %s341
    %p350 = scmp.eq.s32.totalorder %s26, 0
    %p351 = por %p349, %p350
    %p352 = scmp.ne.s32.totalorder %s340, %s341
    %p353 = scmp.eq.s32.totalorder %s27, 1
    %p354 = por %p352, %p353
    %p356 = scmp.ne.s32.totalorder %s341, %s355
    %p357 = scmp.eq.s32.totalorder %s27, 0
    %p358 = por %p356, %p357
    %s359 = ssub.s32 %s21, %s28
    %p360 = scmp.eq.s32.totalorder %s359, 0
    %s362 = sadd.s32 %s361, 1
    %s363 = scalar_select %p360, %s361, %s362
    %p366 = pneg %p360
    %p367 = scmp.eq.s32.totalorder %s21, 1
    %p368 = por %p366, %p367
    %p369 = scmp.ne.s32.totalorder %s361, %s364
    %p370 = scmp.eq.s32.totalorder %s21, 0
    %p371 = por %p369, %p370
    %p372 = scmp.ne.s32.totalorder %s361, %s364
    %p373 = scmp.eq.s32.totalorder %s26, 1
    %p374 = por %p372, %p373
    %p375 = scmp.ne.s32.totalorder %s364, %s365
    %p376 = scmp.eq.s32.totalorder %s26, 0
    %p377 = por %p375, %p376
    %p378 = scmp.ne.s32.totalorder %s364, %s365
    %p379 = scmp.eq.s32.totalorder %s27, 1
    %p380 = por %p378, %p379
    %p382 = scmp.ne.s32.totalorder %s365, %s381
    %p383 = scmp.eq.s32.totalorder %s27, 0
    %p384 = por %p382, %p383
    %p385 = scmp.le.s32.totalorder 1, %s21
    %p386 = scmp.lt.s32.totalorder %s21, 3
    %p387 = pnand %p385, %p386
    %p388 = pneg %p387
    // Predicated region
    $region9: #{_lambda_.2} parent=5 // pred_check
      _
    $region10: #{_lambda_.2} parent=5 // pred_check_branch
      %390 = sbr.rel (%p387) target = $region12
    $region11: #{_lambda_.2} parent=5 // pred_region
      %s391 = ssub.s32 %s21, 1
      // Predicated region
      $region13: #{_lambda_.2} parent=11 // pred_check
        %p392 = pneg %p68
      $region14: #{_lambda_.2} parent=11 // pred_check_branch
        %394 = sbr.rel (%p392) target = $region16
      $region15: #{_lambda_.2} parent=11 // pred_region
        _
      $region16: #{_lambda_.2} parent=11 // pred_fallthru
        _
      // Predicated region
      $region17: #{_lambda_.2} parent=11 // pred_check
        %p395 = pneg %p89
      $region18: #{_lambda_.2} parent=11 // pred_check_branch
        %397 = sbr.rel (%p395) target = $region20
      $region19: #{_lambda_.2} parent=11 // pred_region
        _
      $region20: #{_lambda_.2} parent=11 // pred_fallthru
        _
      // Predicated region
      $region21: #{_lambda_.2} parent=11 // pred_check
        %p398 = pneg %p110
      $region22: #{_lambda_.2} parent=11 // pred_check_branch
        %400 = sbr.rel (%p398) target = $region24
      $region23: #{_lambda_.2} parent=11 // pred_region
        _
      $region24: #{_lambda_.2} parent=11 // pred_fallthru
        _
      // Predicated region
      $region25: #{_lambda_.2} parent=11 // pred_check
        %p401 = pneg %p131
      $region26: #{_lambda_.2} parent=11 // pred_check_branch
        %403 = sbr.rel (%p401) target = $region28
      $region27: #{_lambda_.2} parent=11 // pred_region
        _
      $region28: #{_lambda_.2} parent=11 // pred_fallthru
        _
      // Predicated region
      $region29: #{_lambda_.2} parent=11 // pred_check
        %p404 = pneg %p152
      $region30: #{_lambda_.2} parent=11 // pred_check_branch
        %406 = sbr.rel (%p404) target = $region32
      $region31: #{_lambda_.2} parent=11 // pred_region
        _
      $region32: #{_lambda_.2} parent=11 // pred_fallthru
        _
      // Predicated region
      $region33: #{_lambda_.2} parent=11 // pred_check
        %p407 = pneg %p173
      $region34: #{_lambda_.2} parent=11 // pred_check_branch
        %409 = sbr.rel (%p407) target = $region36
      $region35: #{_lambda_.2} parent=11 // pred_region
        _
      $region36: #{_lambda_.2} parent=11 // pred_fallthru
        _
      // Predicated region
      $region37: #{_lambda_.2} parent=11 // pred_check
        %p410 = pneg %p194
      $region38: #{_lambda_.2} parent=11 // pred_check_branch
        %412 = sbr.rel (%p410) target = $region40
      $region39: #{_lambda_.2} parent=11 // pred_region
        _
      $region40: #{_lambda_.2} parent=11 // pred_fallthru
        _
      // Predicated region
      $region41: #{_lambda_.2} parent=11 // pred_check
        %p413 = pneg %p215
      $region42: #{_lambda_.2} parent=11 // pred_check_branch
        %415 = sbr.rel (%p413) target = $region44
      $region43: #{_lambda_.2} parent=11 // pred_region
        _
      $region44: #{_lambda_.2} parent=11 // pred_fallthru
        _
      // Predicated region
      $region45: #{_lambda_.2} parent=11 // pred_check
        %p416 = pneg %p288
      $region46: #{_lambda_.2} parent=11 // pred_check_branch
        %418 = sbr.rel (%p416) target = $region48
      $region47: #{_lambda_.2} parent=11 // pred_region
        _
      $region48: #{_lambda_.2} parent=11 // pred_fallthru
        _
      // Predicated region
      $region49: #{_lambda_.2} parent=11 // pred_check
        %p419 = pneg %p309
      $region50: #{_lambda_.2} parent=11 // pred_check_branch
        %421 = sbr.rel (%p419) target = $region52
      $region51: #{_lambda_.2} parent=11 // pred_region
        _
      $region52: #{_lambda_.2} parent=11 // pred_fallthru
        _
      // Predicated region
      $region53: #{_lambda_.2} parent=11 // pred_check
        %p422 = pneg %p330
      $region54: #{_lambda_.2} parent=11 // pred_check_branch
        %424 = sbr.rel (%p422) target = $region56
      $region55: #{_lambda_.2} parent=11 // pred_region
        _
      $region56: #{_lambda_.2} parent=11 // pred_fallthru
        _
      // Predicated region
      $region57: #{_lambda_.2} parent=11 // pred_check
        %p425 = pneg %p351
      $region58: #{_lambda_.2} parent=11 // pred_check_branch
        %427 = sbr.rel (%p425) target = $region60
      $region59: #{_lambda_.2} parent=11 // pred_region
        _
      $region60: #{_lambda_.2} parent=11 // pred_fallthru
        _
    $region12: #{_lambda_.2} parent=5 // pred_fallthru
      _
    %p428 = scmp.lt.s32.totalorder %s21, 2
    // Predicated region
    $region61: #{_lambda_.2} parent=5 // pred_check
      %p429 = pneg %p428
    $region62: #{_lambda_.2} parent=5 // pred_check_branch
      %431 = sbr.rel (%p429) target = $region64
    $region63: #{_lambda_.2} parent=5 // pred_region
      // Predicated region
      $region65: #{_lambda_.2} parent=63 // pred_check
        %p432 = pneg %p41
      $region66: #{_lambda_.2} parent=63 // pred_check_branch
        %434 = sbr.rel (%p432) target = $region68
      $region67: #{_lambda_.2} parent=63 // pred_region
        %p435 = scmp.lt.s32.totalorder %s21, 1
        %s436 = scalar_select %p435, %s21, 1
        %s437 = smul.addr %s436, 8
        %s438 = smul.addr %s437, 8
        %s439 = scalar_lea.vmem %s0, %s438
      $region68: #{_lambda_.2} parent=63 // pred_fallthru
        _
      // Predicated region
      $region69: #{_lambda_.2} parent=63 // pred_check
        %p440 = pneg %p235
      $region70: #{_lambda_.2} parent=63 // pred_check_branch
        %442 = sbr.rel (%p440) target = $region72
      $region71: #{_lambda_.2} parent=63 // pred_region
        %p443 = scmp.lt.s32.totalorder %s21, 1
        %s444 = scalar_select %p443, %s21, 1
        %s445 = smul.addr %s444, 2
        %s446 = smul.addr %s445, 8
        %s447 = scalar_lea.vmem %s9, %s446
      $region72: #{_lambda_.2} parent=63 // pred_fallthru
        _
      // Predicated region
      $region73: #{_lambda_.2} parent=63 // pred_check
        %p448 = pneg %p261
      $region74: #{_lambda_.2} parent=63 // pred_check_branch
        %450 = sbr.rel (%p448) target = $region76
      $region75: #{_lambda_.2} parent=63 // pred_region
        %p451 = scmp.lt.s32.totalorder %s21, 1
        %s452 = scalar_select %p451, %s21, 1
        %s453 = smul.addr %s452, 2
        %s454 = smul.addr %s453, 8
        %s455 = scalar_lea.vmem %s10, %s454
      $region76: #{_lambda_.2} parent=63 // pred_fallthru
        _
    $region64: #{_lambda_.2} parent=5 // pred_fallthru
      _
    %p456 = scmp.le.s32.totalorder 1, %s21
    %p457 = scmp.lt.s32.totalorder %s21, 3
    %p458 = pnand %p456, %p457
    %p459 = pneg %p458
    // Predicated region
    $region77: #{_lambda_.2} parent=5 // pred_check
      _
    $region78: #{_lambda_.2} parent=5 // pred_check_branch
      %461 = sbr.rel (%p458) target = $region80
    $region79: #{_lambda_.2} parent=5 // pred_region
      %s462 = ssub.s32 %s21, 1
      %p463 = scmp.lt.s32.totalorder %s26, 1
      %s464 = scalar_select %p463, %s26, 1
      %s465 = smul.addr %s464, 8
      %s466 = smul.addr %s465, 8
      %s467 = scalar_lea.vmem %s0, %s466
      %p468 = pneg %p47
      %p469 = pneg %p44
      %p470 = pneg %p68
      %p471 = pneg %p65
      %p472 = pneg %p89
      %p473 = pneg %p86
      %p474 = pneg %p110
      %p475 = pneg %p107
      %p476 = pneg %p131
      %p477 = pneg %p128
      %p478 = pneg %p152
      %p479 = pneg %p149
      %p480 = pneg %p173
      %p481 = pneg %p170
      %p482 = pneg %p194
      %p483 = pneg %p191
      %p484 = pneg %p215
      %p485 = pneg %p212
      %p486 = scmp.lt.s32.totalorder %s26, 1
      %s487 = scalar_select %p486, %s26, 1
      %s488 = smul.addr %s487, 2
      %s489 = smul.addr %s488, 8
      %s490 = scalar_lea.vmem %s9, %s489
      %p491 = pneg %p241
      %p492 = pneg %p238
      %p493 = scmp.lt.s32.totalorder %s26, 1
      %s494 = scalar_select %p493, %s26, 1
      %s495 = smul.addr %s494, 2
      %s496 = smul.addr %s495, 8
      %s497 = scalar_lea.vmem %s10, %s496
      %p498 = pneg %p267
      %p499 = pneg %p264
      %p500 = pneg %p288
      %p501 = pneg %p285
      %p502 = pneg %p309
      %p503 = pneg %p306
      %p504 = pneg %p330
      %p505 = pneg %p327
      %p506 = pneg %p351
      %p507 = pneg %p348
      %p508 = pneg %p377
      %p509 = pneg %p374
      %p510 = scmp.lt.s32.totalorder %s26, 1
      %s511 = scalar_select %p510, %s26, 1
      %s512 = smul.addr %s511, 8
      %s513 = smul.addr %s512, 8
      %s514 = scalar_lea.vmem %s15, %s513
      %p515 = scmp.lt.s32.totalorder %s26, 1
      %s516 = scalar_select %p515, %s26, 1
      %s517 = smul.addr %s516, 8
      %s518 = smul.addr %s517, 8
      %s519 = scalar_lea.vmem %s0, %s518
      %p520 = scmp.lt.s32.totalorder %s26, 1
      %s521 = scalar_select %p520, %s26, 1
      %s522 = smul.addr %s521, 2
      %s523 = smul.addr %s522, 8
      %s524 = scalar_lea.vmem %s9, %s523
      %p525 = scmp.lt.s32.totalorder %s26, 1
      %s526 = scalar_select %p525, %s26, 1
      %s527 = smul.addr %s526, 2
      %s528 = smul.addr %s527, 8
      %s529 = scalar_lea.vmem %s10, %s528
      %p530 = scmp.lt.s32.totalorder %s26, 1
      %s531 = scalar_select %p530, %s26, 1
      %s532 = smul.addr %s531, 8
      %s533 = smul.addr %s532, 8
      %s534 = scalar_lea.vmem %s15, %s533
      %v535 = vld [vmem:[%s519] sm:$0xff]
      %v536 = vld [vmem:[%s519 + $0x8] sm:$0xff]
      %v537 = vld [vmem:[%s519 + $0x10] sm:$0xff]
      %v538 = vld [vmem:[%s519 + $0x18] sm:$0xff]
      %v539 = vld [vmem:[%s519 + $0x20] sm:$0xff]
      %v540 = vld [vmem:[%s519 + $0x28] sm:$0xff]
      %v541 = vld [vmem:[%s519 + $0x30] sm:$0xff]
      %v542 = vld [vmem:[%s519 + $0x38] sm:$0xff]
      %v543 = vld [vmem:[%s1] sm:$0xff]
      %v544 = vld [vmem:[%s1 + $0x8] sm:$0xff]
      %v545 = vld [vmem:[%s1 + $0x10] sm:$0xff]
      %v546 = vld [vmem:[%s1 + $0x18] sm:$0xff]
      %v547 = vld [vmem:[%s1 + $0x20] sm:$0xff]
      %v548 = vld [vmem:[%s1 + $0x28] sm:$0xff]
      %v549 = vld [vmem:[%s1 + $0x30] sm:$0xff]
      %v550 = vld [vmem:[%s1 + $0x38] sm:$0xff]
      %v551 = vld [vmem:[%s2] sm:$0x1]
      %v552 = vld [vmem:[%s3] sm:$0x3]
      %v553 = vld [vmem:[%s4] sm:$0xf]
      %v554 = vld [vmem:[%s4 + $0x4] sm:$0xf]
      %v555 = vld [vmem:[%s5] sm:$0x1]
      %557 = vset.pattern.permute.xlu0 0
      %558 = vperm.xlu0 %557, %v535
      %v559 = vpop.permute.xlu0 %558
      %562 = vset.pattern.permute.xlu0 0
      %563 = vperm.xlu0 %562, %v536
      %v564 = vpop.permute.xlu0 %563
      %567 = vset.pattern.permute.xlu0 0
      %568 = vperm.xlu0 %567, %v537
      %v569 = vpop.permute.xlu0 %568
      %572 = vset.pattern.permute.xlu0 0
      %573 = vperm.xlu0 %572, %v538
      %v574 = vpop.permute.xlu0 %573
      %577 = vset.pattern.permute.xlu0 0
      %578 = vperm.xlu0 %577, %v539
      %v579 = vpop.permute.xlu0 %578
      %582 = vset.pattern.permute.xlu0 0
      %583 = vperm.xlu0 %582, %v540
      %v584 = vpop.permute.xlu0 %583
      %587 = vset.pattern.permute.xlu0 0
      %588 = vperm.xlu0 %587, %v541
      %v589 = vpop.permute.xlu0 %588
      %592 = vset.pattern.permute.xlu0 0
      %593 = vperm.xlu0 %592, %v542
      %v594 = vpop.permute.xlu0 %593
      %v597 = vlaneseq
      %v598 = vshrl.u32 %v597, 7
      %v599 = vsub.s32 0, %v598
      %v600 = vrot.slane %v551, %v599
      %v602 = vmul.f32 %v559, %v600
      %v603 = vmul.f32 %v564, %v600
      %v604 = vmul.f32 %v569, %v600
      %v605 = vmul.f32 %v574, %v600
      %v606 = vmul.f32 %v579, %v600
      %v607 = vmul.f32 %v584, %v600
      %v608 = vmul.f32 %v589, %v600
      %v609 = vmul.f32 %v594, %v600
      %v610 = vlaneseq
      %v611 = vshrl.u32 %v610, 7
      %v612 = vsub.s32 0, %v611
      %v613 = vrot.slane %v552, %v612
      %v614 = vmul.f32 %v602, %v613
      %v615 = vmul.f32 %v603, %v613
      %v616 = vmul.f32 %v604, %v613
      %v617 = vmul.f32 %v605, %v613
      %v618 = vmul.f32 %v606, %v613
      %v619 = vmul.f32 %v607, %v613
      %v620 = vmul.f32 %v608, %v613
      %v621 = vmul.f32 %v609, %v613
      %vm622 = vcmask 31744
      %v623 = vsel %vm622, %v614, 0.0
      %624 = vadd.xlane.f32.xlu0 %v623
      %v625 = vpop.xlane.xlu0 %624
      %v626 = vsel %vm622, %v615, 0.0
      %627 = vadd.xlane.f32.xlu0 %v626
      %v628 = vpop.xlane.xlu0 %627
      %v629 = vsel %vm622, %v616, 0.0
      %630 = vadd.xlane.f32.xlu0 %v629
      %v631 = vpop.xlane.xlu0 %630
      %v632 = vsel %vm622, %v617, 0.0
      %633 = vadd.xlane.f32.xlu0 %v632
      %v634 = vpop.xlane.xlu0 %633
      %v635 = vsel %vm622, %v618, 0.0
      %636 = vadd.xlane.f32.xlu0 %v635
      %v637 = vpop.xlane.xlu0 %636
      %v638 = vsel %vm622, %v619, 0.0
      %639 = vadd.xlane.f32.xlu0 %v638
      %v640 = vpop.xlane.xlu0 %639
      %v641 = vsel %vm622, %v620, 0.0
      %642 = vadd.xlane.f32.xlu0 %v641
      %v643 = vpop.xlane.xlu0 %642
      %v644 = vsel %vm622, %v621, 0.0
      %645 = vadd.xlane.f32.xlu0 %v644
      %v646 = vpop.xlane.xlu0 %645
      %648 = vrot.lane.b32.xlu0 %v552, 124
      %v649 = vpop.permute.xlu0 %648
      %v650 = vsel %vm622, %v649, 0
      %v653 = vsel %vm622, %v602, 0
      %v656 = vsel %vm622, %v603, 0
      %v659 = vsel %vm622, %v604, 0
      %v662 = vsel %vm622, %v605, 0
      %v665 = vsel %vm622, %v606, 0
      %v668 = vsel %vm622, %v607, 0
      %v671 = vsel %vm622, %v608, 0
      %v674 = vsel %vm622, %v609, 0
      %676 = vmatprep.subr.mxu0 0.0
      %677 = vmatpush1.xpose.msra.mxu0 %v653
      %678 = vmatprep.subr.mxu0 0.0
      %679 = vmatpush1.xpose.msra.mxu0 %v656
      %680 = vmatprep.subr.mxu0 0.0
      %681 = vmatpush1.xpose.msra.mxu0 %v659
      %682 = vmatprep.subr.mxu0 0.0
      %683 = vmatpush1.xpose.msra.mxu0 %v662
      %684 = vmatprep.subr.mxu0 0.0
      %685 = vmatpush1.xpose.msra.mxu0 %v665
      %686 = vmatprep.subr.mxu0 0.0
      %687 = vmatpush1.xpose.msra.mxu0 %v668
      %688 = vmatprep.subr.mxu0 0.0
      %689 = vmatpush1.xpose.msra.mxu0 %v671
      %690 = vmatprep.subr.mxu0 0.0
      %691 = vmatpush1.xpose.msra.mxu0 %v674
      %692 = vmatprep.subr.mxu0 0.0
      %693 = vmatpush1.xpose.msra.mxu0 0.0
      %694 = vmatprep.subr.mxu0 0.0
      %695 = vmatpush1.xpose.msra.mxu0 0.0
      %696 = vmatprep.subr.mxu0 0.0
      %697 = vmatpush1.xpose.msra.mxu0 0.0
      %698 = vmatprep.subr.mxu0 0.0
      %699 = vmatpush1.xpose.msra.mxu0 0.0
      %700 = vmatprep.subr.mxu0 0.0
      %701 = vmatpush1.xpose.msra.mxu0 0.0
      %702 = vmatprep.subr.mxu0 0.0
      %703 = vmatpush1.xpose.msra.mxu0 0.0
      %704 = vmatprep.subr.mxu0 0.0
      %705 = vmatpush1.xpose.msra.mxu0 0.0
      %706 = vmatprep.subr.mxu0 0.0
      %707 = vmatpush1.xpose.msra.mxu0 0.0
      %708 = vmatprep.subr.mxu0 0.0
      %709 = vmatpush1.xpose.msra.mxu0 0.0
      %710 = vmatprep.subr.mxu0 0.0
      %711 = vmatpush1.xpose.msra.mxu0 0.0
      %712 = vmatprep.subr.mxu0 0.0
      %713 = vmatpush1.xpose.msra.mxu0 0.0
      %714 = vmatprep.subr.mxu0 0.0
      %715 = vmatpush1.xpose.msra.mxu0 0.0
      %716 = vmatprep.subr.mxu0 0.0
      %717 = vmatpush1.xpose.msra.mxu0 0.0
      %718 = vmatprep.subr.mxu0 0.0
      %719 = vmatpush1.xpose.msra.mxu0 0.0
      %720 = vmatprep.subr.mxu0 0.0
      %721 = vmatpush1.xpose.msra.mxu0 0.0
      %722 = vmatprep.subr.mxu0 0.0
      %723 = vmatpush1.xpose.msra.mxu0 0.0
      %724 = vmatprep.subr.mxu0 0.0
      %725 = vmatpush1.xpose.msra.mxu0 0.0
      %726 = vmatprep.subr.mxu0 0.0
      %727 = vmatpush1.xpose.msra.mxu0 0.0
      %728 = vmatprep.subr.mxu0 0.0
      %729 = vmatpush1.xpose.msra.mxu0 0.0
      %730 = vmatprep.subr.mxu0 0.0
      %731 = vmatpush1.xpose.msra.mxu0 0.0
      %732 = vmatprep.subr.mxu0 0.0
      %733 = vmatpush1.xpose.msra.mxu0 0.0
      %734 = vmatprep.subr.mxu0 0.0
      %735 = vmatpush1.xpose.msra.mxu0 0.0
      %736 = vmatprep.subr.mxu0 0.0
      %737 = vmatpush1.xpose.msra.mxu0 0.0
      %738 = vmatprep.subr.mxu0 0.0
      %739 = vmatpush1.xpose.msra.mxu0 0.0
      %740 = vmatprep.mubr.f32.mxu0 0.0
      %741 = vmatmul.mubr.f32.gmra.mrb[0].mxu0 %v650
      %v742 = vpop.f32.mrb[0].mxu0
      %v743 = vadd.f32 0.0, %v742
      %v744 = vpop.f32.mrb[0].mxu0
      %745 = vdwg.mxu0
      %v746 = vlaneseq
      %v747 = vshrl.u32 %v746, 7
      %v748 = vsub.s32 0, %v747
      %v749 = vrot.slane %v743, %v748
      %v750 = vadd.f32 %v625, %v749
      %v751 = vadd.f32 %v628, %v749
      %v752 = vadd.f32 %v631, %v749
      %v753 = vadd.f32 %v634, %v749
      %v754 = vadd.f32 %v637, %v749
      %v755 = vadd.f32 %v640, %v749
      %v756 = vadd.f32 %v643, %v749
      %v757 = vadd.f32 %v646, %v749
      %vm758 = vcmp.gt.f32.partialorder %v750, 0.0
      %vm759 = vcmp.gt.f32.partialorder %v751, 0.0
      %vm760 = vcmp.gt.f32.partialorder %v752, 0.0
      %vm761 = vcmp.gt.f32.partialorder %v753, 0.0
      %vm762 = vcmp.gt.f32.partialorder %v754, 0.0
      %vm763 = vcmp.gt.f32.partialorder %v755, 0.0
      %vm764 = vcmp.gt.f32.partialorder %v756, 0.0
      %vm765 = vcmp.gt.f32.partialorder %v757, 0.0
      %v766 = vmul.f32 %v750, 0.2
      %v767 = vmul.f32 %v751, 0.2
      %v768 = vmul.f32 %v752, 0.2
      %v769 = vmul.f32 %v753, 0.2
      %v770 = vmul.f32 %v754, 0.2
      %v771 = vmul.f32 %v755, 0.2
      %v772 = vmul.f32 %v756, 0.2
      %v773 = vmul.f32 %v757, 0.2
      %v774 = vsel %vm758, %v750, %v766
      %v775 = vsel %vm759, %v751, %v767
      %v776 = vsel %vm760, %v752, %v768
      %v777 = vsel %vm761, %v753, %v769
      %v778 = vsel %vm762, %v754, %v770
      %v779 = vsel %vm763, %v755, %v771
      %v780 = vsel %vm764, %v756, %v772
      %v781 = vsel %vm765, %v757, %v773
      %vm782 = vcmp.gt.f32.partialorder %v543, 0.0
      %vm783 = vcmp.gt.f32.partialorder %v544, 0.0
      %vm784 = vcmp.gt.f32.partialorder %v545, 0.0
      %vm785 = vcmp.gt.f32.partialorder %v546, 0.0
      %vm786 = vcmp.gt.f32.partialorder %v547, 0.0
      %vm787 = vcmp.gt.f32.partialorder %v548, 0.0
      %vm788 = vcmp.gt.f32.partialorder %v549, 0.0
      %vm789 = vcmp.gt.f32.partialorder %v550, 0.0
      %v790 = vsel %vm782, %v774, -9e+15
      %v791 = vsel %vm783, %v775, -9e+15
      %v792 = vsel %vm784, %v776, -9e+15
      %v793 = vsel %vm785, %v777, -9e+15
      %v794 = vsel %vm786, %v778, -9e+15
      %v795 = vsel %vm787, %v779, -9e+15
      %v796 = vsel %vm788, %v780, -9e+15
      %v797 = vsel %vm789, %v781, -9e+15
      %vm798 = vcmask 523264
      %v799 = vsel %vm798, %v790, -inf
      %800 = vmax.xlane.f32.xlu0 %v799
      %v801 = vpop.xlane.xlu0 %800
      %v802 = vsel %vm798, %v791, -inf
      %803 = vmax.xlane.f32.xlu0 %v802
      %v804 = vpop.xlane.xlu0 %803
      %v805 = vsel %vm798, %v792, -inf
      %806 = vmax.xlane.f32.xlu0 %v805
      %v807 = vpop.xlane.xlu0 %806
      %v808 = vsel %vm798, %v793, -inf
      %809 = vmax.xlane.f32.xlu0 %v808
      %v810 = vpop.xlane.xlu0 %809
      %v811 = vsel %vm798, %v794, -inf
      %812 = vmax.xlane.f32.xlu0 %v811
      %v813 = vpop.xlane.xlu0 %812
      %v814 = vsel %vm798, %v795, -inf
      %815 = vmax.xlane.f32.xlu0 %v814
      %v816 = vpop.xlane.xlu0 %815
      %v817 = vsel %vm798, %v796, -inf
      %818 = vmax.xlane.f32.xlu0 %v817
      %v819 = vpop.xlane.xlu0 %818
      %v820 = vsel %vm798, %v797, -inf
      %821 = vmax.xlane.f32.xlu0 %v820
      %v822 = vpop.xlane.xlu0 %821
      %v823 = vsub.f32 %v790, %v801
      %v824 = vsub.f32 %v791, %v804
      %v825 = vsub.f32 %v792, %v807
      %v826 = vsub.f32 %v793, %v810
      %v827 = vsub.f32 %v794, %v813
      %v828 = vsub.f32 %v795, %v816
      %v829 = vsub.f32 %v796, %v819
      %v830 = vsub.f32 %v797, %v822
      %v831 = vmul.f32 %v823, 1.442695
      %v832 = vpow.pop %v831
      %v833 = vmul.f32 %v824, 1.442695
      %v834 = vpow.pop %v833
      %v835 = vmul.f32 %v825, 1.442695
      %v836 = vpow.pop %v835
      %v837 = vmul.f32 %v826, 1.442695
      %v838 = vpow.pop %v837
      %v839 = vmul.f32 %v827, 1.442695
      %v840 = vpow.pop %v839
      %v841 = vmul.f32 %v828, 1.442695
      %v842 = vpow.pop %v841
      %v843 = vmul.f32 %v829, 1.442695
      %v844 = vpow.pop %v843
      %v845 = vmul.f32 %v830, 1.442695
      %v846 = vpow.pop %v845
      %v847 = vsel %vm798, %v832, 0.0
      %848 = vadd.xlane.f32.xlu0 %v847
      %v849 = vpop.xlane.xlu0 %848
      %v850 = vsel %vm798, %v834, 0.0
      %851 = vadd.xlane.f32.xlu0 %v850
      %v852 = vpop.xlane.xlu0 %851
      %v853 = vsel %vm798, %v836, 0.0
      %854 = vadd.xlane.f32.xlu0 %v853
      %v855 = vpop.xlane.xlu0 %854
      %v856 = vsel %vm798, %v838, 0.0
      %857 = vadd.xlane.f32.xlu0 %v856
      %v858 = vpop.xlane.xlu0 %857
      %v859 = vsel %vm798, %v840, 0.0
      %860 = vadd.xlane.f32.xlu0 %v859
      %v861 = vpop.xlane.xlu0 %860
      %v862 = vsel %vm798, %v842, 0.0
      %863 = vadd.xlane.f32.xlu0 %v862
      %v864 = vpop.xlane.xlu0 %863
      %v865 = vsel %vm798, %v844, 0.0
      %866 = vadd.xlane.f32.xlu0 %v865
      %v867 = vpop.xlane.xlu0 %866
      %v868 = vsel %vm798, %v846, 0.0
      %869 = vadd.xlane.f32.xlu0 %v868
      %v870 = vpop.xlane.xlu0 %869
      %v871 = vrcp.pop %v849
      %v872 = vrcp.pop %v852
      %v873 = vrcp.pop %v855
      %v874 = vrcp.pop %v858
      %v875 = vrcp.pop %v861
      %v876 = vrcp.pop %v864
      %v877 = vrcp.pop %v867
      %v878 = vrcp.pop %v870
      %v879 = vmul.f32 %v832, %v871
      %v880 = vmul.f32 %v834, %v872
      %v881 = vmul.f32 %v836, %v873
      %v882 = vmul.f32 %v838, %v874
      %v883 = vmul.f32 %v840, %v875
      %v884 = vmul.f32 %v842, %v876
      %v885 = vmul.f32 %v844, %v877
      %v886 = vmul.f32 %v846, %v878
      %v888 = vsel %vm798, %v879, 0
      %v891 = vsel %vm798, %v880, 0
      %v894 = vsel %vm798, %v881, 0
      %v897 = vsel %vm798, %v882, 0
      %v900 = vsel %vm798, %v883, 0
      %v903 = vsel %vm798, %v884, 0
      %v906 = vsel %vm798, %v885, 0
      %v909 = vsel %vm798, %v886, 0
      %911 = vmatprep.subr.mxu0 0.0
      %912 = vmatpush1.msra.mxu0 %v602
      %913 = vmatprep.subr.mxu0 0.0
      %914 = vmatpush1.msra.mxu0 %v603
      %915 = vmatprep.subr.mxu0 0.0
      %916 = vmatpush1.msra.mxu0 %v604
      %917 = vmatprep.subr.mxu0 0.0
      %918 = vmatpush1.msra.mxu0 %v605
      %919 = vmatprep.subr.mxu0 0.0
      %920 = vmatpush1.msra.mxu0 %v606
      %921 = vmatprep.subr.mxu0 0.0
      %922 = vmatpush1.msra.mxu0 %v607
      %923 = vmatprep.subr.mxu0 0.0
      %924 = vmatpush1.msra.mxu0 %v608
      %925 = vmatprep.subr.mxu0 0.0
      %926 = vmatpush1.msra.mxu0 %v609
      %927 = vmatprep.subr.mxu0 0.0
      %928 = vmatpush1.msra.mxu0 0.0
      %929 = vmatprep.subr.mxu0 0.0
      %930 = vmatpush1.msra.mxu0 0.0
      %931 = vmatprep.subr.mxu0 0.0
      %932 = vmatpush1.msra.mxu0 0.0
      %933 = vmatprep.subr.mxu0 0.0
      %934 = vmatpush1.msra.mxu0 0.0
      %935 = vmatprep.subr.mxu0 0.0
      %936 = vmatpush1.msra.mxu0 0.0
      %937 = vmatprep.subr.mxu0 0.0
      %938 = vmatpush1.msra.mxu0 0.0
      %939 = vmatprep.subr.mxu0 0.0
      %940 = vmatpush1.msra.mxu0 0.0
      %941 = vmatprep.subr.mxu0 0.0
      %942 = vmatpush1.msra.mxu0 0.0
      %943 = vmatprep.subr.mxu0 0.0
      %944 = vmatpush1.msra.mxu0 0.0
      %945 = vmatprep.subr.mxu0 0.0
      %946 = vmatpush1.msra.mxu0 0.0
      %947 = vmatprep.subr.mxu0 0.0
      %948 = vmatpush1.msra.mxu0 0.0
      %949 = vmatprep.subr.mxu0 0.0
      %950 = vmatpush1.msra.mxu0 0.0
      %951 = vmatprep.subr.mxu0 0.0
      %952 = vmatpush1.msra.mxu0 0.0
      %953 = vmatprep.subr.mxu0 0.0
      %954 = vmatpush1.msra.mxu0 0.0
      %955 = vmatprep.subr.mxu0 0.0
      %956 = vmatpush1.msra.mxu0 0.0
      %957 = vmatprep.subr.mxu0 0.0
      %958 = vmatpush1.msra.mxu0 0.0
      %959 = vmatprep.subr.mxu0 0.0
      %960 = vmatpush1.msra.mxu0 0.0
      %961 = vmatprep.subr.mxu0 0.0
      %962 = vmatpush1.msra.mxu0 0.0
      %963 = vmatprep.subr.mxu0 0.0
      %964 = vmatpush1.msra.mxu0 0.0
      %965 = vmatprep.subr.mxu0 0.0
      %966 = vmatpush1.msra.mxu0 0.0
      %967 = vmatprep.subr.mxu0 0.0
      %968 = vmatpush1.msra.mxu0 0.0
      %969 = vmatprep.subr.mxu0 0.0
      %970 = vmatpush1.msra.mxu0 0.0
      %971 = vmatprep.subr.mxu0 0.0
      %972 = vmatpush1.msra.mxu0 0.0
      %973 = vmatprep.subr.mxu0 0.0
      %974 = vmatpush1.msra.mxu0 0.0
      %975 = vmatprep.mubr.f32.mxu0 0.0
      %976 = vmatmul.mubr.f32.gmra.mrb[0].mxu0 %v888
      %v977 = vpop.f32.mrb[0].mxu0
      %v978 = vadd.f32 0.0, %v977
      %v979 = vpop.f32.mrb[0].mxu0
      %980 = vmatprep.mubr.f32.mxu0 0.0
      %981 = vmatmul.mubr.f32.gmra.mrb[0].mxu0 %v891
      %v982 = vpop.f32.mrb[0].mxu0
      %v983 = vadd.f32 0.0, %v982
      %v984 = vpop.f32.mrb[0].mxu0
      %985 = vmatprep.mubr.f32.mxu0 0.0
      %986 = vmatmul.mubr.f32.gmra.mrb[0].mxu0 %v894
      %v987 = vpop.f32.mrb[0].mxu0
      %v988 = vadd.f32 0.0, %v987
      %v989 = vpop.f32.mrb[0].mxu0
      %990 = vmatprep.mubr.f32.mxu0 0.0
      %991 = vmatmul.mubr.f32.gmra.mrb[0].mxu0 %v897
      %v992 = vpop.f32.mrb[0].mxu0
      %v993 = vadd.f32 0.0, %v992
      %v994 = vpop.f32.mrb[0].mxu0
      %995 = vmatprep.mubr.f32.mxu0 0.0
      %996 = vmatmul.mubr.f32.gmra.mrb[0].mxu0 %v900
      %v997 = vpop.f32.mrb[0].mxu0
      %v998 = vadd.f32 0.0, %v997
      %v999 = vpop.f32.mrb[0].mxu0
      %1000 = vmatprep.mubr.f32.mxu0 0.0
      %1001 = vmatmul.mubr.f32.gmra.mrb[0].mxu0 %v903
      %v1002 = vpop.f32.mrb[0].mxu0
      %v1003 = vadd.f32 0.0, %v1002
      %v1004 = vpop.f32.mrb[0].mxu0
      %1005 = vmatprep.mubr.f32.mxu0 0.0
      %1006 = vmatmul.mubr.f32.gmra.mrb[0].mxu0 %v906
      %v1007 = vpop.f32.mrb[0].mxu0
      %v1008 = vadd.f32 0.0, %v1007
      %v1009 = vpop.f32.mrb[0].mxu0
      %1010 = vmatprep.mubr.f32.mxu0 0.0
      %1011 = vmatmul.mubr.f32.gmra.mrb[0].mxu0 %v909
      %v1012 = vpop.f32.mrb[0].mxu0
      %v1013 = vadd.f32 0.0, %v1012
      %v1014 = vpop.f32.mrb[0].mxu0
      %1015 = vdwg.mxu0
      %vm1016 = vcmp.gt.f32.partialorder %v978, 0.0
      %vm1017 = vcmp.gt.f32.partialorder %v983, 0.0
      %vm1018 = vcmp.gt.f32.partialorder %v988, 0.0
      %vm1019 = vcmp.gt.f32.partialorder %v993, 0.0
      %vm1020 = vcmp.gt.f32.partialorder %v998, 0.0
      %vm1021 = vcmp.gt.f32.partialorder %v1003, 0.0
      %vm1022 = vcmp.gt.f32.partialorder %v1008, 0.0
      %vm1023 = vcmp.gt.f32.partialorder %v1013, 0.0
      %v1024 = vmin.f32 %v978, 0.0
      %v1025 = vmin.f32 %v983, 0.0
      %v1026 = vmin.f32 %v988, 0.0
      %v1027 = vmin.f32 %v993, 0.0
      %v1028 = vmin.f32 %v998, 0.0
      %v1029 = vmin.f32 %v1003, 0.0
      %v1030 = vmin.f32 %v1008, 0.0
      %v1031 = vmin.f32 %v1013, 0.0
      %v1032 = vmul.f32 %v1024, 1.442695
      %v1033 = vpow.pop %v1032
      %v1034 = vmul.f32 %v1025, 1.442695
      %v1035 = vpow.pop %v1034
      %v1036 = vmul.f32 %v1026, 1.442695
      %v1037 = vpow.pop %v1036
      %v1038 = vmul.f32 %v1027, 1.442695
      %v1039 = vpow.pop %v1038
      %v1040 = vmul.f32 %v1028, 1.442695
      %v1041 = vpow.pop %v1040
      %v1042 = vmul.f32 %v1029, 1.442695
      %v1043 = vpow.pop %v1042
      %v1044 = vmul.f32 %v1030, 1.442695
      %v1045 = vpow.pop %v1044
      %v1046 = vmul.f32 %v1031, 1.442695
      %v1047 = vpow.pop %v1046
      %v1048 = vsub.f32 %v1033, 1.0
      %v1049 = vsub.f32 %v1035, 1.0
      %v1050 = vsub.f32 %v1037, 1.0
      %v1051 = vsub.f32 %v1039, 1.0
      %v1052 = vsub.f32 %v1041, 1.0
      %v1053 = vsub.f32 %v1043, 1.0
      %v1054 = vsub.f32 %v1045, 1.0
      %v1055 = vsub.f32 %v1047, 1.0
      %v1056 = vsel %vm1016, %v978, %v1048
      %v1057 = vsel %vm1017, %v983, %v1049
      %v1058 = vsel %vm1018, %v988, %v1050
      %v1059 = vsel %vm1019, %v993, %v1051
      %v1060 = vsel %vm1020, %v998, %v1052
      %v1061 = vsel %vm1021, %v1003, %v1053
      %v1062 = vsel %vm1022, %v1008, %v1054
      %v1063 = vsel %vm1023, %v1013, %v1055
      %v1064 = vlaneseq
      %v1065 = vshrl.u32 %v1064, 7
      %v1066 = vsub.s32 1, %v1065
      %v1067 = vrot.slane %v552, %v1066
      %1069 = vrot.lane.b32.xlu0 %v1067, 4
      %v1070 = vpop.permute.xlu0 %1069
      %v1072 = vmul.f32 %v602, %v1070
      %v1073 = vmul.f32 %v603, %v1070
      %v1074 = vmul.f32 %v604, %v1070
      %v1075 = vmul.f32 %v605, %v1070
      %v1076 = vmul.f32 %v606, %v1070
      %v1077 = vmul.f32 %v607, %v1070
      %v1078 = vmul.f32 %v608, %v1070
      %v1079 = vmul.f32 %v609, %v1070
      %1088 = vrot.lane.b32.xlu0 %v1072, 124
      %v1089 = vpop.permute.xlu0 %1088
      %1090 = vrot.lane.b32.xlu0 %v1073, 124
      %v1091 = vpop.permute.xlu0 %1090
      %1092 = vrot.lane.b32.xlu0 %v1074, 124
      %v1093 = vpop.permute.xlu0 %1092
      %1094 = vrot.lane.b32.xlu0 %v1075, 124
      %v1095 = vpop.permute.xlu0 %1094
      %1096 = vrot.lane.b32.xlu0 %v1076, 124
      %v1097 = vpop.permute.xlu0 %1096
      %1098 = vrot.lane.b32.xlu0 %v1077, 124
      %v1099 = vpop.permute.xlu0 %1098
      %1100 = vrot.lane.b32.xlu0 %v1078, 124
      %v1101 = vpop.permute.xlu0 %1100
      %1102 = vrot.lane.b32.xlu0 %v1079, 124
      %v1103 = vpop.permute.xlu0 %1102
      %v1112 = vsel %vm622, %v1089, 0.0
      %1113 = vadd.xlane.f32.xlu0 %v1112
      %v1114 = vpop.xlane.xlu0 %1113
      %v1115 = vsel %vm622, %v1091, 0.0
      %1116 = vadd.xlane.f32.xlu0 %v1115
      %v1117 = vpop.xlane.xlu0 %1116
      %v1118 = vsel %vm622, %v1093, 0.0
      %1119 = vadd.xlane.f32.xlu0 %v1118
      %v1120 = vpop.xlane.xlu0 %1119
      %v1121 = vsel %vm622, %v1095, 0.0
      %1122 = vadd.xlane.f32.xlu0 %v1121
      %v1123 = vpop.xlane.xlu0 %1122
      %v1124 = vsel %vm622, %v1097, 0.0
      %1125 = vadd.xlane.f32.xlu0 %v1124
      %v1126 = vpop.xlane.xlu0 %1125
      %v1127 = vsel %vm622, %v1099, 0.0
      %1128 = vadd.xlane.f32.xlu0 %v1127
      %v1129 = vpop.xlane.xlu0 %1128
      %v1130 = vsel %vm622, %v1101, 0.0
      %1131 = vadd.xlane.f32.xlu0 %v1130
      %v1132 = vpop.xlane.xlu0 %1131
      %v1133 = vsel %vm622, %v1103, 0.0
      %1134 = vadd.xlane.f32.xlu0 %v1133
      %v1135 = vpop.xlane.xlu0 %1134
      %v1136 = vrot.slane %v552, 1
      %1137 = vrot.lane.b32.xlu0 %v1136, 124
      %v1138 = vpop.permute.xlu0 %1137
      %1139 = vrot.lane.b32.xlu0 %v602, 124
      %v1140 = vpop.permute.xlu0 %1139
      %1141 = vrot.lane.b32.xlu0 %v603, 124
      %v1142 = vpop.permute.xlu0 %1141
      %1143 = vrot.lane.b32.xlu0 %v604, 124
      %v1144 = vpop.permute.xlu0 %1143
      %1145 = vrot.lane.b32.xlu0 %v605, 124
      %v1146 = vpop.permute.xlu0 %1145
      %1147 = vrot.lane.b32.xlu0 %v606, 124
      %v1148 = vpop.permute.xlu0 %1147
      %1149 = vrot.lane.b32.xlu0 %v607, 124
      %v1150 = vpop.permute.xlu0 %1149
      %1151 = vrot.lane.b32.xlu0 %v608, 124
      %v1152 = vpop.permute.xlu0 %1151
      %1153 = vrot.lane.b32.xlu0 %v609, 124
      %v1154 = vpop.permute.xlu0 %1153
      %v1155 = vsel %vm622, %v1138, 0
      %v1157 = vsel %vm622, %v1140, 0
      %v1159 = vsel %vm622, %v1142, 0
      %v1161 = vsel %vm622, %v1144, 0
      %v1163 = vsel %vm622, %v1146, 0
      %v1165 = vsel %vm622, %v1148, 0
      %v1167 = vsel %vm622, %v1150, 0
      %v1169 = vsel %vm622, %v1152, 0
      %v1171 = vsel %vm622, %v1154, 0
      %1173 = vmatprep.subr.mxu0 0.0
      %1174 = vmatpush1.xpose.msra.mxu0 %v1157
      %1175 = vmatprep.subr.mxu0 0.0
      %1176 = vmatpush1.xpose.msra.mxu0 %v1159
      %1177 = vmatprep.subr.mxu0 0.0
      %1178 = vmatpush1.xpose.msra.mxu0 %v1161
      %1179 = vmatprep.subr.mxu0 0.0
      %1180 = vmatpush1.xpose.msra.mxu0 %v1163
      %1181 = vmatprep.subr.mxu0 0.0
      %1182 = vmatpush1.xpose.msra.mxu0 %v1165
      %1183 = vmatprep.subr.mxu0 0.0
      %1184 = vmatpush1.xpose.msra.mxu0 %v1167
      %1185 = vmatprep.subr.mxu0 0.0
      %1186 = vmatpush1.xpose.msra.mxu0 %v1169
      %1187 = vmatprep.subr.mxu0 0.0
      %1188 = vmatpush1.xpose.msra.mxu0 %v1171
      %1189 = vmatprep.subr.mxu0 0.0
      %1190 = vmatpush1.xpose.msra.mxu0 0.0
      %1191 = vmatprep.subr.mxu0 0.0
      %1192 = vmatpush1.xpose.msra.mxu0 0.0
      %1193 = vmatprep.subr.mxu0 0.0
      %1194 = vmatpush1.xpose.msra.mxu0 0.0
      %1195 = vmatprep.subr.mxu0 0.0
      %1196 = vmatpush1.xpose.msra.mxu0 0.0
      %1197 = vmatprep.subr.mxu0 0.0
      %1198 = vmatpush1.xpose.msra.mxu0 0.0
      %1199 = vmatprep.subr.mxu0 0.0
      %1200 = vmatpush1.xpose.msra.mxu0 0.0
      %1201 = vmatprep.subr.mxu0 0.0
      %1202 = vmatpush1.xpose.msra.mxu0 0.0
      %1203 = vmatprep.subr.mxu0 0.0
      %1204 = vmatpush1.xpose.msra.mxu0 0.0
      %1205 = vmatprep.subr.mxu0 0.0
      %1206 = vmatpush1.xpose.msra.mxu0 0.0
      %1207 = vmatprep.subr.mxu0 0.0
      %1208 = vmatpush1.xpose.msra.mxu0 0.0
      %1209 = vmatprep.subr.mxu0 0.0
      %1210 = vmatpush1.xpose.msra.mxu0 0.0
      %1211 = vmatprep.subr.mxu0 0.0
      %1212 = vmatpush1.xpose.msra.mxu0 0.0
      %1213 = vmatprep.subr.mxu0 0.0
      %1214 = vmatpush1.xpose.msra.mxu0 0.0
      %1215 = vmatprep.subr.mxu0 0.0
      %1216 = vmatpush1.xpose.msra.mxu0 0.0
      %1217 = vmatprep.subr.mxu0 0.0
      %1218 = vmatpush1.xpose.msra.mxu0 0.0
      %1219 = vmatprep.subr.mxu0 0.0
      %1220 = vmatpush1.xpose.msra.mxu0 0.0
      %1221 = vmatprep.subr.mxu0 0.0
      %1222 = vmatpush1.xpose.msra.mxu0 0.0
      %1223 = vmatprep.subr.mxu0 0.0
      %1224 = vmatpush1.xpose.msra.mxu0 0.0
      %1225 = vmatprep.subr.mxu0 0.0
      %1226 = vmatpush1.xpose.msra.mxu0 0.0
      %1227 = vmatprep.subr.mxu0 0.0
      %1228 = vmatpush1.xpose.msra.mxu0 0.0
      %1229 = vmatprep.subr.mxu0 0.0
      %1230 = vmatpush1.xpose.msra.mxu0 0.0
      %1231 = vmatprep.subr.mxu0 0.0
      %1232 = vmatpush1.xpose.msra.mxu0 0.0
      %1233 = vmatprep.subr.mxu0 0.0
      %1234 = vmatpush1.xpose.msra.mxu0 0.0
      %1235 = vmatprep.subr.mxu0 0.0
      %1236 = vmatpush1.xpose.msra.mxu0 0.0
      %1237 = vmatprep.mubr.f32.mxu0 0.0
      %1238 = vmatmul.mubr.f32.gmra.mrb[0].mxu0 %v1155
      %v1239 = vpop.f32.mrb[0].mxu0
      %v1240 = vadd.f32 0.0, %v1239
      %v1241 = vpop.f32.mrb[0].mxu0
      %1242 = vdwg.mxu0
      %v1243 = vlaneseq
      %v1244 = vshrl.u32 %v1243, 7
      %v1245 = vsub.s32 0, %v1244
      %v1246 = vrot.slane %v1240, %v1245
      %v1247 = vadd.f32 %v1114, %v1246
      %v1248 = vadd.f32 %v1117, %v1246
      %v1249 = vadd.f32 %v1120, %v1246
      %v1250 = vadd.f32 %v1123, %v1246
      %v1251 = vadd.f32 %v1126, %v1246
      %v1252 = vadd.f32 %v1129, %v1246
      %v1253 = vadd.f32 %v1132, %v1246
      %v1254 = vadd.f32 %v1135, %v1246
      %vm1255 = vcmp.gt.f32.partialorder %v1247, 0.0
      %vm1256 = vcmp.gt.f32.partialorder %v1248, 0.0
      %vm1257 = vcmp.gt.f32.partialorder %v1249, 0.0
      %vm1258 = vcmp.gt.f32.partialorder %v1250, 0.0
      %vm1259 = vcmp.gt.f32.partialorder %v1251, 0.0
      %vm1260 = vcmp.gt.f32.partialorder %v1252, 0.0
      %vm1261 = vcmp.gt.f32.partialorder %v1253, 0.0
      %vm1262 = vcmp.gt.f32.partialorder %v1254, 0.0
      %v1263 = vmul.f32 %v1247, 0.2
      %v1264 = vmul.f32 %v1248, 0.2
      %v1265 = vmul.f32 %v1249, 0.2
      %v1266 = vmul.f32 %v1250, 0.2
      %v1267 = vmul.f32 %v1251, 0.2
      %v1268 = vmul.f32 %v1252, 0.2
      %v1269 = vmul.f32 %v1253, 0.2
      %v1270 = vmul.f32 %v1254, 0.2
      %v1271 = vsel %vm1255, %v1247, %v1263
      %v1272 = vsel %vm1256, %v1248, %v1264
      %v1273 = vsel %vm1257, %v1249, %v1265
      %v1274 = vsel %vm1258, %v1250, %v1266
      %v1275 = vsel %vm1259, %v1251, %v1267
      %v1276 = vsel %vm1260, %v1252, %v1268
      %v1277 = vsel %vm1261, %v1253, %v1269
      %v1278 = vsel %vm1262, %v1254, %v1270
      %v1279 = vsel %vm782, %v1271, -9e+15
      %v1280 = vsel %vm783, %v1272, -9e+15
      %v1281 = vsel %vm784, %v1273, -9e+15
      %v1282 = vsel %vm785, %v1274, -9e+15
      %v1283 = vsel %vm786, %v1275, -9e+15
      %v1284 = vsel %vm787, %v1276, -9e+15
      %v1285 = vsel %vm788, %v1277, -9e+15
      %v1286 = vsel %vm789, %v1278, -9e+15
      %v1287 = vsel %vm798, %v1279, -inf
      %1288 = vmax.xlane.f32.xlu0 %v1287
      %v1289 = vpop.xlane.xlu0 %1288
      %v1290 = vsel %vm798, %v1280, -inf
      %1291 = vmax.xlane.f32.xlu0 %v1290
      %v1292 = vpop.xlane.xlu0 %1291
      %v1293 = vsel %vm798, %v1281, -inf
      %1294 = vmax.xlane.f32.xlu0 %v1293
      %v1295 = vpop.xlane.xlu0 %1294
      %v1296 = vsel %vm798, %v1282, -inf
      %1297 = vmax.xlane.f32.xlu0 %v1296
      %v1298 = vpop.xlane.xlu0 %1297
      %v1299 = vsel %vm798, %v1283, -inf
      %1300 = vmax.xlane.f32.xlu0 %v1299
      %v1301 = vpop.xlane.xlu0 %1300
      %v1302 = vsel %vm798, %v1284, -inf
      %1303 = vmax.xlane.f32.xlu0 %v1302
      %v1304 = vpop.xlane.xlu0 %1303
      %v1305 = vsel %vm798, %v1285, -inf
      %1306 = vmax.xlane.f32.xlu0 %v1305
      %v1307 = vpop.xlane.xlu0 %1306
      %v1308 = vsel %vm798, %v1286, -inf
      %1309 = vmax.xlane.f32.xlu0 %v1308
      %v1310 = vpop.xlane.xlu0 %1309
      %v1311 = vsub.f32 %v1279, %v1289
      %v1312 = vsub.f32 %v1280, %v1292
      %v1313 = vsub.f32 %v1281, %v1295
      %v1314 = vsub.f32 %v1282, %v1298
      %v1315 = vsub.f32 %v1283, %v1301
      %v1316 = vsub.f32 %v1284, %v1304
      %v1317 = vsub.f32 %v1285, %v1307
      %v1318 = vsub.f32 %v1286, %v1310
      %v1319 = vmul.f32 %v1311, 1.442695
      %v1320 = vpow.pop %v1319
      %v1321 = vmul.f32 %v1312, 1.442695
      %v1322 = vpow.pop %v1321
      %v1323 = vmul.f32 %v1313, 1.442695
      %v1324 = vpow.pop %v1323
      %v1325 = vmul.f32 %v1314, 1.442695
      %v1326 = vpow.pop %v1325
      %v1327 = vmul.f32 %v1315, 1.442695
      %v1328 = vpow.pop %v1327
      %v1329 = vmul.f32 %v1316, 1.442695
      %v1330 = vpow.pop %v1329
      %v1331 = vmul.f32 %v1317, 1.442695
      %v1332 = vpow.pop %v1331
      %v1333 = vmul.f32 %v1318, 1.442695
      %v1334 = vpow.pop %v1333
      %v1335 = vsel %vm798, %v1320, 0.0
      %1336 = vadd.xlane.f32.xlu0 %v1335
      %v1337 = vpop.xlane.xlu0 %1336
      %v1338 = vsel %vm798, %v1322, 0.0
      %1339 = vadd.xlane.f32.xlu0 %v1338
      %v1340 = vpop.xlane.xlu0 %1339
      %v1341 = vsel %vm798, %v1324, 0.0
      %1342 = vadd.xlane.f32.xlu0 %v1341
      %v1343 = vpop.xlane.xlu0 %1342
      %v1344 = vsel %vm798, %v1326, 0.0
      %1345 = vadd.xlane.f32.xlu0 %v1344
      %v1346 = vpop.xlane.xlu0 %1345
      %v1347 = vsel %vm798, %v1328, 0.0
      %1348 = vadd.xlane.f32.xlu0 %v1347
      %v1349 = vpop.xlane.xlu0 %1348
      %v1350 = vsel %vm798, %v1330, 0.0
      %1351 = vadd.xlane.f32.xlu0 %v1350
      %v1352 = vpop.xlane.xlu0 %1351
      %v1353 = vsel %vm798, %v1332, 0.0
      %1354 = vadd.xlane.f32.xlu0 %v1353
      %v1355 = vpop.xlane.xlu0 %1354
      %v1356 = vsel %vm798, %v1334, 0.0
      %1357 = vadd.xlane.f32.xlu0 %v1356
      %v1358 = vpop.xlane.xlu0 %1357
      %v1359 = vrcp.pop %v1337
      %v1360 = vrcp.pop %v1340
      %v1361 = vrcp.pop %v1343
      %v1362 = vrcp.pop %v1346
      %v1363 = vrcp.pop %v1349
      %v1364 = vrcp.pop %v1352
      %v1365 = vrcp.pop %v1355
      %v1366 = vrcp.pop %v1358
      %v1367 = vmul.f32 %v1320, %v1359
      %v1368 = vmul.f32 %v1322, %v1360
      %v1369 = vmul.f32 %v1324, %v1361
      %v1370 = vmul.f32 %v1326, %v1362
      %v1371 = vmul.f32 %v1328, %v1363
      %v1372 = vmul.f32 %v1330, %v1364
      %v1373 = vmul.f32 %v1332, %v1365
      %v1374 = vmul.f32 %v1334, %v1366
      %v1384 = vsel %vm798, %v1367, 0
      %v1387 = vsel %vm798, %v1368, 0
      %v1390 = vsel %vm798, %v1369, 0
      %v1393 = vsel %vm798, %v1370, 0
      %v1396 = vsel %vm798, %v1371, 0
      %v1399 = vsel %vm798, %v1372, 0
      %v1402 = vsel %vm798, %v1373, 0
      %v1405 = vsel %vm798, %v1374, 0
      %1407 = vmatprep.subr.mxu0 0.0
      %1408 = vmatpush1.msra.mxu0 %v1140
      %1409 = vmatprep.subr.mxu0 0.0
      %1410 = vmatpush1.msra.mxu0 %v1142
      %1411 = vmatprep.subr.mxu0 0.0
      %1412 = vmatpush1.msra.mxu0 %v1144
      %1413 = vmatprep.subr.mxu0 0.0
      %1414 = vmatpush1.msra.mxu0 %v1146
      %1415 = vmatprep.subr.mxu0 0.0
      %1416 = vmatpush1.msra.mxu0 %v1148
      %1417 = vmatprep.subr.mxu0 0.0
      %1418 = vmatpush1.msra.mxu0 %v1150
      %1419 = vmatprep.subr.mxu0 0.0
      %1420 = vmatpush1.msra.mxu0 %v1152
      %1421 = vmatprep.subr.mxu0 0.0
      %1422 = vmatpush1.msra.mxu0 %v1154
      %1423 = vmatprep.subr.mxu0 0.0
      %1424 = vmatpush1.msra.mxu0 0.0
      %1425 = vmatprep.subr.mxu0 0.0
      %1426 = vmatpush1.msra.mxu0 0.0
      %1427 = vmatprep.subr.mxu0 0.0
      %1428 = vmatpush1.msra.mxu0 0.0
      %1429 = vmatprep.subr.mxu0 0.0
      %1430 = vmatpush1.msra.mxu0 0.0
      %1431 = vmatprep.subr.mxu0 0.0
      %1432 = vmatpush1.msra.mxu0 0.0
      %1433 = vmatprep.subr.mxu0 0.0
      %1434 = vmatpush1.msra.mxu0 0.0
      %1435 = vmatprep.subr.mxu0 0.0
      %1436 = vmatpush1.msra.mxu0 0.0
      %1437 = vmatprep.subr.mxu0 0.0
      %1438 = vmatpush1.msra.mxu0 0.0
      %1439 = vmatprep.subr.mxu0 0.0
      %1440 = vmatpush1.msra.mxu0 0.0
      %1441 = vmatprep.subr.mxu0 0.0
      %1442 = vmatpush1.msra.mxu0 0.0
      %1443 = vmatprep.subr.mxu0 0.0
      %1444 = vmatpush1.msra.mxu0 0.0
      %1445 = vmatprep.subr.mxu0 0.0
      %1446 = vmatpush1.msra.mxu0 0.0
      %1447 = vmatprep.subr.mxu0 0.0
      %1448 = vmatpush1.msra.mxu0 0.0
      %1449 = vmatprep.subr.mxu0 0.0
      %1450 = vmatpush1.msra.mxu0 0.0
      %1451 = vmatprep.subr.mxu0 0.0
      %1452 = vmatpush1.msra.mxu0 0.0
      %1453 = vmatprep.subr.mxu0 0.0
      %1454 = vmatpush1.msra.mxu0 0.0
      %1455 = vmatprep.subr.mxu0 0.0
      %1456 = vmatpush1.msra.mxu0 0.0
      %1457 = vmatprep.subr.mxu0 0.0
      %1458 = vmatpush1.msra.mxu0 0.0
      %1459 = vmatprep.subr.mxu0 0.0
      %1460 = vmatpush1.msra.mxu0 0.0
      %1461 = vmatprep.subr.mxu0 0.0
      %1462 = vmatpush1.msra.mxu0 0.0
      %1463 = vmatprep.subr.mxu0 0.0
      %1464 = vmatpush1.msra.mxu0 0.0
      %1465 = vmatprep.subr.mxu0 0.0
      %1466 = vmatpush1.msra.mxu0 0.0
      %1467 = vmatprep.subr.mxu0 0.0
      %1468 = vmatpush1.msra.mxu0 0.0
      %1469 = vmatprep.subr.mxu0 0.0
      %1470 = vmatpush1.msra.mxu0 0.0
      %1471 = vmatprep.mubr.f32.mxu0 0.0
      %1472 = vmatmul.mubr.f32.gmra.mrb[0].mxu0 %v1384
      %v1473 = vpop.f32.mrb[0].mxu0
      %v1474 = vadd.f32 0.0, %v1473
      %v1475 = vpop.f32.mrb[0].mxu0
      %1476 = vmatprep.mubr.f32.mxu0 0.0
      %1477 = vmatmul.mubr.f32.gmra.mrb[0].mxu0 %v1387
      %v1478 = vpop.f32.mrb[0].mxu0
      %v1479 = vadd.f32 0.0, %v1478
      %v1480 = vpop.f32.mrb[0].mxu0
      %1481 = vmatprep.mubr.f32.mxu0 0.0
      %1482 = vmatmul.mubr.f32.gmra.mrb[0].mxu0 %v1390
      %v1483 = vpop.f32.mrb[0].mxu0
      %v1484 = vadd.f32 0.0, %v1483
      %v1485 = vpop.f32.mrb[0].mxu0
      %1486 = vmatprep.mubr.f32.mxu0 0.0
      %1487 = vmatmul.mubr.f32.gmra.mrb[0].mxu0 %v1393
      %v1488 = vpop.f32.mrb[0].mxu0
      %v1489 = vadd.f32 0.0, %v1488
      %v1490 = vpop.f32.mrb[0].mxu0
      %1491 = vmatprep.mubr.f32.mxu0 0.0
      %1492 = vmatmul.mubr.f32.gmra.mrb[0].mxu0 %v1396
      %v1493 = vpop.f32.mrb[0].mxu0
      %v1494 = vadd.f32 0.0, %v1493
      %v1495 = vpop.f32.mrb[0].mxu0
      %1496 = vmatprep.mubr.f32.mxu0 0.0
      %1497 = vmatmul.mubr.f32.gmra.mrb[0].mxu0 %v1399
      %v1498 = vpop.f32.mrb[0].mxu0
      %v1499 = vadd.f32 0.0, %v1498
      %v1500 = vpop.f32.mrb[0].mxu0
      %1501 = vmatprep.mubr.f32.mxu0 0.0
      %1502 = vmatmul.mubr.f32.gmra.mrb[0].mxu0 %v1402
      %v1503 = vpop.f32.mrb[0].mxu0
      %v1504 = vadd.f32 0.0, %v1503
      %v1505 = vpop.f32.mrb[0].mxu0
      %1506 = vmatprep.mubr.f32.mxu0 0.0
      %1507 = vmatmul.mubr.f32.gmra.mrb[0].mxu0 %v1405
      %v1508 = vpop.f32.mrb[0].mxu0
      %v1509 = vadd.f32 0.0, %v1508
      %v1510 = vpop.f32.mrb[0].mxu0
      %1511 = vdwg.mxu0
      %vm1512 = vcmp.gt.f32.partialorder %v1474, 0.0
      %vm1513 = vcmp.gt.f32.partialorder %v1479, 0.0
      %vm1514 = vcmp.gt.f32.partialorder %v1484, 0.0
      %vm1515 = vcmp.gt.f32.partialorder %v1489, 0.0
      %vm1516 = vcmp.gt.f32.partialorder %v1494, 0.0
      %vm1517 = vcmp.gt.f32.partialorder %v1499, 0.0
      %vm1518 = vcmp.gt.f32.partialorder %v1504, 0.0
      %vm1519 = vcmp.gt.f32.partialorder %v1509, 0.0
      %v1520 = vmin.f32 %v1474, 0.0
      %v1521 = vmin.f32 %v1479, 0.0
      %v1522 = vmin.f32 %v1484, 0.0
      %v1523 = vmin.f32 %v1489, 0.0
      %v1524 = vmin.f32 %v1494, 0.0
      %v1525 = vmin.f32 %v1499, 0.0
      %v1526 = vmin.f32 %v1504, 0.0
      %v1527 = vmin.f32 %v1509, 0.0
      %v1528 = vmul.f32 %v1520, 1.442695
      %v1529 = vpow.pop %v1528
      %v1530 = vmul.f32 %v1521, 1.442695
      %v1531 = vpow.pop %v1530
      %v1532 = vmul.f32 %v1522, 1.442695
      %v1533 = vpow.pop %v1532
      %v1534 = vmul.f32 %v1523, 1.442695
      %v1535 = vpow.pop %v1534
      %v1536 = vmul.f32 %v1524, 1.442695
      %v1537 = vpow.pop %v1536
      %v1538 = vmul.f32 %v1525, 1.442695
      %v1539 = vpow.pop %v1538
      %v1540 = vmul.f32 %v1526, 1.442695
      %v1541 = vpow.pop %v1540
      %v1542 = vmul.f32 %v1527, 1.442695
      %v1543 = vpow.pop %v1542
      %v1544 = vsub.f32 %v1529, 1.0
      %v1545 = vsub.f32 %v1531, 1.0
      %v1546 = vsub.f32 %v1533, 1.0
      %v1547 = vsub.f32 %v1535, 1.0
      %v1548 = vsub.f32 %v1537, 1.0
      %v1549 = vsub.f32 %v1539, 1.0
      %v1550 = vsub.f32 %v1541, 1.0
      %v1551 = vsub.f32 %v1543, 1.0
      %v1552 = vsel %vm1512, %v1474, %v1544
      %v1553 = vsel %vm1513, %v1479, %v1545
      %v1554 = vsel %vm1514, %v1484, %v1546
      %v1555 = vsel %vm1515, %v1489, %v1547
      %v1556 = vsel %vm1516, %v1494, %v1548
      %v1557 = vsel %vm1517, %v1499, %v1549
      %v1558 = vsel %vm1518, %v1504, %v1550
      %v1559 = vsel %vm1519, %v1509, %v1551
      %v1561 = vsel %vm622, %v1552, 0
      %v1564 = vsel %vm622, %v1553, 0
      %v1567 = vsel %vm622, %v1554, 0
      %v1570 = vsel %vm622, %v1555, 0
      %v1573 = vsel %vm622, %v1556, 0
      %v1576 = vsel %vm622, %v1557, 0
      %v1579 = vsel %vm622, %v1558, 0
      %v1582 = vsel %vm622, %v1559, 0
      %vm1584 = vcmask 1043456
      %v1586 = vsel %vm1584, %v554, 0
      %1588 = vmatprep.subr.mxu0 0.0
      %1589 = vmatpush1.msra.mxu0 %v1586
      %1590 = vmatprep.subr.mxu0 0.0
      %1591 = vmatpush1.msra.mxu0 0.0
      %1592 = vmatprep.subr.mxu0 0.0
      %1593 = vmatpush1.msra.mxu0 0.0
      %1594 = vmatprep.subr.mxu0 0.0
      %1595 = vmatpush1.msra.mxu0 0.0
      %1596 = vmatprep.subr.mxu0 0.0
      %1597 = vmatpush1.msra.mxu0 0.0
      %1598 = vmatprep.subr.mxu0 0.0
      %1599 = vmatpush1.msra.mxu0 0.0
      %1600 = vmatprep.subr.mxu0 0.0
      %1601 = vmatpush1.msra.mxu0 0.0
      %1602 = vmatprep.subr.mxu0 0.0
      %1603 = vmatpush1.msra.mxu0 0.0
      %1604 = vmatprep.subr.mxu0 0.0
      %1605 = vmatpush1.msra.mxu0 0.0
      %1606 = vmatprep.subr.mxu0 0.0
      %1607 = vmatpush1.msra.mxu0 0.0
      %1608 = vmatprep.subr.mxu0 0.0
      %1609 = vmatpush1.msra.mxu0 0.0
      %1610 = vmatprep.subr.mxu0 0.0
      %1611 = vmatpush1.msra.mxu0 0.0
      %1612 = vmatprep.subr.mxu0 0.0
      %1613 = vmatpush1.msra.mxu0 0.0
      %1614 = vmatprep.subr.mxu0 0.0
      %1615 = vmatpush1.msra.mxu0 0.0
      %1616 = vmatprep.subr.mxu0 0.0
      %1617 = vmatpush1.msra.mxu0 0.0
      %1618 = vmatprep.subr.mxu0 0.0
      %1619 = vmatpush1.msra.mxu0 0.0
      %1620 = vmatprep.subr.mxu0 0.0
      %1621 = vmatpush1.msra.mxu0 0.0
      %1622 = vmatprep.subr.mxu0 0.0
      %1623 = vmatpush1.msra.mxu0 0.0
      %1624 = vmatprep.subr.mxu0 0.0
      %1625 = vmatpush1.msra.mxu0 0.0
      %1626 = vmatprep.subr.mxu0 0.0
      %1627 = vmatpush1.msra.mxu0 0.0
      %1628 = vmatprep.subr.mxu0 0.0
      %1629 = vmatpush1.msra.mxu0 0.0
      %1630 = vmatprep.subr.mxu0 0.0
      %1631 = vmatpush1.msra.mxu0 0.0
      %1632 = vmatprep.subr.mxu0 0.0
      %1633 = vmatpush1.msra.mxu0 0.0
      %1634 = vmatprep.subr.mxu0 0.0
      %1635 = vmatpush1.msra.mxu0 0.0
      %1636 = vmatprep.subr.mxu0 0.0
      %1637 = vmatpush1.msra.mxu0 0.0
      %1638 = vmatprep.subr.mxu0 0.0
      %1639 = vmatpush1.msra.mxu0 0.0
      %1640 = vmatprep.subr.mxu0 0.0
      %1641 = vmatpush1.msra.mxu0 0.0
      %1642 = vmatprep.subr.mxu0 0.0
      %1643 = vmatpush1.msra.mxu0 0.0
      %1644 = vmatprep.subr.mxu0 0.0
      %1645 = vmatpush1.msra.mxu0 0.0
      %1646 = vmatprep.subr.mxu0 0.0
      %1647 = vmatpush1.msra.mxu0 0.0
      %1648 = vmatprep.subr.mxu0 0.0
      %1649 = vmatpush1.msra.mxu0 0.0
      %1650 = vmatprep.subr.mxu0 0.0
      %1651 = vmatpush1.msra.mxu0 0.0
      %1652 = vmatprep.mubr.f32.mxu0 0.0
      %1653 = vmatmul.mubr.f32.gmra.mrb[0].mxu0 %v1561
      %v1654 = vpop.f32.mrb[0].mxu0
      %v1655 = vadd.f32 0.0, %v1654
      %v1656 = vpop.f32.mrb[0].mxu0
      %1657 = vmatprep.mubr.f32.mxu0 0.0
      %1658 = vmatmul.mubr.f32.gmra.mrb[0].mxu0 %v1564
      %v1659 = vpop.f32.mrb[0].mxu0
      %v1660 = vadd.f32 0.0, %v1659
      %v1661 = vpop.f32.mrb[0].mxu0
      %1662 = vmatprep.mubr.f32.mxu0 0.0
      %1663 = vmatmul.mubr.f32.gmra.mrb[0].mxu0 %v1567
      %v1664 = vpop.f32.mrb[0].mxu0
      %v1665 = vadd.f32 0.0, %v1664
      %v1666 = vpop.f32.mrb[0].mxu0
      %1667 = vmatprep.mubr.f32.mxu0 0.0
      %1668 = vmatmul.mubr.f32.gmra.mrb[0].mxu0 %v1570
      %v1669 = vpop.f32.mrb[0].mxu0
      %v1670 = vadd.f32 0.0, %v1669
      %v1671 = vpop.f32.mrb[0].mxu0
      %1672 = vmatprep.mubr.f32.mxu0 0.0
      %1673 = vmatmul.mubr.f32.gmra.mrb[0].mxu0 %v1573
      %v1674 = vpop.f32.mrb[0].mxu0
      %v1675 = vadd.f32 0.0, %v1674
      %v1676 = vpop.f32.mrb[0].mxu0
      %1677 = vmatprep.mubr.f32.mxu0 0.0
      %1678 = vmatmul.mubr.f32.gmra.mrb[0].mxu0 %v1576
      %v1679 = vpop.f32.mrb[0].mxu0
      %v1680 = vadd.f32 0.0, %v1679
      %v1681 = vpop.f32.mrb[0].mxu0
      %1682 = vmatprep.mubr.f32.mxu0 0.0
      %1683 = vmatmul.mubr.f32.gmra.mrb[0].mxu0 %v1579
      %v1684 = vpop.f32.mrb[0].mxu0
      %v1685 = vadd.f32 0.0, %v1684
      %v1686 = vpop.f32.mrb[0].mxu0
      %1687 = vmatprep.mubr.f32.mxu0 0.0
      %1688 = vmatmul.mubr.f32.gmra.mrb[0].mxu0 %v1582
      %v1689 = vpop.f32.mrb[0].mxu0
      %v1690 = vadd.f32 0.0, %v1689
      %v1691 = vpop.f32.mrb[0].mxu0
      %1692 = vdwg.mxu0
      %v1694 = vsel %vm622, %v1056, 0
      %v1697 = vsel %vm622, %v1057, 0
      %v1700 = vsel %vm622, %v1058, 0
      %v1703 = vsel %vm622, %v1059, 0
      %v1706 = vsel %vm622, %v1060, 0
      %v1709 = vsel %vm622, %v1061, 0
      %v1712 = vsel %vm622, %v1062, 0
      %v1715 = vsel %vm622, %v1063, 0
      %v1718 = vsel %vm1584, %v553, 0
      %1720 = vmatprep.subr.mxu0 0.0
      %1721 = vmatpush1.msra.mxu0 %v1718
      %1722 = vmatprep.subr.mxu0 0.0
      %1723 = vmatpush1.msra.mxu0 0.0
      %1724 = vmatprep.subr.mxu0 0.0
      %1725 = vmatpush1.msra.mxu0 0.0
      %1726 = vmatprep.subr.mxu0 0.0
      %1727 = vmatpush1.msra.mxu0 0.0
      %1728 = vmatprep.subr.mxu0 0.0
      %1729 = vmatpush1.msra.mxu0 0.0
      %1730 = vmatprep.subr.mxu0 0.0
      %1731 = vmatpush1.msra.mxu0 0.0
      %1732 = vmatprep.subr.mxu0 0.0
      %1733 = vmatpush1.msra.mxu0 0.0
      %1734 = vmatprep.subr.mxu0 0.0
      %1735 = vmatpush1.msra.mxu0 0.0
      %1736 = vmatprep.subr.mxu0 0.0
      %1737 = vmatpush1.msra.mxu0 0.0
      %1738 = vmatprep.subr.mxu0 0.0
      %1739 = vmatpush1.msra.mxu0 0.0
      %1740 = vmatprep.subr.mxu0 0.0
      %1741 = vmatpush1.msra.mxu0 0.0
      %1742 = vmatprep.subr.mxu0 0.0
      %1743 = vmatpush1.msra.mxu0 0.0
      %1744 = vmatprep.subr.mxu0 0.0
      %1745 = vmatpush1.msra.mxu0 0.0
      %1746 = vmatprep.subr.mxu0 0.0
      %1747 = vmatpush1.msra.mxu0 0.0
      %1748 = vmatprep.subr.mxu0 0.0
      %1749 = vmatpush1.msra.mxu0 0.0
      %1750 = vmatprep.subr.mxu0 0.0
      %1751 = vmatpush1.msra.mxu0 0.0
      %1752 = vmatprep.subr.mxu0 0.0
      %1753 = vmatpush1.msra.mxu0 0.0
      %1754 = vmatprep.subr.mxu0 0.0
      %1755 = vmatpush1.msra.mxu0 0.0
      %1756 = vmatprep.subr.mxu0 0.0
      %1757 = vmatpush1.msra.mxu0 0.0
      %1758 = vmatprep.subr.mxu0 0.0
      %1759 = vmatpush1.msra.mxu0 0.0
      %1760 = vmatprep.subr.mxu0 0.0
      %1761 = vmatpush1.msra.mxu0 0.0
      %1762 = vmatprep.subr.mxu0 0.0
      %1763 = vmatpush1.msra.mxu0 0.0
      %1764 = vmatprep.subr.mxu0 0.0
      %1765 = vmatpush1.msra.mxu0 0.0
      %1766 = vmatprep.subr.mxu0 0.0
      %1767 = vmatpush1.msra.mxu0 0.0
      %1768 = vmatprep.subr.mxu0 0.0
      %1769 = vmatpush1.msra.mxu0 0.0
      %1770 = vmatprep.subr.mxu0 0.0
      %1771 = vmatpush1.msra.mxu0 0.0
      %1772 = vmatprep.subr.mxu0 0.0
      %1773 = vmatpush1.msra.mxu0 0.0
      %1774 = vmatprep.subr.mxu0 0.0
      %1775 = vmatpush1.msra.mxu0 0.0
      %1776 = vmatprep.subr.mxu0 0.0
      %1777 = vmatpush1.msra.mxu0 0.0
      %1778 = vmatprep.subr.mxu0 0.0
      %1779 = vmatpush1.msra.mxu0 0.0
      %1780 = vmatprep.subr.mxu0 0.0
      %1781 = vmatpush1.msra.mxu0 0.0
      %1782 = vmatprep.subr.mxu0 0.0
      %1783 = vmatpush1.msra.mxu0 0.0
      %1784 = vmatprep.mubr.f32.mxu0 0.0
      %1785 = vmatmul.mubr.f32.gmra.mrb[0].mxu0 %v1694
      %v1786 = vpop.f32.mrb[0].mxu0
      %v1787 = vadd.f32 %v1655, %v1786
      %v1788 = vpop.f32.mrb[0].mxu0
      %1789 = vmatprep.mubr.f32.mxu0 0.0
      %1790 = vmatmul.mubr.f32.gmra.mrb[0].mxu0 %v1697
      %v1791 = vpop.f32.mrb[0].mxu0
      %v1792 = vadd.f32 %v1660, %v1791
      %v1793 = vpop.f32.mrb[0].mxu0
      %1794 = vmatprep.mubr.f32.mxu0 0.0
      %1795 = vmatmul.mubr.f32.gmra.mrb[0].mxu0 %v1700
      %v1796 = vpop.f32.mrb[0].mxu0
      %v1797 = vadd.f32 %v1665, %v1796
      %v1798 = vpop.f32.mrb[0].mxu0
      %1799 = vmatprep.mubr.f32.mxu0 0.0
      %1800 = vmatmul.mubr.f32.gmra.mrb[0].mxu0 %v1703
      %v1801 = vpop.f32.mrb[0].mxu0
      %v1802 = vadd.f32 %v1670, %v1801
      %v1803 = vpop.f32.mrb[0].mxu0
      %1804 = vmatprep.mubr.f32.mxu0 0.0
      %1805 = vmatmul.mubr.f32.gmra.mrb[0].mxu0 %v1706
      %v1806 = vpop.f32.mrb[0].mxu0
      %v1807 = vadd.f32 %v1675, %v1806
      %v1808 = vpop.f32.mrb[0].mxu0
      %1809 = vmatprep.mubr.f32.mxu0 0.0
      %1810 = vmatmul.mubr.f32.gmra.mrb[0].mxu0 %v1709
      %v1811 = vpop.f32.mrb[0].mxu0
      %v1812 = vadd.f32 %v1680, %v1811
      %v1813 = vpop.f32.mrb[0].mxu0
      %1814 = vmatprep.mubr.f32.mxu0 0.0
      %1815 = vmatmul.mubr.f32.gmra.mrb[0].mxu0 %v1712
      %v1816 = vpop.f32.mrb[0].mxu0
      %v1817 = vadd.f32 %v1685, %v1816
      %v1818 = vpop.f32.mrb[0].mxu0
      %1819 = vmatprep.mubr.f32.mxu0 0.0
      %1820 = vmatmul.mubr.f32.gmra.mrb[0].mxu0 %v1715
      %v1821 = vpop.f32.mrb[0].mxu0
      %v1822 = vadd.f32 %v1690, %v1821
      %v1823 = vpop.f32.mrb[0].mxu0
      %1824 = vdwg.mxu0
      %v1826 = vlaneseq
      %v1827 = vshrl.u32 %v1826, 7
      %v1828 = vsub.s32 0, %v1827
      %v1829 = vrot.slane %v555, %v1828
      %v1831 = vmul.f32 %v1787, %v1829
      %v1832 = vmul.f32 %v1792, %v1829
      %v1833 = vmul.f32 %v1797, %v1829
      %v1834 = vmul.f32 %v1802, %v1829
      %v1835 = vmul.f32 %v1807, %v1829
      %v1836 = vmul.f32 %v1812, %v1829
      %v1837 = vmul.f32 %v1817, %v1829
      %v1838 = vmul.f32 %v1822, %v1829
      %v1839 = vsel %vm622, %v1831, 0.0
      %1840 = vadd.xlane.f32.xlu0 %v1839
      %v1841 = vpop.xlane.xlu0 %1840
      %v1842 = vsel %vm622, %v1832, 0.0
      %1843 = vadd.xlane.f32.xlu0 %v1842
      %v1844 = vpop.xlane.xlu0 %1843
      %v1845 = vsel %vm622, %v1833, 0.0
      %1846 = vadd.xlane.f32.xlu0 %v1845
      %v1847 = vpop.xlane.xlu0 %1846
      %v1848 = vsel %vm622, %v1834, 0.0
      %1849 = vadd.xlane.f32.xlu0 %v1848
      %v1850 = vpop.xlane.xlu0 %1849
      %v1851 = vsel %vm622, %v1835, 0.0
      %1852 = vadd.xlane.f32.xlu0 %v1851
      %v1853 = vpop.xlane.xlu0 %1852
      %v1854 = vsel %vm622, %v1836, 0.0
      %1855 = vadd.xlane.f32.xlu0 %v1854
      %v1856 = vpop.xlane.xlu0 %1855
      %v1857 = vsel %vm622, %v1837, 0.0
      %1858 = vadd.xlane.f32.xlu0 %v1857
      %v1859 = vpop.xlane.xlu0 %1858
      %v1860 = vsel %vm622, %v1838, 0.0
      %1861 = vadd.xlane.f32.xlu0 %v1860
      %v1862 = vpop.xlane.xlu0 %1861
      %1863 = vrot.lane.b32.xlu0 %v1829, 124
      %v1864 = vpop.permute.xlu0 %1863
      %v1865 = vsel %vm622, %v1864, 0
      %v1868 = vsel %vm622, %v1787, 0
      %v1871 = vsel %vm622, %v1792, 0
      %v1874 = vsel %vm622, %v1797, 0
      %v1877 = vsel %vm622, %v1802, 0
      %v1880 = vsel %vm622, %v1807, 0
      %v1883 = vsel %vm622, %v1812, 0
      %v1886 = vsel %vm622, %v1817, 0
      %v1889 = vsel %vm622, %v1822, 0
      %1891 = vmatprep.subr.mxu0 0.0
      %1892 = vmatpush1.xpose.msra.mxu0 %v1868
      %1893 = vmatprep.subr.mxu0 0.0
      %1894 = vmatpush1.xpose.msra.mxu0 %v1871
      %1895 = vmatprep.subr.mxu0 0.0
      %1896 = vmatpush1.xpose.msra.mxu0 %v1874
      %1897 = vmatprep.subr.mxu0 0.0
      %1898 = vmatpush1.xpose.msra.mxu0 %v1877
      %1899 = vmatprep.subr.mxu0 0.0
      %1900 = vmatpush1.xpose.msra.mxu0 %v1880
      %1901 = vmatprep.subr.mxu0 0.0
      %1902 = vmatpush1.xpose.msra.mxu0 %v1883
      %1903 = vmatprep.subr.mxu0 0.0
      %1904 = vmatpush1.xpose.msra.mxu0 %v1886
      %1905 = vmatprep.subr.mxu0 0.0
      %1906 = vmatpush1.xpose.msra.mxu0 %v1889
      %1907 = vmatprep.subr.mxu0 0.0
      %1908 = vmatpush1.xpose.msra.mxu0 0.0
      %1909 = vmatprep.subr.mxu0 0.0
      %1910 = vmatpush1.xpose.msra.mxu0 0.0
      %1911 = vmatprep.subr.mxu0 0.0
      %1912 = vmatpush1.xpose.msra.mxu0 0.0
      %1913 = vmatprep.subr.mxu0 0.0
      %1914 = vmatpush1.xpose.msra.mxu0 0.0
      %1915 = vmatprep.subr.mxu0 0.0
      %1916 = vmatpush1.xpose.msra.mxu0 0.0
      %1917 = vmatprep.subr.mxu0 0.0
      %1918 = vmatpush1.xpose.msra.mxu0 0.0
      %1919 = vmatprep.subr.mxu0 0.0
      %1920 = vmatpush1.xpose.msra.mxu0 0.0
      %1921 = vmatprep.subr.mxu0 0.0
      %1922 = vmatpush1.xpose.msra.mxu0 0.0
      %1923 = vmatprep.subr.mxu0 0.0
      %1924 = vmatpush1.xpose.msra.mxu0 0.0
      %1925 = vmatprep.subr.mxu0 0.0
      %1926 = vmatpush1.xpose.msra.mxu0 0.0
      %1927 = vmatprep.subr.mxu0 0.0
      %1928 = vmatpush1.xpose.msra.mxu0 0.0
      %1929 = vmatprep.subr.mxu0 0.0
      %1930 = vmatpush1.xpose.msra.mxu0 0.0
      %1931 = vmatprep.subr.mxu0 0.0
      %1932 = vmatpush1.xpose.msra.mxu0 0.0
      %1933 = vmatprep.subr.mxu0 0.0
      %1934 = vmatpush1.xpose.msra.mxu0 0.0
      %1935 = vmatprep.subr.mxu0 0.0
      %1936 = vmatpush1.xpose.msra.mxu0 0.0
      %1937 = vmatprep.subr.mxu0 0.0
      %1938 = vmatpush1.xpose.msra.mxu0 0.0
      %1939 = vmatprep.subr.mxu0 0.0
      %1940 = vmatpush1.xpose.msra.mxu0 0.0
      %1941 = vmatprep.subr.mxu0 0.0
      %1942 = vmatpush1.xpose.msra.mxu0 0.0
      %1943 = vmatprep.subr.mxu0 0.0
      %1944 = vmatpush1.xpose.msra.mxu0 0.0
      %1945 = vmatprep.subr.mxu0 0.0
      %1946 = vmatpush1.xpose.msra.mxu0 0.0
      %1947 = vmatprep.subr.mxu0 0.0
      %1948 = vmatpush1.xpose.msra.mxu0 0.0
      %1949 = vmatprep.subr.mxu0 0.0
      %1950 = vmatpush1.xpose.msra.mxu0 0.0
      %1951 = vmatprep.subr.mxu0 0.0
      %1952 = vmatpush1.xpose.msra.mxu0 0.0
      %1953 = vmatprep.subr.mxu0 0.0
      %1954 = vmatpush1.xpose.msra.mxu0 0.0
      %1955 = vmatprep.mubr.f32.mxu0 0.0
      %1956 = vmatmul.mubr.f32.gmra.mrb[0].mxu0 %v1865
      %v1957 = vpop.f32.mrb[0].mxu0
      %v1958 = vadd.f32 0.0, %v1957
      %v1959 = vpop.f32.mrb[0].mxu0
      %1960 = vdwg.mxu0
      %v1961 = vlaneseq
      %v1962 = vshrl.u32 %v1961, 7
      %v1963 = vsub.s32 0, %v1962
      %v1964 = vrot.slane %v1958, %v1963
      %v1965 = vadd.f32 %v1841, %v1964
      %v1966 = vadd.f32 %v1844, %v1964
      %v1967 = vadd.f32 %v1847, %v1964
      %v1968 = vadd.f32 %v1850, %v1964
      %v1969 = vadd.f32 %v1853, %v1964
      %v1970 = vadd.f32 %v1856, %v1964
      %v1971 = vadd.f32 %v1859, %v1964
      %v1972 = vadd.f32 %v1862, %v1964
      %vm1973 = vcmp.gt.f32.partialorder %v1965, 0.0
      %vm1974 = vcmp.gt.f32.partialorder %v1966, 0.0
      %vm1975 = vcmp.gt.f32.partialorder %v1967, 0.0
      %vm1976 = vcmp.gt.f32.partialorder %v1968, 0.0
      %vm1977 = vcmp.gt.f32.partialorder %v1969, 0.0
      %vm1978 = vcmp.gt.f32.partialorder %v1970, 0.0
      %vm1979 = vcmp.gt.f32.partialorder %v1971, 0.0
      %vm1980 = vcmp.gt.f32.partialorder %v1972, 0.0
      %v1981 = vmul.f32 %v1965, 0.2
      %v1982 = vmul.f32 %v1966, 0.2
      %v1983 = vmul.f32 %v1967, 0.2
      %v1984 = vmul.f32 %v1968, 0.2
      %v1985 = vmul.f32 %v1969, 0.2
      %v1986 = vmul.f32 %v1970, 0.2
      %v1987 = vmul.f32 %v1971, 0.2
      %v1988 = vmul.f32 %v1972, 0.2
      %v1989 = vsel %vm1973, %v1965, %v1981
      %v1990 = vsel %vm1974, %v1966, %v1982
      %v1991 = vsel %vm1975, %v1967, %v1983
      %v1992 = vsel %vm1976, %v1968, %v1984
      %v1993 = vsel %vm1977, %v1969, %v1985
      %v1994 = vsel %vm1978, %v1970, %v1986
      %v1995 = vsel %vm1979, %v1971, %v1987
      %v1996 = vsel %vm1980, %v1972, %v1988
      %v1997 = vsel %vm782, %v1989, -9e+15
      %v1998 = vsel %vm783, %v1990, -9e+15
      %v1999 = vsel %vm784, %v1991, -9e+15
      %v2000 = vsel %vm785, %v1992, -9e+15
      %v2001 = vsel %vm786, %v1993, -9e+15
      %v2002 = vsel %vm787, %v1994, -9e+15
      %v2003 = vsel %vm788, %v1995, -9e+15
      %v2004 = vsel %vm789, %v1996, -9e+15
      %v2005 = vsel %vm798, %v1997, -inf
      %2006 = vmax.xlane.f32.xlu0 %v2005
      %v2007 = vpop.xlane.xlu0 %2006
      %v2008 = vsel %vm798, %v1998, -inf
      %2009 = vmax.xlane.f32.xlu0 %v2008
      %v2010 = vpop.xlane.xlu0 %2009
      %v2011 = vsel %vm798, %v1999, -inf
      %2012 = vmax.xlane.f32.xlu0 %v2011
      %v2013 = vpop.xlane.xlu0 %2012
      %v2014 = vsel %vm798, %v2000, -inf
      %2015 = vmax.xlane.f32.xlu0 %v2014
      %v2016 = vpop.xlane.xlu0 %2015
      %v2017 = vsel %vm798, %v2001, -inf
      %2018 = vmax.xlane.f32.xlu0 %v2017
      %v2019 = vpop.xlane.xlu0 %2018
      %v2020 = vsel %vm798, %v2002, -inf
      %2021 = vmax.xlane.f32.xlu0 %v2020
      %v2022 = vpop.xlane.xlu0 %2021
      %v2023 = vsel %vm798, %v2003, -inf
      %2024 = vmax.xlane.f32.xlu0 %v2023
      %v2025 = vpop.xlane.xlu0 %2024
      %v2026 = vsel %vm798, %v2004, -inf
      %2027 = vmax.xlane.f32.xlu0 %v2026
      %v2028 = vpop.xlane.xlu0 %2027
      %v2029 = vsub.f32 %v1997, %v2007
      %v2030 = vsub.f32 %v1998, %v2010
      %v2031 = vsub.f32 %v1999, %v2013
      %v2032 = vsub.f32 %v2000, %v2016
      %v2033 = vsub.f32 %v2001, %v2019
      %v2034 = vsub.f32 %v2002, %v2022
      %v2035 = vsub.f32 %v2003, %v2025
      %v2036 = vsub.f32 %v2004, %v2028
      %v2037 = vmul.f32 %v2029, 1.442695
      %v2038 = vpow.pop %v2037
      %v2039 = vmul.f32 %v2030, 1.442695
      %v2040 = vpow.pop %v2039
      %v2041 = vmul.f32 %v2031, 1.442695
      %v2042 = vpow.pop %v2041
      %v2043 = vmul.f32 %v2032, 1.442695
      %v2044 = vpow.pop %v2043
      %v2045 = vmul.f32 %v2033, 1.442695
      %v2046 = vpow.pop %v2045
      %v2047 = vmul.f32 %v2034, 1.442695
      %v2048 = vpow.pop %v2047
      %v2049 = vmul.f32 %v2035, 1.442695
      %v2050 = vpow.pop %v2049
      %v2051 = vmul.f32 %v2036, 1.442695
      %v2052 = vpow.pop %v2051
      %v2053 = vsel %vm798, %v2038, 0.0
      %2054 = vadd.xlane.f32.xlu0 %v2053
      %v2055 = vpop.xlane.xlu0 %2054
      %v2056 = vsel %vm798, %v2040, 0.0
      %2057 = vadd.xlane.f32.xlu0 %v2056
      %v2058 = vpop.xlane.xlu0 %2057
      %v2059 = vsel %vm798, %v2042, 0.0
      %2060 = vadd.xlane.f32.xlu0 %v2059
      %v2061 = vpop.xlane.xlu0 %2060
      %v2062 = vsel %vm798, %v2044, 0.0
      %2063 = vadd.xlane.f32.xlu0 %v2062
      %v2064 = vpop.xlane.xlu0 %2063
      %v2065 = vsel %vm798, %v2046, 0.0
      %2066 = vadd.xlane.f32.xlu0 %v2065
      %v2067 = vpop.xlane.xlu0 %2066
      %v2068 = vsel %vm798, %v2048, 0.0
      %2069 = vadd.xlane.f32.xlu0 %v2068
      %v2070 = vpop.xlane.xlu0 %2069
      %v2071 = vsel %vm798, %v2050, 0.0
      %2072 = vadd.xlane.f32.xlu0 %v2071
      %v2073 = vpop.xlane.xlu0 %2072
      %v2074 = vsel %vm798, %v2052, 0.0
      %2075 = vadd.xlane.f32.xlu0 %v2074
      %v2076 = vpop.xlane.xlu0 %2075
      %v2077 = vrcp.pop %v2055
      %v2078 = vrcp.pop %v2058
      %v2079 = vrcp.pop %v2061
      %v2080 = vrcp.pop %v2064
      %v2081 = vrcp.pop %v2067
      %v2082 = vrcp.pop %v2070
      %v2083 = vrcp.pop %v2073
      %v2084 = vrcp.pop %v2076
      %v2085 = vmul.f32 %v2038, %v2077
      %v2086 = vmul.f32 %v2040, %v2078
      %v2087 = vmul.f32 %v2042, %v2079
      %v2088 = vmul.f32 %v2044, %v2080
      %v2089 = vmul.f32 %v2046, %v2081
      %v2090 = vmul.f32 %v2048, %v2082
      %v2091 = vmul.f32 %v2050, %v2083
      %v2092 = vmul.f32 %v2052, %v2084
      %v2094 = vsel %vm798, %v2085, 0
      %v2097 = vsel %vm798, %v2086, 0
      %v2100 = vsel %vm798, %v2087, 0
      %v2103 = vsel %vm798, %v2088, 0
      %v2106 = vsel %vm798, %v2089, 0
      %v2109 = vsel %vm798, %v2090, 0
      %v2112 = vsel %vm798, %v2091, 0
      %v2115 = vsel %vm798, %v2092, 0
      %2117 = vmatprep.subr.mxu0 0.0
      %2118 = vmatpush1.msra.mxu0 %v1787
      %2119 = vmatprep.subr.mxu0 0.0
      %2120 = vmatpush1.msra.mxu0 %v1792
      %2121 = vmatprep.subr.mxu0 0.0
      %2122 = vmatpush1.msra.mxu0 %v1797
      %2123 = vmatprep.subr.mxu0 0.0
      %2124 = vmatpush1.msra.mxu0 %v1802
      %2125 = vmatprep.subr.mxu0 0.0
      %2126 = vmatpush1.msra.mxu0 %v1807
      %2127 = vmatprep.subr.mxu0 0.0
      %2128 = vmatpush1.msra.mxu0 %v1812
      %2129 = vmatprep.subr.mxu0 0.0
      %2130 = vmatpush1.msra.mxu0 %v1817
      %2131 = vmatprep.subr.mxu0 0.0
      %2132 = vmatpush1.msra.mxu0 %v1822
      %2133 = vmatprep.subr.mxu0 0.0
      %2134 = vmatpush1.msra.mxu0 0.0
      %2135 = vmatprep.subr.mxu0 0.0
      %2136 = vmatpush1.msra.mxu0 0.0
      %2137 = vmatprep.subr.mxu0 0.0
      %2138 = vmatpush1.msra.mxu0 0.0
      %2139 = vmatprep.subr.mxu0 0.0
      %2140 = vmatpush1.msra.mxu0 0.0
      %2141 = vmatprep.subr.mxu0 0.0
      %2142 = vmatpush1.msra.mxu0 0.0
      %2143 = vmatprep.subr.mxu0 0.0
      %2144 = vmatpush1.msra.mxu0 0.0
      %2145 = vmatprep.subr.mxu0 0.0
      %2146 = vmatpush1.msra.mxu0 0.0
      %2147 = vmatprep.subr.mxu0 0.0
      %2148 = vmatpush1.msra.mxu0 0.0
      %2149 = vmatprep.subr.mxu0 0.0
      %2150 = vmatpush1.msra.mxu0 0.0
      %2151 = vmatprep.subr.mxu0 0.0
      %2152 = vmatpush1.msra.mxu0 0.0
      %2153 = vmatprep.subr.mxu0 0.0
      %2154 = vmatpush1.msra.mxu0 0.0
      %2155 = vmatprep.subr.mxu0 0.0
      %2156 = vmatpush1.msra.mxu0 0.0
      %2157 = vmatprep.subr.mxu0 0.0
      %2158 = vmatpush1.msra.mxu0 0.0
      %2159 = vmatprep.subr.mxu0 0.0
      %2160 = vmatpush1.msra.mxu0 0.0
      %2161 = vmatprep.subr.mxu0 0.0
      %2162 = vmatpush1.msra.mxu0 0.0
      %2163 = vmatprep.subr.mxu0 0.0
      %2164 = vmatpush1.msra.mxu0 0.0
      %2165 = vmatprep.subr.mxu0 0.0
      %2166 = vmatpush1.msra.mxu0 0.0
      %2167 = vmatprep.subr.mxu0 0.0
      %2168 = vmatpush1.msra.mxu0 0.0
      %2169 = vmatprep.subr.mxu0 0.0
      %2170 = vmatpush1.msra.mxu0 0.0
      %2171 = vmatprep.subr.mxu0 0.0
      %2172 = vmatpush1.msra.mxu0 0.0
      %2173 = vmatprep.subr.mxu0 0.0
      %2174 = vmatpush1.msra.mxu0 0.0
      %2175 = vmatprep.subr.mxu0 0.0
      %2176 = vmatpush1.msra.mxu0 0.0
      %2177 = vmatprep.subr.mxu0 0.0
      %2178 = vmatpush1.msra.mxu0 0.0
      %2179 = vmatprep.subr.mxu0 0.0
      %2180 = vmatpush1.msra.mxu0 0.0
      %2181 = vmatprep.mubr.f32.mxu0 0.0
      %2182 = vmatmul.mubr.f32.gmra.mrb[0].mxu0 %v2094
      %v2183 = vpop.f32.mrb[0].mxu0
      %v2184 = vadd.f32 0.0, %v2183
      %v2185 = vpop.f32.mrb[0].mxu0
      %2186 = vmatprep.mubr.f32.mxu0 0.0
      %2187 = vmatmul.mubr.f32.gmra.mrb[0].mxu0 %v2097
      %v2188 = vpop.f32.mrb[0].mxu0
      %v2189 = vadd.f32 0.0, %v2188
      %v2190 = vpop.f32.mrb[0].mxu0
      %2191 = vmatprep.mubr.f32.mxu0 0.0
      %2192 = vmatmul.mubr.f32.gmra.mrb[0].mxu0 %v2100
      %v2193 = vpop.f32.mrb[0].mxu0
      %v2194 = vadd.f32 0.0, %v2193
      %v2195 = vpop.f32.mrb[0].mxu0
      %2196 = vmatprep.mubr.f32.mxu0 0.0
      %2197 = vmatmul.mubr.f32.gmra.mrb[0].mxu0 %v2103
      %v2198 = vpop.f32.mrb[0].mxu0
      %v2199 = vadd.f32 0.0, %v2198
      %v2200 = vpop.f32.mrb[0].mxu0
      %2201 = vmatprep.mubr.f32.mxu0 0.0
      %2202 = vmatmul.mubr.f32.gmra.mrb[0].mxu0 %v2106
      %v2203 = vpop.f32.mrb[0].mxu0
      %v2204 = vadd.f32 0.0, %v2203
      %v2205 = vpop.f32.mrb[0].mxu0
      %2206 = vmatprep.mubr.f32.mxu0 0.0
      %2207 = vmatmul.mubr.f32.gmra.mrb[0].mxu0 %v2109
      %v2208 = vpop.f32.mrb[0].mxu0
      %v2209 = vadd.f32 0.0, %v2208
      %v2210 = vpop.f32.mrb[0].mxu0
      %2211 = vmatprep.mubr.f32.mxu0 0.0
      %2212 = vmatmul.mubr.f32.gmra.mrb[0].mxu0 %v2112
      %v2213 = vpop.f32.mrb[0].mxu0
      %v2214 = vadd.f32 0.0, %v2213
      %v2215 = vpop.f32.mrb[0].mxu0
      %2216 = vmatprep.mubr.f32.mxu0 0.0
      %2217 = vmatmul.mubr.f32.gmra.mrb[0].mxu0 %v2115
      %v2218 = vpop.f32.mrb[0].mxu0
      %v2219 = vadd.f32 0.0, %v2218
      %v2220 = vpop.f32.mrb[0].mxu0
      %2221 = vdwg.mxu0
      %v2222 = vld [vmem:[%s524] sm:$0xff]
      %v2223 = vld [vmem:[%s524 + $0x8] sm:$0xff]
      %v2224 = vld [vmem:[%s529] sm:$0xff]
      %v2225 = vld [vmem:[%s529 + $0x8] sm:$0xff]
      %v2226 = vld [vmem:[%s6] sm:$0xf]
      %v2227 = vld [vmem:[%s7] sm:$0xff]
      %v2228 = vld [vmem:[%s8] sm:$0x1]
      %vm2229 = vcmask 64512
      %v2231 = vsel %vm2229, %v2222, 0
      %v2234 = vsel %vm2229, %v2223, 0
      %2236 = vmatprep.subr.mxu0 0.0
      %2237 = vmatpush1.msra.mxu0 %v2227
      %2238 = vmatprep.subr.mxu0 0.0
      %2239 = vmatpush1.msra.mxu0 0.0
      %2240 = vmatprep.subr.mxu0 0.0
      %2241 = vmatpush1.msra.mxu0 0.0
      %2242 = vmatprep.subr.mxu0 0.0
      %2243 = vmatpush1.msra.mxu0 0.0
      %2244 = vmatprep.subr.mxu0 0.0
      %2245 = vmatpush1.msra.mxu0 0.0
      %2246 = vmatprep.subr.mxu0 0.0
      %2247 = vmatpush1.msra.mxu0 0.0
      %2248 = vmatprep.subr.mxu0 0.0
      %2249 = vmatpush1.msra.mxu0 0.0
      %2250 = vmatprep.subr.mxu0 0.0
      %2251 = vmatpush1.msra.mxu0 0.0
      %2252 = vmatprep.subr.mxu0 0.0
      %2253 = vmatpush1.msra.mxu0 0.0
      %2254 = vmatprep.subr.mxu0 0.0
      %2255 = vmatpush1.msra.mxu0 0.0
      %2256 = vmatprep.subr.mxu0 0.0
      %2257 = vmatpush1.msra.mxu0 0.0
      %2258 = vmatprep.subr.mxu0 0.0
      %2259 = vmatpush1.msra.mxu0 0.0
      %2260 = vmatprep.subr.mxu0 0.0
      %2261 = vmatpush1.msra.mxu0 0.0
      %2262 = vmatprep.subr.mxu0 0.0
      %2263 = vmatpush1.msra.mxu0 0.0
      %2264 = vmatprep.subr.mxu0 0.0
      %2265 = vmatpush1.msra.mxu0 0.0
      %2266 = vmatprep.subr.mxu0 0.0
      %2267 = vmatpush1.msra.mxu0 0.0
      %2268 = vmatprep.subr.mxu0 0.0
      %2269 = vmatpush1.msra.mxu0 0.0
      %2270 = vmatprep.subr.mxu0 0.0
      %2271 = vmatpush1.msra.mxu0 0.0
      %2272 = vmatprep.subr.mxu0 0.0
      %2273 = vmatpush1.msra.mxu0 0.0
      %2274 = vmatprep.subr.mxu0 0.0
      %2275 = vmatpush1.msra.mxu0 0.0
      %2276 = vmatprep.subr.mxu0 0.0
      %2277 = vmatpush1.msra.mxu0 0.0
      %2278 = vmatprep.subr.mxu0 0.0
      %2279 = vmatpush1.msra.mxu0 0.0
      %2280 = vmatprep.subr.mxu0 0.0
      %2281 = vmatpush1.msra.mxu0 0.0
      %2282 = vmatprep.subr.mxu0 0.0
      %2283 = vmatpush1.msra.mxu0 0.0
      %2284 = vmatprep.subr.mxu0 0.0
      %2285 = vmatpush1.msra.mxu0 0.0
      %2286 = vmatprep.subr.mxu0 0.0
      %2287 = vmatpush1.msra.mxu0 0.0
      %2288 = vmatprep.subr.mxu0 0.0
      %2289 = vmatpush1.msra.mxu0 0.0
      %2290 = vmatprep.subr.mxu0 0.0
      %2291 = vmatpush1.msra.mxu0 0.0
      %2292 = vmatprep.subr.mxu0 0.0
      %2293 = vmatpush1.msra.mxu0 0.0
      %2294 = vmatprep.subr.mxu0 0.0
      %2295 = vmatpush1.msra.mxu0 0.0
      %2296 = vmatprep.subr.mxu0 0.0
      %2297 = vmatpush1.msra.mxu0 0.0
      %2298 = vmatprep.subr.mxu0 0.0
      %2299 = vmatpush1.msra.mxu0 0.0
      %2300 = vmatprep.mubr.f32.mxu0 0.0
      %2301 = vmatmul.mubr.f32.gmra.mrb[0].mxu0 %v2231
      %v2302 = vpop.f32.mrb[0].mxu0
      %v2303 = vadd.f32 0.0, %v2302
      %v2304 = vpop.f32.mrb[0].mxu0
      %2305 = vmatprep.mubr.f32.mxu0 0.0
      %2306 = vmatmul.mubr.f32.gmra.mrb[0].mxu0 %v2234
      %v2307 = vpop.f32.mrb[0].mxu0
      %v2308 = vadd.f32 0.0, %v2307
      %v2309 = vpop.f32.mrb[0].mxu0
      %2310 = vdwg.mxu0
      %v2312 = vsel %vm622, %v2184, 0
      %v2315 = vsel %vm622, %v2189, 0
      %v2318 = vsel %vm1584, %v2226, 0
      %2320 = vmatprep.subr.mxu0 0.0
      %2321 = vmatpush1.msra.mxu0 %v2318
      %2322 = vmatprep.subr.mxu0 0.0
      %2323 = vmatpush1.msra.mxu0 0.0
      %2324 = vmatprep.subr.mxu0 0.0
      %2325 = vmatpush1.msra.mxu0 0.0
      %2326 = vmatprep.subr.mxu0 0.0
      %2327 = vmatpush1.msra.mxu0 0.0
      %2328 = vmatprep.subr.mxu0 0.0
      %2329 = vmatpush1.msra.mxu0 0.0
      %2330 = vmatprep.subr.mxu0 0.0
      %2331 = vmatpush1.msra.mxu0 0.0
      %2332 = vmatprep.subr.mxu0 0.0
      %2333 = vmatpush1.msra.mxu0 0.0
      %2334 = vmatprep.subr.mxu0 0.0
      %2335 = vmatpush1.msra.mxu0 0.0
      %2336 = vmatprep.subr.mxu0 0.0
      %2337 = vmatpush1.msra.mxu0 0.0
      %2338 = vmatprep.subr.mxu0 0.0
      %2339 = vmatpush1.msra.mxu0 0.0
      %2340 = vmatprep.subr.mxu0 0.0
      %2341 = vmatpush1.msra.mxu0 0.0
      %2342 = vmatprep.subr.mxu0 0.0
      %2343 = vmatpush1.msra.mxu0 0.0
      %2344 = vmatprep.subr.mxu0 0.0
      %2345 = vmatpush1.msra.mxu0 0.0
      %2346 = vmatprep.subr.mxu0 0.0
      %2347 = vmatpush1.msra.mxu0 0.0
      %2348 = vmatprep.subr.mxu0 0.0
      %2349 = vmatpush1.msra.mxu0 0.0
      %2350 = vmatprep.subr.mxu0 0.0
      %2351 = vmatpush1.msra.mxu0 0.0
      %2352 = vmatprep.subr.mxu0 0.0
      %2353 = vmatpush1.msra.mxu0 0.0
      %2354 = vmatprep.subr.mxu0 0.0
      %2355 = vmatpush1.msra.mxu0 0.0
      %2356 = vmatprep.subr.mxu0 0.0
      %2357 = vmatpush1.msra.mxu0 0.0
      %2358 = vmatprep.subr.mxu0 0.0
      %2359 = vmatpush1.msra.mxu0 0.0
      %2360 = vmatprep.subr.mxu0 0.0
      %2361 = vmatpush1.msra.mxu0 0.0
      %2362 = vmatprep.subr.mxu0 0.0
      %2363 = vmatpush1.msra.mxu0 0.0
      %2364 = vmatprep.subr.mxu0 0.0
      %2365 = vmatpush1.msra.mxu0 0.0
      %2366 = vmatprep.subr.mxu0 0.0
      %2367 = vmatpush1.msra.mxu0 0.0
      %2368 = vmatprep.subr.mxu0 0.0
      %2369 = vmatpush1.msra.mxu0 0.0
      %2370 = vmatprep.subr.mxu0 0.0
      %2371 = vmatpush1.msra.mxu0 0.0
      %2372 = vmatprep.subr.mxu0 0.0
      %2373 = vmatpush1.msra.mxu0 0.0
      %2374 = vmatprep.subr.mxu0 0.0
      %2375 = vmatpush1.msra.mxu0 0.0
      %2376 = vmatprep.subr.mxu0 0.0
      %2377 = vmatpush1.msra.mxu0 0.0
      %2378 = vmatprep.subr.mxu0 0.0
      %2379 = vmatpush1.msra.mxu0 0.0
      %2380 = vmatprep.subr.mxu0 0.0
      %2381 = vmatpush1.msra.mxu0 0.0
      %2382 = vmatprep.subr.mxu0 0.0
      %2383 = vmatpush1.msra.mxu0 0.0
      %2384 = vmatprep.mubr.f32.mxu0 0.0
      %2385 = vmatmul.mubr.f32.gmra.mrb[0].mxu0 %v2312
      %v2386 = vpop.f32.mrb[0].mxu0
      %v2387 = vadd.f32 %v2303, %v2386
      %v2388 = vpop.f32.mrb[0].mxu0
      %2389 = vmatprep.mubr.f32.mxu0 0.0
      %2390 = vmatmul.mubr.f32.gmra.mrb[0].mxu0 %v2315
      %v2391 = vpop.f32.mrb[0].mxu0
      %v2392 = vadd.f32 %v2308, %v2391
      %v2393 = vpop.f32.mrb[0].mxu0
      %2394 = vdwg.mxu0
      %v2396 = vlaneseq
      %v2397 = vshrl.u32 %v2396, 7
      %v2398 = vsub.s32 0, %v2397
      %v2399 = vrot.slane %v2228, %v2398
      %v2401 = vadd.f32 %v2387, %v2399
      %v2402 = vadd.f32 %v2392, %v2399
      %v2403 = vxor.u32 %v2401, 2147483648
      %v2404 = vxor.u32 %v2402, 2147483648
      %v2405 = vmul.f32 %v2403, 1.442695
      %v2406 = vpow.pop %v2405
      %v2407 = vmul.f32 %v2404, 1.442695
      %v2408 = vpow.pop %v2407
      %v2409 = vadd.f32 %v2406, 1.0
      %v2410 = vadd.f32 %v2408, 1.0
      %v2411 = vrcp.pop %v2409
      %v2412 = vmul.f32 1.0, %v2411
      %v2413 = vrcp.pop %v2410
      %v2414 = vmul.f32 1.0, %v2413
      %v2415 = vtanh.pop %v2401
      %v2416 = vtanh.pop %v2402
      %2419 = vrot.lane.b32.xlu0 %v2224, 8
      %v2420 = vpop.permute.xlu0 %2419
      %2421 = vrot.lane.b32.xlu0 %v2225, 8
      %v2422 = vpop.permute.xlu0 %2421
      %v2425 = vmul.f32 %v2412, %v2420
      %v2426 = vmul.f32 %v2414, %v2422
      %2429 = vrot.lane.b32.xlu0 %v2415, 112
      %v2430 = vpop.permute.xlu0 %2429
      %2431 = vrot.lane.b32.xlu0 %v2416, 112
      %v2432 = vpop.permute.xlu0 %2431
      %v2435 = vmul.f32 %v2412, %v2430
      %v2436 = vmul.f32 %v2414, %v2432
      %2439 = vrot.lane.b32.xlu0 %v2435, 8
      %v2440 = vpop.permute.xlu0 %2439
      %2441 = vrot.lane.b32.xlu0 %v2436, 8
      %v2442 = vpop.permute.xlu0 %2441
      %v2445 = vadd.f32 %v2425, %v2440
      %v2446 = vadd.f32 %v2426, %v2442
      %v2447 = vtanh.pop %v2445
      %v2448 = vtanh.pop %v2446
      %2451 = vrot.lane.b32.xlu0 %v2447, 16
      %v2452 = vpop.permute.xlu0 %2451
      %2453 = vrot.lane.b32.xlu0 %v2448, 16
      %v2454 = vpop.permute.xlu0 %2453
      %v2457 = vmul.f32 %v2412, %v2452
      %v2458 = vmul.f32 %v2414, %v2454
      %2461 = vrot.lane.b32.xlu0 %v2457, 104
      %v2462 = vpop.permute.xlu0 %2461
      %2463 = vrot.lane.b32.xlu0 %v2458, 104
      %v2464 = vpop.permute.xlu0 %2463
      %v2465 = vsel %vm2229, %v2462, 0
      %v2467 = vsel %vm2229, %v2464, 0
      %2469 = vmatprep.subr.mxu0 0.0
      %2470 = vmatpush1.msra.mxu0 %v2227
      %2471 = vmatprep.subr.mxu0 0.0
      %2472 = vmatpush1.msra.mxu0 0.0
      %2473 = vmatprep.subr.mxu0 0.0
      %2474 = vmatpush1.msra.mxu0 0.0
      %2475 = vmatprep.subr.mxu0 0.0
      %2476 = vmatpush1.msra.mxu0 0.0
      %2477 = vmatprep.subr.mxu0 0.0
      %2478 = vmatpush1.msra.mxu0 0.0
      %2479 = vmatprep.subr.mxu0 0.0
      %2480 = vmatpush1.msra.mxu0 0.0
      %2481 = vmatprep.subr.mxu0 0.0
      %2482 = vmatpush1.msra.mxu0 0.0
      %2483 = vmatprep.subr.mxu0 0.0
      %2484 = vmatpush1.msra.mxu0 0.0
      %2485 = vmatprep.subr.mxu0 0.0
      %2486 = vmatpush1.msra.mxu0 0.0
      %2487 = vmatprep.subr.mxu0 0.0
      %2488 = vmatpush1.msra.mxu0 0.0
      %2489 = vmatprep.subr.mxu0 0.0
      %2490 = vmatpush1.msra.mxu0 0.0
      %2491 = vmatprep.subr.mxu0 0.0
      %2492 = vmatpush1.msra.mxu0 0.0
      %2493 = vmatprep.subr.mxu0 0.0
      %2494 = vmatpush1.msra.mxu0 0.0
      %2495 = vmatprep.subr.mxu0 0.0
      %2496 = vmatpush1.msra.mxu0 0.0
      %2497 = vmatprep.subr.mxu0 0.0
      %2498 = vmatpush1.msra.mxu0 0.0
      %2499 = vmatprep.subr.mxu0 0.0
      %2500 = vmatpush1.msra.mxu0 0.0
      %2501 = vmatprep.subr.mxu0 0.0
      %2502 = vmatpush1.msra.mxu0 0.0
      %2503 = vmatprep.subr.mxu0 0.0
      %2504 = vmatpush1.msra.mxu0 0.0
      %2505 = vmatprep.subr.mxu0 0.0
      %2506 = vmatpush1.msra.mxu0 0.0
      %2507 = vmatprep.subr.mxu0 0.0
      %2508 = vmatpush1.msra.mxu0 0.0
      %2509 = vmatprep.subr.mxu0 0.0
      %2510 = vmatpush1.msra.mxu0 0.0
      %2511 = vmatprep.subr.mxu0 0.0
      %2512 = vmatpush1.msra.mxu0 0.0
      %2513 = vmatprep.subr.mxu0 0.0
      %2514 = vmatpush1.msra.mxu0 0.0
      %2515 = vmatprep.subr.mxu0 0.0
      %2516 = vmatpush1.msra.mxu0 0.0
      %2517 = vmatprep.subr.mxu0 0.0
      %2518 = vmatpush1.msra.mxu0 0.0
      %2519 = vmatprep.subr.mxu0 0.0
      %2520 = vmatpush1.msra.mxu0 0.0
      %2521 = vmatprep.subr.mxu0 0.0
      %2522 = vmatpush1.msra.mxu0 0.0
      %2523 = vmatprep.subr.mxu0 0.0
      %2524 = vmatpush1.msra.mxu0 0.0
      %2525 = vmatprep.subr.mxu0 0.0
      %2526 = vmatpush1.msra.mxu0 0.0
      %2527 = vmatprep.subr.mxu0 0.0
      %2528 = vmatpush1.msra.mxu0 0.0
      %2529 = vmatprep.subr.mxu0 0.0
      %2530 = vmatpush1.msra.mxu0 0.0
      %2531 = vmatprep.subr.mxu0 0.0
      %2532 = vmatpush1.msra.mxu0 0.0
      %2533 = vmatprep.mubr.f32.mxu0 0.0
      %2534 = vmatmul.mubr.f32.gmra.mrb[0].mxu0 %v2465
      %v2535 = vpop.f32.mrb[0].mxu0
      %v2536 = vadd.f32 0.0, %v2535
      %v2537 = vpop.f32.mrb[0].mxu0
      %2538 = vmatprep.mubr.f32.mxu0 0.0
      %2539 = vmatmul.mubr.f32.gmra.mrb[0].mxu0 %v2467
      %v2540 = vpop.f32.mrb[0].mxu0
      %v2541 = vadd.f32 0.0, %v2540
      %v2542 = vpop.f32.mrb[0].mxu0
      %2543 = vdwg.mxu0
      %v2545 = vsel %vm622, %v2194, 0
      %v2548 = vsel %vm622, %v2199, 0
      %2550 = vmatprep.subr.mxu0 0.0
      %2551 = vmatpush1.msra.mxu0 %v2318
      %2552 = vmatprep.subr.mxu0 0.0
      %2553 = vmatpush1.msra.mxu0 0.0
      %2554 = vmatprep.subr.mxu0 0.0
      %2555 = vmatpush1.msra.mxu0 0.0
      %2556 = vmatprep.subr.mxu0 0.0
      %2557 = vmatpush1.msra.mxu0 0.0
      %2558 = vmatprep.subr.mxu0 0.0
      %2559 = vmatpush1.msra.mxu0 0.0
      %2560 = vmatprep.subr.mxu0 0.0
      %2561 = vmatpush1.msra.mxu0 0.0
      %2562 = vmatprep.subr.mxu0 0.0
      %2563 = vmatpush1.msra.mxu0 0.0
      %2564 = vmatprep.subr.mxu0 0.0
      %2565 = vmatpush1.msra.mxu0 0.0
      %2566 = vmatprep.subr.mxu0 0.0
      %2567 = vmatpush1.msra.mxu0 0.0
      %2568 = vmatprep.subr.mxu0 0.0
      %2569 = vmatpush1.msra.mxu0 0.0
      %2570 = vmatprep.subr.mxu0 0.0
      %2571 = vmatpush1.msra.mxu0 0.0
      %2572 = vmatprep.subr.mxu0 0.0
      %2573 = vmatpush1.msra.mxu0 0.0
      %2574 = vmatprep.subr.mxu0 0.0
      %2575 = vmatpush1.msra.mxu0 0.0
      %2576 = vmatprep.subr.mxu0 0.0
      %2577 = vmatpush1.msra.mxu0 0.0
      %2578 = vmatprep.subr.mxu0 0.0
      %2579 = vmatpush1.msra.mxu0 0.0
      %2580 = vmatprep.subr.mxu0 0.0
      %2581 = vmatpush1.msra.mxu0 0.0
      %2582 = vmatprep.subr.mxu0 0.0
      %2583 = vmatpush1.msra.mxu0 0.0
      %2584 = vmatprep.subr.mxu0 0.0
      %2585 = vmatpush1.msra.mxu0 0.0
      %2586 = vmatprep.subr.mxu0 0.0
      %2587 = vmatpush1.msra.mxu0 0.0
      %2588 = vmatprep.subr.mxu0 0.0
      %2589 = vmatpush1.msra.mxu0 0.0
      %2590 = vmatprep.subr.mxu0 0.0
      %2591 = vmatpush1.msra.mxu0 0.0
      %2592 = vmatprep.subr.mxu0 0.0
      %2593 = vmatpush1.msra.mxu0 0.0
      %2594 = vmatprep.subr.mxu0 0.0
      %2595 = vmatpush1.msra.mxu0 0.0
      %2596 = vmatprep.subr.mxu0 0.0
      %2597 = vmatpush1.msra.mxu0 0.0
      %2598 = vmatprep.subr.mxu0 0.0
      %2599 = vmatpush1.msra.mxu0 0.0
      %2600 = vmatprep.subr.mxu0 0.0
      %2601 = vmatpush1.msra.mxu0 0.0
      %2602 = vmatprep.subr.mxu0 0.0
      %2603 = vmatpush1.msra.mxu0 0.0
      %2604 = vmatprep.subr.mxu0 0.0
      %2605 = vmatpush1.msra.mxu0 0.0
      %2606 = vmatprep.subr.mxu0 0.0
      %2607 = vmatpush1.msra.mxu0 0.0
      %2608 = vmatprep.subr.mxu0 0.0
      %2609 = vmatpush1.msra.mxu0 0.0
      %2610 = vmatprep.subr.mxu0 0.0
      %2611 = vmatpush1.msra.mxu0 0.0
      %2612 = vmatprep.subr.mxu0 0.0
      %2613 = vmatpush1.msra.mxu0 0.0
      %2614 = vmatprep.mubr.f32.mxu0 0.0
      %2615 = vmatmul.mubr.f32.gmra.mrb[0].mxu0 %v2545
      %v2616 = vpop.f32.mrb[0].mxu0
      %v2617 = vadd.f32 %v2536, %v2616
      %v2618 = vpop.f32.mrb[0].mxu0
      %2619 = vmatprep.mubr.f32.mxu0 0.0
      %2620 = vmatmul.mubr.f32.gmra.mrb[0].mxu0 %v2548
      %v2621 = vpop.f32.mrb[0].mxu0
      %v2622 = vadd.f32 %v2541, %v2621
      %v2623 = vpop.f32.mrb[0].mxu0
      %2624 = vdwg.mxu0
      %v2625 = vadd.f32 %v2617, %v2399
      %v2626 = vadd.f32 %v2622, %v2399
      %v2627 = vxor.u32 %v2625, 2147483648
      %v2628 = vxor.u32 %v2626, 2147483648
      %v2629 = vmul.f32 %v2627, 1.442695
      %v2630 = vpow.pop %v2629
      %v2631 = vmul.f32 %v2628, 1.442695
      %v2632 = vpow.pop %v2631
      %v2633 = vadd.f32 %v2630, 1.0
      %v2634 = vadd.f32 %v2632, 1.0
      %v2635 = vrcp.pop %v2633
      %v2636 = vmul.f32 1.0, %v2635
      %v2637 = vrcp.pop %v2634
      %v2638 = vmul.f32 1.0, %v2637
      %v2639 = vtanh.pop %v2625
      %v2640 = vtanh.pop %v2626
      %v2641 = vmul.f32 %v2636, %v2445
      %v2642 = vmul.f32 %v2638, %v2446
      %2645 = vrot.lane.b32.xlu0 %v2639, 112
      %v2646 = vpop.permute.xlu0 %2645
      %2647 = vrot.lane.b32.xlu0 %v2640, 112
      %v2648 = vpop.permute.xlu0 %2647
      %v2651 = vmul.f32 %v2636, %v2646
      %v2652 = vmul.f32 %v2638, %v2648
      %2655 = vrot.lane.b32.xlu0 %v2651, 8
      %v2656 = vpop.permute.xlu0 %2655
      %2657 = vrot.lane.b32.xlu0 %v2652, 8
      %v2658 = vpop.permute.xlu0 %2657
      %v2661 = vadd.f32 %v2641, %v2656
      %v2662 = vadd.f32 %v2642, %v2658
      %v2663 = vtanh.pop %v2661
      %v2664 = vtanh.pop %v2662
      %2667 = vrot.lane.b32.xlu0 %v2663, 16
      %v2668 = vpop.permute.xlu0 %2667
      %2669 = vrot.lane.b32.xlu0 %v2664, 16
      %v2670 = vpop.permute.xlu0 %2669
      %v2673 = vmul.f32 %v2636, %v2668
      %v2674 = vmul.f32 %v2638, %v2670
      %2677 = vrot.lane.b32.xlu0 %v2673, 104
      %v2678 = vpop.permute.xlu0 %2677
      %2679 = vrot.lane.b32.xlu0 %v2674, 104
      %v2680 = vpop.permute.xlu0 %2679
      %v2681 = vsel %vm2229, %v2678, 0
      %v2683 = vsel %vm2229, %v2680, 0
      %2685 = vmatprep.subr.mxu0 0.0
      %2686 = vmatpush1.msra.mxu0 %v2227
      %2687 = vmatprep.subr.mxu0 0.0
      %2688 = vmatpush1.msra.mxu0 0.0
      %2689 = vmatprep.subr.mxu0 0.0
      %2690 = vmatpush1.msra.mxu0 0.0
      %2691 = vmatprep.subr.mxu0 0.0
      %2692 = vmatpush1.msra.mxu0 0.0
      %2693 = vmatprep.subr.mxu0 0.0
      %2694 = vmatpush1.msra.mxu0 0.0
      %2695 = vmatprep.subr.mxu0 0.0
      %2696 = vmatpush1.msra.mxu0 0.0
      %2697 = vmatprep.subr.mxu0 0.0
      %2698 = vmatpush1.msra.mxu0 0.0
      %2699 = vmatprep.subr.mxu0 0.0
      %2700 = vmatpush1.msra.mxu0 0.0
      %2701 = vmatprep.subr.mxu0 0.0
      %2702 = vmatpush1.msra.mxu0 0.0
      %2703 = vmatprep.subr.mxu0 0.0
      %2704 = vmatpush1.msra.mxu0 0.0
      %2705 = vmatprep.subr.mxu0 0.0
      %2706 = vmatpush1.msra.mxu0 0.0
      %2707 = vmatprep.subr.mxu0 0.0
      %2708 = vmatpush1.msra.mxu0 0.0
      %2709 = vmatprep.subr.mxu0 0.0
      %2710 = vmatpush1.msra.mxu0 0.0
      %2711 = vmatprep.subr.mxu0 0.0
      %2712 = vmatpush1.msra.mxu0 0.0
      %2713 = vmatprep.subr.mxu0 0.0
      %2714 = vmatpush1.msra.mxu0 0.0
      %2715 = vmatprep.subr.mxu0 0.0
      %2716 = vmatpush1.msra.mxu0 0.0
      %2717 = vmatprep.subr.mxu0 0.0
      %2718 = vmatpush1.msra.mxu0 0.0
      %2719 = vmatprep.subr.mxu0 0.0
      %2720 = vmatpush1.msra.mxu0 0.0
      %2721 = vmatprep.subr.mxu0 0.0
      %2722 = vmatpush1.msra.mxu0 0.0
      %2723 = vmatprep.subr.mxu0 0.0
      %2724 = vmatpush1.msra.mxu0 0.0
      %2725 = vmatprep.subr.mxu0 0.0
      %2726 = vmatpush1.msra.mxu0 0.0
      %2727 = vmatprep.subr.mxu0 0.0
      %2728 = vmatpush1.msra.mxu0 0.0
      %2729 = vmatprep.subr.mxu0 0.0
      %2730 = vmatpush1.msra.mxu0 0.0
      %2731 = vmatprep.subr.mxu0 0.0
      %2732 = vmatpush1.msra.mxu0 0.0
      %2733 = vmatprep.subr.mxu0 0.0
      %2734 = vmatpush1.msra.mxu0 0.0
      %2735 = vmatprep.subr.mxu0 0.0
      %2736 = vmatpush1.msra.mxu0 0.0
      %2737 = vmatprep.subr.mxu0 0.0
      %2738 = vmatpush1.msra.mxu0 0.0
      %2739 = vmatprep.subr.mxu0 0.0
      %2740 = vmatpush1.msra.mxu0 0.0
      %2741 = vmatprep.subr.mxu0 0.0
      %2742 = vmatpush1.msra.mxu0 0.0
      %2743 = vmatprep.subr.mxu0 0.0
      %2744 = vmatpush1.msra.mxu0 0.0
      %2745 = vmatprep.subr.mxu0 0.0
      %2746 = vmatpush1.msra.mxu0 0.0
      %2747 = vmatprep.subr.mxu0 0.0
      %2748 = vmatpush1.msra.mxu0 0.0
      %2749 = vmatprep.mubr.f32.mxu0 0.0
      %2750 = vmatmul.mubr.f32.gmra.mrb[0].mxu0 %v2681
      %v2751 = vpop.f32.mrb[0].mxu0
      %v2752 = vadd.f32 0.0, %v2751
      %v2753 = vpop.f32.mrb[0].mxu0
      %2754 = vmatprep.mubr.f32.mxu0 0.0
      %2755 = vmatmul.mubr.f32.gmra.mrb[0].mxu0 %v2683
      %v2756 = vpop.f32.mrb[0].mxu0
      %v2757 = vadd.f32 0.0, %v2756
      %v2758 = vpop.f32.mrb[0].mxu0
      %2759 = vdwg.mxu0
      %v2761 = vsel %vm622, %v2204, 0
      %v2764 = vsel %vm622, %v2209, 0
      %2766 = vmatprep.subr.mxu0 0.0
      %2767 = vmatpush1.msra.mxu0 %v2318
      %2768 = vmatprep.subr.mxu0 0.0
      %2769 = vmatpush1.msra.mxu0 0.0
      %2770 = vmatprep.subr.mxu0 0.0
      %2771 = vmatpush1.msra.mxu0 0.0
      %2772 = vmatprep.subr.mxu0 0.0
      %2773 = vmatpush1.msra.mxu0 0.0
      %2774 = vmatprep.subr.mxu0 0.0
      %2775 = vmatpush1.msra.mxu0 0.0
      %2776 = vmatprep.subr.mxu0 0.0
      %2777 = vmatpush1.msra.mxu0 0.0
      %2778 = vmatprep.subr.mxu0 0.0
      %2779 = vmatpush1.msra.mxu0 0.0
      %2780 = vmatprep.subr.mxu0 0.0
      %2781 = vmatpush1.msra.mxu0 0.0
      %2782 = vmatprep.subr.mxu0 0.0
      %2783 = vmatpush1.msra.mxu0 0.0
      %2784 = vmatprep.subr.mxu0 0.0
      %2785 = vmatpush1.msra.mxu0 0.0
      %2786 = vmatprep.subr.mxu0 0.0
      %2787 = vmatpush1.msra.mxu0 0.0
      %2788 = vmatprep.subr.mxu0 0.0
      %2789 = vmatpush1.msra.mxu0 0.0
      %2790 = vmatprep.subr.mxu0 0.0
      %2791 = vmatpush1.msra.mxu0 0.0
      %2792 = vmatprep.subr.mxu0 0.0
      %2793 = vmatpush1.msra.mxu0 0.0
      %2794 = vmatprep.subr.mxu0 0.0
      %2795 = vmatpush1.msra.mxu0 0.0
      %2796 = vmatprep.subr.mxu0 0.0
      %2797 = vmatpush1.msra.mxu0 0.0
      %2798 = vmatprep.subr.mxu0 0.0
      %2799 = vmatpush1.msra.mxu0 0.0
      %2800 = vmatprep.subr.mxu0 0.0
      %2801 = vmatpush1.msra.mxu0 0.0
      %2802 = vmatprep.subr.mxu0 0.0
      %2803 = vmatpush1.msra.mxu0 0.0
      %2804 = vmatprep.subr.mxu0 0.0
      %2805 = vmatpush1.msra.mxu0 0.0
      %2806 = vmatprep.subr.mxu0 0.0
      %2807 = vmatpush1.msra.mxu0 0.0
      %2808 = vmatprep.subr.mxu0 0.0
      %2809 = vmatpush1.msra.mxu0 0.0
      %2810 = vmatprep.subr.mxu0 0.0
      %2811 = vmatpush1.msra.mxu0 0.0
      %2812 = vmatprep.subr.mxu0 0.0
      %2813 = vmatpush1.msra.mxu0 0.0
      %2814 = vmatprep.subr.mxu0 0.0
      %2815 = vmatpush1.msra.mxu0 0.0
      %2816 = vmatprep.subr.mxu0 0.0
      %2817 = vmatpush1.msra.mxu0 0.0
      %2818 = vmatprep.subr.mxu0 0.0
      %2819 = vmatpush1.msra.mxu0 0.0
      %2820 = vmatprep.subr.mxu0 0.0
      %2821 = vmatpush1.msra.mxu0 0.0
      %2822 = vmatprep.subr.mxu0 0.0
      %2823 = vmatpush1.msra.mxu0 0.0
      %2824 = vmatprep.subr.mxu0 0.0
      %2825 = vmatpush1.msra.mxu0 0.0
      %2826 = vmatprep.subr.mxu0 0.0
      %2827 = vmatpush1.msra.mxu0 0.0
      %2828 = vmatprep.subr.mxu0 0.0
      %2829 = vmatpush1.msra.mxu0 0.0
      %2830 = vmatprep.mubr.f32.mxu0 0.0
      %2831 = vmatmul.mubr.f32.gmra.mrb[0].mxu0 %v2761
      %v2832 = vpop.f32.mrb[0].mxu0
      %v2833 = vadd.f32 %v2752, %v2832
      %v2834 = vpop.f32.mrb[0].mxu0
      %2835 = vmatprep.mubr.f32.mxu0 0.0
      %2836 = vmatmul.mubr.f32.gmra.mrb[0].mxu0 %v2764
      %v2837 = vpop.f32.mrb[0].mxu0
      %v2838 = vadd.f32 %v2757, %v2837
      %v2839 = vpop.f32.mrb[0].mxu0
      %2840 = vdwg.mxu0
      %v2841 = vadd.f32 %v2833, %v2399
      %v2842 = vadd.f32 %v2838, %v2399
      %v2843 = vxor.u32 %v2841, 2147483648
      %v2844 = vxor.u32 %v2842, 2147483648
      %v2845 = vmul.f32 %v2843, 1.442695
      %v2846 = vpow.pop %v2845
      %v2847 = vmul.f32 %v2844, 1.442695
      %v2848 = vpow.pop %v2847
      %v2849 = vadd.f32 %v2846, 1.0
      %v2850 = vadd.f32 %v2848, 1.0
      %v2851 = vrcp.pop %v2849
      %v2852 = vmul.f32 1.0, %v2851
      %v2853 = vrcp.pop %v2850
      %v2854 = vmul.f32 1.0, %v2853
      %v2855 = vtanh.pop %v2841
      %v2856 = vtanh.pop %v2842
      %v2857 = vmul.f32 %v2852, %v2661
      %v2858 = vmul.f32 %v2854, %v2662
      %2861 = vrot.lane.b32.xlu0 %v2855, 112
      %v2862 = vpop.permute.xlu0 %2861
      %2863 = vrot.lane.b32.xlu0 %v2856, 112
      %v2864 = vpop.permute.xlu0 %2863
      %v2867 = vmul.f32 %v2852, %v2862
      %v2868 = vmul.f32 %v2854, %v2864
      %2871 = vrot.lane.b32.xlu0 %v2867, 8
      %v2872 = vpop.permute.xlu0 %2871
      %2873 = vrot.lane.b32.xlu0 %v2868, 8
      %v2874 = vpop.permute.xlu0 %2873
      %v2877 = vadd.f32 %v2857, %v2872
      %v2878 = vadd.f32 %v2858, %v2874
      %v2879 = vtanh.pop %v2877
      %v2880 = vtanh.pop %v2878
      %2883 = vrot.lane.b32.xlu0 %v2879, 16
      %v2884 = vpop.permute.xlu0 %2883
      %2885 = vrot.lane.b32.xlu0 %v2880, 16
      %v2886 = vpop.permute.xlu0 %2885
      %v2889 = vmul.f32 %v2852, %v2884
      %v2890 = vmul.f32 %v2854, %v2886
      %2893 = vrot.lane.b32.xlu0 %v2889, 104
      %v2894 = vpop.permute.xlu0 %2893
      %2895 = vrot.lane.b32.xlu0 %v2890, 104
      %v2896 = vpop.permute.xlu0 %2895
      %v2897 = vsel %vm2229, %v2894, 0
      %v2899 = vsel %vm2229, %v2896, 0
      %2901 = vmatprep.subr.mxu0 0.0
      %2902 = vmatpush1.msra.mxu0 %v2227
      %2903 = vmatprep.subr.mxu0 0.0
      %2904 = vmatpush1.msra.mxu0 0.0
      %2905 = vmatprep.subr.mxu0 0.0
      %2906 = vmatpush1.msra.mxu0 0.0
      %2907 = vmatprep.subr.mxu0 0.0
      %2908 = vmatpush1.msra.mxu0 0.0
      %2909 = vmatprep.subr.mxu0 0.0
      %2910 = vmatpush1.msra.mxu0 0.0
      %2911 = vmatprep.subr.mxu0 0.0
      %2912 = vmatpush1.msra.mxu0 0.0
      %2913 = vmatprep.subr.mxu0 0.0
      %2914 = vmatpush1.msra.mxu0 0.0
      %2915 = vmatprep.subr.mxu0 0.0
      %2916 = vmatpush1.msra.mxu0 0.0
      %2917 = vmatprep.subr.mxu0 0.0
      %2918 = vmatpush1.msra.mxu0 0.0
      %2919 = vmatprep.subr.mxu0 0.0
      %2920 = vmatpush1.msra.mxu0 0.0
      %2921 = vmatprep.subr.mxu0 0.0
      %2922 = vmatpush1.msra.mxu0 0.0
      %2923 = vmatprep.subr.mxu0 0.0
      %2924 = vmatpush1.msra.mxu0 0.0
      %2925 = vmatprep.subr.mxu0 0.0
      %2926 = vmatpush1.msra.mxu0 0.0
      %2927 = vmatprep.subr.mxu0 0.0
      %2928 = vmatpush1.msra.mxu0 0.0
      %2929 = vmatprep.subr.mxu0 0.0
      %2930 = vmatpush1.msra.mxu0 0.0
      %2931 = vmatprep.subr.mxu0 0.0
      %2932 = vmatpush1.msra.mxu0 0.0
      %2933 = vmatprep.subr.mxu0 0.0
      %2934 = vmatpush1.msra.mxu0 0.0
      %2935 = vmatprep.subr.mxu0 0.0
      %2936 = vmatpush1.msra.mxu0 0.0
      %2937 = vmatprep.subr.mxu0 0.0
      %2938 = vmatpush1.msra.mxu0 0.0
      %2939 = vmatprep.subr.mxu0 0.0
      %2940 = vmatpush1.msra.mxu0 0.0
      %2941 = vmatprep.subr.mxu0 0.0
      %2942 = vmatpush1.msra.mxu0 0.0
      %2943 = vmatprep.subr.mxu0 0.0
      %2944 = vmatpush1.msra.mxu0 0.0
      %2945 = vmatprep.subr.mxu0 0.0
      %2946 = vmatpush1.msra.mxu0 0.0
      %2947 = vmatprep.subr.mxu0 0.0
      %2948 = vmatpush1.msra.mxu0 0.0
      %2949 = vmatprep.subr.mxu0 0.0
      %2950 = vmatpush1.msra.mxu0 0.0
      %2951 = vmatprep.subr.mxu0 0.0
      %2952 = vmatpush1.msra.mxu0 0.0
      %2953 = vmatprep.subr.mxu0 0.0
      %2954 = vmatpush1.msra.mxu0 0.0
      %2955 = vmatprep.subr.mxu0 0.0
      %2956 = vmatpush1.msra.mxu0 0.0
      %2957 = vmatprep.subr.mxu0 0.0
      %2958 = vmatpush1.msra.mxu0 0.0
      %2959 = vmatprep.subr.mxu0 0.0
      %2960 = vmatpush1.msra.mxu0 0.0
      %2961 = vmatprep.subr.mxu0 0.0
      %2962 = vmatpush1.msra.mxu0 0.0
      %2963 = vmatprep.subr.mxu0 0.0
      %2964 = vmatpush1.msra.mxu0 0.0
      %2965 = vmatprep.mubr.f32.mxu0 0.0
      %2966 = vmatmul.mubr.f32.gmra.mrb[0].mxu0 %v2897
      %v2967 = vpop.f32.mrb[0].mxu0
      %v2968 = vadd.f32 0.0, %v2967
      %v2969 = vpop.f32.mrb[0].mxu0
      %2970 = vmatprep.mubr.f32.mxu0 0.0
      %2971 = vmatmul.mubr.f32.gmra.mrb[0].mxu0 %v2899
      %v2972 = vpop.f32.mrb[0].mxu0
      %v2973 = vadd.f32 0.0, %v2972
      %v2974 = vpop.f32.mrb[0].mxu0
      %2975 = vdwg.mxu0
      %v2977 = vsel %vm622, %v2214, 0
      %v2980 = vsel %vm622, %v2219, 0
      %2982 = vmatprep.subr.mxu0 0.0
      %2983 = vmatpush1.msra.mxu0 %v2318
      %2984 = vmatprep.subr.mxu0 0.0
      %2985 = vmatpush1.msra.mxu0 0.0
      %2986 = vmatprep.subr.mxu0 0.0
      %2987 = vmatpush1.msra.mxu0 0.0
      %2988 = vmatprep.subr.mxu0 0.0
      %2989 = vmatpush1.msra.mxu0 0.0
      %2990 = vmatprep.subr.mxu0 0.0
      %2991 = vmatpush1.msra.mxu0 0.0
      %2992 = vmatprep.subr.mxu0 0.0
      %2993 = vmatpush1.msra.mxu0 0.0
      %2994 = vmatprep.subr.mxu0 0.0
      %2995 = vmatpush1.msra.mxu0 0.0
      %2996 = vmatprep.subr.mxu0 0.0
      %2997 = vmatpush1.msra.mxu0 0.0
      %2998 = vmatprep.subr.mxu0 0.0
      %2999 = vmatpush1.msra.mxu0 0.0
      %3000 = vmatprep.subr.mxu0 0.0
      %3001 = vmatpush1.msra.mxu0 0.0
      %3002 = vmatprep.subr.mxu0 0.0
      %3003 = vmatpush1.msra.mxu0 0.0
      %3004 = vmatprep.subr.mxu0 0.0
      %3005 = vmatpush1.msra.mxu0 0.0
      %3006 = vmatprep.subr.mxu0 0.0
      %3007 = vmatpush1.msra.mxu0 0.0
      %3008 = vmatprep.subr.mxu0 0.0
      %3009 = vmatpush1.msra.mxu0 0.0
      %3010 = vmatprep.subr.mxu0 0.0
      %3011 = vmatpush1.msra.mxu0 0.0
      %3012 = vmatprep.subr.mxu0 0.0
      %3013 = vmatpush1.msra.mxu0 0.0
      %3014 = vmatprep.subr.mxu0 0.0
      %3015 = vmatpush1.msra.mxu0 0.0
      %3016 = vmatprep.subr.mxu0 0.0
      %3017 = vmatpush1.msra.mxu0 0.0
      %3018 = vmatprep.subr.mxu0 0.0
      %3019 = vmatpush1.msra.mxu0 0.0
      %3020 = vmatprep.subr.mxu0 0.0
      %3021 = vmatpush1.msra.mxu0 0.0
      %3022 = vmatprep.subr.mxu0 0.0
      %3023 = vmatpush1.msra.mxu0 0.0
      %3024 = vmatprep.subr.mxu0 0.0
      %3025 = vmatpush1.msra.mxu0 0.0
      %3026 = vmatprep.subr.mxu0 0.0
      %3027 = vmatpush1.msra.mxu0 0.0
      %3028 = vmatprep.subr.mxu0 0.0
      %3029 = vmatpush1.msra.mxu0 0.0
      %3030 = vmatprep.subr.mxu0 0.0
      %3031 = vmatpush1.msra.mxu0 0.0
      %3032 = vmatprep.subr.mxu0 0.0
      %3033 = vmatpush1.msra.mxu0 0.0
      %3034 = vmatprep.subr.mxu0 0.0
      %3035 = vmatpush1.msra.mxu0 0.0
      %3036 = vmatprep.subr.mxu0 0.0
      %3037 = vmatpush1.msra.mxu0 0.0
      %3038 = vmatprep.subr.mxu0 0.0
      %3039 = vmatpush1.msra.mxu0 0.0
      %3040 = vmatprep.subr.mxu0 0.0
      %3041 = vmatpush1.msra.mxu0 0.0
      %3042 = vmatprep.subr.mxu0 0.0
      %3043 = vmatpush1.msra.mxu0 0.0
      %3044 = vmatprep.subr.mxu0 0.0
      %3045 = vmatpush1.msra.mxu0 0.0
      %3046 = vmatprep.mubr.f32.mxu0 0.0
      %3047 = vmatmul.mubr.f32.gmra.mrb[0].mxu0 %v2977
      %v3048 = vpop.f32.mrb[0].mxu0
      %v3049 = vadd.f32 %v2968, %v3048
      %v3050 = vpop.f32.mrb[0].mxu0
      %3051 = vmatprep.mubr.f32.mxu0 0.0
      %3052 = vmatmul.mubr.f32.gmra.mrb[0].mxu0 %v2980
      %v3053 = vpop.f32.mrb[0].mxu0
      %v3054 = vadd.f32 %v2973, %v3053
      %v3055 = vpop.f32.mrb[0].mxu0
      %3056 = vdwg.mxu0
      %v3057 = vadd.f32 %v3049, %v2399
      %v3058 = vadd.f32 %v3054, %v2399
      %v3059 = vxor.u32 %v3057, 2147483648
      %v3060 = vxor.u32 %v3058, 2147483648
      %v3061 = vmul.f32 %v3059, 1.442695
      %v3062 = vpow.pop %v3061
      %v3063 = vmul.f32 %v3060, 1.442695
      %v3064 = vpow.pop %v3063
      %v3065 = vadd.f32 %v3062, 1.0
      %v3066 = vadd.f32 %v3064, 1.0
      %v3067 = vrcp.pop %v3065
      %v3068 = vmul.f32 1.0, %v3067
      %v3069 = vrcp.pop %v3066
      %v3070 = vmul.f32 1.0, %v3069
      %v3071 = vtanh.pop %v3057
      %v3072 = vtanh.pop %v3058
      %v3073 = vmul.f32 %v3068, %v2877
      %v3074 = vmul.f32 %v3070, %v2878
      %3077 = vrot.lane.b32.xlu0 %v3071, 112
      %v3078 = vpop.permute.xlu0 %3077
      %3079 = vrot.lane.b32.xlu0 %v3072, 112
      %v3080 = vpop.permute.xlu0 %3079
      %v3083 = vmul.f32 %v3068, %v3078
      %v3084 = vmul.f32 %v3070, %v3080
      %3087 = vrot.lane.b32.xlu0 %v3083, 8
      %v3088 = vpop.permute.xlu0 %3087
      %3089 = vrot.lane.b32.xlu0 %v3084, 8
      %v3090 = vpop.permute.xlu0 %3089
      %v3093 = vadd.f32 %v3073, %v3088
      %v3094 = vadd.f32 %v3074, %v3090
      %v3095 = vtanh.pop %v3093
      %v3096 = vtanh.pop %v3094
      %3099 = vrot.lane.b32.xlu0 %v3095, 16
      %v3100 = vpop.permute.xlu0 %3099
      %3101 = vrot.lane.b32.xlu0 %v3096, 16
      %v3102 = vpop.permute.xlu0 %3101
      %v3105 = vmul.f32 %v3068, %v3100
      %v3106 = vmul.f32 %v3070, %v3102
      %v3107 = vld [vmem:[%s11] sm:$0x1]
      %v3108 = vld [vmem:[%s12] sm:$0x1]
      %v3109 = vld [vmem:[%s13] sm:$0x1]
      %v3110 = vld [vmem:[%s14] sm:$0x1]
      %v3112 = vlaneseq
      %v3113 = vshrl.u32 %v3112, 7
      %v3114 = vsub.s32 0, %v3113
      %v3115 = vrot.slane %v3107, %v3114
      %v3117 = vmul.f32 %v559, %v3115
      %v3118 = vmul.f32 %v564, %v3115
      %v3119 = vmul.f32 %v569, %v3115
      %v3120 = vmul.f32 %v574, %v3115
      %v3121 = vmul.f32 %v579, %v3115
      %v3122 = vmul.f32 %v584, %v3115
      %v3123 = vmul.f32 %v589, %v3115
      %v3124 = vmul.f32 %v594, %v3115
      %v3126 = vlaneseq
      %v3127 = vshrl.u32 %v3126, 7
      %v3128 = vsub.s32 0, %v3127
      %v3129 = vrot.slane %v3108, %v3128
      %v3131 = vadd.f32 %v3117, %v3129
      %v3132 = vadd.f32 %v3118, %v3129
      %v3133 = vadd.f32 %v3119, %v3129
      %v3134 = vadd.f32 %v3120, %v3129
      %v3135 = vadd.f32 %v3121, %v3129
      %v3136 = vadd.f32 %v3122, %v3129
      %v3137 = vadd.f32 %v3123, %v3129
      %v3138 = vadd.f32 %v3124, %v3129
      %3141 = vrot.lane.b32.xlu0 %v3105, 104
      %v3142 = vpop.permute.xlu0 %3141
      %3143 = vrot.lane.b32.xlu0 %v3106, 104
      %v3144 = vpop.permute.xlu0 %3143
      %v3153 = vadd.f32 %v3131, %v2462
      %v3154 = vadd.f32 %v3132, %v2464
      %v3155 = vadd.f32 %v3133, %v2678
      %v3156 = vadd.f32 %v3134, %v2680
      %v3157 = vadd.f32 %v3135, %v2894
      %v3158 = vadd.f32 %v3136, %v2896
      %v3159 = vadd.f32 %v3137, %v3142
      %v3160 = vadd.f32 %v3138, %v3144
      %v3161 = vmax.f32 %v3153, 0.0
      %v3162 = vmax.f32 %v3154, 0.0
      %v3163 = vmax.f32 %v3155, 0.0
      %v3164 = vmax.f32 %v3156, 0.0
      %v3165 = vmax.f32 %v3157, 0.0
      %v3166 = vmax.f32 %v3158, 0.0
      %v3167 = vmax.f32 %v3159, 0.0
      %v3168 = vmax.f32 %v3160, 0.0
      %v3169 = vsel %vm2229, %v3161, 0.0
      %3170 = vadd.xlane.f32.xlu0 %v3169
      %v3171 = vpop.xlane.xlu0 %3170
      %v3172 = vsel %vm2229, %v3162, 0.0
      %3173 = vadd.xlane.f32.xlu0 %v3172
      %v3174 = vpop.xlane.xlu0 %3173
      %v3175 = vsel %vm2229, %v3163, 0.0
      %3176 = vadd.xlane.f32.xlu0 %v3175
      %v3177 = vpop.xlane.xlu0 %3176
      %v3178 = vsel %vm2229, %v3164, 0.0
      %3179 = vadd.xlane.f32.xlu0 %v3178
      %v3180 = vpop.xlane.xlu0 %3179
      %v3181 = vsel %vm2229, %v3165, 0.0
      %3182 = vadd.xlane.f32.xlu0 %v3181
      %v3183 = vpop.xlane.xlu0 %3182
      %v3184 = vsel %vm2229, %v3166, 0.0
      %3185 = vadd.xlane.f32.xlu0 %v3184
      %v3186 = vpop.xlane.xlu0 %3185
      %v3187 = vsel %vm2229, %v3167, 0.0
      %3188 = vadd.xlane.f32.xlu0 %v3187
      %v3189 = vpop.xlane.xlu0 %3188
      %v3190 = vsel %vm2229, %v3168, 0.0
      %3191 = vadd.xlane.f32.xlu0 %v3190
      %v3192 = vpop.xlane.xlu0 %3191
      %v3193 = vrcp.pop 8.0
      %v3194 = vmul.f32 %v3171, %v3193
      %v3195 = vmul.f32 %v3174, %v3193
      %v3196 = vmul.f32 %v3177, %v3193
      %v3197 = vmul.f32 %v3180, %v3193
      %v3198 = vmul.f32 %v3183, %v3193
      %v3199 = vmul.f32 %v3186, %v3193
      %v3200 = vmul.f32 %v3189, %v3193
      %v3201 = vmul.f32 %v3192, %v3193
      %v3202 = vsub.f32 %v3161, %v3194
      %v3203 = vsub.f32 %v3162, %v3195
      %v3204 = vsub.f32 %v3163, %v3196
      %v3205 = vsub.f32 %v3164, %v3197
      %v3206 = vsub.f32 %v3165, %v3198
      %v3207 = vsub.f32 %v3166, %v3199
      %v3208 = vsub.f32 %v3167, %v3200
      %v3209 = vsub.f32 %v3168, %v3201
      %v3210 = vmul.f32 %v3202, %v3202
      %v3211 = vmul.f32 %v3203, %v3203
      %v3212 = vmul.f32 %v3204, %v3204
      %v3213 = vmul.f32 %v3205, %v3205
      %v3214 = vmul.f32 %v3206, %v3206
      %v3215 = vmul.f32 %v3207, %v3207
      %v3216 = vmul.f32 %v3208, %v3208
      %v3217 = vmul.f32 %v3209, %v3209
      %v3218 = vsel %vm2229, %v3210, 0.0
      %3219 = vadd.xlane.f32.xlu0 %v3218
      %v3220 = vpop.xlane.xlu0 %3219
      %v3221 = vsel %vm2229, %v3211, 0.0
      %3222 = vadd.xlane.f32.xlu0 %v3221
      %v3223 = vpop.xlane.xlu0 %3222
      %v3224 = vsel %vm2229, %v3212, 0.0
      %3225 = vadd.xlane.f32.xlu0 %v3224
      %v3226 = vpop.xlane.xlu0 %3225
      %v3227 = vsel %vm2229, %v3213, 0.0
      %3228 = vadd.xlane.f32.xlu0 %v3227
      %v3229 = vpop.xlane.xlu0 %3228
      %v3230 = vsel %vm2229, %v3214, 0.0
      %3231 = vadd.xlane.f32.xlu0 %v3230
      %v3232 = vpop.xlane.xlu0 %3231
      %v3233 = vsel %vm2229, %v3215, 0.0
      %3234 = vadd.xlane.f32.xlu0 %v3233
      %v3235 = vpop.xlane.xlu0 %3234
      %v3236 = vsel %vm2229, %v3216, 0.0
      %3237 = vadd.xlane.f32.xlu0 %v3236
      %v3238 = vpop.xlane.xlu0 %3237
      %v3239 = vsel %vm2229, %v3217, 0.0
      %3240 = vadd.xlane.f32.xlu0 %v3239
      %v3241 = vpop.xlane.xlu0 %3240
      %v3242 = vmul.f32 %v3220, %v3193
      %v3243 = vmul.f32 %v3223, %v3193
      %v3244 = vmul.f32 %v3226, %v3193
      %v3245 = vmul.f32 %v3229, %v3193
      %v3246 = vmul.f32 %v3232, %v3193
      %v3247 = vmul.f32 %v3235, %v3193
      %v3248 = vmul.f32 %v3238, %v3193
      %v3249 = vmul.f32 %v3241, %v3193
      %v3250 = vadd.f32 %v3242, 1e-05
      %v3251 = vadd.f32 %v3243, 1e-05
      %v3252 = vadd.f32 %v3244, 1e-05
      %v3253 = vadd.f32 %v3245, 1e-05
      %v3254 = vadd.f32 %v3246, 1e-05
      %v3255 = vadd.f32 %v3247, 1e-05
      %v3256 = vadd.f32 %v3248, 1e-05
      %v3257 = vadd.f32 %v3249, 1e-05
      %v3258 = vrsqrt.pop %v3250
      %v3259 = vrsqrt.pop %v3251
      %v3260 = vrsqrt.pop %v3252
      %v3261 = vrsqrt.pop %v3253
      %v3262 = vrsqrt.pop %v3254
      %v3263 = vrsqrt.pop %v3255
      %v3264 = vrsqrt.pop %v3256
      %v3265 = vrsqrt.pop %v3257
      %v3266 = vmul.f32 %v3202, %v3258
      %v3267 = vmul.f32 %v3203, %v3259
      %v3268 = vmul.f32 %v3204, %v3260
      %v3269 = vmul.f32 %v3205, %v3261
      %v3270 = vmul.f32 %v3206, %v3262
      %v3271 = vmul.f32 %v3207, %v3263
      %v3272 = vmul.f32 %v3208, %v3264
      %v3273 = vmul.f32 %v3209, %v3265
      %v3275 = vlaneseq
      %v3276 = vshrl.u32 %v3275, 7
      %v3277 = vsub.s32 0, %v3276
      %v3278 = vrot.slane %v3109, %v3277
      %v3280 = vmul.f32 %v3266, %v3278
      %v3281 = vmul.f32 %v3267, %v3278
      %v3282 = vmul.f32 %v3268, %v3278
      %v3283 = vmul.f32 %v3269, %v3278
      %v3284 = vmul.f32 %v3270, %v3278
      %v3285 = vmul.f32 %v3271, %v3278
      %v3286 = vmul.f32 %v3272, %v3278
      %v3287 = vmul.f32 %v3273, %v3278
      %v3289 = vlaneseq
      %v3290 = vshrl.u32 %v3289, 7
      %v3291 = vsub.s32 0, %v3290
      %v3292 = vrot.slane %v3110, %v3291
      %v3294 = vadd.f32 %v3280, %v3292
      %v3295 = vadd.f32 %v3281, %v3292
      %v3296 = vadd.f32 %v3282, %v3292
      %v3297 = vadd.f32 %v3283, %v3292
      %v3298 = vadd.f32 %v3284, %v3292
      %v3299 = vadd.f32 %v3285, %v3292
      %v3300 = vadd.f32 %v3286, %v3292
      %v3301 = vadd.f32 %v3287, %v3292
      %3302 = vst.msk [vmem:[%s534] sm:$0xff] %vm2229, %v3294
      %3303 = vst.msk [vmem:[%s534 + $0x8] sm:$0xff] %vm2229, %v3295
      %3304 = vst.msk [vmem:[%s534 + $0x10] sm:$0xff] %vm2229, %v3296
      %3305 = vst.msk [vmem:[%s534 + $0x18] sm:$0xff] %vm2229, %v3297
      %3306 = vst.msk [vmem:[%s534 + $0x20] sm:$0xff] %vm2229, %v3298
      %3307 = vst.msk [vmem:[%s534 + $0x28] sm:$0xff] %vm2229, %v3299
      %3308 = vst.msk [vmem:[%s534 + $0x30] sm:$0xff] %vm2229, %v3300
      %3309 = vst.msk [vmem:[%s534 + $0x38] sm:$0xff] %vm2229, %v3301
      %p3310 = scmp.lt.s32.totalorder %s26, 1
      %s3311 = scalar_select %p3310, %s26, 1
      %s3312 = smul.addr %s3311, 8
      %s3313 = smul.addr %s3312, 8
      %s3314 = scalar_lea.vmem %s15, %s3313
      // Predicated region
      $region81: #{_lambda_.2} parent=79 // pred_check
        %p3315 = pneg %p374
      $region82: #{_lambda_.2} parent=79 // pred_check_branch
        %3317 = sbr.rel (%p3315) target = $region84
      $region83: #{_lambda_.2} parent=79 // pred_region
        _
      $region84: #{_lambda_.2} parent=79 // pred_fallthru
        _
    $region80: #{_lambda_.2} parent=5 // pred_fallthru
      _
    %p3318 = scmp.le.s32.totalorder 2, %s21
    // Predicated region
    $region85: #{_lambda_.2} parent=5 // pred_check
      %p3319 = pneg %p3318
    $region86: #{_lambda_.2} parent=5 // pred_check_branch
      %3321 = sbr.rel (%p3319) target = $region88
    $region87: #{_lambda_.2} parent=5 // pred_region
      %s3322 = ssub.s32 %s21, 2
      // Predicated region
      $region89: #{_lambda_.2} parent=87 // pred_check
        %p3323 = pneg %p380
      $region90: #{_lambda_.2} parent=87 // pred_check_branch
        %3325 = sbr.rel (%p3323) target = $region92
      $region91: #{_lambda_.2} parent=87 // pred_region
        %p3326 = scmp.lt.s32.totalorder %s27, 1
        %s3327 = scalar_select %p3326, %s27, 1
        %s3328 = smul.addr %s3327, 8
        %s3329 = smul.addr %s3328, 8
        %s3330 = scalar_lea.vmem %s15, %s3329
      $region92: #{_lambda_.2} parent=87 // pred_fallthru
        _
    $region88: #{_lambda_.2} parent=5 // pred_fallthru
      _
  $region6: #{_lambda_.2} parent=0 // loop_footer
    %s25 = sadd.s32 1, %s21
  $region7: #{_lambda_.2} parent=0 // loop_footer_branch
    %20 = sbr.rel target = $region3
  $region8: #{_lambda_.2} parent=0 // loop_exit
    _

// kernel: _lambda_.3
$region0: #{_lambda_.3}
  #allocation0 [shape = 'u32[]', space=smem, size = 0x4, offset = 0x4, fixed_abs, tag = 'smem constant byte address 0x4 - core index']
  #allocation1 [shape = 'u32[144,128]{1,0:T(1,128)}', space=vmem, size = 0x12000, scoped, tag = 'internal scratch']
  #allocation2 [shape = 'f32[1,1]{1,0:T(1,128)S(1)}', space=vmem, size = 0x200, scoped, tag = 'scoped memory for _lambda_.3']
  #allocation3 [shape = 'f32[1,1]{1,0:T(1,128)S(1)}', space=vmem, size = 0x200, scoped, tag = 'scoped memory for _lambda_.3']
  %s0 = inlined_call_operand.vmem [shape: f32[2,64,8], index: 0, kind: input, shape index: {}]
  %s1 = inlined_call_operand.vmem [shape: f32[64,64], index: 1, kind: input, shape index: {}]
  %s2 = inlined_call_operand.vmem [shape: f32[8,16], index: 2, kind: input, shape index: {}]
  %s3 = inlined_call_operand.vmem [shape: f32[2,16], index: 3, kind: input, shape index: {}]
  %s4 = inlined_call_operand.vmem [shape: f32[2,8,8], index: 4, kind: input, shape index: {}]
  %s5 = inlined_call_operand.vmem [shape: f32[1,16], index: 5, kind: input, shape index: {}]
  %s6 = inlined_call_operand.vmem [shape: f32[8,32], index: 6, kind: input, shape index: {}]
  %s7 = inlined_call_operand.vmem [shape: f32[8,32], index: 7, kind: input, shape index: {}]
  %s8 = inlined_call_operand.vmem [shape: f32[1,32], index: 8, kind: input, shape index: {}]
  %s9 = inlined_call_operand.vmem [shape: f32[2,16,8], index: 9, kind: input, shape index: {}]
  %s10 = inlined_call_operand.vmem [shape: f32[2,16,8], index: 10, kind: input, shape index: {}]
  %s11 = inlined_call_operand.vmem [shape: f32[8,8], index: 11, kind: input, shape index: {}]
  %s12 = inlined_call_operand.vmem [shape: f32[1,8], index: 12, kind: input, shape index: {}]
  %s13 = inlined_call_operand.vmem [shape: f32[1,8], index: 13, kind: input, shape index: {}]
  %s14 = inlined_call_operand.vmem [shape: f32[1,8], index: 14, kind: input, shape index: {}]
  %s15 = inlined_call_operand.vmem [shape: f32[2,16,2], index: 15, kind: input, shape index: {}]
  %s16 = inlined_call_operand.vmem [shape: f32[1,2], index: 16, kind: input, shape index: {}]
  %s17 = inlined_call_operand.<no memory space> [shape: f32[1,1], index: 17, kind: input, shape index: {}]
  %s18 = inlined_call_operand.vmem [shape: f32[9,10], index: 18, kind: input, shape index: {}]
  %s19 = inlined_call_operand.vmem [shape: f32[1,10], index: 19, kind: input, shape index: {}]
  %s20 = inlined_call_operand.vmem [shape: f32[1,10], index: 20, kind: input, shape index: {}]
  %s21 = inlined_call_operand.<no memory space> [shape: f32[1,1], index: 21, kind: input, shape index: {}]
  %s22 = inlined_call_operand.vmem [shape: f32[2,16,1], index: 22, kind: output, shape index: {}]
  %s23 = sld [smem:[#allocation0]]
  $region121: #{_lambda_.3} parent=0
    _
  %s25 = ssub.s32 1, %s23
  %s26 = scalar_select 0, %s25, %s23
  %v27 = vstv %s17
  %28 = vst [vmem:[#allocation2] sm:$0x1] %v27
  %v29 = vstv %s21
  %30 = vst [vmem:[#allocation3] sm:$0x1] %v29
  loop: start=0, step=1, limit=4
  $region2: #{_lambda_.3} parent=0 // loop_pre_header
    _
  $region3: #{_lambda_.3} parent=0 // loop_header
    %s32 = sphi 0, %s36
    %p33 = scmp.ge.s32.totalorder %s32, 4
    %s42 = sphi 0, %s44
    %s45 = sphi 0, %s42
    %s46 = sphi 0, %s45
    %s62 = sphi 0, %s46
    %s66 = sphi 0, %s66
    %s68 = sphi 0, %s66
    %s69 = sphi 0, %s68
    %s83 = sphi 0, %s69
    %s87 = sphi 0, %s87
    %s89 = sphi 0, %s87
    %s90 = sphi 0, %s89
    %s104 = sphi 0, %s90
    %s108 = sphi 0, %s108
    %s110 = sphi 0, %s108
    %s111 = sphi 0, %s110
    %s125 = sphi 0, %s111
    %s129 = sphi 0, %s129
    %s131 = sphi 0, %s129
    %s132 = sphi 0, %s131
    %s146 = sphi 0, %s132
    %s150 = sphi 0, %s150
    %s152 = sphi 0, %s150
    %s153 = sphi 0, %s152
    %s167 = sphi 0, %s153
    %s171 = sphi 0, %s171
    %s173 = sphi 0, %s171
    %s174 = sphi 0, %s173
    %s188 = sphi 0, %s174
    %s192 = sphi 0, %s192
    %s194 = sphi 0, %s192
    %s195 = sphi 0, %s194
    %s209 = sphi 0, %s195
    %s213 = sphi 0, %s213
    %s215 = sphi 0, %s213
    %s216 = sphi 0, %s215
    %s230 = sphi 0, %s216
    %s236 = sphi 0, %s238
    %s239 = sphi 0, %s236
    %s240 = sphi 0, %s239
    %s256 = sphi 0, %s240
    %s262 = sphi 0, %s264
    %s265 = sphi 0, %s262
    %s266 = sphi 0, %s265
    %s282 = sphi 0, %s266
    %s286 = sphi 0, %s286
    %s288 = sphi 0, %s286
    %s289 = sphi 0, %s288
    %s303 = sphi 0, %s289
    %s307 = sphi 0, %s307
    %s309 = sphi 0, %s307
    %s310 = sphi 0, %s309
    %s324 = sphi 0, %s310
    %s328 = sphi 0, %s328
    %s330 = sphi 0, %s328
    %s331 = sphi 0, %s330
    %s345 = sphi 0, %s331
    %s349 = sphi 0, %s349
    %s351 = sphi 0, %s349
    %s352 = sphi 0, %s351
    %s366 = sphi 0, %s352
    %s372 = sphi 0, %s374
    %s375 = sphi 0, %s372
    %s376 = sphi 0, %s375
    %s392 = sphi 0, %s376
    %s396 = sphi 0, %s396
    %s398 = sphi 0, %s396
    %s399 = sphi 0, %s398
    %s413 = sphi 0, %s399
    %s417 = sphi 0, %s417
    %s419 = sphi 0, %s417
    %s420 = sphi 0, %s419
    %s434 = sphi 0, %s420
    %s438 = sphi 0, %s438
    %s440 = sphi 0, %s438
    %s441 = sphi 0, %s440
    %s455 = sphi 0, %s441
    %s459 = sphi 0, %s459
    %s461 = sphi 0, %s459
    %s462 = sphi 0, %s461
    %s476 = sphi 0, %s462
    %s480 = sphi 0, %s480
    %s482 = sphi 0, %s480
    %s483 = sphi 0, %s482
    %s497 = sphi 0, %s483
    %s501 = sphi 0, %s501
    %s503 = sphi 0, %s501
    %s504 = sphi 0, %s503
    %s518 = sphi 0, %s504
    %s524 = sphi 0, %s526
    %s527 = sphi 0, %s524
    %s528 = sphi 0, %s527
    %s544 = sphi 0, %s528
  $region4: #{_lambda_.3} parent=0 // loop_header_branch
    %35 = sbr.rel (%p33) target = $region8
  $region5: #{_lambda_.3} parent=0 // loop_body
    %s37 = ssub.s32 %s32, 1
    %s38 = ssub.s32 %s32, 2
    %s39 = sadd.s32 %s32, 1
    %s40 = ssub.s32 %s32, %s39
    %p41 = scmp.eq.s32.totalorder %s40, 0
    %s43 = sadd.s32 %s42, 1
    %s44 = scalar_select %p41, %s42, %s43
    %p47 = pneg %p41
    %p48 = scmp.eq.s32.totalorder %s32, 1
    %p49 = por %p47, %p48
    %p50 = scmp.ne.s32.totalorder %s42, %s45
    %p51 = scmp.eq.s32.totalorder %s32, 0
    %p52 = por %p50, %p51
    %p53 = scmp.ne.s32.totalorder %s42, %s45
    %p54 = scmp.eq.s32.totalorder %s37, 1
    %p55 = por %p53, %p54
    %p56 = scmp.ne.s32.totalorder %s45, %s46
    %p57 = scmp.eq.s32.totalorder %s37, 0
    %p58 = por %p56, %p57
    %p59 = scmp.ne.s32.totalorder %s45, %s46
    %p60 = scmp.eq.s32.totalorder %s38, 1
    %p61 = por %p59, %p60
    %p63 = scmp.ne.s32.totalorder %s46, %s62
    %p64 = scmp.eq.s32.totalorder %s38, 0
    %p65 = por %p63, %p64
    %s67 = sadd.s32 %s66, 1
    %p70 = scmp.eq.s32.totalorder %s32, 1
    %p71 = scmp.ne.s32.totalorder %s66, %s68
    %p72 = scmp.eq.s32.totalorder %s32, 0
    %p73 = por %p71, %p72
    %p74 = scmp.ne.s32.totalorder %s66, %s68
    %p75 = scmp.eq.s32.totalorder %s37, 1
    %p76 = por %p74, %p75
    %p77 = scmp.ne.s32.totalorder %s68, %s69
    %p78 = scmp.eq.s32.totalorder %s37, 0
    %p79 = por %p77, %p78
    %p80 = scmp.ne.s32.totalorder %s68, %s69
    %p81 = scmp.eq.s32.totalorder %s38, 1
    %p82 = por %p80, %p81
    %p84 = scmp.ne.s32.totalorder %s69, %s83
    %p85 = scmp.eq.s32.totalorder %s38, 0
    %p86 = por %p84, %p85
    %s88 = sadd.s32 %s87, 1
    %p91 = scmp.eq.s32.totalorder %s32, 1
    %p92 = scmp.ne.s32.totalorder %s87, %s89
    %p93 = scmp.eq.s32.totalorder %s32, 0
    %p94 = por %p92, %p93
    %p95 = scmp.ne.s32.totalorder %s87, %s89
    %p96 = scmp.eq.s32.totalorder %s37, 1
    %p97 = por %p95, %p96
    %p98 = scmp.ne.s32.totalorder %s89, %s90
    %p99 = scmp.eq.s32.totalorder %s37, 0
    %p100 = por %p98, %p99
    %p101 = scmp.ne.s32.totalorder %s89, %s90
    %p102 = scmp.eq.s32.totalorder %s38, 1
    %p103 = por %p101, %p102
    %p105 = scmp.ne.s32.totalorder %s90, %s104
    %p106 = scmp.eq.s32.totalorder %s38, 0
    %p107 = por %p105, %p106
    %s109 = sadd.s32 %s108, 1
    %p112 = scmp.eq.s32.totalorder %s32, 1
    %p113 = scmp.ne.s32.totalorder %s108, %s110
    %p114 = scmp.eq.s32.totalorder %s32, 0
    %p115 = por %p113, %p114
    %p116 = scmp.ne.s32.totalorder %s108, %s110
    %p117 = scmp.eq.s32.totalorder %s37, 1
    %p118 = por %p116, %p117
    %p119 = scmp.ne.s32.totalorder %s110, %s111
    %p120 = scmp.eq.s32.totalorder %s37, 0
    %p121 = por %p119, %p120
    %p122 = scmp.ne.s32.totalorder %s110, %s111
    %p123 = scmp.eq.s32.totalorder %s38, 1
    %p124 = por %p122, %p123
    %p126 = scmp.ne.s32.totalorder %s111, %s125
    %p127 = scmp.eq.s32.totalorder %s38, 0
    %p128 = por %p126, %p127
    %s130 = sadd.s32 %s129, 1
    %p133 = scmp.eq.s32.totalorder %s32, 1
    %p134 = scmp.ne.s32.totalorder %s129, %s131
    %p135 = scmp.eq.s32.totalorder %s32, 0
    %p136 = por %p134, %p135
    %p137 = scmp.ne.s32.totalorder %s129, %s131
    %p138 = scmp.eq.s32.totalorder %s37, 1
    %p139 = por %p137, %p138
    %p140 = scmp.ne.s32.totalorder %s131, %s132
    %p141 = scmp.eq.s32.totalorder %s37, 0
    %p142 = por %p140, %p141
    %p143 = scmp.ne.s32.totalorder %s131, %s132
    %p144 = scmp.eq.s32.totalorder %s38, 1
    %p145 = por %p143, %p144
    %p147 = scmp.ne.s32.totalorder %s132, %s146
    %p148 = scmp.eq.s32.totalorder %s38, 0
    %p149 = por %p147, %p148
    %s151 = sadd.s32 %s150, 1
    %p154 = scmp.eq.s32.totalorder %s32, 1
    %p155 = scmp.ne.s32.totalorder %s150, %s152
    %p156 = scmp.eq.s32.totalorder %s32, 0
    %p157 = por %p155, %p156
    %p158 = scmp.ne.s32.totalorder %s150, %s152
    %p159 = scmp.eq.s32.totalorder %s37, 1
    %p160 = por %p158, %p159
    %p161 = scmp.ne.s32.totalorder %s152, %s153
    %p162 = scmp.eq.s32.totalorder %s37, 0
    %p163 = por %p161, %p162
    %p164 = scmp.ne.s32.totalorder %s152, %s153
    %p165 = scmp.eq.s32.totalorder %s38, 1
    %p166 = por %p164, %p165
    %p168 = scmp.ne.s32.totalorder %s153, %s167
    %p169 = scmp.eq.s32.totalorder %s38, 0
    %p170 = por %p168, %p169
    %s172 = sadd.s32 %s171, 1
    %p175 = scmp.eq.s32.totalorder %s32, 1
    %p176 = scmp.ne.s32.totalorder %s171, %s173
    %p177 = scmp.eq.s32.totalorder %s32, 0
    %p178 = por %p176, %p177
    %p179 = scmp.ne.s32.totalorder %s171, %s173
    %p180 = scmp.eq.s32.totalorder %s37, 1
    %p181 = por %p179, %p180
    %p182 = scmp.ne.s32.totalorder %s173, %s174
    %p183 = scmp.eq.s32.totalorder %s37, 0
    %p184 = por %p182, %p183
    %p185 = scmp.ne.s32.totalorder %s173, %s174
    %p186 = scmp.eq.s32.totalorder %s38, 1
    %p187 = por %p185, %p186
    %p189 = scmp.ne.s32.totalorder %s174, %s188
    %p190 = scmp.eq.s32.totalorder %s38, 0
    %p191 = por %p189, %p190
    %s193 = sadd.s32 %s192, 1
    %p196 = scmp.eq.s32.totalorder %s32, 1
    %p197 = scmp.ne.s32.totalorder %s192, %s194
    %p198 = scmp.eq.s32.totalorder %s32, 0
    %p199 = por %p197, %p198
    %p200 = scmp.ne.s32.totalorder %s192, %s194
    %p201 = scmp.eq.s32.totalorder %s37, 1
    %p202 = por %p200, %p201
    %p203 = scmp.ne.s32.totalorder %s194, %s195
    %p204 = scmp.eq.s32.totalorder %s37, 0
    %p205 = por %p203, %p204
    %p206 = scmp.ne.s32.totalorder %s194, %s195
    %p207 = scmp.eq.s32.totalorder %s38, 1
    %p208 = por %p206, %p207
    %p210 = scmp.ne.s32.totalorder %s195, %s209
    %p211 = scmp.eq.s32.totalorder %s38, 0
    %p212 = por %p210, %p211
    %s214 = sadd.s32 %s213, 1
    %p217 = scmp.eq.s32.totalorder %s32, 1
    %p218 = scmp.ne.s32.totalorder %s213, %s215
    %p219 = scmp.eq.s32.totalorder %s32, 0
    %p220 = por %p218, %p219
    %p221 = scmp.ne.s32.totalorder %s213, %s215
    %p222 = scmp.eq.s32.totalorder %s37, 1
    %p223 = por %p221, %p222
    %p224 = scmp.ne.s32.totalorder %s215, %s216
    %p225 = scmp.eq.s32.totalorder %s37, 0
    %p226 = por %p224, %p225
    %p227 = scmp.ne.s32.totalorder %s215, %s216
    %p228 = scmp.eq.s32.totalorder %s38, 1
    %p229 = por %p227, %p228
    %p231 = scmp.ne.s32.totalorder %s216, %s230
    %p232 = scmp.eq.s32.totalorder %s38, 0
    %p233 = por %p231, %p232
    %s234 = ssub.s32 %s32, %s39
    %p235 = scmp.eq.s32.totalorder %s234, 0
    %s237 = sadd.s32 %s236, 1
    %s238 = scalar_select %p235, %s236, %s237
    %p241 = pneg %p235
    %p242 = scmp.eq.s32.totalorder %s32, 1
    %p243 = por %p241, %p242
    %p244 = scmp.ne.s32.totalorder %s236, %s239
    %p245 = scmp.eq.s32.totalorder %s32, 0
    %p246 = por %p244, %p245
    %p247 = scmp.ne.s32.totalorder %s236, %s239
    %p248 = scmp.eq.s32.totalorder %s37, 1
    %p249 = por %p247, %p248
    %p250 = scmp.ne.s32.totalorder %s239, %s240
    %p251 = scmp.eq.s32.totalorder %s37, 0
    %p252 = por %p250, %p251
    %p253 = scmp.ne.s32.totalorder %s239, %s240
    %p254 = scmp.eq.s32.totalorder %s38, 1
    %p255 = por %p253, %p254
    %p257 = scmp.ne.s32.totalorder %s240, %s256
    %p258 = scmp.eq.s32.totalorder %s38, 0
    %p259 = por %p257, %p258
    %s260 = ssub.s32 %s32, %s39
    %p261 = scmp.eq.s32.totalorder %s260, 0
    %s263 = sadd.s32 %s262, 1
    %s264 = scalar_select %p261, %s262, %s263
    %p267 = pneg %p261
    %p268 = scmp.eq.s32.totalorder %s32, 1
    %p269 = por %p267, %p268
    %p270 = scmp.ne.s32.totalorder %s262, %s265
    %p271 = scmp.eq.s32.totalorder %s32, 0
    %p272 = por %p270, %p271
    %p273 = scmp.ne.s32.totalorder %s262, %s265
    %p274 = scmp.eq.s32.totalorder %s37, 1
    %p275 = por %p273, %p274
    %p276 = scmp.ne.s32.totalorder %s265, %s266
    %p277 = scmp.eq.s32.totalorder %s37, 0
    %p278 = por %p276, %p277
    %p279 = scmp.ne.s32.totalorder %s265, %s266
    %p280 = scmp.eq.s32.totalorder %s38, 1
    %p281 = por %p279, %p280
    %p283 = scmp.ne.s32.totalorder %s266, %s282
    %p284 = scmp.eq.s32.totalorder %s38, 0
    %p285 = por %p283, %p284
    %s287 = sadd.s32 %s286, 1
    %p290 = scmp.eq.s32.totalorder %s32, 1
    %p291 = scmp.ne.s32.totalorder %s286, %s288
    %p292 = scmp.eq.s32.totalorder %s32, 0
    %p293 = por %p291, %p292
    %p294 = scmp.ne.s32.totalorder %s286, %s288
    %p295 = scmp.eq.s32.totalorder %s37, 1
    %p296 = por %p294, %p295
    %p297 = scmp.ne.s32.totalorder %s288, %s289
    %p298 = scmp.eq.s32.totalorder %s37, 0
    %p299 = por %p297, %p298
    %p300 = scmp.ne.s32.totalorder %s288, %s289
    %p301 = scmp.eq.s32.totalorder %s38, 1
    %p302 = por %p300, %p301
    %p304 = scmp.ne.s32.totalorder %s289, %s303
    %p305 = scmp.eq.s32.totalorder %s38, 0
    %p306 = por %p304, %p305
    %s308 = sadd.s32 %s307, 1
    %p311 = scmp.eq.s32.totalorder %s32, 1
    %p312 = scmp.ne.s32.totalorder %s307, %s309
    %p313 = scmp.eq.s32.totalorder %s32, 0
    %p314 = por %p312, %p313
    %p315 = scmp.ne.s32.totalorder %s307, %s309
    %p316 = scmp.eq.s32.totalorder %s37, 1
    %p317 = por %p315, %p316
    %p318 = scmp.ne.s32.totalorder %s309, %s310
    %p319 = scmp.eq.s32.totalorder %s37, 0
    %p320 = por %p318, %p319
    %p321 = scmp.ne.s32.totalorder %s309, %s310
    %p322 = scmp.eq.s32.totalorder %s38, 1
    %p323 = por %p321, %p322
    %p325 = scmp.ne.s32.totalorder %s310, %s324
    %p326 = scmp.eq.s32.totalorder %s38, 0
    %p327 = por %p325, %p326
    %s329 = sadd.s32 %s328, 1
    %p332 = scmp.eq.s32.totalorder %s32, 1
    %p333 = scmp.ne.s32.totalorder %s328, %s330
    %p334 = scmp.eq.s32.totalorder %s32, 0
    %p335 = por %p333, %p334
    %p336 = scmp.ne.s32.totalorder %s328, %s330
    %p337 = scmp.eq.s32.totalorder %s37, 1
    %p338 = por %p336, %p337
    %p339 = scmp.ne.s32.totalorder %s330, %s331
    %p340 = scmp.eq.s32.totalorder %s37, 0
    %p341 = por %p339, %p340
    %p342 = scmp.ne.s32.totalorder %s330, %s331
    %p343 = scmp.eq.s32.totalorder %s38, 1
    %p344 = por %p342, %p343
    %p346 = scmp.ne.s32.totalorder %s331, %s345
    %p347 = scmp.eq.s32.totalorder %s38, 0
    %p348 = por %p346, %p347
    %s350 = sadd.s32 %s349, 1
    %p353 = scmp.eq.s32.totalorder %s32, 1
    %p354 = scmp.ne.s32.totalorder %s349, %s351
    %p355 = scmp.eq.s32.totalorder %s32, 0
    %p356 = por %p354, %p355
    %p357 = scmp.ne.s32.totalorder %s349, %s351
    %p358 = scmp.eq.s32.totalorder %s37, 1
    %p359 = por %p357, %p358
    %p360 = scmp.ne.s32.totalorder %s351, %s352
    %p361 = scmp.eq.s32.totalorder %s37, 0
    %p362 = por %p360, %p361
    %p363 = scmp.ne.s32.totalorder %s351, %s352
    %p364 = scmp.eq.s32.totalorder %s38, 1
    %p365 = por %p363, %p364
    %p367 = scmp.ne.s32.totalorder %s352, %s366
    %p368 = scmp.eq.s32.totalorder %s38, 0
    %p369 = por %p367, %p368
    %s370 = ssub.s32 %s32, %s39
    %p371 = scmp.eq.s32.totalorder %s370, 0
    %s373 = sadd.s32 %s372, 1
    %s374 = scalar_select %p371, %s372, %s373
    %p377 = pneg %p371
    %p378 = scmp.eq.s32.totalorder %s32, 1
    %p379 = por %p377, %p378
    %p380 = scmp.ne.s32.totalorder %s372, %s375
    %p381 = scmp.eq.s32.totalorder %s32, 0
    %p382 = por %p380, %p381
    %p383 = scmp.ne.s32.totalorder %s372, %s375
    %p384 = scmp.eq.s32.totalorder %s37, 1
    %p385 = por %p383, %p384
    %p386 = scmp.ne.s32.totalorder %s375, %s376
    %p387 = scmp.eq.s32.totalorder %s37, 0
    %p388 = por %p386, %p387
    %p389 = scmp.ne.s32.totalorder %s375, %s376
    %p390 = scmp.eq.s32.totalorder %s38, 1
    %p391 = por %p389, %p390
    %p393 = scmp.ne.s32.totalorder %s376, %s392
    %p394 = scmp.eq.s32.totalorder %s38, 0
    %p395 = por %p393, %p394
    %s397 = sadd.s32 %s396, 1
    %p400 = scmp.eq.s32.totalorder %s32, 1
    %p401 = scmp.ne.s32.totalorder %s396, %s398
    %p402 = scmp.eq.s32.totalorder %s32, 0
    %p403 = por %p401, %p402
    %p404 = scmp.ne.s32.totalorder %s396, %s398
    %p405 = scmp.eq.s32.totalorder %s37, 1
    %p406 = por %p404, %p405
    %p407 = scmp.ne.s32.totalorder %s398, %s399
    %p408 = scmp.eq.s32.totalorder %s37, 0
    %p409 = por %p407, %p408
    %p410 = scmp.ne.s32.totalorder %s398, %s399
    %p411 = scmp.eq.s32.totalorder %s38, 1
    %p412 = por %p410, %p411
    %p414 = scmp.ne.s32.totalorder %s399, %s413
    %p415 = scmp.eq.s32.totalorder %s38, 0
    %p416 = por %p414, %p415
    %s418 = sadd.s32 %s417, 1
    %p421 = scmp.eq.s32.totalorder %s32, 1
    %p422 = scmp.ne.s32.totalorder %s417, %s419
    %p423 = scmp.eq.s32.totalorder %s32, 0
    %p424 = por %p422, %p423
    %p425 = scmp.ne.s32.totalorder %s417, %s419
    %p426 = scmp.eq.s32.totalorder %s37, 1
    %p427 = por %p425, %p426
    %p428 = scmp.ne.s32.totalorder %s419, %s420
    %p429 = scmp.eq.s32.totalorder %s37, 0
    %p430 = por %p428, %p429
    %p431 = scmp.ne.s32.totalorder %s419, %s420
    %p432 = scmp.eq.s32.totalorder %s38, 1
    %p433 = por %p431, %p432
    %p435 = scmp.ne.s32.totalorder %s420, %s434
    %p436 = scmp.eq.s32.totalorder %s38, 0
    %p437 = por %p435, %p436
    %s439 = sadd.s32 %s438, 1
    %p442 = scmp.eq.s32.totalorder %s32, 1
    %p443 = scmp.ne.s32.totalorder %s438, %s440
    %p444 = scmp.eq.s32.totalorder %s32, 0
    %p445 = por %p443, %p444
    %p446 = scmp.ne.s32.totalorder %s438, %s440
    %p447 = scmp.eq.s32.totalorder %s37, 1
    %p448 = por %p446, %p447
    %p449 = scmp.ne.s32.totalorder %s440, %s441
    %p450 = scmp.eq.s32.totalorder %s37, 0
    %p451 = por %p449, %p450
    %p452 = scmp.ne.s32.totalorder %s440, %s441
    %p453 = scmp.eq.s32.totalorder %s38, 1
    %p454 = por %p452, %p453
    %p456 = scmp.ne.s32.totalorder %s441, %s455
    %p457 = scmp.eq.s32.totalorder %s38, 0
    %p458 = por %p456, %p457
    %s460 = sadd.s32 %s459, 1
    %p463 = scmp.eq.s32.totalorder %s32, 1
    %p464 = scmp.ne.s32.totalorder %s459, %s461
    %p465 = scmp.eq.s32.totalorder %s32, 0
    %p466 = por %p464, %p465
    %p467 = scmp.ne.s32.totalorder %s459, %s461
    %p468 = scmp.eq.s32.totalorder %s37, 1
    %p469 = por %p467, %p468
    %p470 = scmp.ne.s32.totalorder %s461, %s462
    %p471 = scmp.eq.s32.totalorder %s37, 0
    %p472 = por %p470, %p471
    %p473 = scmp.ne.s32.totalorder %s461, %s462
    %p474 = scmp.eq.s32.totalorder %s38, 1
    %p475 = por %p473, %p474
    %p477 = scmp.ne.s32.totalorder %s462, %s476
    %p478 = scmp.eq.s32.totalorder %s38, 0
    %p479 = por %p477, %p478
    %s481 = sadd.s32 %s480, 1
    %p484 = scmp.eq.s32.totalorder %s32, 1
    %p485 = scmp.ne.s32.totalorder %s480, %s482
    %p486 = scmp.eq.s32.totalorder %s32, 0
    %p487 = por %p485, %p486
    %p488 = scmp.ne.s32.totalorder %s480, %s482
    %p489 = scmp.eq.s32.totalorder %s37, 1
    %p490 = por %p488, %p489
    %p491 = scmp.ne.s32.totalorder %s482, %s483
    %p492 = scmp.eq.s32.totalorder %s37, 0
    %p493 = por %p491, %p492
    %p494 = scmp.ne.s32.totalorder %s482, %s483
    %p495 = scmp.eq.s32.totalorder %s38, 1
    %p496 = por %p494, %p495
    %p498 = scmp.ne.s32.totalorder %s483, %s497
    %p499 = scmp.eq.s32.totalorder %s38, 0
    %p500 = por %p498, %p499
    %s502 = sadd.s32 %s501, 1
    %p505 = scmp.eq.s32.totalorder %s32, 1
    %p506 = scmp.ne.s32.totalorder %s501, %s503
    %p507 = scmp.eq.s32.totalorder %s32, 0
    %p508 = por %p506, %p507
    %p509 = scmp.ne.s32.totalorder %s501, %s503
    %p510 = scmp.eq.s32.totalorder %s37, 1
    %p511 = por %p509, %p510
    %p512 = scmp.ne.s32.totalorder %s503, %s504
    %p513 = scmp.eq.s32.totalorder %s37, 0
    %p514 = por %p512, %p513
    %p515 = scmp.ne.s32.totalorder %s503, %s504
    %p516 = scmp.eq.s32.totalorder %s38, 1
    %p517 = por %p515, %p516
    %p519 = scmp.ne.s32.totalorder %s504, %s518
    %p520 = scmp.eq.s32.totalorder %s38, 0
    %p521 = por %p519, %p520
    %s522 = ssub.s32 %s32, %s39
    %p523 = scmp.eq.s32.totalorder %s522, 0
    %s525 = sadd.s32 %s524, 1
    %s526 = scalar_select %p523, %s524, %s525
    %p529 = pneg %p523
    %p530 = scmp.eq.s32.totalorder %s32, 1
    %p531 = por %p529, %p530
    %p532 = scmp.ne.s32.totalorder %s524, %s527
    %p533 = scmp.eq.s32.totalorder %s32, 0
    %p534 = por %p532, %p533
    %p535 = scmp.ne.s32.totalorder %s524, %s527
    %p536 = scmp.eq.s32.totalorder %s37, 1
    %p537 = por %p535, %p536
    %p538 = scmp.ne.s32.totalorder %s527, %s528
    %p539 = scmp.eq.s32.totalorder %s37, 0
    %p540 = por %p538, %p539
    %p541 = scmp.ne.s32.totalorder %s527, %s528
    %p542 = scmp.eq.s32.totalorder %s38, 1
    %p543 = por %p541, %p542
    %p545 = scmp.ne.s32.totalorder %s528, %s544
    %p546 = scmp.eq.s32.totalorder %s38, 0
    %p547 = por %p545, %p546
    %p548 = scmp.le.s32.totalorder 1, %s32
    %p549 = scmp.lt.s32.totalorder %s32, 3
    %p550 = pnand %p548, %p549
    %p551 = pneg %p550
    // Predicated region
    $region9: #{_lambda_.3} parent=5 // pred_check
      _
    $region10: #{_lambda_.3} parent=5 // pred_check_branch
      %553 = sbr.rel (%p550) target = $region12
    $region11: #{_lambda_.3} parent=5 // pred_region
      %s554 = ssub.s32 %s32, 1
      // Predicated region
      $region13: #{_lambda_.3} parent=11 // pred_check
        %p555 = pneg %p79
      $region14: #{_lambda_.3} parent=11 // pred_check_branch
        %557 = sbr.rel (%p555) target = $region16
      $region15: #{_lambda_.3} parent=11 // pred_region
        _
      $region16: #{_lambda_.3} parent=11 // pred_fallthru
        _
      // Predicated region
      $region17: #{_lambda_.3} parent=11 // pred_check
        %p558 = pneg %p100
      $region18: #{_lambda_.3} parent=11 // pred_check_branch
        %560 = sbr.rel (%p558) target = $region20
      $region19: #{_lambda_.3} parent=11 // pred_region
        _
      $region20: #{_lambda_.3} parent=11 // pred_fallthru
        _
      // Predicated region
      $region21: #{_lambda_.3} parent=11 // pred_check
        %p561 = pneg %p121
      $region22: #{_lambda_.3} parent=11 // pred_check_branch
        %563 = sbr.rel (%p561) target = $region24
      $region23: #{_lambda_.3} parent=11 // pred_region
        _
      $region24: #{_lambda_.3} parent=11 // pred_fallthru
        _
      // Predicated region
      $region25: #{_lambda_.3} parent=11 // pred_check
        %p564 = pneg %p142
      $region26: #{_lambda_.3} parent=11 // pred_check_branch
        %566 = sbr.rel (%p564) target = $region28
      $region27: #{_lambda_.3} parent=11 // pred_region
        _
      $region28: #{_lambda_.3} parent=11 // pred_fallthru
        _
      // Predicated region
      $region29: #{_lambda_.3} parent=11 // pred_check
        %p567 = pneg %p163
      $region30: #{_lambda_.3} parent=11 // pred_check_branch
        %569 = sbr.rel (%p567) target = $region32
      $region31: #{_lambda_.3} parent=11 // pred_region
        _
      $region32: #{_lambda_.3} parent=11 // pred_fallthru
        _
      // Predicated region
      $region33: #{_lambda_.3} parent=11 // pred_check
        %p570 = pneg %p184
      $region34: #{_lambda_.3} parent=11 // pred_check_branch
        %572 = sbr.rel (%p570) target = $region36
      $region35: #{_lambda_.3} parent=11 // pred_region
        _
      $region36: #{_lambda_.3} parent=11 // pred_fallthru
        _
      // Predicated region
      $region37: #{_lambda_.3} parent=11 // pred_check
        %p573 = pneg %p205
      $region38: #{_lambda_.3} parent=11 // pred_check_branch
        %575 = sbr.rel (%p573) target = $region40
      $region39: #{_lambda_.3} parent=11 // pred_region
        _
      $region40: #{_lambda_.3} parent=11 // pred_fallthru
        _
      // Predicated region
      $region41: #{_lambda_.3} parent=11 // pred_check
        %p576 = pneg %p226
      $region42: #{_lambda_.3} parent=11 // pred_check_branch
        %578 = sbr.rel (%p576) target = $region44
      $region43: #{_lambda_.3} parent=11 // pred_region
        _
      $region44: #{_lambda_.3} parent=11 // pred_fallthru
        _
      // Predicated region
      $region45: #{_lambda_.3} parent=11 // pred_check
        %p579 = pneg %p299
      $region46: #{_lambda_.3} parent=11 // pred_check_branch
        %581 = sbr.rel (%p579) target = $region48
      $region47: #{_lambda_.3} parent=11 // pred_region
        _
      $region48: #{_lambda_.3} parent=11 // pred_fallthru
        _
      // Predicated region
      $region49: #{_lambda_.3} parent=11 // pred_check
        %p582 = pneg %p320
      $region50: #{_lambda_.3} parent=11 // pred_check_branch
        %584 = sbr.rel (%p582) target = $region52
      $region51: #{_lambda_.3} parent=11 // pred_region
        _
      $region52: #{_lambda_.3} parent=11 // pred_fallthru
        _
      // Predicated region
      $region53: #{_lambda_.3} parent=11 // pred_check
        %p585 = pneg %p341
      $region54: #{_lambda_.3} parent=11 // pred_check_branch
        %587 = sbr.rel (%p585) target = $region56
      $region55: #{_lambda_.3} parent=11 // pred_region
        _
      $region56: #{_lambda_.3} parent=11 // pred_fallthru
        _
      // Predicated region
      $region57: #{_lambda_.3} parent=11 // pred_check
        %p588 = pneg %p362
      $region58: #{_lambda_.3} parent=11 // pred_check_branch
        %590 = sbr.rel (%p588) target = $region60
      $region59: #{_lambda_.3} parent=11 // pred_region
        _
      $region60: #{_lambda_.3} parent=11 // pred_fallthru
        _
      // Predicated region
      $region61: #{_lambda_.3} parent=11 // pred_check
        %p591 = pneg %p409
      $region62: #{_lambda_.3} parent=11 // pred_check_branch
        %593 = sbr.rel (%p591) target = $region64
      $region63: #{_lambda_.3} parent=11 // pred_region
        _
      $region64: #{_lambda_.3} parent=11 // pred_fallthru
        _
      // Predicated region
      $region65: #{_lambda_.3} parent=11 // pred_check
        %p594 = pneg %p430
      $region66: #{_lambda_.3} parent=11 // pred_check_branch
        %596 = sbr.rel (%p594) target = $region68
      $region67: #{_lambda_.3} parent=11 // pred_region
        _
      $region68: #{_lambda_.3} parent=11 // pred_fallthru
        _
      // Predicated region
      $region69: #{_lambda_.3} parent=11 // pred_check
        %p597 = pneg %p451
      $region70: #{_lambda_.3} parent=11 // pred_check_branch
        %599 = sbr.rel (%p597) target = $region72
      $region71: #{_lambda_.3} parent=11 // pred_region
        _
      $region72: #{_lambda_.3} parent=11 // pred_fallthru
        _
      // Predicated region
      $region73: #{_lambda_.3} parent=11 // pred_check
        %p600 = pneg %p472
      $region74: #{_lambda_.3} parent=11 // pred_check_branch
        %602 = sbr.rel (%p600) target = $region76
      $region75: #{_lambda_.3} parent=11 // pred_region
        _
      $region76: #{_lambda_.3} parent=11 // pred_fallthru
        _
      // Predicated region
      $region77: #{_lambda_.3} parent=11 // pred_check
        %p603 = pneg %p493
      $region78: #{_lambda_.3} parent=11 // pred_check_branch
        %605 = sbr.rel (%p603) target = $region80
      $region79: #{_lambda_.3} parent=11 // pred_region
        _
      $region80: #{_lambda_.3} parent=11 // pred_fallthru
        _
      // Predicated region
      $region81: #{_lambda_.3} parent=11 // pred_check
        %p606 = pneg %p514
      $region82: #{_lambda_.3} parent=11 // pred_check_branch
        %608 = sbr.rel (%p606) target = $region84
      $region83: #{_lambda_.3} parent=11 // pred_region
        _
      $region84: #{_lambda_.3} parent=11 // pred_fallthru
        _
    $region12: #{_lambda_.3} parent=5 // pred_fallthru
      _
    %p609 = scmp.lt.s32.totalorder %s32, 2
    // Predicated region
    $region85: #{_lambda_.3} parent=5 // pred_check
      %p610 = pneg %p609
    $region86: #{_lambda_.3} parent=5 // pred_check_branch
      %612 = sbr.rel (%p610) target = $region88
    $region87: #{_lambda_.3} parent=5 // pred_region
      // Predicated region
      $region89: #{_lambda_.3} parent=87 // pred_check
        %p613 = pneg %p52
      $region90: #{_lambda_.3} parent=87 // pred_check_branch
        %615 = sbr.rel (%p613) target = $region92
      $region91: #{_lambda_.3} parent=87 // pred_region
        %p616 = scmp.lt.s32.totalorder %s32, 1
        %s617 = scalar_select %p616, %s32, 1
        %s618 = smul.addr %s617, 8
        %s619 = smul.addr %s618, 8
        %s620 = scalar_lea.vmem %s0, %s619
      $region92: #{_lambda_.3} parent=87 // pred_fallthru
        _
      // Predicated region
      $region93: #{_lambda_.3} parent=87 // pred_check
        %p621 = pneg %p246
      $region94: #{_lambda_.3} parent=87 // pred_check_branch
        %623 = sbr.rel (%p621) target = $region96
      $region95: #{_lambda_.3} parent=87 // pred_region
        %p624 = scmp.lt.s32.totalorder %s32, 1
        %s625 = scalar_select %p624, %s32, 1
        %s626 = smul.addr %s625, 2
        %s627 = smul.addr %s626, 8
        %s628 = scalar_lea.vmem %s9, %s627
      $region96: #{_lambda_.3} parent=87 // pred_fallthru
        _
      // Predicated region
      $region97: #{_lambda_.3} parent=87 // pred_check
        %p629 = pneg %p272
      $region98: #{_lambda_.3} parent=87 // pred_check_branch
        %631 = sbr.rel (%p629) target = $region100
      $region99: #{_lambda_.3} parent=87 // pred_region
        %p632 = scmp.lt.s32.totalorder %s32, 1
        %s633 = scalar_select %p632, %s32, 1
        %s634 = smul.addr %s633, 2
        %s635 = smul.addr %s634, 8
        %s636 = scalar_lea.vmem %s10, %s635
      $region100: #{_lambda_.3} parent=87 // pred_fallthru
        _
      // Predicated region
      $region101: #{_lambda_.3} parent=87 // pred_check
        %p637 = pneg %p382
      $region102: #{_lambda_.3} parent=87 // pred_check_branch
        %639 = sbr.rel (%p637) target = $region104
      $region103: #{_lambda_.3} parent=87 // pred_region
        %p640 = scmp.lt.s32.totalorder %s32, 1
        %s641 = scalar_select %p640, %s32, 1
        %s642 = smul.addr %s641, 2
        %s643 = smul.addr %s642, 8
        %s644 = scalar_lea.vmem %s15, %s643
      $region104: #{_lambda_.3} parent=87 // pred_fallthru
        _
    $region88: #{_lambda_.3} parent=5 // pred_fallthru
      _
    %p645 = scmp.le.s32.totalorder 1, %s32
    %p646 = scmp.lt.s32.totalorder %s32, 3
    %p647 = pnand %p645, %p646
    %p648 = pneg %p647
    // Predicated region
    $region105: #{_lambda_.3} parent=5 // pred_check
      _
    $region106: #{_lambda_.3} parent=5 // pred_check_branch
      %650 = sbr.rel (%p647) target = $region108
    $region107: #{_lambda_.3} parent=5 // pred_region
      %s651 = ssub.s32 %s32, 1
      %p652 = scmp.lt.s32.totalorder %s37, 1
      %s653 = scalar_select %p652, %s37, 1
      %s654 = smul.addr %s653, 8
      %s655 = smul.addr %s654, 8
      %s656 = scalar_lea.vmem %s0, %s655
      %p657 = pneg %p58
      %p658 = pneg %p55
      %p659 = pneg %p79
      %p660 = pneg %p76
      %p661 = pneg %p100
      %p662 = pneg %p97
      %p663 = pneg %p121
      %p664 = pneg %p118
      %p665 = pneg %p142
      %p666 = pneg %p139
      %p667 = pneg %p163
      %p668 = pneg %p160
      %p669 = pneg %p184
      %p670 = pneg %p181
      %p671 = pneg %p205
      %p672 = pneg %p202
      %p673 = pneg %p226
      %p674 = pneg %p223
      %p675 = scmp.lt.s32.totalorder %s37, 1
      %s676 = scalar_select %p675, %s37, 1
      %s677 = smul.addr %s676, 2
      %s678 = smul.addr %s677, 8
      %s679 = scalar_lea.vmem %s9, %s678
      %p680 = pneg %p252
      %p681 = pneg %p249
      %p682 = scmp.lt.s32.totalorder %s37, 1
      %s683 = scalar_select %p682, %s37, 1
      %s684 = smul.addr %s683, 2
      %s685 = smul.addr %s684, 8
      %s686 = scalar_lea.vmem %s10, %s685
      %p687 = pneg %p278
      %p688 = pneg %p275
      %p689 = pneg %p299
      %p690 = pneg %p296
      %p691 = pneg %p320
      %p692 = pneg %p317
      %p693 = pneg %p341
      %p694 = pneg %p338
      %p695 = pneg %p362
      %p696 = pneg %p359
      %p697 = scmp.lt.s32.totalorder %s37, 1
      %s698 = scalar_select %p697, %s37, 1
      %s699 = smul.addr %s698, 2
      %s700 = smul.addr %s699, 8
      %s701 = scalar_lea.vmem %s15, %s700
      %p702 = pneg %p388
      %p703 = pneg %p385
      %p704 = pneg %p409
      %p705 = pneg %p406
      %p706 = pneg %p430
      %p707 = pneg %p427
      %p708 = pneg %p451
      %p709 = pneg %p448
      %p710 = pneg %p472
      %p711 = pneg %p469
      %p712 = pneg %p493
      %p713 = pneg %p490
      %p714 = pneg %p514
      %p715 = pneg %p511
      %p716 = pneg %p540
      %p717 = pneg %p537
      %p718 = scmp.lt.s32.totalorder %s37, 1
      %s719 = scalar_select %p718, %s37, 1
      %s720 = smul.addr %s719, 2
      %s721 = smul.addr %s720, 8
      %s722 = scalar_lea.vmem %s22, %s721
      %p723 = scmp.lt.s32.totalorder %s37, 1
      %s724 = scalar_select %p723, %s37, 1
      %s725 = smul.addr %s724, 8
      %s726 = smul.addr %s725, 8
      %s727 = scalar_lea.vmem %s0, %s726
      %p728 = scmp.lt.s32.totalorder %s37, 1
      %s729 = scalar_select %p728, %s37, 1
      %s730 = smul.addr %s729, 2
      %s731 = smul.addr %s730, 8
      %s732 = scalar_lea.vmem %s9, %s731
      %p733 = scmp.lt.s32.totalorder %s37, 1
      %s734 = scalar_select %p733, %s37, 1
      %s735 = smul.addr %s734, 2
      %s736 = smul.addr %s735, 8
      %s737 = scalar_lea.vmem %s10, %s736
      %p738 = scmp.lt.s32.totalorder %s37, 1
      %s739 = scalar_select %p738, %s37, 1
      %s740 = smul.addr %s739, 2
      %s741 = smul.addr %s740, 8
      %s742 = scalar_lea.vmem %s15, %s741
      %p743 = scmp.lt.s32.totalorder %s37, 1
      %s744 = scalar_select %p743, %s37, 1
      %s745 = smul.addr %s744, 2
      %s746 = smul.addr %s745, 8
      %s747 = scalar_lea.vmem %s22, %s746
      %v748 = vld [vmem:[%s727] sm:$0xff]
      %v749 = vld [vmem:[%s727 + $0x8] sm:$0xff]
      %v750 = vld [vmem:[%s727 + $0x10] sm:$0xff]
      %v751 = vld [vmem:[%s727 + $0x18] sm:$0xff]
      %v752 = vld [vmem:[%s727 + $0x20] sm:$0xff]
      %v753 = vld [vmem:[%s727 + $0x28] sm:$0xff]
      %v754 = vld [vmem:[%s727 + $0x30] sm:$0xff]
      %v755 = vld [vmem:[%s727 + $0x38] sm:$0xff]
      %v756 = vld [vmem:[%s1] sm:$0xff]
      %v757 = vld [vmem:[%s1 + $0x8] sm:$0xff]
      %v758 = vld [vmem:[%s1 + $0x10] sm:$0xff]
      %v759 = vld [vmem:[%s1 + $0x18] sm:$0xff]
      %v760 = vld [vmem:[%s1 + $0x20] sm:$0xff]
      %v761 = vld [vmem:[%s1 + $0x28] sm:$0xff]
      %v762 = vld [vmem:[%s1 + $0x30] sm:$0xff]
      %v763 = vld [vmem:[%s1 + $0x38] sm:$0xff]
      %v764 = vld [vmem:[%s2] sm:$0xff]
      %v765 = vld [vmem:[%s3] sm:$0x3]
      %v766 = vld [vmem:[%s4] sm:$0xff]
      %v767 = vld [vmem:[%s4 + $0x8] sm:$0xff]
      %v768 = vld [vmem:[%s5] sm:$0x1]
      %vm769 = vcmask 64512
      %v771 = vsel %vm769, %v748, 0
      %v774 = vsel %vm769, %v749, 0
      %v777 = vsel %vm769, %v750, 0
      %v780 = vsel %vm769, %v751, 0
      %v783 = vsel %vm769, %v752, 0
      %v786 = vsel %vm769, %v753, 0
      %v789 = vsel %vm769, %v754, 0
      %v792 = vsel %vm769, %v755, 0
      %794 = vmatprep.subr.mxu0 0.0
      %795 = vmatpush1.msra.mxu0 %v764
      %796 = vmatprep.subr.mxu0 0.0
      %797 = vmatpush1.msra.mxu0 0.0
      %798 = vmatprep.subr.mxu0 0.0
      %799 = vmatpush1.msra.mxu0 0.0
      %800 = vmatprep.subr.mxu0 0.0
      %801 = vmatpush1.msra.mxu0 0.0
      %802 = vmatprep.subr.mxu0 0.0
      %803 = vmatpush1.msra.mxu0 0.0
      %804 = vmatprep.subr.mxu0 0.0
      %805 = vmatpush1.msra.mxu0 0.0
      %806 = vmatprep.subr.mxu0 0.0
      %807 = vmatpush1.msra.mxu0 0.0
      %808 = vmatprep.subr.mxu0 0.0
      %809 = vmatpush1.msra.mxu0 0.0
      %810 = vmatprep.subr.mxu0 0.0
      %811 = vmatpush1.msra.mxu0 0.0
      %812 = vmatprep.subr.mxu0 0.0
      %813 = vmatpush1.msra.mxu0 0.0
      %814 = vmatprep.subr.mxu0 0.0
      %815 = vmatpush1.msra.mxu0 0.0
      %816 = vmatprep.subr.mxu0 0.0
      %817 = vmatpush1.msra.mxu0 0.0
      %818 = vmatprep.subr.mxu0 0.0
      %819 = vmatpush1.msra.mxu0 0.0
      %820 = vmatprep.subr.mxu0 0.0
      %821 = vmatpush1.msra.mxu0 0.0
      %822 = vmatprep.subr.mxu0 0.0
      %823 = vmatpush1.msra.mxu0 0.0
      %824 = vmatprep.subr.mxu0 0.0
      %825 = vmatpush1.msra.mxu0 0.0
      %826 = vmatprep.subr.mxu0 0.0
      %827 = vmatpush1.msra.mxu0 0.0
      %828 = vmatprep.subr.mxu0 0.0
      %829 = vmatpush1.msra.mxu0 0.0
      %830 = vmatprep.subr.mxu0 0.0
      %831 = vmatpush1.msra.mxu0 0.0
      %832 = vmatprep.subr.mxu0 0.0
      %833 = vmatpush1.msra.mxu0 0.0
      %834 = vmatprep.subr.mxu0 0.0
      %835 = vmatpush1.msra.mxu0 0.0
      %836 = vmatprep.subr.mxu0 0.0
      %837 = vmatpush1.msra.mxu0 0.0
      %838 = vmatprep.subr.mxu0 0.0
      %839 = vmatpush1.msra.mxu0 0.0
      %840 = vmatprep.subr.mxu0 0.0
      %841 = vmatpush1.msra.mxu0 0.0
      %842 = vmatprep.subr.mxu0 0.0
      %843 = vmatpush1.msra.mxu0 0.0
      %844 = vmatprep.subr.mxu0 0.0
      %845 = vmatpush1.msra.mxu0 0.0
      %846 = vmatprep.subr.mxu0 0.0
      %847 = vmatpush1.msra.mxu0 0.0
      %848 = vmatprep.subr.mxu0 0.0
      %849 = vmatpush1.msra.mxu0 0.0
      %850 = vmatprep.subr.mxu0 0.0
      %851 = vmatpush1.msra.mxu0 0.0
      %852 = vmatprep.subr.mxu0 0.0
      %853 = vmatpush1.msra.mxu0 0.0
      %854 = vmatprep.subr.mxu0 0.0
      %855 = vmatpush1.msra.mxu0 0.0
      %856 = vmatprep.subr.mxu0 0.0
      %857 = vmatpush1.msra.mxu0 0.0
      %858 = vmatprep.mubr.f32.mxu0 0.0
      %859 = vmatmul.mubr.f32.gmra.mrb[0].mxu0 %v771
      %v860 = vpop.f32.mrb[0].mxu0
      %v861 = vadd.f32 0.0, %v860
      %v862 = vpop.f32.mrb[0].mxu0
      %863 = vmatprep.mubr.f32.mxu0 0.0
      %864 = vmatmul.mubr.f32.gmra.mrb[0].mxu0 %v774
      %v865 = vpop.f32.mrb[0].mxu0
      %v866 = vadd.f32 0.0, %v865
      %v867 = vpop.f32.mrb[0].mxu0
      %868 = vmatprep.mubr.f32.mxu0 0.0
      %869 = vmatmul.mubr.f32.gmra.mrb[0].mxu0 %v777
      %v870 = vpop.f32.mrb[0].mxu0
      %v871 = vadd.f32 0.0, %v870
      %v872 = vpop.f32.mrb[0].mxu0
      %873 = vmatprep.mubr.f32.mxu0 0.0
      %874 = vmatmul.mubr.f32.gmra.mrb[0].mxu0 %v780
      %v875 = vpop.f32.mrb[0].mxu0
      %v876 = vadd.f32 0.0, %v875
      %v877 = vpop.f32.mrb[0].mxu0
      %878 = vmatprep.mubr.f32.mxu0 0.0
      %879 = vmatmul.mubr.f32.gmra.mrb[0].mxu0 %v783
      %v880 = vpop.f32.mrb[0].mxu0
      %v881 = vadd.f32 0.0, %v880
      %v882 = vpop.f32.mrb[0].mxu0
      %883 = vmatprep.mubr.f32.mxu0 0.0
      %884 = vmatmul.mubr.f32.gmra.mrb[0].mxu0 %v786
      %v885 = vpop.f32.mrb[0].mxu0
      %v886 = vadd.f32 0.0, %v885
      %v887 = vpop.f32.mrb[0].mxu0
      %888 = vmatprep.mubr.f32.mxu0 0.0
      %889 = vmatmul.mubr.f32.gmra.mrb[0].mxu0 %v789
      %v890 = vpop.f32.mrb[0].mxu0
      %v891 = vadd.f32 0.0, %v890
      %v892 = vpop.f32.mrb[0].mxu0
      %893 = vmatprep.mubr.f32.mxu0 0.0
      %894 = vmatmul.mubr.f32.gmra.mrb[0].mxu0 %v792
      %v895 = vpop.f32.mrb[0].mxu0
      %v896 = vadd.f32 0.0, %v895
      %v897 = vpop.f32.mrb[0].mxu0
      %898 = vdwg.mxu0
      %v899 = vlaneseq
      %v900 = vshrl.u32 %v899, 7
      %v901 = vsub.s32 0, %v900
      %v902 = vrot.slane %v765, %v901
      %v903 = vmul.f32 %v861, %v902
      %v904 = vmul.f32 %v866, %v902
      %v905 = vmul.f32 %v871, %v902
      %v906 = vmul.f32 %v876, %v902
      %v907 = vmul.f32 %v881, %v902
      %v908 = vmul.f32 %v886, %v902
      %v909 = vmul.f32 %v891, %v902
      %v910 = vmul.f32 %v896, %v902
      %v911 = vsel %vm769, %v903, 0.0
      %912 = vadd.xlane.f32.xlu0 %v911
      %v913 = vpop.xlane.xlu0 %912
      %v914 = vsel %vm769, %v904, 0.0
      %915 = vadd.xlane.f32.xlu0 %v914
      %v916 = vpop.xlane.xlu0 %915
      %v917 = vsel %vm769, %v905, 0.0
      %918 = vadd.xlane.f32.xlu0 %v917
      %v919 = vpop.xlane.xlu0 %918
      %v920 = vsel %vm769, %v906, 0.0
      %921 = vadd.xlane.f32.xlu0 %v920
      %v922 = vpop.xlane.xlu0 %921
      %v923 = vsel %vm769, %v907, 0.0
      %924 = vadd.xlane.f32.xlu0 %v923
      %v925 = vpop.xlane.xlu0 %924
      %v926 = vsel %vm769, %v908, 0.0
      %927 = vadd.xlane.f32.xlu0 %v926
      %v928 = vpop.xlane.xlu0 %927
      %v929 = vsel %vm769, %v909, 0.0
      %930 = vadd.xlane.f32.xlu0 %v929
      %v931 = vpop.xlane.xlu0 %930
      %v932 = vsel %vm769, %v910, 0.0
      %933 = vadd.xlane.f32.xlu0 %v932
      %v934 = vpop.xlane.xlu0 %933
      %936 = vrot.lane.b32.xlu0 %v765, 120
      %v937 = vpop.permute.xlu0 %936
      %v938 = vsel %vm769, %v937, 0
      %v941 = vsel %vm769, %v861, 0
      %v944 = vsel %vm769, %v866, 0
      %v947 = vsel %vm769, %v871, 0
      %v950 = vsel %vm769, %v876, 0
      %v953 = vsel %vm769, %v881, 0
      %v956 = vsel %vm769, %v886, 0
      %v959 = vsel %vm769, %v891, 0
      %v962 = vsel %vm769, %v896, 0
      %964 = vmatprep.subr.mxu0 0.0
      %965 = vmatpush1.xpose.msra.mxu0 %v941
      %966 = vmatprep.subr.mxu0 0.0
      %967 = vmatpush1.xpose.msra.mxu0 %v944
      %968 = vmatprep.subr.mxu0 0.0
      %969 = vmatpush1.xpose.msra.mxu0 %v947
      %970 = vmatprep.subr.mxu0 0.0
      %971 = vmatpush1.xpose.msra.mxu0 %v950
      %972 = vmatprep.subr.mxu0 0.0
      %973 = vmatpush1.xpose.msra.mxu0 %v953
      %974 = vmatprep.subr.mxu0 0.0
      %975 = vmatpush1.xpose.msra.mxu0 %v956
      %976 = vmatprep.subr.mxu0 0.0
      %977 = vmatpush1.xpose.msra.mxu0 %v959
      %978 = vmatprep.subr.mxu0 0.0
      %979 = vmatpush1.xpose.msra.mxu0 %v962
      %980 = vmatprep.subr.mxu0 0.0
      %981 = vmatpush1.xpose.msra.mxu0 0.0
      %982 = vmatprep.subr.mxu0 0.0
      %983 = vmatpush1.xpose.msra.mxu0 0.0
      %984 = vmatprep.subr.mxu0 0.0
      %985 = vmatpush1.xpose.msra.mxu0 0.0
      %986 = vmatprep.subr.mxu0 0.0
      %987 = vmatpush1.xpose.msra.mxu0 0.0
      %988 = vmatprep.subr.mxu0 0.0
      %989 = vmatpush1.xpose.msra.mxu0 0.0
      %990 = vmatprep.subr.mxu0 0.0
      %991 = vmatpush1.xpose.msra.mxu0 0.0
      %992 = vmatprep.subr.mxu0 0.0
      %993 = vmatpush1.xpose.msra.mxu0 0.0
      %994 = vmatprep.subr.mxu0 0.0
      %995 = vmatpush1.xpose.msra.mxu0 0.0
      %996 = vmatprep.subr.mxu0 0.0
      %997 = vmatpush1.xpose.msra.mxu0 0.0
      %998 = vmatprep.subr.mxu0 0.0
      %999 = vmatpush1.xpose.msra.mxu0 0.0
      %1000 = vmatprep.subr.mxu0 0.0
      %1001 = vmatpush1.xpose.msra.mxu0 0.0
      %1002 = vmatprep.subr.mxu0 0.0
      %1003 = vmatpush1.xpose.msra.mxu0 0.0
      %1004 = vmatprep.subr.mxu0 0.0
      %1005 = vmatpush1.xpose.msra.mxu0 0.0
      %1006 = vmatprep.subr.mxu0 0.0
      %1007 = vmatpush1.xpose.msra.mxu0 0.0
      %1008 = vmatprep.subr.mxu0 0.0
      %1009 = vmatpush1.xpose.msra.mxu0 0.0
      %1010 = vmatprep.subr.mxu0 0.0
      %1011 = vmatpush1.xpose.msra.mxu0 0.0
      %1012 = vmatprep.subr.mxu0 0.0
      %1013 = vmatpush1.xpose.msra.mxu0 0.0
      %1014 = vmatprep.subr.mxu0 0.0
      %1015 = vmatpush1.xpose.msra.mxu0 0.0
      %1016 = vmatprep.subr.mxu0 0.0
      %1017 = vmatpush1.xpose.msra.mxu0 0.0
      %1018 = vmatprep.subr.mxu0 0.0
      %1019 = vmatpush1.xpose.msra.mxu0 0.0
      %1020 = vmatprep.subr.mxu0 0.0
      %1021 = vmatpush1.xpose.msra.mxu0 0.0
      %1022 = vmatprep.subr.mxu0 0.0
      %1023 = vmatpush1.xpose.msra.mxu0 0.0
      %1024 = vmatprep.subr.mxu0 0.0
      %1025 = vmatpush1.xpose.msra.mxu0 0.0
      %1026 = vmatprep.subr.mxu0 0.0
      %1027 = vmatpush1.xpose.msra.mxu0 0.0
      %1028 = vmatprep.mubr.f32.mxu0 0.0
      %1029 = vmatmul.mubr.f32.gmra.mrb[0].mxu0 %v938
      %v1030 = vpop.f32.mrb[0].mxu0
      %v1031 = vadd.f32 0.0, %v1030
      %v1032 = vpop.f32.mrb[0].mxu0
      %1033 = vdwg.mxu0
      %v1034 = vlaneseq
      %v1035 = vshrl.u32 %v1034, 7
      %v1036 = vsub.s32 0, %v1035
      %v1037 = vrot.slane %v1031, %v1036
      %v1038 = vadd.f32 %v913, %v1037
      %v1039 = vadd.f32 %v916, %v1037
      %v1040 = vadd.f32 %v919, %v1037
      %v1041 = vadd.f32 %v922, %v1037
      %v1042 = vadd.f32 %v925, %v1037
      %v1043 = vadd.f32 %v928, %v1037
      %v1044 = vadd.f32 %v931, %v1037
      %v1045 = vadd.f32 %v934, %v1037
      %vm1046 = vcmp.gt.f32.partialorder %v1038, 0.0
      %vm1047 = vcmp.gt.f32.partialorder %v1039, 0.0
      %vm1048 = vcmp.gt.f32.partialorder %v1040, 0.0
      %vm1049 = vcmp.gt.f32.partialorder %v1041, 0.0
      %vm1050 = vcmp.gt.f32.partialorder %v1042, 0.0
      %vm1051 = vcmp.gt.f32.partialorder %v1043, 0.0
      %vm1052 = vcmp.gt.f32.partialorder %v1044, 0.0
      %vm1053 = vcmp.gt.f32.partialorder %v1045, 0.0
      %v1054 = vmul.f32 %v1038, 0.2
      %v1055 = vmul.f32 %v1039, 0.2
      %v1056 = vmul.f32 %v1040, 0.2
      %v1057 = vmul.f32 %v1041, 0.2
      %v1058 = vmul.f32 %v1042, 0.2
      %v1059 = vmul.f32 %v1043, 0.2
      %v1060 = vmul.f32 %v1044, 0.2
      %v1061 = vmul.f32 %v1045, 0.2
      %v1062 = vsel %vm1046, %v1038, %v1054
      %v1063 = vsel %vm1047, %v1039, %v1055
      %v1064 = vsel %vm1048, %v1040, %v1056
      %v1065 = vsel %vm1049, %v1041, %v1057
      %v1066 = vsel %vm1050, %v1042, %v1058
      %v1067 = vsel %vm1051, %v1043, %v1059
      %v1068 = vsel %vm1052, %v1044, %v1060
      %v1069 = vsel %vm1053, %v1045, %v1061
      %vm1070 = vcmp.gt.f32.partialorder %v756, 0.0
      %vm1071 = vcmp.gt.f32.partialorder %v757, 0.0
      %vm1072 = vcmp.gt.f32.partialorder %v758, 0.0
      %vm1073 = vcmp.gt.f32.partialorder %v759, 0.0
      %vm1074 = vcmp.gt.f32.partialorder %v760, 0.0
      %vm1075 = vcmp.gt.f32.partialorder %v761, 0.0
      %vm1076 = vcmp.gt.f32.partialorder %v762, 0.0
      %vm1077 = vcmp.gt.f32.partialorder %v763, 0.0
      %v1078 = vsel %vm1070, %v1062, -9e+15
      %v1079 = vsel %vm1071, %v1063, -9e+15
      %v1080 = vsel %vm1072, %v1064, -9e+15
      %v1081 = vsel %vm1073, %v1065, -9e+15
      %v1082 = vsel %vm1074, %v1066, -9e+15
      %v1083 = vsel %vm1075, %v1067, -9e+15
      %v1084 = vsel %vm1076, %v1068, -9e+15
      %v1085 = vsel %vm1077, %v1069, -9e+15
      %vm1086 = vcmask 523264
      %v1087 = vsel %vm1086, %v1078, -inf
      %1088 = vmax.xlane.f32.xlu0 %v1087
      %v1089 = vpop.xlane.xlu0 %1088
      %v1090 = vsel %vm1086, %v1079, -inf
      %1091 = vmax.xlane.f32.xlu0 %v1090
      %v1092 = vpop.xlane.xlu0 %1091
      %v1093 = vsel %vm1086, %v1080, -inf
      %1094 = vmax.xlane.f32.xlu0 %v1093
      %v1095 = vpop.xlane.xlu0 %1094
      %v1096 = vsel %vm1086, %v1081, -inf
      %1097 = vmax.xlane.f32.xlu0 %v1096
      %v1098 = vpop.xlane.xlu0 %1097
      %v1099 = vsel %vm1086, %v1082, -inf
      %1100 = vmax.xlane.f32.xlu0 %v1099
      %v1101 = vpop.xlane.xlu0 %1100
      %v1102 = vsel %vm1086, %v1083, -inf
      %1103 = vmax.xlane.f32.xlu0 %v1102
      %v1104 = vpop.xlane.xlu0 %1103
      %v1105 = vsel %vm1086, %v1084, -inf
      %1106 = vmax.xlane.f32.xlu0 %v1105
      %v1107 = vpop.xlane.xlu0 %1106
      %v1108 = vsel %vm1086, %v1085, -inf
      %1109 = vmax.xlane.f32.xlu0 %v1108
      %v1110 = vpop.xlane.xlu0 %1109
      %v1111 = vsub.f32 %v1078, %v1089
      %v1112 = vsub.f32 %v1079, %v1092
      %v1113 = vsub.f32 %v1080, %v1095
      %v1114 = vsub.f32 %v1081, %v1098
      %v1115 = vsub.f32 %v1082, %v1101
      %v1116 = vsub.f32 %v1083, %v1104
      %v1117 = vsub.f32 %v1084, %v1107
      %v1118 = vsub.f32 %v1085, %v1110
      %v1119 = vmul.f32 %v1111, 1.442695
      %v1120 = vpow.pop %v1119
      %v1121 = vmul.f32 %v1112, 1.442695
      %v1122 = vpow.pop %v1121
      %v1123 = vmul.f32 %v1113, 1.442695
      %v1124 = vpow.pop %v1123
      %v1125 = vmul.f32 %v1114, 1.442695
      %v1126 = vpow.pop %v1125
      %v1127 = vmul.f32 %v1115, 1.442695
      %v1128 = vpow.pop %v1127
      %v1129 = vmul.f32 %v1116, 1.442695
      %v1130 = vpow.pop %v1129
      %v1131 = vmul.f32 %v1117, 1.442695
      %v1132 = vpow.pop %v1131
      %v1133 = vmul.f32 %v1118, 1.442695
      %v1134 = vpow.pop %v1133
      %v1135 = vsel %vm1086, %v1120, 0.0
      %1136 = vadd.xlane.f32.xlu0 %v1135
      %v1137 = vpop.xlane.xlu0 %1136
      %v1138 = vsel %vm1086, %v1122, 0.0
      %1139 = vadd.xlane.f32.xlu0 %v1138
      %v1140 = vpop.xlane.xlu0 %1139
      %v1141 = vsel %vm1086, %v1124, 0.0
      %1142 = vadd.xlane.f32.xlu0 %v1141
      %v1143 = vpop.xlane.xlu0 %1142
      %v1144 = vsel %vm1086, %v1126, 0.0
      %1145 = vadd.xlane.f32.xlu0 %v1144
      %v1146 = vpop.xlane.xlu0 %1145
      %v1147 = vsel %vm1086, %v1128, 0.0
      %1148 = vadd.xlane.f32.xlu0 %v1147
      %v1149 = vpop.xlane.xlu0 %1148
      %v1150 = vsel %vm1086, %v1130, 0.0
      %1151 = vadd.xlane.f32.xlu0 %v1150
      %v1152 = vpop.xlane.xlu0 %1151
      %v1153 = vsel %vm1086, %v1132, 0.0
      %1154 = vadd.xlane.f32.xlu0 %v1153
      %v1155 = vpop.xlane.xlu0 %1154
      %v1156 = vsel %vm1086, %v1134, 0.0
      %1157 = vadd.xlane.f32.xlu0 %v1156
      %v1158 = vpop.xlane.xlu0 %1157
      %v1159 = vrcp.pop %v1137
      %v1160 = vrcp.pop %v1140
      %v1161 = vrcp.pop %v1143
      %v1162 = vrcp.pop %v1146
      %v1163 = vrcp.pop %v1149
      %v1164 = vrcp.pop %v1152
      %v1165 = vrcp.pop %v1155
      %v1166 = vrcp.pop %v1158
      %v1167 = vmul.f32 %v1120, %v1159
      %v1168 = vmul.f32 %v1122, %v1160
      %v1169 = vmul.f32 %v1124, %v1161
      %v1170 = vmul.f32 %v1126, %v1162
      %v1171 = vmul.f32 %v1128, %v1163
      %v1172 = vmul.f32 %v1130, %v1164
      %v1173 = vmul.f32 %v1132, %v1165
      %v1174 = vmul.f32 %v1134, %v1166
      %v1176 = vsel %vm1086, %v1167, 0
      %v1179 = vsel %vm1086, %v1168, 0
      %v1182 = vsel %vm1086, %v1169, 0
      %v1185 = vsel %vm1086, %v1170, 0
      %v1188 = vsel %vm1086, %v1171, 0
      %v1191 = vsel %vm1086, %v1172, 0
      %v1194 = vsel %vm1086, %v1173, 0
      %v1197 = vsel %vm1086, %v1174, 0
      %1199 = vmatprep.subr.mxu0 0.0
      %1200 = vmatpush1.msra.mxu0 %v861
      %1201 = vmatprep.subr.mxu0 0.0
      %1202 = vmatpush1.msra.mxu0 %v866
      %1203 = vmatprep.subr.mxu0 0.0
      %1204 = vmatpush1.msra.mxu0 %v871
      %1205 = vmatprep.subr.mxu0 0.0
      %1206 = vmatpush1.msra.mxu0 %v876
      %1207 = vmatprep.subr.mxu0 0.0
      %1208 = vmatpush1.msra.mxu0 %v881
      %1209 = vmatprep.subr.mxu0 0.0
      %1210 = vmatpush1.msra.mxu0 %v886
      %1211 = vmatprep.subr.mxu0 0.0
      %1212 = vmatpush1.msra.mxu0 %v891
      %1213 = vmatprep.subr.mxu0 0.0
      %1214 = vmatpush1.msra.mxu0 %v896
      %1215 = vmatprep.subr.mxu0 0.0
      %1216 = vmatpush1.msra.mxu0 0.0
      %1217 = vmatprep.subr.mxu0 0.0
      %1218 = vmatpush1.msra.mxu0 0.0
      %1219 = vmatprep.subr.mxu0 0.0
      %1220 = vmatpush1.msra.mxu0 0.0
      %1221 = vmatprep.subr.mxu0 0.0
      %1222 = vmatpush1.msra.mxu0 0.0
      %1223 = vmatprep.subr.mxu0 0.0
      %1224 = vmatpush1.msra.mxu0 0.0
      %1225 = vmatprep.subr.mxu0 0.0
      %1226 = vmatpush1.msra.mxu0 0.0
      %1227 = vmatprep.subr.mxu0 0.0
      %1228 = vmatpush1.msra.mxu0 0.0
      %1229 = vmatprep.subr.mxu0 0.0
      %1230 = vmatpush1.msra.mxu0 0.0
      %1231 = vmatprep.subr.mxu0 0.0
      %1232 = vmatpush1.msra.mxu0 0.0
      %1233 = vmatprep.subr.mxu0 0.0
      %1234 = vmatpush1.msra.mxu0 0.0
      %1235 = vmatprep.subr.mxu0 0.0
      %1236 = vmatpush1.msra.mxu0 0.0
      %1237 = vmatprep.subr.mxu0 0.0
      %1238 = vmatpush1.msra.mxu0 0.0
      %1239 = vmatprep.subr.mxu0 0.0
      %1240 = vmatpush1.msra.mxu0 0.0
      %1241 = vmatprep.subr.mxu0 0.0
      %1242 = vmatpush1.msra.mxu0 0.0
      %1243 = vmatprep.subr.mxu0 0.0
      %1244 = vmatpush1.msra.mxu0 0.0
      %1245 = vmatprep.subr.mxu0 0.0
      %1246 = vmatpush1.msra.mxu0 0.0
      %1247 = vmatprep.subr.mxu0 0.0
      %1248 = vmatpush1.msra.mxu0 0.0
      %1249 = vmatprep.subr.mxu0 0.0
      %1250 = vmatpush1.msra.mxu0 0.0
      %1251 = vmatprep.subr.mxu0 0.0
      %1252 = vmatpush1.msra.mxu0 0.0
      %1253 = vmatprep.subr.mxu0 0.0
      %1254 = vmatpush1.msra.mxu0 0.0
      %1255 = vmatprep.subr.mxu0 0.0
      %1256 = vmatpush1.msra.mxu0 0.0
      %1257 = vmatprep.subr.mxu0 0.0
      %1258 = vmatpush1.msra.mxu0 0.0
      %1259 = vmatprep.subr.mxu0 0.0
      %1260 = vmatpush1.msra.mxu0 0.0
      %1261 = vmatprep.subr.mxu0 0.0
      %1262 = vmatpush1.msra.mxu0 0.0
      %1263 = vmatprep.mubr.f32.mxu0 0.0
      %1264 = vmatmul.mubr.f32.gmra.mrb[0].mxu0 %v1176
      %v1265 = vpop.f32.mrb[0].mxu0
      %v1266 = vadd.f32 0.0, %v1265
      %v1267 = vpop.f32.mrb[0].mxu0
      %1268 = vmatprep.mubr.f32.mxu0 0.0
      %1269 = vmatmul.mubr.f32.gmra.mrb[0].mxu0 %v1179
      %v1270 = vpop.f32.mrb[0].mxu0
      %v1271 = vadd.f32 0.0, %v1270
      %v1272 = vpop.f32.mrb[0].mxu0
      %1273 = vmatprep.mubr.f32.mxu0 0.0
      %1274 = vmatmul.mubr.f32.gmra.mrb[0].mxu0 %v1182
      %v1275 = vpop.f32.mrb[0].mxu0
      %v1276 = vadd.f32 0.0, %v1275
      %v1277 = vpop.f32.mrb[0].mxu0
      %1278 = vmatprep.mubr.f32.mxu0 0.0
      %1279 = vmatmul.mubr.f32.gmra.mrb[0].mxu0 %v1185
      %v1280 = vpop.f32.mrb[0].mxu0
      %v1281 = vadd.f32 0.0, %v1280
      %v1282 = vpop.f32.mrb[0].mxu0
      %1283 = vmatprep.mubr.f32.mxu0 0.0
      %1284 = vmatmul.mubr.f32.gmra.mrb[0].mxu0 %v1188
      %v1285 = vpop.f32.mrb[0].mxu0
      %v1286 = vadd.f32 0.0, %v1285
      %v1287 = vpop.f32.mrb[0].mxu0
      %1288 = vmatprep.mubr.f32.mxu0 0.0
      %1289 = vmatmul.mubr.f32.gmra.mrb[0].mxu0 %v1191
      %v1290 = vpop.f32.mrb[0].mxu0
      %v1291 = vadd.f32 0.0, %v1290
      %v1292 = vpop.f32.mrb[0].mxu0
      %1293 = vmatprep.mubr.f32.mxu0 0.0
      %1294 = vmatmul.mubr.f32.gmra.mrb[0].mxu0 %v1194
      %v1295 = vpop.f32.mrb[0].mxu0
      %v1296 = vadd.f32 0.0, %v1295
      %v1297 = vpop.f32.mrb[0].mxu0
      %1298 = vmatprep.mubr.f32.mxu0 0.0
      %1299 = vmatmul.mubr.f32.gmra.mrb[0].mxu0 %v1197
      %v1300 = vpop.f32.mrb[0].mxu0
      %v1301 = vadd.f32 0.0, %v1300
      %v1302 = vpop.f32.mrb[0].mxu0
      %1303 = vdwg.mxu0
      %vm1304 = vcmp.gt.f32.partialorder %v1266, 0.0
      %vm1305 = vcmp.gt.f32.partialorder %v1271, 0.0
      %vm1306 = vcmp.gt.f32.partialorder %v1276, 0.0
      %vm1307 = vcmp.gt.f32.partialorder %v1281, 0.0
      %vm1308 = vcmp.gt.f32.partialorder %v1286, 0.0
      %vm1309 = vcmp.gt.f32.partialorder %v1291, 0.0
      %vm1310 = vcmp.gt.f32.partialorder %v1296, 0.0
      %vm1311 = vcmp.gt.f32.partialorder %v1301, 0.0
      %v1312 = vmin.f32 %v1266, 0.0
      %v1313 = vmin.f32 %v1271, 0.0
      %v1314 = vmin.f32 %v1276, 0.0
      %v1315 = vmin.f32 %v1281, 0.0
      %v1316 = vmin.f32 %v1286, 0.0
      %v1317 = vmin.f32 %v1291, 0.0
      %v1318 = vmin.f32 %v1296, 0.0
      %v1319 = vmin.f32 %v1301, 0.0
      %v1320 = vmul.f32 %v1312, 1.442695
      %v1321 = vpow.pop %v1320
      %v1322 = vmul.f32 %v1313, 1.442695
      %v1323 = vpow.pop %v1322
      %v1324 = vmul.f32 %v1314, 1.442695
      %v1325 = vpow.pop %v1324
      %v1326 = vmul.f32 %v1315, 1.442695
      %v1327 = vpow.pop %v1326
      %v1328 = vmul.f32 %v1316, 1.442695
      %v1329 = vpow.pop %v1328
      %v1330 = vmul.f32 %v1317, 1.442695
      %v1331 = vpow.pop %v1330
      %v1332 = vmul.f32 %v1318, 1.442695
      %v1333 = vpow.pop %v1332
      %v1334 = vmul.f32 %v1319, 1.442695
      %v1335 = vpow.pop %v1334
      %v1336 = vsub.f32 %v1321, 1.0
      %v1337 = vsub.f32 %v1323, 1.0
      %v1338 = vsub.f32 %v1325, 1.0
      %v1339 = vsub.f32 %v1327, 1.0
      %v1340 = vsub.f32 %v1329, 1.0
      %v1341 = vsub.f32 %v1331, 1.0
      %v1342 = vsub.f32 %v1333, 1.0
      %v1343 = vsub.f32 %v1335, 1.0
      %v1344 = vsel %vm1304, %v1266, %v1336
      %v1345 = vsel %vm1305, %v1271, %v1337
      %v1346 = vsel %vm1306, %v1276, %v1338
      %v1347 = vsel %vm1307, %v1281, %v1339
      %v1348 = vsel %vm1308, %v1286, %v1340
      %v1349 = vsel %vm1309, %v1291, %v1341
      %v1350 = vsel %vm1310, %v1296, %v1342
      %v1351 = vsel %vm1311, %v1301, %v1343
      %v1352 = vlaneseq
      %v1353 = vshrl.u32 %v1352, 7
      %v1354 = vsub.s32 1, %v1353
      %v1355 = vrot.slane %v765, %v1354
      %1357 = vrot.lane.b32.xlu0 %v1355, 8
      %v1358 = vpop.permute.xlu0 %1357
      %v1360 = vmul.f32 %v861, %v1358
      %v1361 = vmul.f32 %v866, %v1358
      %v1362 = vmul.f32 %v871, %v1358
      %v1363 = vmul.f32 %v876, %v1358
      %v1364 = vmul.f32 %v881, %v1358
      %v1365 = vmul.f32 %v886, %v1358
      %v1366 = vmul.f32 %v891, %v1358
      %v1367 = vmul.f32 %v896, %v1358
      %1376 = vrot.lane.b32.xlu0 %v1360, 120
      %v1377 = vpop.permute.xlu0 %1376
      %1378 = vrot.lane.b32.xlu0 %v1361, 120
      %v1379 = vpop.permute.xlu0 %1378
      %1380 = vrot.lane.b32.xlu0 %v1362, 120
      %v1381 = vpop.permute.xlu0 %1380
      %1382 = vrot.lane.b32.xlu0 %v1363, 120
      %v1383 = vpop.permute.xlu0 %1382
      %1384 = vrot.lane.b32.xlu0 %v1364, 120
      %v1385 = vpop.permute.xlu0 %1384
      %1386 = vrot.lane.b32.xlu0 %v1365, 120
      %v1387 = vpop.permute.xlu0 %1386
      %1388 = vrot.lane.b32.xlu0 %v1366, 120
      %v1389 = vpop.permute.xlu0 %1388
      %1390 = vrot.lane.b32.xlu0 %v1367, 120
      %v1391 = vpop.permute.xlu0 %1390
      %v1400 = vsel %vm769, %v1377, 0.0
      %1401 = vadd.xlane.f32.xlu0 %v1400
      %v1402 = vpop.xlane.xlu0 %1401
      %v1403 = vsel %vm769, %v1379, 0.0
      %1404 = vadd.xlane.f32.xlu0 %v1403
      %v1405 = vpop.xlane.xlu0 %1404
      %v1406 = vsel %vm769, %v1381, 0.0
      %1407 = vadd.xlane.f32.xlu0 %v1406
      %v1408 = vpop.xlane.xlu0 %1407
      %v1409 = vsel %vm769, %v1383, 0.0
      %1410 = vadd.xlane.f32.xlu0 %v1409
      %v1411 = vpop.xlane.xlu0 %1410
      %v1412 = vsel %vm769, %v1385, 0.0
      %1413 = vadd.xlane.f32.xlu0 %v1412
      %v1414 = vpop.xlane.xlu0 %1413
      %v1415 = vsel %vm769, %v1387, 0.0
      %1416 = vadd.xlane.f32.xlu0 %v1415
      %v1417 = vpop.xlane.xlu0 %1416
      %v1418 = vsel %vm769, %v1389, 0.0
      %1419 = vadd.xlane.f32.xlu0 %v1418
      %v1420 = vpop.xlane.xlu0 %1419
      %v1421 = vsel %vm769, %v1391, 0.0
      %1422 = vadd.xlane.f32.xlu0 %v1421
      %v1423 = vpop.xlane.xlu0 %1422
      %v1424 = vrot.slane %v765, 1
      %1425 = vrot.lane.b32.xlu0 %v1424, 120
      %v1426 = vpop.permute.xlu0 %1425
      %1427 = vrot.lane.b32.xlu0 %v861, 120
      %v1428 = vpop.permute.xlu0 %1427
      %1429 = vrot.lane.b32.xlu0 %v866, 120
      %v1430 = vpop.permute.xlu0 %1429
      %1431 = vrot.lane.b32.xlu0 %v871, 120
      %v1432 = vpop.permute.xlu0 %1431
      %1433 = vrot.lane.b32.xlu0 %v876, 120
      %v1434 = vpop.permute.xlu0 %1433
      %1435 = vrot.lane.b32.xlu0 %v881, 120
      %v1436 = vpop.permute.xlu0 %1435
      %1437 = vrot.lane.b32.xlu0 %v886, 120
      %v1438 = vpop.permute.xlu0 %1437
      %1439 = vrot.lane.b32.xlu0 %v891, 120
      %v1440 = vpop.permute.xlu0 %1439
      %1441 = vrot.lane.b32.xlu0 %v896, 120
      %v1442 = vpop.permute.xlu0 %1441
      %v1443 = vsel %vm769, %v1426, 0
      %v1445 = vsel %vm769, %v1428, 0
      %v1447 = vsel %vm769, %v1430, 0
      %v1449 = vsel %vm769, %v1432, 0
      %v1451 = vsel %vm769, %v1434, 0
      %v1453 = vsel %vm769, %v1436, 0
      %v1455 = vsel %vm769, %v1438, 0
      %v1457 = vsel %vm769, %v1440, 0
      %v1459 = vsel %vm769, %v1442, 0
      %1461 = vmatprep.subr.mxu0 0.0
      %1462 = vmatpush1.xpose.msra.mxu0 %v1445
      %1463 = vmatprep.subr.mxu0 0.0
      %1464 = vmatpush1.xpose.msra.mxu0 %v1447
      %1465 = vmatprep.subr.mxu0 0.0
      %1466 = vmatpush1.xpose.msra.mxu0 %v1449
      %1467 = vmatprep.subr.mxu0 0.0
      %1468 = vmatpush1.xpose.msra.mxu0 %v1451
      %1469 = vmatprep.subr.mxu0 0.0
      %1470 = vmatpush1.xpose.msra.mxu0 %v1453
      %1471 = vmatprep.subr.mxu0 0.0
      %1472 = vmatpush1.xpose.msra.mxu0 %v1455
      %1473 = vmatprep.subr.mxu0 0.0
      %1474 = vmatpush1.xpose.msra.mxu0 %v1457
      %1475 = vmatprep.subr.mxu0 0.0
      %1476 = vmatpush1.xpose.msra.mxu0 %v1459
      %1477 = vmatprep.subr.mxu0 0.0
      %1478 = vmatpush1.xpose.msra.mxu0 0.0
      %1479 = vmatprep.subr.mxu0 0.0
      %1480 = vmatpush1.xpose.msra.mxu0 0.0
      %1481 = vmatprep.subr.mxu0 0.0
      %1482 = vmatpush1.xpose.msra.mxu0 0.0
      %1483 = vmatprep.subr.mxu0 0.0
      %1484 = vmatpush1.xpose.msra.mxu0 0.0
      %1485 = vmatprep.subr.mxu0 0.0
      %1486 = vmatpush1.xpose.msra.mxu0 0.0
      %1487 = vmatprep.subr.mxu0 0.0
      %1488 = vmatpush1.xpose.msra.mxu0 0.0
      %1489 = vmatprep.subr.mxu0 0.0
      %1490 = vmatpush1.xpose.msra.mxu0 0.0
      %1491 = vmatprep.subr.mxu0 0.0
      %1492 = vmatpush1.xpose.msra.mxu0 0.0
      %1493 = vmatprep.subr.mxu0 0.0
      %1494 = vmatpush1.xpose.msra.mxu0 0.0
      %1495 = vmatprep.subr.mxu0 0.0
      %1496 = vmatpush1.xpose.msra.mxu0 0.0
      %1497 = vmatprep.subr.mxu0 0.0
      %1498 = vmatpush1.xpose.msra.mxu0 0.0
      %1499 = vmatprep.subr.mxu0 0.0
      %1500 = vmatpush1.xpose.msra.mxu0 0.0
      %1501 = vmatprep.subr.mxu0 0.0
      %1502 = vmatpush1.xpose.msra.mxu0 0.0
      %1503 = vmatprep.subr.mxu0 0.0
      %1504 = vmatpush1.xpose.msra.mxu0 0.0
      %1505 = vmatprep.subr.mxu0 0.0
      %1506 = vmatpush1.xpose.msra.mxu0 0.0
      %1507 = vmatprep.subr.mxu0 0.0
      %1508 = vmatpush1.xpose.msra.mxu0 0.0
      %1509 = vmatprep.subr.mxu0 0.0
      %1510 = vmatpush1.xpose.msra.mxu0 0.0
      %1511 = vmatprep.subr.mxu0 0.0
      %1512 = vmatpush1.xpose.msra.mxu0 0.0
      %1513 = vmatprep.subr.mxu0 0.0
      %1514 = vmatpush1.xpose.msra.mxu0 0.0
      %1515 = vmatprep.subr.mxu0 0.0
      %1516 = vmatpush1.xpose.msra.mxu0 0.0
      %1517 = vmatprep.subr.mxu0 0.0
      %1518 = vmatpush1.xpose.msra.mxu0 0.0
      %1519 = vmatprep.subr.mxu0 0.0
      %1520 = vmatpush1.xpose.msra.mxu0 0.0
      %1521 = vmatprep.subr.mxu0 0.0
      %1522 = vmatpush1.xpose.msra.mxu0 0.0
      %1523 = vmatprep.subr.mxu0 0.0
      %1524 = vmatpush1.xpose.msra.mxu0 0.0
      %1525 = vmatprep.mubr.f32.mxu0 0.0
      %1526 = vmatmul.mubr.f32.gmra.mrb[0].mxu0 %v1443
      %v1527 = vpop.f32.mrb[0].mxu0
      %v1528 = vadd.f32 0.0, %v1527
      %v1529 = vpop.f32.mrb[0].mxu0
      %1530 = vdwg.mxu0
      %v1531 = vlaneseq
      %v1532 = vshrl.u32 %v1531, 7
      %v1533 = vsub.s32 0, %v1532
      %v1534 = vrot.slane %v1528, %v1533
      %v1535 = vadd.f32 %v1402, %v1534
      %v1536 = vadd.f32 %v1405, %v1534
      %v1537 = vadd.f32 %v1408, %v1534
      %v1538 = vadd.f32 %v1411, %v1534
      %v1539 = vadd.f32 %v1414, %v1534
      %v1540 = vadd.f32 %v1417, %v1534
      %v1541 = vadd.f32 %v1420, %v1534
      %v1542 = vadd.f32 %v1423, %v1534
      %vm1543 = vcmp.gt.f32.partialorder %v1535, 0.0
      %vm1544 = vcmp.gt.f32.partialorder %v1536, 0.0
      %vm1545 = vcmp.gt.f32.partialorder %v1537, 0.0
      %vm1546 = vcmp.gt.f32.partialorder %v1538, 0.0
      %vm1547 = vcmp.gt.f32.partialorder %v1539, 0.0
      %vm1548 = vcmp.gt.f32.partialorder %v1540, 0.0
      %vm1549 = vcmp.gt.f32.partialorder %v1541, 0.0
      %vm1550 = vcmp.gt.f32.partialorder %v1542, 0.0
      %v1551 = vmul.f32 %v1535, 0.2
      %v1552 = vmul.f32 %v1536, 0.2
      %v1553 = vmul.f32 %v1537, 0.2
      %v1554 = vmul.f32 %v1538, 0.2
      %v1555 = vmul.f32 %v1539, 0.2
      %v1556 = vmul.f32 %v1540, 0.2
      %v1557 = vmul.f32 %v1541, 0.2
      %v1558 = vmul.f32 %v1542, 0.2
      %v1559 = vsel %vm1543, %v1535, %v1551
      %v1560 = vsel %vm1544, %v1536, %v1552
      %v1561 = vsel %vm1545, %v1537, %v1553
      %v1562 = vsel %vm1546, %v1538, %v1554
      %v1563 = vsel %vm1547, %v1539, %v1555
      %v1564 = vsel %vm1548, %v1540, %v1556
      %v1565 = vsel %vm1549, %v1541, %v1557
      %v1566 = vsel %vm1550, %v1542, %v1558
      %v1567 = vsel %vm1070, %v1559, -9e+15
      %v1568 = vsel %vm1071, %v1560, -9e+15
      %v1569 = vsel %vm1072, %v1561, -9e+15
      %v1570 = vsel %vm1073, %v1562, -9e+15
      %v1571 = vsel %vm1074, %v1563, -9e+15
      %v1572 = vsel %vm1075, %v1564, -9e+15
      %v1573 = vsel %vm1076, %v1565, -9e+15
      %v1574 = vsel %vm1077, %v1566, -9e+15
      %v1575 = vsel %vm1086, %v1567, -inf
      %1576 = vmax.xlane.f32.xlu0 %v1575
      %v1577 = vpop.xlane.xlu0 %1576
      %v1578 = vsel %vm1086, %v1568, -inf
      %1579 = vmax.xlane.f32.xlu0 %v1578
      %v1580 = vpop.xlane.xlu0 %1579
      %v1581 = vsel %vm1086, %v1569, -inf
      %1582 = vmax.xlane.f32.xlu0 %v1581
      %v1583 = vpop.xlane.xlu0 %1582
      %v1584 = vsel %vm1086, %v1570, -inf
      %1585 = vmax.xlane.f32.xlu0 %v1584
      %v1586 = vpop.xlane.xlu0 %1585
      %v1587 = vsel %vm1086, %v1571, -inf
      %1588 = vmax.xlane.f32.xlu0 %v1587
      %v1589 = vpop.xlane.xlu0 %1588
      %v1590 = vsel %vm1086, %v1572, -inf
      %1591 = vmax.xlane.f32.xlu0 %v1590
      %v1592 = vpop.xlane.xlu0 %1591
      %v1593 = vsel %vm1086, %v1573, -inf
      %1594 = vmax.xlane.f32.xlu0 %v1593
      %v1595 = vpop.xlane.xlu0 %1594
      %v1596 = vsel %vm1086, %v1574, -inf
      %1597 = vmax.xlane.f32.xlu0 %v1596
      %v1598 = vpop.xlane.xlu0 %1597
      %v1599 = vsub.f32 %v1567, %v1577
      %v1600 = vsub.f32 %v1568, %v1580
      %v1601 = vsub.f32 %v1569, %v1583
      %v1602 = vsub.f32 %v1570, %v1586
      %v1603 = vsub.f32 %v1571, %v1589
      %v1604 = vsub.f32 %v1572, %v1592
      %v1605 = vsub.f32 %v1573, %v1595
      %v1606 = vsub.f32 %v1574, %v1598
      %v1607 = vmul.f32 %v1599, 1.442695
      %v1608 = vpow.pop %v1607
      %v1609 = vmul.f32 %v1600, 1.442695
      %v1610 = vpow.pop %v1609
      %v1611 = vmul.f32 %v1601, 1.442695
      %v1612 = vpow.pop %v1611
      %v1613 = vmul.f32 %v1602, 1.442695
      %v1614 = vpow.pop %v1613
      %v1615 = vmul.f32 %v1603, 1.442695
      %v1616 = vpow.pop %v1615
      %v1617 = vmul.f32 %v1604, 1.442695
      %v1618 = vpow.pop %v1617
      %v1619 = vmul.f32 %v1605, 1.442695
      %v1620 = vpow.pop %v1619
      %v1621 = vmul.f32 %v1606, 1.442695
      %v1622 = vpow.pop %v1621
      %v1623 = vsel %vm1086, %v1608, 0.0
      %1624 = vadd.xlane.f32.xlu0 %v1623
      %v1625 = vpop.xlane.xlu0 %1624
      %v1626 = vsel %vm1086, %v1610, 0.0
      %1627 = vadd.xlane.f32.xlu0 %v1626
      %v1628 = vpop.xlane.xlu0 %1627
      %v1629 = vsel %vm1086, %v1612, 0.0
      %1630 = vadd.xlane.f32.xlu0 %v1629
      %v1631 = vpop.xlane.xlu0 %1630
      %v1632 = vsel %vm1086, %v1614, 0.0
      %1633 = vadd.xlane.f32.xlu0 %v1632
      %v1634 = vpop.xlane.xlu0 %1633
      %v1635 = vsel %vm1086, %v1616, 0.0
      %1636 = vadd.xlane.f32.xlu0 %v1635
      %v1637 = vpop.xlane.xlu0 %1636
      %v1638 = vsel %vm1086, %v1618, 0.0
      %1639 = vadd.xlane.f32.xlu0 %v1638
      %v1640 = vpop.xlane.xlu0 %1639
      %v1641 = vsel %vm1086, %v1620, 0.0
      %1642 = vadd.xlane.f32.xlu0 %v1641
      %v1643 = vpop.xlane.xlu0 %1642
      %v1644 = vsel %vm1086, %v1622, 0.0
      %1645 = vadd.xlane.f32.xlu0 %v1644
      %v1646 = vpop.xlane.xlu0 %1645
      %v1647 = vrcp.pop %v1625
      %v1648 = vrcp.pop %v1628
      %v1649 = vrcp.pop %v1631
      %v1650 = vrcp.pop %v1634
      %v1651 = vrcp.pop %v1637
      %v1652 = vrcp.pop %v1640
      %v1653 = vrcp.pop %v1643
      %v1654 = vrcp.pop %v1646
      %v1655 = vmul.f32 %v1608, %v1647
      %v1656 = vmul.f32 %v1610, %v1648
      %v1657 = vmul.f32 %v1612, %v1649
      %v1658 = vmul.f32 %v1614, %v1650
      %v1659 = vmul.f32 %v1616, %v1651
      %v1660 = vmul.f32 %v1618, %v1652
      %v1661 = vmul.f32 %v1620, %v1653
      %v1662 = vmul.f32 %v1622, %v1654
      %v1672 = vsel %vm1086, %v1655, 0
      %v1675 = vsel %vm1086, %v1656, 0
      %v1678 = vsel %vm1086, %v1657, 0
      %v1681 = vsel %vm1086, %v1658, 0
      %v1684 = vsel %vm1086, %v1659, 0
      %v1687 = vsel %vm1086, %v1660, 0
      %v1690 = vsel %vm1086, %v1661, 0
      %v1693 = vsel %vm1086, %v1662, 0
      %1695 = vmatprep.subr.mxu0 0.0
      %1696 = vmatpush1.msra.mxu0 %v1428
      %1697 = vmatprep.subr.mxu0 0.0
      %1698 = vmatpush1.msra.mxu0 %v1430
      %1699 = vmatprep.subr.mxu0 0.0
      %1700 = vmatpush1.msra.mxu0 %v1432
      %1701 = vmatprep.subr.mxu0 0.0
      %1702 = vmatpush1.msra.mxu0 %v1434
      %1703 = vmatprep.subr.mxu0 0.0
      %1704 = vmatpush1.msra.mxu0 %v1436
      %1705 = vmatprep.subr.mxu0 0.0
      %1706 = vmatpush1.msra.mxu0 %v1438
      %1707 = vmatprep.subr.mxu0 0.0
      %1708 = vmatpush1.msra.mxu0 %v1440
      %1709 = vmatprep.subr.mxu0 0.0
      %1710 = vmatpush1.msra.mxu0 %v1442
      %1711 = vmatprep.subr.mxu0 0.0
      %1712 = vmatpush1.msra.mxu0 0.0
      %1713 = vmatprep.subr.mxu0 0.0
      %1714 = vmatpush1.msra.mxu0 0.0
      %1715 = vmatprep.subr.mxu0 0.0
      %1716 = vmatpush1.msra.mxu0 0.0
      %1717 = vmatprep.subr.mxu0 0.0
      %1718 = vmatpush1.msra.mxu0 0.0
      %1719 = vmatprep.subr.mxu0 0.0
      %1720 = vmatpush1.msra.mxu0 0.0
      %1721 = vmatprep.subr.mxu0 0.0
      %1722 = vmatpush1.msra.mxu0 0.0
      %1723 = vmatprep.subr.mxu0 0.0
      %1724 = vmatpush1.msra.mxu0 0.0
      %1725 = vmatprep.subr.mxu0 0.0
      %1726 = vmatpush1.msra.mxu0 0.0
      %1727 = vmatprep.subr.mxu0 0.0
      %1728 = vmatpush1.msra.mxu0 0.0
      %1729 = vmatprep.subr.mxu0 0.0
      %1730 = vmatpush1.msra.mxu0 0.0
      %1731 = vmatprep.subr.mxu0 0.0
      %1732 = vmatpush1.msra.mxu0 0.0
      %1733 = vmatprep.subr.mxu0 0.0
      %1734 = vmatpush1.msra.mxu0 0.0
      %1735 = vmatprep.subr.mxu0 0.0
      %1736 = vmatpush1.msra.mxu0 0.0
      %1737 = vmatprep.subr.mxu0 0.0
      %1738 = vmatpush1.msra.mxu0 0.0
      %1739 = vmatprep.subr.mxu0 0.0
      %1740 = vmatpush1.msra.mxu0 0.0
      %1741 = vmatprep.subr.mxu0 0.0
      %1742 = vmatpush1.msra.mxu0 0.0
      %1743 = vmatprep.subr.mxu0 0.0
      %1744 = vmatpush1.msra.mxu0 0.0
      %1745 = vmatprep.subr.mxu0 0.0
      %1746 = vmatpush1.msra.mxu0 0.0
      %1747 = vmatprep.subr.mxu0 0.0
      %1748 = vmatpush1.msra.mxu0 0.0
      %1749 = vmatprep.subr.mxu0 0.0
      %1750 = vmatpush1.msra.mxu0 0.0
      %1751 = vmatprep.subr.mxu0 0.0
      %1752 = vmatpush1.msra.mxu0 0.0
      %1753 = vmatprep.subr.mxu0 0.0
      %1754 = vmatpush1.msra.mxu0 0.0
      %1755 = vmatprep.subr.mxu0 0.0
      %1756 = vmatpush1.msra.mxu0 0.0
      %1757 = vmatprep.subr.mxu0 0.0
      %1758 = vmatpush1.msra.mxu0 0.0
      %1759 = vmatprep.mubr.f32.mxu0 0.0
      %1760 = vmatmul.mubr.f32.gmra.mrb[0].mxu0 %v1672
      %v1761 = vpop.f32.mrb[0].mxu0
      %v1762 = vadd.f32 0.0, %v1761
      %v1763 = vpop.f32.mrb[0].mxu0
      %1764 = vmatprep.mubr.f32.mxu0 0.0
      %1765 = vmatmul.mubr.f32.gmra.mrb[0].mxu0 %v1675
      %v1766 = vpop.f32.mrb[0].mxu0
      %v1767 = vadd.f32 0.0, %v1766
      %v1768 = vpop.f32.mrb[0].mxu0
      %1769 = vmatprep.mubr.f32.mxu0 0.0
      %1770 = vmatmul.mubr.f32.gmra.mrb[0].mxu0 %v1678
      %v1771 = vpop.f32.mrb[0].mxu0
      %v1772 = vadd.f32 0.0, %v1771
      %v1773 = vpop.f32.mrb[0].mxu0
      %1774 = vmatprep.mubr.f32.mxu0 0.0
      %1775 = vmatmul.mubr.f32.gmra.mrb[0].mxu0 %v1681
      %v1776 = vpop.f32.mrb[0].mxu0
      %v1777 = vadd.f32 0.0, %v1776
      %v1778 = vpop.f32.mrb[0].mxu0
      %1779 = vmatprep.mubr.f32.mxu0 0.0
      %1780 = vmatmul.mubr.f32.gmra.mrb[0].mxu0 %v1684
      %v1781 = vpop.f32.mrb[0].mxu0
      %v1782 = vadd.f32 0.0, %v1781
      %v1783 = vpop.f32.mrb[0].mxu0
      %1784 = vmatprep.mubr.f32.mxu0 0.0
      %1785 = vmatmul.mubr.f32.gmra.mrb[0].mxu0 %v1687
      %v1786 = vpop.f32.mrb[0].mxu0
      %v1787 = vadd.f32 0.0, %v1786
      %v1788 = vpop.f32.mrb[0].mxu0
      %1789 = vmatprep.mubr.f32.mxu0 0.0
      %1790 = vmatmul.mubr.f32.gmra.mrb[0].mxu0 %v1690
      %v1791 = vpop.f32.mrb[0].mxu0
      %v1792 = vadd.f32 0.0, %v1791
      %v1793 = vpop.f32.mrb[0].mxu0
      %1794 = vmatprep.mubr.f32.mxu0 0.0
      %1795 = vmatmul.mubr.f32.gmra.mrb[0].mxu0 %v1693
      %v1796 = vpop.f32.mrb[0].mxu0
      %v1797 = vadd.f32 0.0, %v1796
      %v1798 = vpop.f32.mrb[0].mxu0
      %1799 = vdwg.mxu0
      %vm1800 = vcmp.gt.f32.partialorder %v1762, 0.0
      %vm1801 = vcmp.gt.f32.partialorder %v1767, 0.0
      %vm1802 = vcmp.gt.f32.partialorder %v1772, 0.0
      %vm1803 = vcmp.gt.f32.partialorder %v1777, 0.0
      %vm1804 = vcmp.gt.f32.partialorder %v1782, 0.0
      %vm1805 = vcmp.gt.f32.partialorder %v1787, 0.0
      %vm1806 = vcmp.gt.f32.partialorder %v1792, 0.0
      %vm1807 = vcmp.gt.f32.partialorder %v1797, 0.0
      %v1808 = vmin.f32 %v1762, 0.0
      %v1809 = vmin.f32 %v1767, 0.0
      %v1810 = vmin.f32 %v1772, 0.0
      %v1811 = vmin.f32 %v1777, 0.0
      %v1812 = vmin.f32 %v1782, 0.0
      %v1813 = vmin.f32 %v1787, 0.0
      %v1814 = vmin.f32 %v1792, 0.0
      %v1815 = vmin.f32 %v1797, 0.0
      %v1816 = vmul.f32 %v1808, 1.442695
      %v1817 = vpow.pop %v1816
      %v1818 = vmul.f32 %v1809, 1.442695
      %v1819 = vpow.pop %v1818
      %v1820 = vmul.f32 %v1810, 1.442695
      %v1821 = vpow.pop %v1820
      %v1822 = vmul.f32 %v1811, 1.442695
      %v1823 = vpow.pop %v1822
      %v1824 = vmul.f32 %v1812, 1.442695
      %v1825 = vpow.pop %v1824
      %v1826 = vmul.f32 %v1813, 1.442695
      %v1827 = vpow.pop %v1826
      %v1828 = vmul.f32 %v1814, 1.442695
      %v1829 = vpow.pop %v1828
      %v1830 = vmul.f32 %v1815, 1.442695
      %v1831 = vpow.pop %v1830
      %v1832 = vsub.f32 %v1817, 1.0
      %v1833 = vsub.f32 %v1819, 1.0
      %v1834 = vsub.f32 %v1821, 1.0
      %v1835 = vsub.f32 %v1823, 1.0
      %v1836 = vsub.f32 %v1825, 1.0
      %v1837 = vsub.f32 %v1827, 1.0
      %v1838 = vsub.f32 %v1829, 1.0
      %v1839 = vsub.f32 %v1831, 1.0
      %v1840 = vsel %vm1800, %v1762, %v1832
      %v1841 = vsel %vm1801, %v1767, %v1833
      %v1842 = vsel %vm1802, %v1772, %v1834
      %v1843 = vsel %vm1803, %v1777, %v1835
      %v1844 = vsel %vm1804, %v1782, %v1836
      %v1845 = vsel %vm1805, %v1787, %v1837
      %v1846 = vsel %vm1806, %v1792, %v1838
      %v1847 = vsel %vm1807, %v1797, %v1839
      %v1849 = vsel %vm769, %v1840, 0
      %v1852 = vsel %vm769, %v1841, 0
      %v1855 = vsel %vm769, %v1842, 0
      %v1858 = vsel %vm769, %v1843, 0
      %v1861 = vsel %vm769, %v1844, 0
      %v1864 = vsel %vm769, %v1845, 0
      %v1867 = vsel %vm769, %v1846, 0
      %v1870 = vsel %vm769, %v1847, 0
      %1872 = vmatprep.subr.mxu0 0.0
      %1873 = vmatpush1.msra.mxu0 %v767
      %1874 = vmatprep.subr.mxu0 0.0
      %1875 = vmatpush1.msra.mxu0 0.0
      %1876 = vmatprep.subr.mxu0 0.0
      %1877 = vmatpush1.msra.mxu0 0.0
      %1878 = vmatprep.subr.mxu0 0.0
      %1879 = vmatpush1.msra.mxu0 0.0
      %1880 = vmatprep.subr.mxu0 0.0
      %1881 = vmatpush1.msra.mxu0 0.0
      %1882 = vmatprep.subr.mxu0 0.0
      %1883 = vmatpush1.msra.mxu0 0.0
      %1884 = vmatprep.subr.mxu0 0.0
      %1885 = vmatpush1.msra.mxu0 0.0
      %1886 = vmatprep.subr.mxu0 0.0
      %1887 = vmatpush1.msra.mxu0 0.0
      %1888 = vmatprep.subr.mxu0 0.0
      %1889 = vmatpush1.msra.mxu0 0.0
      %1890 = vmatprep.subr.mxu0 0.0
      %1891 = vmatpush1.msra.mxu0 0.0
      %1892 = vmatprep.subr.mxu0 0.0
      %1893 = vmatpush1.msra.mxu0 0.0
      %1894 = vmatprep.subr.mxu0 0.0
      %1895 = vmatpush1.msra.mxu0 0.0
      %1896 = vmatprep.subr.mxu0 0.0
      %1897 = vmatpush1.msra.mxu0 0.0
      %1898 = vmatprep.subr.mxu0 0.0
      %1899 = vmatpush1.msra.mxu0 0.0
      %1900 = vmatprep.subr.mxu0 0.0
      %1901 = vmatpush1.msra.mxu0 0.0
      %1902 = vmatprep.subr.mxu0 0.0
      %1903 = vmatpush1.msra.mxu0 0.0
      %1904 = vmatprep.subr.mxu0 0.0
      %1905 = vmatpush1.msra.mxu0 0.0
      %1906 = vmatprep.subr.mxu0 0.0
      %1907 = vmatpush1.msra.mxu0 0.0
      %1908 = vmatprep.subr.mxu0 0.0
      %1909 = vmatpush1.msra.mxu0 0.0
      %1910 = vmatprep.subr.mxu0 0.0
      %1911 = vmatpush1.msra.mxu0 0.0
      %1912 = vmatprep.subr.mxu0 0.0
      %1913 = vmatpush1.msra.mxu0 0.0
      %1914 = vmatprep.subr.mxu0 0.0
      %1915 = vmatpush1.msra.mxu0 0.0
      %1916 = vmatprep.subr.mxu0 0.0
      %1917 = vmatpush1.msra.mxu0 0.0
      %1918 = vmatprep.subr.mxu0 0.0
      %1919 = vmatpush1.msra.mxu0 0.0
      %1920 = vmatprep.subr.mxu0 0.0
      %1921 = vmatpush1.msra.mxu0 0.0
      %1922 = vmatprep.subr.mxu0 0.0
      %1923 = vmatpush1.msra.mxu0 0.0
      %1924 = vmatprep.subr.mxu0 0.0
      %1925 = vmatpush1.msra.mxu0 0.0
      %1926 = vmatprep.subr.mxu0 0.0
      %1927 = vmatpush1.msra.mxu0 0.0
      %1928 = vmatprep.subr.mxu0 0.0
      %1929 = vmatpush1.msra.mxu0 0.0
      %1930 = vmatprep.subr.mxu0 0.0
      %1931 = vmatpush1.msra.mxu0 0.0
      %1932 = vmatprep.subr.mxu0 0.0
      %1933 = vmatpush1.msra.mxu0 0.0
      %1934 = vmatprep.subr.mxu0 0.0
      %1935 = vmatpush1.msra.mxu0 0.0
      %1936 = vmatprep.mubr.f32.mxu0 0.0
      %1937 = vmatmul.mubr.f32.gmra.mrb[0].mxu0 %v1849
      %v1938 = vpop.f32.mrb[0].mxu0
      %v1939 = vadd.f32 0.0, %v1938
      %v1940 = vpop.f32.mrb[0].mxu0
      %1941 = vmatprep.mubr.f32.mxu0 0.0
      %1942 = vmatmul.mubr.f32.gmra.mrb[0].mxu0 %v1852
      %v1943 = vpop.f32.mrb[0].mxu0
      %v1944 = vadd.f32 0.0, %v1943
      %v1945 = vpop.f32.mrb[0].mxu0
      %1946 = vmatprep.mubr.f32.mxu0 0.0
      %1947 = vmatmul.mubr.f32.gmra.mrb[0].mxu0 %v1855
      %v1948 = vpop.f32.mrb[0].mxu0
      %v1949 = vadd.f32 0.0, %v1948
      %v1950 = vpop.f32.mrb[0].mxu0
      %1951 = vmatprep.mubr.f32.mxu0 0.0
      %1952 = vmatmul.mubr.f32.gmra.mrb[0].mxu0 %v1858
      %v1953 = vpop.f32.mrb[0].mxu0
      %v1954 = vadd.f32 0.0, %v1953
      %v1955 = vpop.f32.mrb[0].mxu0
      %1956 = vmatprep.mubr.f32.mxu0 0.0
      %1957 = vmatmul.mubr.f32.gmra.mrb[0].mxu0 %v1861
      %v1958 = vpop.f32.mrb[0].mxu0
      %v1959 = vadd.f32 0.0, %v1958
      %v1960 = vpop.f32.mrb[0].mxu0
      %1961 = vmatprep.mubr.f32.mxu0 0.0
      %1962 = vmatmul.mubr.f32.gmra.mrb[0].mxu0 %v1864
      %v1963 = vpop.f32.mrb[0].mxu0
      %v1964 = vadd.f32 0.0, %v1963
      %v1965 = vpop.f32.mrb[0].mxu0
      %1966 = vmatprep.mubr.f32.mxu0 0.0
      %1967 = vmatmul.mubr.f32.gmra.mrb[0].mxu0 %v1867
      %v1968 = vpop.f32.mrb[0].mxu0
      %v1969 = vadd.f32 0.0, %v1968
      %v1970 = vpop.f32.mrb[0].mxu0
      %1971 = vmatprep.mubr.f32.mxu0 0.0
      %1972 = vmatmul.mubr.f32.gmra.mrb[0].mxu0 %v1870
      %v1973 = vpop.f32.mrb[0].mxu0
      %v1974 = vadd.f32 0.0, %v1973
      %v1975 = vpop.f32.mrb[0].mxu0
      %1976 = vdwg.mxu0
      %v1978 = vsel %vm769, %v1344, 0
      %v1981 = vsel %vm769, %v1345, 0
      %v1984 = vsel %vm769, %v1346, 0
      %v1987 = vsel %vm769, %v1347, 0
      %v1990 = vsel %vm769, %v1348, 0
      %v1993 = vsel %vm769, %v1349, 0
      %v1996 = vsel %vm769, %v1350, 0
      %v1999 = vsel %vm769, %v1351, 0
      %2001 = vmatprep.subr.mxu0 0.0
      %2002 = vmatpush1.msra.mxu0 %v766
      %2003 = vmatprep.subr.mxu0 0.0
      %2004 = vmatpush1.msra.mxu0 0.0
      %2005 = vmatprep.subr.mxu0 0.0
      %2006 = vmatpush1.msra.mxu0 0.0
      %2007 = vmatprep.subr.mxu0 0.0
      %2008 = vmatpush1.msra.mxu0 0.0
      %2009 = vmatprep.subr.mxu0 0.0
      %2010 = vmatpush1.msra.mxu0 0.0
      %2011 = vmatprep.subr.mxu0 0.0
      %2012 = vmatpush1.msra.mxu0 0.0
      %2013 = vmatprep.subr.mxu0 0.0
      %2014 = vmatpush1.msra.mxu0 0.0
      %2015 = vmatprep.subr.mxu0 0.0
      %2016 = vmatpush1.msra.mxu0 0.0
      %2017 = vmatprep.subr.mxu0 0.0
      %2018 = vmatpush1.msra.mxu0 0.0
      %2019 = vmatprep.subr.mxu0 0.0
      %2020 = vmatpush1.msra.mxu0 0.0
      %2021 = vmatprep.subr.mxu0 0.0
      %2022 = vmatpush1.msra.mxu0 0.0
      %2023 = vmatprep.subr.mxu0 0.0
      %2024 = vmatpush1.msra.mxu0 0.0
      %2025 = vmatprep.subr.mxu0 0.0
      %2026 = vmatpush1.msra.mxu0 0.0
      %2027 = vmatprep.subr.mxu0 0.0
      %2028 = vmatpush1.msra.mxu0 0.0
      %2029 = vmatprep.subr.mxu0 0.0
      %2030 = vmatpush1.msra.mxu0 0.0
      %2031 = vmatprep.subr.mxu0 0.0
      %2032 = vmatpush1.msra.mxu0 0.0
      %2033 = vmatprep.subr.mxu0 0.0
      %2034 = vmatpush1.msra.mxu0 0.0
      %2035 = vmatprep.subr.mxu0 0.0
      %2036 = vmatpush1.msra.mxu0 0.0
      %2037 = vmatprep.subr.mxu0 0.0
      %2038 = vmatpush1.msra.mxu0 0.0
      %2039 = vmatprep.subr.mxu0 0.0
      %2040 = vmatpush1.msra.mxu0 0.0
      %2041 = vmatprep.subr.mxu0 0.0
      %2042 = vmatpush1.msra.mxu0 0.0
      %2043 = vmatprep.subr.mxu0 0.0
      %2044 = vmatpush1.msra.mxu0 0.0
      %2045 = vmatprep.subr.mxu0 0.0
      %2046 = vmatpush1.msra.mxu0 0.0
      %2047 = vmatprep.subr.mxu0 0.0
      %2048 = vmatpush1.msra.mxu0 0.0
      %2049 = vmatprep.subr.mxu0 0.0
      %2050 = vmatpush1.msra.mxu0 0.0
      %2051 = vmatprep.subr.mxu0 0.0
      %2052 = vmatpush1.msra.mxu0 0.0
      %2053 = vmatprep.subr.mxu0 0.0
      %2054 = vmatpush1.msra.mxu0 0.0
      %2055 = vmatprep.subr.mxu0 0.0
      %2056 = vmatpush1.msra.mxu0 0.0
      %2057 = vmatprep.subr.mxu0 0.0
      %2058 = vmatpush1.msra.mxu0 0.0
      %2059 = vmatprep.subr.mxu0 0.0
      %2060 = vmatpush1.msra.mxu0 0.0
      %2061 = vmatprep.subr.mxu0 0.0
      %2062 = vmatpush1.msra.mxu0 0.0
      %2063 = vmatprep.subr.mxu0 0.0
      %2064 = vmatpush1.msra.mxu0 0.0
      %2065 = vmatprep.mubr.f32.mxu0 0.0
      %2066 = vmatmul.mubr.f32.gmra.mrb[0].mxu0 %v1978
      %v2067 = vpop.f32.mrb[0].mxu0
      %v2068 = vadd.f32 %v1939, %v2067
      %v2069 = vpop.f32.mrb[0].mxu0
      %2070 = vmatprep.mubr.f32.mxu0 0.0
      %2071 = vmatmul.mubr.f32.gmra.mrb[0].mxu0 %v1981
      %v2072 = vpop.f32.mrb[0].mxu0
      %v2073 = vadd.f32 %v1944, %v2072
      %v2074 = vpop.f32.mrb[0].mxu0
      %2075 = vmatprep.mubr.f32.mxu0 0.0
      %2076 = vmatmul.mubr.f32.gmra.mrb[0].mxu0 %v1984
      %v2077 = vpop.f32.mrb[0].mxu0
      %v2078 = vadd.f32 %v1949, %v2077
      %v2079 = vpop.f32.mrb[0].mxu0
      %2080 = vmatprep.mubr.f32.mxu0 0.0
      %2081 = vmatmul.mubr.f32.gmra.mrb[0].mxu0 %v1987
      %v2082 = vpop.f32.mrb[0].mxu0
      %v2083 = vadd.f32 %v1954, %v2082
      %v2084 = vpop.f32.mrb[0].mxu0
      %2085 = vmatprep.mubr.f32.mxu0 0.0
      %2086 = vmatmul.mubr.f32.gmra.mrb[0].mxu0 %v1990
      %v2087 = vpop.f32.mrb[0].mxu0
      %v2088 = vadd.f32 %v1959, %v2087
      %v2089 = vpop.f32.mrb[0].mxu0
      %2090 = vmatprep.mubr.f32.mxu0 0.0
      %2091 = vmatmul.mubr.f32.gmra.mrb[0].mxu0 %v1993
      %v2092 = vpop.f32.mrb[0].mxu0
      %v2093 = vadd.f32 %v1964, %v2092
      %v2094 = vpop.f32.mrb[0].mxu0
      %2095 = vmatprep.mubr.f32.mxu0 0.0
      %2096 = vmatmul.mubr.f32.gmra.mrb[0].mxu0 %v1996
      %v2097 = vpop.f32.mrb[0].mxu0
      %v2098 = vadd.f32 %v1969, %v2097
      %v2099 = vpop.f32.mrb[0].mxu0
      %2100 = vmatprep.mubr.f32.mxu0 0.0
      %2101 = vmatmul.mubr.f32.gmra.mrb[0].mxu0 %v1999
      %v2102 = vpop.f32.mrb[0].mxu0
      %v2103 = vadd.f32 %v1974, %v2102
      %v2104 = vpop.f32.mrb[0].mxu0
      %2105 = vdwg.mxu0
      %v2107 = vlaneseq
      %v2108 = vshrl.u32 %v2107, 7
      %v2109 = vsub.s32 0, %v2108
      %v2110 = vrot.slane %v768, %v2109
      %v2112 = vmul.f32 %v2068, %v2110
      %v2113 = vmul.f32 %v2073, %v2110
      %v2114 = vmul.f32 %v2078, %v2110
      %v2115 = vmul.f32 %v2083, %v2110
      %v2116 = vmul.f32 %v2088, %v2110
      %v2117 = vmul.f32 %v2093, %v2110
      %v2118 = vmul.f32 %v2098, %v2110
      %v2119 = vmul.f32 %v2103, %v2110
      %v2120 = vsel %vm769, %v2112, 0.0
      %2121 = vadd.xlane.f32.xlu0 %v2120
      %v2122 = vpop.xlane.xlu0 %2121
      %v2123 = vsel %vm769, %v2113, 0.0
      %2124 = vadd.xlane.f32.xlu0 %v2123
      %v2125 = vpop.xlane.xlu0 %2124
      %v2126 = vsel %vm769, %v2114, 0.0
      %2127 = vadd.xlane.f32.xlu0 %v2126
      %v2128 = vpop.xlane.xlu0 %2127
      %v2129 = vsel %vm769, %v2115, 0.0
      %2130 = vadd.xlane.f32.xlu0 %v2129
      %v2131 = vpop.xlane.xlu0 %2130
      %v2132 = vsel %vm769, %v2116, 0.0
      %2133 = vadd.xlane.f32.xlu0 %v2132
      %v2134 = vpop.xlane.xlu0 %2133
      %v2135 = vsel %vm769, %v2117, 0.0
      %2136 = vadd.xlane.f32.xlu0 %v2135
      %v2137 = vpop.xlane.xlu0 %2136
      %v2138 = vsel %vm769, %v2118, 0.0
      %2139 = vadd.xlane.f32.xlu0 %v2138
      %v2140 = vpop.xlane.xlu0 %2139
      %v2141 = vsel %vm769, %v2119, 0.0
      %2142 = vadd.xlane.f32.xlu0 %v2141
      %v2143 = vpop.xlane.xlu0 %2142
      %2144 = vrot.lane.b32.xlu0 %v2110, 120
      %v2145 = vpop.permute.xlu0 %2144
      %v2146 = vsel %vm769, %v2145, 0
      %v2149 = vsel %vm769, %v2068, 0
      %v2152 = vsel %vm769, %v2073, 0
      %v2155 = vsel %vm769, %v2078, 0
      %v2158 = vsel %vm769, %v2083, 0
      %v2161 = vsel %vm769, %v2088, 0
      %v2164 = vsel %vm769, %v2093, 0
      %v2167 = vsel %vm769, %v2098, 0
      %v2170 = vsel %vm769, %v2103, 0
      %2172 = vmatprep.subr.mxu0 0.0
      %2173 = vmatpush1.xpose.msra.mxu0 %v2149
      %2174 = vmatprep.subr.mxu0 0.0
      %2175 = vmatpush1.xpose.msra.mxu0 %v2152
      %2176 = vmatprep.subr.mxu0 0.0
      %2177 = vmatpush1.xpose.msra.mxu0 %v2155
      %2178 = vmatprep.subr.mxu0 0.0
      %2179 = vmatpush1.xpose.msra.mxu0 %v2158
      %2180 = vmatprep.subr.mxu0 0.0
      %2181 = vmatpush1.xpose.msra.mxu0 %v2161
      %2182 = vmatprep.subr.mxu0 0.0
      %2183 = vmatpush1.xpose.msra.mxu0 %v2164
      %2184 = vmatprep.subr.mxu0 0.0
      %2185 = vmatpush1.xpose.msra.mxu0 %v2167
      %2186 = vmatprep.subr.mxu0 0.0
      %2187 = vmatpush1.xpose.msra.mxu0 %v2170
      %2188 = vmatprep.subr.mxu0 0.0
      %2189 = vmatpush1.xpose.msra.mxu0 0.0
      %2190 = vmatprep.subr.mxu0 0.0
      %2191 = vmatpush1.xpose.msra.mxu0 0.0
      %2192 = vmatprep.subr.mxu0 0.0
      %2193 = vmatpush1.xpose.msra.mxu0 0.0
      %2194 = vmatprep.subr.mxu0 0.0
      %2195 = vmatpush1.xpose.msra.mxu0 0.0
      %2196 = vmatprep.subr.mxu0 0.0
      %2197 = vmatpush1.xpose.msra.mxu0 0.0
      %2198 = vmatprep.subr.mxu0 0.0
      %2199 = vmatpush1.xpose.msra.mxu0 0.0
      %2200 = vmatprep.subr.mxu0 0.0
      %2201 = vmatpush1.xpose.msra.mxu0 0.0
      %2202 = vmatprep.subr.mxu0 0.0
      %2203 = vmatpush1.xpose.msra.mxu0 0.0
      %2204 = vmatprep.subr.mxu0 0.0
      %2205 = vmatpush1.xpose.msra.mxu0 0.0
      %2206 = vmatprep.subr.mxu0 0.0
      %2207 = vmatpush1.xpose.msra.mxu0 0.0
      %2208 = vmatprep.subr.mxu0 0.0
      %2209 = vmatpush1.xpose.msra.mxu0 0.0
      %2210 = vmatprep.subr.mxu0 0.0
      %2211 = vmatpush1.xpose.msra.mxu0 0.0
      %2212 = vmatprep.subr.mxu0 0.0
      %2213 = vmatpush1.xpose.msra.mxu0 0.0
      %2214 = vmatprep.subr.mxu0 0.0
      %2215 = vmatpush1.xpose.msra.mxu0 0.0
      %2216 = vmatprep.subr.mxu0 0.0
      %2217 = vmatpush1.xpose.msra.mxu0 0.0
      %2218 = vmatprep.subr.mxu0 0.0
      %2219 = vmatpush1.xpose.msra.mxu0 0.0
      %2220 = vmatprep.subr.mxu0 0.0
      %2221 = vmatpush1.xpose.msra.mxu0 0.0
      %2222 = vmatprep.subr.mxu0 0.0
      %2223 = vmatpush1.xpose.msra.mxu0 0.0
      %2224 = vmatprep.subr.mxu0 0.0
      %2225 = vmatpush1.xpose.msra.mxu0 0.0
      %2226 = vmatprep.subr.mxu0 0.0
      %2227 = vmatpush1.xpose.msra.mxu0 0.0
      %2228 = vmatprep.subr.mxu0 0.0
      %2229 = vmatpush1.xpose.msra.mxu0 0.0
      %2230 = vmatprep.subr.mxu0 0.0
      %2231 = vmatpush1.xpose.msra.mxu0 0.0
      %2232 = vmatprep.subr.mxu0 0.0
      %2233 = vmatpush1.xpose.msra.mxu0 0.0
      %2234 = vmatprep.subr.mxu0 0.0
      %2235 = vmatpush1.xpose.msra.mxu0 0.0
      %2236 = vmatprep.mubr.f32.mxu0 0.0
      %2237 = vmatmul.mubr.f32.gmra.mrb[0].mxu0 %v2146
      %v2238 = vpop.f32.mrb[0].mxu0
      %v2239 = vadd.f32 0.0, %v2238
      %v2240 = vpop.f32.mrb[0].mxu0
      %2241 = vdwg.mxu0
      %v2242 = vlaneseq
      %v2243 = vshrl.u32 %v2242, 7
      %v2244 = vsub.s32 0, %v2243
      %v2245 = vrot.slane %v2239, %v2244
      %v2246 = vadd.f32 %v2122, %v2245
      %v2247 = vadd.f32 %v2125, %v2245
      %v2248 = vadd.f32 %v2128, %v2245
      %v2249 = vadd.f32 %v2131, %v2245
      %v2250 = vadd.f32 %v2134, %v2245
      %v2251 = vadd.f32 %v2137, %v2245
      %v2252 = vadd.f32 %v2140, %v2245
      %v2253 = vadd.f32 %v2143, %v2245
      %vm2254 = vcmp.gt.f32.partialorder %v2246, 0.0
      %vm2255 = vcmp.gt.f32.partialorder %v2247, 0.0
      %vm2256 = vcmp.gt.f32.partialorder %v2248, 0.0
      %vm2257 = vcmp.gt.f32.partialorder %v2249, 0.0
      %vm2258 = vcmp.gt.f32.partialorder %v2250, 0.0
      %vm2259 = vcmp.gt.f32.partialorder %v2251, 0.0
      %vm2260 = vcmp.gt.f32.partialorder %v2252, 0.0
      %vm2261 = vcmp.gt.f32.partialorder %v2253, 0.0
      %v2262 = vmul.f32 %v2246, 0.2
      %v2263 = vmul.f32 %v2247, 0.2
      %v2264 = vmul.f32 %v2248, 0.2
      %v2265 = vmul.f32 %v2249, 0.2
      %v2266 = vmul.f32 %v2250, 0.2
      %v2267 = vmul.f32 %v2251, 0.2
      %v2268 = vmul.f32 %v2252, 0.2
      %v2269 = vmul.f32 %v2253, 0.2
      %v2270 = vsel %vm2254, %v2246, %v2262
      %v2271 = vsel %vm2255, %v2247, %v2263
      %v2272 = vsel %vm2256, %v2248, %v2264
      %v2273 = vsel %vm2257, %v2249, %v2265
      %v2274 = vsel %vm2258, %v2250, %v2266
      %v2275 = vsel %vm2259, %v2251, %v2267
      %v2276 = vsel %vm2260, %v2252, %v2268
      %v2277 = vsel %vm2261, %v2253, %v2269
      %v2278 = vsel %vm1070, %v2270, -9e+15
      %v2279 = vsel %vm1071, %v2271, -9e+15
      %v2280 = vsel %vm1072, %v2272, -9e+15
      %v2281 = vsel %vm1073, %v2273, -9e+15
      %v2282 = vsel %vm1074, %v2274, -9e+15
      %v2283 = vsel %vm1075, %v2275, -9e+15
      %v2284 = vsel %vm1076, %v2276, -9e+15
      %v2285 = vsel %vm1077, %v2277, -9e+15
      %v2286 = vsel %vm1086, %v2278, -inf
      %2287 = vmax.xlane.f32.xlu0 %v2286
      %v2288 = vpop.xlane.xlu0 %2287
      %v2289 = vsel %vm1086, %v2279, -inf
      %2290 = vmax.xlane.f32.xlu0 %v2289
      %v2291 = vpop.xlane.xlu0 %2290
      %v2292 = vsel %vm1086, %v2280, -inf
      %2293 = vmax.xlane.f32.xlu0 %v2292
      %v2294 = vpop.xlane.xlu0 %2293
      %v2295 = vsel %vm1086, %v2281, -inf
      %2296 = vmax.xlane.f32.xlu0 %v2295
      %v2297 = vpop.xlane.xlu0 %2296
      %v2298 = vsel %vm1086, %v2282, -inf
      %2299 = vmax.xlane.f32.xlu0 %v2298
      %v2300 = vpop.xlane.xlu0 %2299
      %v2301 = vsel %vm1086, %v2283, -inf
      %2302 = vmax.xlane.f32.xlu0 %v2301
      %v2303 = vpop.xlane.xlu0 %2302
      %v2304 = vsel %vm1086, %v2284, -inf
      %2305 = vmax.xlane.f32.xlu0 %v2304
      %v2306 = vpop.xlane.xlu0 %2305
      %v2307 = vsel %vm1086, %v2285, -inf
      %2308 = vmax.xlane.f32.xlu0 %v2307
      %v2309 = vpop.xlane.xlu0 %2308
      %v2310 = vsub.f32 %v2278, %v2288
      %v2311 = vsub.f32 %v2279, %v2291
      %v2312 = vsub.f32 %v2280, %v2294
      %v2313 = vsub.f32 %v2281, %v2297
      %v2314 = vsub.f32 %v2282, %v2300
      %v2315 = vsub.f32 %v2283, %v2303
      %v2316 = vsub.f32 %v2284, %v2306
      %v2317 = vsub.f32 %v2285, %v2309
      %v2318 = vmul.f32 %v2310, 1.442695
      %v2319 = vpow.pop %v2318
      %v2320 = vmul.f32 %v2311, 1.442695
      %v2321 = vpow.pop %v2320
      %v2322 = vmul.f32 %v2312, 1.442695
      %v2323 = vpow.pop %v2322
      %v2324 = vmul.f32 %v2313, 1.442695
      %v2325 = vpow.pop %v2324
      %v2326 = vmul.f32 %v2314, 1.442695
      %v2327 = vpow.pop %v2326
      %v2328 = vmul.f32 %v2315, 1.442695
      %v2329 = vpow.pop %v2328
      %v2330 = vmul.f32 %v2316, 1.442695
      %v2331 = vpow.pop %v2330
      %v2332 = vmul.f32 %v2317, 1.442695
      %v2333 = vpow.pop %v2332
      %v2334 = vsel %vm1086, %v2319, 0.0
      %2335 = vadd.xlane.f32.xlu0 %v2334
      %v2336 = vpop.xlane.xlu0 %2335
      %v2337 = vsel %vm1086, %v2321, 0.0
      %2338 = vadd.xlane.f32.xlu0 %v2337
      %v2339 = vpop.xlane.xlu0 %2338
      %v2340 = vsel %vm1086, %v2323, 0.0
      %2341 = vadd.xlane.f32.xlu0 %v2340
      %v2342 = vpop.xlane.xlu0 %2341
      %v2343 = vsel %vm1086, %v2325, 0.0
      %2344 = vadd.xlane.f32.xlu0 %v2343
      %v2345 = vpop.xlane.xlu0 %2344
      %v2346 = vsel %vm1086, %v2327, 0.0
      %2347 = vadd.xlane.f32.xlu0 %v2346
      %v2348 = vpop.xlane.xlu0 %2347
      %v2349 = vsel %vm1086, %v2329, 0.0
      %2350 = vadd.xlane.f32.xlu0 %v2349
      %v2351 = vpop.xlane.xlu0 %2350
      %v2352 = vsel %vm1086, %v2331, 0.0
      %2353 = vadd.xlane.f32.xlu0 %v2352
      %v2354 = vpop.xlane.xlu0 %2353
      %v2355 = vsel %vm1086, %v2333, 0.0
      %2356 = vadd.xlane.f32.xlu0 %v2355
      %v2357 = vpop.xlane.xlu0 %2356
      %v2358 = vrcp.pop %v2336
      %v2359 = vrcp.pop %v2339
      %v2360 = vrcp.pop %v2342
      %v2361 = vrcp.pop %v2345
      %v2362 = vrcp.pop %v2348
      %v2363 = vrcp.pop %v2351
      %v2364 = vrcp.pop %v2354
      %v2365 = vrcp.pop %v2357
      %v2366 = vmul.f32 %v2319, %v2358
      %v2367 = vmul.f32 %v2321, %v2359
      %v2368 = vmul.f32 %v2323, %v2360
      %v2369 = vmul.f32 %v2325, %v2361
      %v2370 = vmul.f32 %v2327, %v2362
      %v2371 = vmul.f32 %v2329, %v2363
      %v2372 = vmul.f32 %v2331, %v2364
      %v2373 = vmul.f32 %v2333, %v2365
      %v2375 = vsel %vm1086, %v2366, 0
      %v2378 = vsel %vm1086, %v2367, 0
      %v2381 = vsel %vm1086, %v2368, 0
      %v2384 = vsel %vm1086, %v2369, 0
      %v2387 = vsel %vm1086, %v2370, 0
      %v2390 = vsel %vm1086, %v2371, 0
      %v2393 = vsel %vm1086, %v2372, 0
      %v2396 = vsel %vm1086, %v2373, 0
      %2398 = vmatprep.subr.mxu0 0.0
      %2399 = vmatpush1.msra.mxu0 %v2068
      %2400 = vmatprep.subr.mxu0 0.0
      %2401 = vmatpush1.msra.mxu0 %v2073
      %2402 = vmatprep.subr.mxu0 0.0
      %2403 = vmatpush1.msra.mxu0 %v2078
      %2404 = vmatprep.subr.mxu0 0.0
      %2405 = vmatpush1.msra.mxu0 %v2083
      %2406 = vmatprep.subr.mxu0 0.0
      %2407 = vmatpush1.msra.mxu0 %v2088
      %2408 = vmatprep.subr.mxu0 0.0
      %2409 = vmatpush1.msra.mxu0 %v2093
      %2410 = vmatprep.subr.mxu0 0.0
      %2411 = vmatpush1.msra.mxu0 %v2098
      %2412 = vmatprep.subr.mxu0 0.0
      %2413 = vmatpush1.msra.mxu0 %v2103
      %2414 = vmatprep.subr.mxu0 0.0
      %2415 = vmatpush1.msra.mxu0 0.0
      %2416 = vmatprep.subr.mxu0 0.0
      %2417 = vmatpush1.msra.mxu0 0.0
      %2418 = vmatprep.subr.mxu0 0.0
      %2419 = vmatpush1.msra.mxu0 0.0
      %2420 = vmatprep.subr.mxu0 0.0
      %2421 = vmatpush1.msra.mxu0 0.0
      %2422 = vmatprep.subr.mxu0 0.0
      %2423 = vmatpush1.msra.mxu0 0.0
      %2424 = vmatprep.subr.mxu0 0.0
      %2425 = vmatpush1.msra.mxu0 0.0
      %2426 = vmatprep.subr.mxu0 0.0
      %2427 = vmatpush1.msra.mxu0 0.0
      %2428 = vmatprep.subr.mxu0 0.0
      %2429 = vmatpush1.msra.mxu0 0.0
      %2430 = vmatprep.subr.mxu0 0.0
      %2431 = vmatpush1.msra.mxu0 0.0
      %2432 = vmatprep.subr.mxu0 0.0
      %2433 = vmatpush1.msra.mxu0 0.0
      %2434 = vmatprep.subr.mxu0 0.0
      %2435 = vmatpush1.msra.mxu0 0.0
      %2436 = vmatprep.subr.mxu0 0.0
      %2437 = vmatpush1.msra.mxu0 0.0
      %2438 = vmatprep.subr.mxu0 0.0
      %2439 = vmatpush1.msra.mxu0 0.0
      %2440 = vmatprep.subr.mxu0 0.0
      %2441 = vmatpush1.msra.mxu0 0.0
      %2442 = vmatprep.subr.mxu0 0.0
      %2443 = vmatpush1.msra.mxu0 0.0
      %2444 = vmatprep.subr.mxu0 0.0
      %2445 = vmatpush1.msra.mxu0 0.0
      %2446 = vmatprep.subr.mxu0 0.0
      %2447 = vmatpush1.msra.mxu0 0.0
      %2448 = vmatprep.subr.mxu0 0.0
      %2449 = vmatpush1.msra.mxu0 0.0
      %2450 = vmatprep.subr.mxu0 0.0
      %2451 = vmatpush1.msra.mxu0 0.0
      %2452 = vmatprep.subr.mxu0 0.0
      %2453 = vmatpush1.msra.mxu0 0.0
      %2454 = vmatprep.subr.mxu0 0.0
      %2455 = vmatpush1.msra.mxu0 0.0
      %2456 = vmatprep.subr.mxu0 0.0
      %2457 = vmatpush1.msra.mxu0 0.0
      %2458 = vmatprep.subr.mxu0 0.0
      %2459 = vmatpush1.msra.mxu0 0.0
      %2460 = vmatprep.subr.mxu0 0.0
      %2461 = vmatpush1.msra.mxu0 0.0
      %2462 = vmatprep.mubr.f32.mxu0 0.0
      %2463 = vmatmul.mubr.f32.gmra.mrb[0].mxu0 %v2375
      %v2464 = vpop.f32.mrb[0].mxu0
      %v2465 = vadd.f32 0.0, %v2464
      %v2466 = vpop.f32.mrb[0].mxu0
      %2467 = vmatprep.mubr.f32.mxu0 0.0
      %2468 = vmatmul.mubr.f32.gmra.mrb[0].mxu0 %v2378
      %v2469 = vpop.f32.mrb[0].mxu0
      %v2470 = vadd.f32 0.0, %v2469
      %v2471 = vpop.f32.mrb[0].mxu0
      %2472 = vmatprep.mubr.f32.mxu0 0.0
      %2473 = vmatmul.mubr.f32.gmra.mrb[0].mxu0 %v2381
      %v2474 = vpop.f32.mrb[0].mxu0
      %v2475 = vadd.f32 0.0, %v2474
      %v2476 = vpop.f32.mrb[0].mxu0
      %2477 = vmatprep.mubr.f32.mxu0 0.0
      %2478 = vmatmul.mubr.f32.gmra.mrb[0].mxu0 %v2384
      %v2479 = vpop.f32.mrb[0].mxu0
      %v2480 = vadd.f32 0.0, %v2479
      %v2481 = vpop.f32.mrb[0].mxu0
      %2482 = vmatprep.mubr.f32.mxu0 0.0
      %2483 = vmatmul.mubr.f32.gmra.mrb[0].mxu0 %v2387
      %v2484 = vpop.f32.mrb[0].mxu0
      %v2485 = vadd.f32 0.0, %v2484
      %v2486 = vpop.f32.mrb[0].mxu0
      %2487 = vmatprep.mubr.f32.mxu0 0.0
      %2488 = vmatmul.mubr.f32.gmra.mrb[0].mxu0 %v2390
      %v2489 = vpop.f32.mrb[0].mxu0
      %v2490 = vadd.f32 0.0, %v2489
      %v2491 = vpop.f32.mrb[0].mxu0
      %2492 = vmatprep.mubr.f32.mxu0 0.0
      %2493 = vmatmul.mubr.f32.gmra.mrb[0].mxu0 %v2393
      %v2494 = vpop.f32.mrb[0].mxu0
      %v2495 = vadd.f32 0.0, %v2494
      %v2496 = vpop.f32.mrb[0].mxu0
      %2497 = vmatprep.mubr.f32.mxu0 0.0
      %2498 = vmatmul.mubr.f32.gmra.mrb[0].mxu0 %v2396
      %v2499 = vpop.f32.mrb[0].mxu0
      %v2500 = vadd.f32 0.0, %v2499
      %v2501 = vpop.f32.mrb[0].mxu0
      %2502 = vdwg.mxu0
      %v2503 = vld [vmem:[%s732] sm:$0xff]
      %v2504 = vld [vmem:[%s732 + $0x8] sm:$0xff]
      %v2505 = vld [vmem:[%s737] sm:$0xff]
      %v2506 = vld [vmem:[%s737 + $0x8] sm:$0xff]
      %v2507 = vld [vmem:[%s6] sm:$0xff]
      %v2508 = vld [vmem:[%s7] sm:$0xff]
      %v2509 = vld [vmem:[%s8] sm:$0x1]
      %v2511 = vsel %vm769, %v2503, 0
      %v2514 = vsel %vm769, %v2504, 0
      %2516 = vmatprep.subr.mxu0 0.0
      %2517 = vmatpush1.msra.mxu0 %v2508
      %2518 = vmatprep.subr.mxu0 0.0
      %2519 = vmatpush1.msra.mxu0 0.0
      %2520 = vmatprep.subr.mxu0 0.0
      %2521 = vmatpush1.msra.mxu0 0.0
      %2522 = vmatprep.subr.mxu0 0.0
      %2523 = vmatpush1.msra.mxu0 0.0
      %2524 = vmatprep.subr.mxu0 0.0
      %2525 = vmatpush1.msra.mxu0 0.0
      %2526 = vmatprep.subr.mxu0 0.0
      %2527 = vmatpush1.msra.mxu0 0.0
      %2528 = vmatprep.subr.mxu0 0.0
      %2529 = vmatpush1.msra.mxu0 0.0
      %2530 = vmatprep.subr.mxu0 0.0
      %2531 = vmatpush1.msra.mxu0 0.0
      %2532 = vmatprep.subr.mxu0 0.0
      %2533 = vmatpush1.msra.mxu0 0.0
      %2534 = vmatprep.subr.mxu0 0.0
      %2535 = vmatpush1.msra.mxu0 0.0
      %2536 = vmatprep.subr.mxu0 0.0
      %2537 = vmatpush1.msra.mxu0 0.0
      %2538 = vmatprep.subr.mxu0 0.0
      %2539 = vmatpush1.msra.mxu0 0.0
      %2540 = vmatprep.subr.mxu0 0.0
      %2541 = vmatpush1.msra.mxu0 0.0
      %2542 = vmatprep.subr.mxu0 0.0
      %2543 = vmatpush1.msra.mxu0 0.0
      %2544 = vmatprep.subr.mxu0 0.0
      %2545 = vmatpush1.msra.mxu0 0.0
      %2546 = vmatprep.subr.mxu0 0.0
      %2547 = vmatpush1.msra.mxu0 0.0
      %2548 = vmatprep.subr.mxu0 0.0
      %2549 = vmatpush1.msra.mxu0 0.0
      %2550 = vmatprep.subr.mxu0 0.0
      %2551 = vmatpush1.msra.mxu0 0.0
      %2552 = vmatprep.subr.mxu0 0.0
      %2553 = vmatpush1.msra.mxu0 0.0
      %2554 = vmatprep.subr.mxu0 0.0
      %2555 = vmatpush1.msra.mxu0 0.0
      %2556 = vmatprep.subr.mxu0 0.0
      %2557 = vmatpush1.msra.mxu0 0.0
      %2558 = vmatprep.subr.mxu0 0.0
      %2559 = vmatpush1.msra.mxu0 0.0
      %2560 = vmatprep.subr.mxu0 0.0
      %2561 = vmatpush1.msra.mxu0 0.0
      %2562 = vmatprep.subr.mxu0 0.0
      %2563 = vmatpush1.msra.mxu0 0.0
      %2564 = vmatprep.subr.mxu0 0.0
      %2565 = vmatpush1.msra.mxu0 0.0
      %2566 = vmatprep.subr.mxu0 0.0
      %2567 = vmatpush1.msra.mxu0 0.0
      %2568 = vmatprep.subr.mxu0 0.0
      %2569 = vmatpush1.msra.mxu0 0.0
      %2570 = vmatprep.subr.mxu0 0.0
      %2571 = vmatpush1.msra.mxu0 0.0
      %2572 = vmatprep.subr.mxu0 0.0
      %2573 = vmatpush1.msra.mxu0 0.0
      %2574 = vmatprep.subr.mxu0 0.0
      %2575 = vmatpush1.msra.mxu0 0.0
      %2576 = vmatprep.subr.mxu0 0.0
      %2577 = vmatpush1.msra.mxu0 0.0
      %2578 = vmatprep.subr.mxu0 0.0
      %2579 = vmatpush1.msra.mxu0 0.0
      %2580 = vmatprep.mubr.f32.mxu0 0.0
      %2581 = vmatmul.mubr.f32.gmra.mrb[0].mxu0 %v2511
      %v2582 = vpop.f32.mrb[0].mxu0
      %v2583 = vadd.f32 0.0, %v2582
      %v2584 = vpop.f32.mrb[0].mxu0
      %2585 = vmatprep.mubr.f32.mxu0 0.0
      %2586 = vmatmul.mubr.f32.gmra.mrb[0].mxu0 %v2514
      %v2587 = vpop.f32.mrb[0].mxu0
      %v2588 = vadd.f32 0.0, %v2587
      %v2589 = vpop.f32.mrb[0].mxu0
      %2590 = vdwg.mxu0
      %v2592 = vsel %vm769, %v2465, 0
      %v2595 = vsel %vm769, %v2470, 0
      %2597 = vmatprep.subr.mxu0 0.0
      %2598 = vmatpush1.msra.mxu0 %v2507
      %2599 = vmatprep.subr.mxu0 0.0
      %2600 = vmatpush1.msra.mxu0 0.0
      %2601 = vmatprep.subr.mxu0 0.0
      %2602 = vmatpush1.msra.mxu0 0.0
      %2603 = vmatprep.subr.mxu0 0.0
      %2604 = vmatpush1.msra.mxu0 0.0
      %2605 = vmatprep.subr.mxu0 0.0
      %2606 = vmatpush1.msra.mxu0 0.0
      %2607 = vmatprep.subr.mxu0 0.0
      %2608 = vmatpush1.msra.mxu0 0.0
      %2609 = vmatprep.subr.mxu0 0.0
      %2610 = vmatpush1.msra.mxu0 0.0
      %2611 = vmatprep.subr.mxu0 0.0
      %2612 = vmatpush1.msra.mxu0 0.0
      %2613 = vmatprep.subr.mxu0 0.0
      %2614 = vmatpush1.msra.mxu0 0.0
      %2615 = vmatprep.subr.mxu0 0.0
      %2616 = vmatpush1.msra.mxu0 0.0
      %2617 = vmatprep.subr.mxu0 0.0
      %2618 = vmatpush1.msra.mxu0 0.0
      %2619 = vmatprep.subr.mxu0 0.0
      %2620 = vmatpush1.msra.mxu0 0.0
      %2621 = vmatprep.subr.mxu0 0.0
      %2622 = vmatpush1.msra.mxu0 0.0
      %2623 = vmatprep.subr.mxu0 0.0
      %2624 = vmatpush1.msra.mxu0 0.0
      %2625 = vmatprep.subr.mxu0 0.0
      %2626 = vmatpush1.msra.mxu0 0.0
      %2627 = vmatprep.subr.mxu0 0.0
      %2628 = vmatpush1.msra.mxu0 0.0
      %2629 = vmatprep.subr.mxu0 0.0
      %2630 = vmatpush1.msra.mxu0 0.0
      %2631 = vmatprep.subr.mxu0 0.0
      %2632 = vmatpush1.msra.mxu0 0.0
      %2633 = vmatprep.subr.mxu0 0.0
      %2634 = vmatpush1.msra.mxu0 0.0
      %2635 = vmatprep.subr.mxu0 0.0
      %2636 = vmatpush1.msra.mxu0 0.0
      %2637 = vmatprep.subr.mxu0 0.0
      %2638 = vmatpush1.msra.mxu0 0.0
      %2639 = vmatprep.subr.mxu0 0.0
      %2640 = vmatpush1.msra.mxu0 0.0
      %2641 = vmatprep.subr.mxu0 0.0
      %2642 = vmatpush1.msra.mxu0 0.0
      %2643 = vmatprep.subr.mxu0 0.0
      %2644 = vmatpush1.msra.mxu0 0.0
      %2645 = vmatprep.subr.mxu0 0.0
      %2646 = vmatpush1.msra.mxu0 0.0
      %2647 = vmatprep.subr.mxu0 0.0
      %2648 = vmatpush1.msra.mxu0 0.0
      %2649 = vmatprep.subr.mxu0 0.0
      %2650 = vmatpush1.msra.mxu0 0.0
      %2651 = vmatprep.subr.mxu0 0.0
      %2652 = vmatpush1.msra.mxu0 0.0
      %2653 = vmatprep.subr.mxu0 0.0
      %2654 = vmatpush1.msra.mxu0 0.0
      %2655 = vmatprep.subr.mxu0 0.0
      %2656 = vmatpush1.msra.mxu0 0.0
      %2657 = vmatprep.subr.mxu0 0.0
      %2658 = vmatpush1.msra.mxu0 0.0
      %2659 = vmatprep.subr.mxu0 0.0
      %2660 = vmatpush1.msra.mxu0 0.0
      %2661 = vmatprep.mubr.f32.mxu0 0.0
      %2662 = vmatmul.mubr.f32.gmra.mrb[0].mxu0 %v2592
      %v2663 = vpop.f32.mrb[0].mxu0
      %v2664 = vadd.f32 %v2583, %v2663
      %v2665 = vpop.f32.mrb[0].mxu0
      %2666 = vmatprep.mubr.f32.mxu0 0.0
      %2667 = vmatmul.mubr.f32.gmra.mrb[0].mxu0 %v2595
      %v2668 = vpop.f32.mrb[0].mxu0
      %v2669 = vadd.f32 %v2588, %v2668
      %v2670 = vpop.f32.mrb[0].mxu0
      %2671 = vdwg.mxu0
      %v2673 = vlaneseq
      %v2674 = vshrl.u32 %v2673, 7
      %v2675 = vsub.s32 0, %v2674
      %v2676 = vrot.slane %v2509, %v2675
      %v2678 = vadd.f32 %v2664, %v2676
      %v2679 = vadd.f32 %v2669, %v2676
      %v2680 = vxor.u32 %v2678, 2147483648
      %v2681 = vxor.u32 %v2679, 2147483648
      %v2682 = vmul.f32 %v2680, 1.442695
      %v2683 = vpow.pop %v2682
      %v2684 = vmul.f32 %v2681, 1.442695
      %v2685 = vpow.pop %v2684
      %v2686 = vadd.f32 %v2683, 1.0
      %v2687 = vadd.f32 %v2685, 1.0
      %v2688 = vrcp.pop %v2686
      %v2689 = vmul.f32 1.0, %v2688
      %v2690 = vrcp.pop %v2687
      %v2691 = vmul.f32 1.0, %v2690
      %v2692 = vtanh.pop %v2678
      %v2693 = vtanh.pop %v2679
      %2696 = vrot.lane.b32.xlu0 %v2505, 8
      %v2697 = vpop.permute.xlu0 %2696
      %2698 = vrot.lane.b32.xlu0 %v2506, 8
      %v2699 = vpop.permute.xlu0 %2698
      %v2702 = vmul.f32 %v2689, %v2697
      %v2703 = vmul.f32 %v2691, %v2699
      %2706 = vrot.lane.b32.xlu0 %v2692, 112
      %v2707 = vpop.permute.xlu0 %2706
      %2708 = vrot.lane.b32.xlu0 %v2693, 112
      %v2709 = vpop.permute.xlu0 %2708
      %v2712 = vmul.f32 %v2689, %v2707
      %v2713 = vmul.f32 %v2691, %v2709
      %2716 = vrot.lane.b32.xlu0 %v2712, 8
      %v2717 = vpop.permute.xlu0 %2716
      %2718 = vrot.lane.b32.xlu0 %v2713, 8
      %v2719 = vpop.permute.xlu0 %2718
      %v2722 = vadd.f32 %v2702, %v2717
      %v2723 = vadd.f32 %v2703, %v2719
      %v2724 = vtanh.pop %v2722
      %v2725 = vtanh.pop %v2723
      %2728 = vrot.lane.b32.xlu0 %v2724, 16
      %v2729 = vpop.permute.xlu0 %2728
      %2730 = vrot.lane.b32.xlu0 %v2725, 16
      %v2731 = vpop.permute.xlu0 %2730
      %v2734 = vmul.f32 %v2689, %v2729
      %v2735 = vmul.f32 %v2691, %v2731
      %2738 = vrot.lane.b32.xlu0 %v2734, 104
      %v2739 = vpop.permute.xlu0 %2738
      %2740 = vrot.lane.b32.xlu0 %v2735, 104
      %v2741 = vpop.permute.xlu0 %2740
      %v2742 = vsel %vm769, %v2739, 0
      %v2744 = vsel %vm769, %v2741, 0
      %2746 = vmatprep.subr.mxu0 0.0
      %2747 = vmatpush1.msra.mxu0 %v2508
      %2748 = vmatprep.subr.mxu0 0.0
      %2749 = vmatpush1.msra.mxu0 0.0
      %2750 = vmatprep.subr.mxu0 0.0
      %2751 = vmatpush1.msra.mxu0 0.0
      %2752 = vmatprep.subr.mxu0 0.0
      %2753 = vmatpush1.msra.mxu0 0.0
      %2754 = vmatprep.subr.mxu0 0.0
      %2755 = vmatpush1.msra.mxu0 0.0
      %2756 = vmatprep.subr.mxu0 0.0
      %2757 = vmatpush1.msra.mxu0 0.0
      %2758 = vmatprep.subr.mxu0 0.0
      %2759 = vmatpush1.msra.mxu0 0.0
      %2760 = vmatprep.subr.mxu0 0.0
      %2761 = vmatpush1.msra.mxu0 0.0
      %2762 = vmatprep.subr.mxu0 0.0
      %2763 = vmatpush1.msra.mxu0 0.0
      %2764 = vmatprep.subr.mxu0 0.0
      %2765 = vmatpush1.msra.mxu0 0.0
      %2766 = vmatprep.subr.mxu0 0.0
      %2767 = vmatpush1.msra.mxu0 0.0
      %2768 = vmatprep.subr.mxu0 0.0
      %2769 = vmatpush1.msra.mxu0 0.0
      %2770 = vmatprep.subr.mxu0 0.0
      %2771 = vmatpush1.msra.mxu0 0.0
      %2772 = vmatprep.subr.mxu0 0.0
      %2773 = vmatpush1.msra.mxu0 0.0
      %2774 = vmatprep.subr.mxu0 0.0
      %2775 = vmatpush1.msra.mxu0 0.0
      %2776 = vmatprep.subr.mxu0 0.0
      %2777 = vmatpush1.msra.mxu0 0.0
      %2778 = vmatprep.subr.mxu0 0.0
      %2779 = vmatpush1.msra.mxu0 0.0
      %2780 = vmatprep.subr.mxu0 0.0
      %2781 = vmatpush1.msra.mxu0 0.0
      %2782 = vmatprep.subr.mxu0 0.0
      %2783 = vmatpush1.msra.mxu0 0.0
      %2784 = vmatprep.subr.mxu0 0.0
      %2785 = vmatpush1.msra.mxu0 0.0
      %2786 = vmatprep.subr.mxu0 0.0
      %2787 = vmatpush1.msra.mxu0 0.0
      %2788 = vmatprep.subr.mxu0 0.0
      %2789 = vmatpush1.msra.mxu0 0.0
      %2790 = vmatprep.subr.mxu0 0.0
      %2791 = vmatpush1.msra.mxu0 0.0
      %2792 = vmatprep.subr.mxu0 0.0
      %2793 = vmatpush1.msra.mxu0 0.0
      %2794 = vmatprep.subr.mxu0 0.0
      %2795 = vmatpush1.msra.mxu0 0.0
      %2796 = vmatprep.subr.mxu0 0.0
      %2797 = vmatpush1.msra.mxu0 0.0
      %2798 = vmatprep.subr.mxu0 0.0
      %2799 = vmatpush1.msra.mxu0 0.0
      %2800 = vmatprep.subr.mxu0 0.0
      %2801 = vmatpush1.msra.mxu0 0.0
      %2802 = vmatprep.subr.mxu0 0.0
      %2803 = vmatpush1.msra.mxu0 0.0
      %2804 = vmatprep.subr.mxu0 0.0
      %2805 = vmatpush1.msra.mxu0 0.0
      %2806 = vmatprep.subr.mxu0 0.0
      %2807 = vmatpush1.msra.mxu0 0.0
      %2808 = vmatprep.subr.mxu0 0.0
      %2809 = vmatpush1.msra.mxu0 0.0
      %2810 = vmatprep.mubr.f32.mxu0 0.0
      %2811 = vmatmul.mubr.f32.gmra.mrb[0].mxu0 %v2742
      %v2812 = vpop.f32.mrb[0].mxu0
      %v2813 = vadd.f32 0.0, %v2812
      %v2814 = vpop.f32.mrb[0].mxu0
      %2815 = vmatprep.mubr.f32.mxu0 0.0
      %2816 = vmatmul.mubr.f32.gmra.mrb[0].mxu0 %v2744
      %v2817 = vpop.f32.mrb[0].mxu0
      %v2818 = vadd.f32 0.0, %v2817
      %v2819 = vpop.f32.mrb[0].mxu0
      %2820 = vdwg.mxu0
      %v2822 = vsel %vm769, %v2475, 0
      %v2825 = vsel %vm769, %v2480, 0
      %2827 = vmatprep.subr.mxu0 0.0
      %2828 = vmatpush1.msra.mxu0 %v2507
      %2829 = vmatprep.subr.mxu0 0.0
      %2830 = vmatpush1.msra.mxu0 0.0
      %2831 = vmatprep.subr.mxu0 0.0
      %2832 = vmatpush1.msra.mxu0 0.0
      %2833 = vmatprep.subr.mxu0 0.0
      %2834 = vmatpush1.msra.mxu0 0.0
      %2835 = vmatprep.subr.mxu0 0.0
      %2836 = vmatpush1.msra.mxu0 0.0
      %2837 = vmatprep.subr.mxu0 0.0
      %2838 = vmatpush1.msra.mxu0 0.0
      %2839 = vmatprep.subr.mxu0 0.0
      %2840 = vmatpush1.msra.mxu0 0.0
      %2841 = vmatprep.subr.mxu0 0.0
      %2842 = vmatpush1.msra.mxu0 0.0
      %2843 = vmatprep.subr.mxu0 0.0
      %2844 = vmatpush1.msra.mxu0 0.0
      %2845 = vmatprep.subr.mxu0 0.0
      %2846 = vmatpush1.msra.mxu0 0.0
      %2847 = vmatprep.subr.mxu0 0.0
      %2848 = vmatpush1.msra.mxu0 0.0
      %2849 = vmatprep.subr.mxu0 0.0
      %2850 = vmatpush1.msra.mxu0 0.0
      %2851 = vmatprep.subr.mxu0 0.0
      %2852 = vmatpush1.msra.mxu0 0.0
      %2853 = vmatprep.subr.mxu0 0.0
      %2854 = vmatpush1.msra.mxu0 0.0
      %2855 = vmatprep.subr.mxu0 0.0
      %2856 = vmatpush1.msra.mxu0 0.0
      %2857 = vmatprep.subr.mxu0 0.0
      %2858 = vmatpush1.msra.mxu0 0.0
      %2859 = vmatprep.subr.mxu0 0.0
      %2860 = vmatpush1.msra.mxu0 0.0
      %2861 = vmatprep.subr.mxu0 0.0
      %2862 = vmatpush1.msra.mxu0 0.0
      %2863 = vmatprep.subr.mxu0 0.0
      %2864 = vmatpush1.msra.mxu0 0.0
      %2865 = vmatprep.subr.mxu0 0.0
      %2866 = vmatpush1.msra.mxu0 0.0
      %2867 = vmatprep.subr.mxu0 0.0
      %2868 = vmatpush1.msra.mxu0 0.0
      %2869 = vmatprep.subr.mxu0 0.0
      %2870 = vmatpush1.msra.mxu0 0.0
      %2871 = vmatprep.subr.mxu0 0.0
      %2872 = vmatpush1.msra.mxu0 0.0
      %2873 = vmatprep.subr.mxu0 0.0
      %2874 = vmatpush1.msra.mxu0 0.0
      %2875 = vmatprep.subr.mxu0 0.0
      %2876 = vmatpush1.msra.mxu0 0.0
      %2877 = vmatprep.subr.mxu0 0.0
      %2878 = vmatpush1.msra.mxu0 0.0
      %2879 = vmatprep.subr.mxu0 0.0
      %2880 = vmatpush1.msra.mxu0 0.0
      %2881 = vmatprep.subr.mxu0 0.0
      %2882 = vmatpush1.msra.mxu0 0.0
      %2883 = vmatprep.subr.mxu0 0.0
      %2884 = vmatpush1.msra.mxu0 0.0
      %2885 = vmatprep.subr.mxu0 0.0
      %2886 = vmatpush1.msra.mxu0 0.0
      %2887 = vmatprep.subr.mxu0 0.0
      %2888 = vmatpush1.msra.mxu0 0.0
      %2889 = vmatprep.subr.mxu0 0.0
      %2890 = vmatpush1.msra.mxu0 0.0
      %2891 = vmatprep.mubr.f32.mxu0 0.0
      %2892 = vmatmul.mubr.f32.gmra.mrb[0].mxu0 %v2822
      %v2893 = vpop.f32.mrb[0].mxu0
      %v2894 = vadd.f32 %v2813, %v2893
      %v2895 = vpop.f32.mrb[0].mxu0
      %2896 = vmatprep.mubr.f32.mxu0 0.0
      %2897 = vmatmul.mubr.f32.gmra.mrb[0].mxu0 %v2825
      %v2898 = vpop.f32.mrb[0].mxu0
      %v2899 = vadd.f32 %v2818, %v2898
      %v2900 = vpop.f32.mrb[0].mxu0
      %2901 = vdwg.mxu0
      %v2902 = vadd.f32 %v2894, %v2676
      %v2903 = vadd.f32 %v2899, %v2676
      %v2904 = vxor.u32 %v2902, 2147483648
      %v2905 = vxor.u32 %v2903, 2147483648
      %v2906 = vmul.f32 %v2904, 1.442695
      %v2907 = vpow.pop %v2906
      %v2908 = vmul.f32 %v2905, 1.442695
      %v2909 = vpow.pop %v2908
      %v2910 = vadd.f32 %v2907, 1.0
      %v2911 = vadd.f32 %v2909, 1.0
      %v2912 = vrcp.pop %v2910
      %v2913 = vmul.f32 1.0, %v2912
      %v2914 = vrcp.pop %v2911
      %v2915 = vmul.f32 1.0, %v2914
      %v2916 = vtanh.pop %v2902
      %v2917 = vtanh.pop %v2903
      %v2918 = vmul.f32 %v2913, %v2722
      %v2919 = vmul.f32 %v2915, %v2723
      %2922 = vrot.lane.b32.xlu0 %v2916, 112
      %v2923 = vpop.permute.xlu0 %2922
      %2924 = vrot.lane.b32.xlu0 %v2917, 112
      %v2925 = vpop.permute.xlu0 %2924
      %v2928 = vmul.f32 %v2913, %v2923
      %v2929 = vmul.f32 %v2915, %v2925
      %2932 = vrot.lane.b32.xlu0 %v2928, 8
      %v2933 = vpop.permute.xlu0 %2932
      %2934 = vrot.lane.b32.xlu0 %v2929, 8
      %v2935 = vpop.permute.xlu0 %2934
      %v2938 = vadd.f32 %v2918, %v2933
      %v2939 = vadd.f32 %v2919, %v2935
      %v2940 = vtanh.pop %v2938
      %v2941 = vtanh.pop %v2939
      %2944 = vrot.lane.b32.xlu0 %v2940, 16
      %v2945 = vpop.permute.xlu0 %2944
      %2946 = vrot.lane.b32.xlu0 %v2941, 16
      %v2947 = vpop.permute.xlu0 %2946
      %v2950 = vmul.f32 %v2913, %v2945
      %v2951 = vmul.f32 %v2915, %v2947
      %2954 = vrot.lane.b32.xlu0 %v2950, 104
      %v2955 = vpop.permute.xlu0 %2954
      %2956 = vrot.lane.b32.xlu0 %v2951, 104
      %v2957 = vpop.permute.xlu0 %2956
      %v2958 = vsel %vm769, %v2955, 0
      %v2960 = vsel %vm769, %v2957, 0
      %2962 = vmatprep.subr.mxu0 0.0
      %2963 = vmatpush1.msra.mxu0 %v2508
      %2964 = vmatprep.subr.mxu0 0.0
      %2965 = vmatpush1.msra.mxu0 0.0
      %2966 = vmatprep.subr.mxu0 0.0
      %2967 = vmatpush1.msra.mxu0 0.0
      %2968 = vmatprep.subr.mxu0 0.0
      %2969 = vmatpush1.msra.mxu0 0.0
      %2970 = vmatprep.subr.mxu0 0.0
      %2971 = vmatpush1.msra.mxu0 0.0
      %2972 = vmatprep.subr.mxu0 0.0
      %2973 = vmatpush1.msra.mxu0 0.0
      %2974 = vmatprep.subr.mxu0 0.0
      %2975 = vmatpush1.msra.mxu0 0.0
      %2976 = vmatprep.subr.mxu0 0.0
      %2977 = vmatpush1.msra.mxu0 0.0
      %2978 = vmatprep.subr.mxu0 0.0
      %2979 = vmatpush1.msra.mxu0 0.0
      %2980 = vmatprep.subr.mxu0 0.0
      %2981 = vmatpush1.msra.mxu0 0.0
      %2982 = vmatprep.subr.mxu0 0.0
      %2983 = vmatpush1.msra.mxu0 0.0
      %2984 = vmatprep.subr.mxu0 0.0
      %2985 = vmatpush1.msra.mxu0 0.0
      %2986 = vmatprep.subr.mxu0 0.0
      %2987 = vmatpush1.msra.mxu0 0.0
      %2988 = vmatprep.subr.mxu0 0.0
      %2989 = vmatpush1.msra.mxu0 0.0
      %2990 = vmatprep.subr.mxu0 0.0
      %2991 = vmatpush1.msra.mxu0 0.0
      %2992 = vmatprep.subr.mxu0 0.0
      %2993 = vmatpush1.msra.mxu0 0.0
      %2994 = vmatprep.subr.mxu0 0.0
      %2995 = vmatpush1.msra.mxu0 0.0
      %2996 = vmatprep.subr.mxu0 0.0
      %2997 = vmatpush1.msra.mxu0 0.0
      %2998 = vmatprep.subr.mxu0 0.0
      %2999 = vmatpush1.msra.mxu0 0.0
      %3000 = vmatprep.subr.mxu0 0.0
      %3001 = vmatpush1.msra.mxu0 0.0
      %3002 = vmatprep.subr.mxu0 0.0
      %3003 = vmatpush1.msra.mxu0 0.0
      %3004 = vmatprep.subr.mxu0 0.0
      %3005 = vmatpush1.msra.mxu0 0.0
      %3006 = vmatprep.subr.mxu0 0.0
      %3007 = vmatpush1.msra.mxu0 0.0
      %3008 = vmatprep.subr.mxu0 0.0
      %3009 = vmatpush1.msra.mxu0 0.0
      %3010 = vmatprep.subr.mxu0 0.0
      %3011 = vmatpush1.msra.mxu0 0.0
      %3012 = vmatprep.subr.mxu0 0.0
      %3013 = vmatpush1.msra.mxu0 0.0
      %3014 = vmatprep.subr.mxu0 0.0
      %3015 = vmatpush1.msra.mxu0 0.0
      %3016 = vmatprep.subr.mxu0 0.0
      %3017 = vmatpush1.msra.mxu0 0.0
      %3018 = vmatprep.subr.mxu0 0.0
      %3019 = vmatpush1.msra.mxu0 0.0
      %3020 = vmatprep.subr.mxu0 0.0
      %3021 = vmatpush1.msra.mxu0 0.0
      %3022 = vmatprep.subr.mxu0 0.0
      %3023 = vmatpush1.msra.mxu0 0.0
      %3024 = vmatprep.subr.mxu0 0.0
      %3025 = vmatpush1.msra.mxu0 0.0
      %3026 = vmatprep.mubr.f32.mxu0 0.0
      %3027 = vmatmul.mubr.f32.gmra.mrb[0].mxu0 %v2958
      %v3028 = vpop.f32.mrb[0].mxu0
      %v3029 = vadd.f32 0.0, %v3028
      %v3030 = vpop.f32.mrb[0].mxu0
      %3031 = vmatprep.mubr.f32.mxu0 0.0
      %3032 = vmatmul.mubr.f32.gmra.mrb[0].mxu0 %v2960
      %v3033 = vpop.f32.mrb[0].mxu0
      %v3034 = vadd.f32 0.0, %v3033
      %v3035 = vpop.f32.mrb[0].mxu0
      %3036 = vdwg.mxu0
      %v3038 = vsel %vm769, %v2485, 0
      %v3041 = vsel %vm769, %v2490, 0
      %3043 = vmatprep.subr.mxu0 0.0
      %3044 = vmatpush1.msra.mxu0 %v2507
      %3045 = vmatprep.subr.mxu0 0.0
      %3046 = vmatpush1.msra.mxu0 0.0
      %3047 = vmatprep.subr.mxu0 0.0
      %3048 = vmatpush1.msra.mxu0 0.0
      %3049 = vmatprep.subr.mxu0 0.0
      %3050 = vmatpush1.msra.mxu0 0.0
      %3051 = vmatprep.subr.mxu0 0.0
      %3052 = vmatpush1.msra.mxu0 0.0
      %3053 = vmatprep.subr.mxu0 0.0
      %3054 = vmatpush1.msra.mxu0 0.0
      %3055 = vmatprep.subr.mxu0 0.0
      %3056 = vmatpush1.msra.mxu0 0.0
      %3057 = vmatprep.subr.mxu0 0.0
      %3058 = vmatpush1.msra.mxu0 0.0
      %3059 = vmatprep.subr.mxu0 0.0
      %3060 = vmatpush1.msra.mxu0 0.0
      %3061 = vmatprep.subr.mxu0 0.0
      %3062 = vmatpush1.msra.mxu0 0.0
      %3063 = vmatprep.subr.mxu0 0.0
      %3064 = vmatpush1.msra.mxu0 0.0
      %3065 = vmatprep.subr.mxu0 0.0
      %3066 = vmatpush1.msra.mxu0 0.0
      %3067 = vmatprep.subr.mxu0 0.0
      %3068 = vmatpush1.msra.mxu0 0.0
      %3069 = vmatprep.subr.mxu0 0.0
      %3070 = vmatpush1.msra.mxu0 0.0
      %3071 = vmatprep.subr.mxu0 0.0
      %3072 = vmatpush1.msra.mxu0 0.0
      %3073 = vmatprep.subr.mxu0 0.0
      %3074 = vmatpush1.msra.mxu0 0.0
      %3075 = vmatprep.subr.mxu0 0.0
      %3076 = vmatpush1.msra.mxu0 0.0
      %3077 = vmatprep.subr.mxu0 0.0
      %3078 = vmatpush1.msra.mxu0 0.0
      %3079 = vmatprep.subr.mxu0 0.0
      %3080 = vmatpush1.msra.mxu0 0.0
      %3081 = vmatprep.subr.mxu0 0.0
      %3082 = vmatpush1.msra.mxu0 0.0
      %3083 = vmatprep.subr.mxu0 0.0
      %3084 = vmatpush1.msra.mxu0 0.0
      %3085 = vmatprep.subr.mxu0 0.0
      %3086 = vmatpush1.msra.mxu0 0.0
      %3087 = vmatprep.subr.mxu0 0.0
      %3088 = vmatpush1.msra.mxu0 0.0
      %3089 = vmatprep.subr.mxu0 0.0
      %3090 = vmatpush1.msra.mxu0 0.0
      %3091 = vmatprep.subr.mxu0 0.0
      %3092 = vmatpush1.msra.mxu0 0.0
      %3093 = vmatprep.subr.mxu0 0.0
      %3094 = vmatpush1.msra.mxu0 0.0
      %3095 = vmatprep.subr.mxu0 0.0
      %3096 = vmatpush1.msra.mxu0 0.0
      %3097 = vmatprep.subr.mxu0 0.0
      %3098 = vmatpush1.msra.mxu0 0.0
      %3099 = vmatprep.subr.mxu0 0.0
      %3100 = vmatpush1.msra.mxu0 0.0
      %3101 = vmatprep.subr.mxu0 0.0
      %3102 = vmatpush1.msra.mxu0 0.0
      %3103 = vmatprep.subr.mxu0 0.0
      %3104 = vmatpush1.msra.mxu0 0.0
      %3105 = vmatprep.subr.mxu0 0.0
      %3106 = vmatpush1.msra.mxu0 0.0
      %3107 = vmatprep.mubr.f32.mxu0 0.0
      %3108 = vmatmul.mubr.f32.gmra.mrb[0].mxu0 %v3038
      %v3109 = vpop.f32.mrb[0].mxu0
      %v3110 = vadd.f32 %v3029, %v3109
      %v3111 = vpop.f32.mrb[0].mxu0
      %3112 = vmatprep.mubr.f32.mxu0 0.0
      %3113 = vmatmul.mubr.f32.gmra.mrb[0].mxu0 %v3041
      %v3114 = vpop.f32.mrb[0].mxu0
      %v3115 = vadd.f32 %v3034, %v3114
      %v3116 = vpop.f32.mrb[0].mxu0
      %3117 = vdwg.mxu0
      %v3118 = vadd.f32 %v3110, %v2676
      %v3119 = vadd.f32 %v3115, %v2676
      %v3120 = vxor.u32 %v3118, 2147483648
      %v3121 = vxor.u32 %v3119, 2147483648
      %v3122 = vmul.f32 %v3120, 1.442695
      %v3123 = vpow.pop %v3122
      %v3124 = vmul.f32 %v3121, 1.442695
      %v3125 = vpow.pop %v3124
      %v3126 = vadd.f32 %v3123, 1.0
      %v3127 = vadd.f32 %v3125, 1.0
      %v3128 = vrcp.pop %v3126
      %v3129 = vmul.f32 1.0, %v3128
      %v3130 = vrcp.pop %v3127
      %v3131 = vmul.f32 1.0, %v3130
      %v3132 = vtanh.pop %v3118
      %v3133 = vtanh.pop %v3119
      %v3134 = vmul.f32 %v3129, %v2938
      %v3135 = vmul.f32 %v3131, %v2939
      %3138 = vrot.lane.b32.xlu0 %v3132, 112
      %v3139 = vpop.permute.xlu0 %3138
      %3140 = vrot.lane.b32.xlu0 %v3133, 112
      %v3141 = vpop.permute.xlu0 %3140
      %v3144 = vmul.f32 %v3129, %v3139
      %v3145 = vmul.f32 %v3131, %v3141
      %3148 = vrot.lane.b32.xlu0 %v3144, 8
      %v3149 = vpop.permute.xlu0 %3148
      %3150 = vrot.lane.b32.xlu0 %v3145, 8
      %v3151 = vpop.permute.xlu0 %3150
      %v3154 = vadd.f32 %v3134, %v3149
      %v3155 = vadd.f32 %v3135, %v3151
      %v3156 = vtanh.pop %v3154
      %v3157 = vtanh.pop %v3155
      %3160 = vrot.lane.b32.xlu0 %v3156, 16
      %v3161 = vpop.permute.xlu0 %3160
      %3162 = vrot.lane.b32.xlu0 %v3157, 16
      %v3163 = vpop.permute.xlu0 %3162
      %v3166 = vmul.f32 %v3129, %v3161
      %v3167 = vmul.f32 %v3131, %v3163
      %3170 = vrot.lane.b32.xlu0 %v3166, 104
      %v3171 = vpop.permute.xlu0 %3170
      %3172 = vrot.lane.b32.xlu0 %v3167, 104
      %v3173 = vpop.permute.xlu0 %3172
      %v3174 = vsel %vm769, %v3171, 0
      %v3176 = vsel %vm769, %v3173, 0
      %3178 = vmatprep.subr.mxu0 0.0
      %3179 = vmatpush1.msra.mxu0 %v2508
      %3180 = vmatprep.subr.mxu0 0.0
      %3181 = vmatpush1.msra.mxu0 0.0
      %3182 = vmatprep.subr.mxu0 0.0
      %3183 = vmatpush1.msra.mxu0 0.0
      %3184 = vmatprep.subr.mxu0 0.0
      %3185 = vmatpush1.msra.mxu0 0.0
      %3186 = vmatprep.subr.mxu0 0.0
      %3187 = vmatpush1.msra.mxu0 0.0
      %3188 = vmatprep.subr.mxu0 0.0
      %3189 = vmatpush1.msra.mxu0 0.0
      %3190 = vmatprep.subr.mxu0 0.0
      %3191 = vmatpush1.msra.mxu0 0.0
      %3192 = vmatprep.subr.mxu0 0.0
      %3193 = vmatpush1.msra.mxu0 0.0
      %3194 = vmatprep.subr.mxu0 0.0
      %3195 = vmatpush1.msra.mxu0 0.0
      %3196 = vmatprep.subr.mxu0 0.0
      %3197 = vmatpush1.msra.mxu0 0.0
      %3198 = vmatprep.subr.mxu0 0.0
      %3199 = vmatpush1.msra.mxu0 0.0
      %3200 = vmatprep.subr.mxu0 0.0
      %3201 = vmatpush1.msra.mxu0 0.0
      %3202 = vmatprep.subr.mxu0 0.0
      %3203 = vmatpush1.msra.mxu0 0.0
      %3204 = vmatprep.subr.mxu0 0.0
      %3205 = vmatpush1.msra.mxu0 0.0
      %3206 = vmatprep.subr.mxu0 0.0
      %3207 = vmatpush1.msra.mxu0 0.0
      %3208 = vmatprep.subr.mxu0 0.0
      %3209 = vmatpush1.msra.mxu0 0.0
      %3210 = vmatprep.subr.mxu0 0.0
      %3211 = vmatpush1.msra.mxu0 0.0
      %3212 = vmatprep.subr.mxu0 0.0
      %3213 = vmatpush1.msra.mxu0 0.0
      %3214 = vmatprep.subr.mxu0 0.0
      %3215 = vmatpush1.msra.mxu0 0.0
      %3216 = vmatprep.subr.mxu0 0.0
      %3217 = vmatpush1.msra.mxu0 0.0
      %3218 = vmatprep.subr.mxu0 0.0
      %3219 = vmatpush1.msra.mxu0 0.0
      %3220 = vmatprep.subr.mxu0 0.0
      %3221 = vmatpush1.msra.mxu0 0.0
      %3222 = vmatprep.subr.mxu0 0.0
      %3223 = vmatpush1.msra.mxu0 0.0
      %3224 = vmatprep.subr.mxu0 0.0
      %3225 = vmatpush1.msra.mxu0 0.0
      %3226 = vmatprep.subr.mxu0 0.0
      %3227 = vmatpush1.msra.mxu0 0.0
      %3228 = vmatprep.subr.mxu0 0.0
      %3229 = vmatpush1.msra.mxu0 0.0
      %3230 = vmatprep.subr.mxu0 0.0
      %3231 = vmatpush1.msra.mxu0 0.0
      %3232 = vmatprep.subr.mxu0 0.0
      %3233 = vmatpush1.msra.mxu0 0.0
      %3234 = vmatprep.subr.mxu0 0.0
      %3235 = vmatpush1.msra.mxu0 0.0
      %3236 = vmatprep.subr.mxu0 0.0
      %3237 = vmatpush1.msra.mxu0 0.0
      %3238 = vmatprep.subr.mxu0 0.0
      %3239 = vmatpush1.msra.mxu0 0.0
      %3240 = vmatprep.subr.mxu0 0.0
      %3241 = vmatpush1.msra.mxu0 0.0
      %3242 = vmatprep.mubr.f32.mxu0 0.0
      %3243 = vmatmul.mubr.f32.gmra.mrb[0].mxu0 %v3174
      %v3244 = vpop.f32.mrb[0].mxu0
      %v3245 = vadd.f32 0.0, %v3244
      %v3246 = vpop.f32.mrb[0].mxu0
      %3247 = vmatprep.mubr.f32.mxu0 0.0
      %3248 = vmatmul.mubr.f32.gmra.mrb[0].mxu0 %v3176
      %v3249 = vpop.f32.mrb[0].mxu0
      %v3250 = vadd.f32 0.0, %v3249
      %v3251 = vpop.f32.mrb[0].mxu0
      %3252 = vdwg.mxu0
      %v3254 = vsel %vm769, %v2495, 0
      %v3257 = vsel %vm769, %v2500, 0
      %3259 = vmatprep.subr.mxu0 0.0
      %3260 = vmatpush1.msra.mxu0 %v2507
      %3261 = vmatprep.subr.mxu0 0.0
      %3262 = vmatpush1.msra.mxu0 0.0
      %3263 = vmatprep.subr.mxu0 0.0
      %3264 = vmatpush1.msra.mxu0 0.0
      %3265 = vmatprep.subr.mxu0 0.0
      %3266 = vmatpush1.msra.mxu0 0.0
      %3267 = vmatprep.subr.mxu0 0.0
      %3268 = vmatpush1.msra.mxu0 0.0
      %3269 = vmatprep.subr.mxu0 0.0
      %3270 = vmatpush1.msra.mxu0 0.0
      %3271 = vmatprep.subr.mxu0 0.0
      %3272 = vmatpush1.msra.mxu0 0.0
      %3273 = vmatprep.subr.mxu0 0.0
      %3274 = vmatpush1.msra.mxu0 0.0
      %3275 = vmatprep.subr.mxu0 0.0
      %3276 = vmatpush1.msra.mxu0 0.0
      %3277 = vmatprep.subr.mxu0 0.0
      %3278 = vmatpush1.msra.mxu0 0.0
      %3279 = vmatprep.subr.mxu0 0.0
      %3280 = vmatpush1.msra.mxu0 0.0
      %3281 = vmatprep.subr.mxu0 0.0
      %3282 = vmatpush1.msra.mxu0 0.0
      %3283 = vmatprep.subr.mxu0 0.0
      %3284 = vmatpush1.msra.mxu0 0.0
      %3285 = vmatprep.subr.mxu0 0.0
      %3286 = vmatpush1.msra.mxu0 0.0
      %3287 = vmatprep.subr.mxu0 0.0
      %3288 = vmatpush1.msra.mxu0 0.0
      %3289 = vmatprep.subr.mxu0 0.0
      %3290 = vmatpush1.msra.mxu0 0.0
      %3291 = vmatprep.subr.mxu0 0.0
      %3292 = vmatpush1.msra.mxu0 0.0
      %3293 = vmatprep.subr.mxu0 0.0
      %3294 = vmatpush1.msra.mxu0 0.0
      %3295 = vmatprep.subr.mxu0 0.0
      %3296 = vmatpush1.msra.mxu0 0.0
      %3297 = vmatprep.subr.mxu0 0.0
      %3298 = vmatpush1.msra.mxu0 0.0
      %3299 = vmatprep.subr.mxu0 0.0
      %3300 = vmatpush1.msra.mxu0 0.0
      %3301 = vmatprep.subr.mxu0 0.0
      %3302 = vmatpush1.msra.mxu0 0.0
      %3303 = vmatprep.subr.mxu0 0.0
      %3304 = vmatpush1.msra.mxu0 0.0
      %3305 = vmatprep.subr.mxu0 0.0
      %3306 = vmatpush1.msra.mxu0 0.0
      %3307 = vmatprep.subr.mxu0 0.0
      %3308 = vmatpush1.msra.mxu0 0.0
      %3309 = vmatprep.subr.mxu0 0.0
      %3310 = vmatpush1.msra.mxu0 0.0
      %3311 = vmatprep.subr.mxu0 0.0
      %3312 = vmatpush1.msra.mxu0 0.0
      %3313 = vmatprep.subr.mxu0 0.0
      %3314 = vmatpush1.msra.mxu0 0.0
      %3315 = vmatprep.subr.mxu0 0.0
      %3316 = vmatpush1.msra.mxu0 0.0
      %3317 = vmatprep.subr.mxu0 0.0
      %3318 = vmatpush1.msra.mxu0 0.0
      %3319 = vmatprep.subr.mxu0 0.0
      %3320 = vmatpush1.msra.mxu0 0.0
      %3321 = vmatprep.subr.mxu0 0.0
      %3322 = vmatpush1.msra.mxu0 0.0
      %3323 = vmatprep.mubr.f32.mxu0 0.0
      %3324 = vmatmul.mubr.f32.gmra.mrb[0].mxu0 %v3254
      %v3325 = vpop.f32.mrb[0].mxu0
      %v3326 = vadd.f32 %v3245, %v3325
      %v3327 = vpop.f32.mrb[0].mxu0
      %3328 = vmatprep.mubr.f32.mxu0 0.0
      %3329 = vmatmul.mubr.f32.gmra.mrb[0].mxu0 %v3257
      %v3330 = vpop.f32.mrb[0].mxu0
      %v3331 = vadd.f32 %v3250, %v3330
      %v3332 = vpop.f32.mrb[0].mxu0
      %3333 = vdwg.mxu0
      %v3334 = vadd.f32 %v3326, %v2676
      %v3335 = vadd.f32 %v3331, %v2676
      %v3336 = vxor.u32 %v3334, 2147483648
      %v3337 = vxor.u32 %v3335, 2147483648
      %v3338 = vmul.f32 %v3336, 1.442695
      %v3339 = vpow.pop %v3338
      %v3340 = vmul.f32 %v3337, 1.442695
      %v3341 = vpow.pop %v3340
      %v3342 = vadd.f32 %v3339, 1.0
      %v3343 = vadd.f32 %v3341, 1.0
      %v3344 = vrcp.pop %v3342
      %v3345 = vmul.f32 1.0, %v3344
      %v3346 = vrcp.pop %v3343
      %v3347 = vmul.f32 1.0, %v3346
      %v3348 = vtanh.pop %v3334
      %v3349 = vtanh.pop %v3335
      %v3350 = vmul.f32 %v3345, %v3154
      %v3351 = vmul.f32 %v3347, %v3155
      %3354 = vrot.lane.b32.xlu0 %v3348, 112
      %v3355 = vpop.permute.xlu0 %3354
      %3356 = vrot.lane.b32.xlu0 %v3349, 112
      %v3357 = vpop.permute.xlu0 %3356
      %v3360 = vmul.f32 %v3345, %v3355
      %v3361 = vmul.f32 %v3347, %v3357
      %3364 = vrot.lane.b32.xlu0 %v3360, 8
      %v3365 = vpop.permute.xlu0 %3364
      %3366 = vrot.lane.b32.xlu0 %v3361, 8
      %v3367 = vpop.permute.xlu0 %3366
      %v3370 = vadd.f32 %v3350, %v3365
      %v3371 = vadd.f32 %v3351, %v3367
      %v3372 = vtanh.pop %v3370
      %v3373 = vtanh.pop %v3371
      %3376 = vrot.lane.b32.xlu0 %v3372, 16
      %v3377 = vpop.permute.xlu0 %3376
      %3378 = vrot.lane.b32.xlu0 %v3373, 16
      %v3379 = vpop.permute.xlu0 %3378
      %v3382 = vmul.f32 %v3345, %v3377
      %v3383 = vmul.f32 %v3347, %v3379
      %v3384 = vld [vmem:[%s11] sm:$0xff]
      %v3385 = vld [vmem:[%s12] sm:$0x1]
      %v3386 = vld [vmem:[%s13] sm:$0x1]
      %v3387 = vld [vmem:[%s14] sm:$0x1]
      %v3389 = vlaneseq
      %v3390 = vshrl.u32 %v3389, 7
      %v3391 = vsub.s32 0, %v3390
      %v3392 = vrot.slane %v3385, %v3391
      %3394 = vmatprep.subr.mxu0 0.0
      %3395 = vmatpush1.msra.mxu0 %v3384
      %3396 = vmatprep.subr.mxu0 0.0
      %3397 = vmatpush1.msra.mxu0 0.0
      %3398 = vmatprep.subr.mxu0 0.0
      %3399 = vmatpush1.msra.mxu0 0.0
      %3400 = vmatprep.subr.mxu0 0.0
      %3401 = vmatpush1.msra.mxu0 0.0
      %3402 = vmatprep.subr.mxu0 0.0
      %3403 = vmatpush1.msra.mxu0 0.0
      %3404 = vmatprep.subr.mxu0 0.0
      %3405 = vmatpush1.msra.mxu0 0.0
      %3406 = vmatprep.subr.mxu0 0.0
      %3407 = vmatpush1.msra.mxu0 0.0
      %3408 = vmatprep.subr.mxu0 0.0
      %3409 = vmatpush1.msra.mxu0 0.0
      %3410 = vmatprep.subr.mxu0 0.0
      %3411 = vmatpush1.msra.mxu0 0.0
      %3412 = vmatprep.subr.mxu0 0.0
      %3413 = vmatpush1.msra.mxu0 0.0
      %3414 = vmatprep.subr.mxu0 0.0
      %3415 = vmatpush1.msra.mxu0 0.0
      %3416 = vmatprep.subr.mxu0 0.0
      %3417 = vmatpush1.msra.mxu0 0.0
      %3418 = vmatprep.subr.mxu0 0.0
      %3419 = vmatpush1.msra.mxu0 0.0
      %3420 = vmatprep.subr.mxu0 0.0
      %3421 = vmatpush1.msra.mxu0 0.0
      %3422 = vmatprep.subr.mxu0 0.0
      %3423 = vmatpush1.msra.mxu0 0.0
      %3424 = vmatprep.subr.mxu0 0.0
      %3425 = vmatpush1.msra.mxu0 0.0
      %3426 = vmatprep.subr.mxu0 0.0
      %3427 = vmatpush1.msra.mxu0 0.0
      %3428 = vmatprep.subr.mxu0 0.0
      %3429 = vmatpush1.msra.mxu0 0.0
      %3430 = vmatprep.subr.mxu0 0.0
      %3431 = vmatpush1.msra.mxu0 0.0
      %3432 = vmatprep.subr.mxu0 0.0
      %3433 = vmatpush1.msra.mxu0 0.0
      %3434 = vmatprep.subr.mxu0 0.0
      %3435 = vmatpush1.msra.mxu0 0.0
      %3436 = vmatprep.subr.mxu0 0.0
      %3437 = vmatpush1.msra.mxu0 0.0
      %3438 = vmatprep.subr.mxu0 0.0
      %3439 = vmatpush1.msra.mxu0 0.0
      %3440 = vmatprep.subr.mxu0 0.0
      %3441 = vmatpush1.msra.mxu0 0.0
      %3442 = vmatprep.subr.mxu0 0.0
      %3443 = vmatpush1.msra.mxu0 0.0
      %3444 = vmatprep.subr.mxu0 0.0
      %3445 = vmatpush1.msra.mxu0 0.0
      %3446 = vmatprep.subr.mxu0 0.0
      %3447 = vmatpush1.msra.mxu0 0.0
      %3448 = vmatprep.subr.mxu0 0.0
      %3449 = vmatpush1.msra.mxu0 0.0
      %3450 = vmatprep.subr.mxu0 0.0
      %3451 = vmatpush1.msra.mxu0 0.0
      %3452 = vmatprep.subr.mxu0 0.0
      %3453 = vmatpush1.msra.mxu0 0.0
      %3454 = vmatprep.subr.mxu0 0.0
      %3455 = vmatpush1.msra.mxu0 0.0
      %3456 = vmatprep.subr.mxu0 0.0
      %3457 = vmatpush1.msra.mxu0 0.0
      %3458 = vmatprep.mubr.f32.mxu0 0.0
      %3459 = vmatmul.mubr.f32.gmra.mrb[0].mxu0 %v789
      %v3460 = vpop.f32.mrb[0].mxu0
      %v3461 = vadd.f32 %v3392, %v3460
      %v3462 = vpop.f32.mrb[0].mxu0
      %3463 = vmatprep.mubr.f32.mxu0 0.0
      %3464 = vmatmul.mubr.f32.gmra.mrb[0].mxu0 %v792
      %v3465 = vpop.f32.mrb[0].mxu0
      %v3466 = vadd.f32 %v3392, %v3465
      %v3467 = vpop.f32.mrb[0].mxu0
      %3468 = vdwg.mxu0
      %3471 = vrot.lane.b32.xlu0 %v3382, 104
      %v3472 = vpop.permute.xlu0 %3471
      %3473 = vrot.lane.b32.xlu0 %v3383, 104
      %v3474 = vpop.permute.xlu0 %3473
      %v3477 = vadd.f32 %v3461, %v3472
      %v3478 = vadd.f32 %v3466, %v3474
      %v3479 = vmax.f32 %v3477, 0.0
      %v3480 = vmax.f32 %v3478, 0.0
      %v3481 = vsel %vm769, %v3479, 0.0
      %3482 = vadd.xlane.f32.xlu0 %v3481
      %v3483 = vpop.xlane.xlu0 %3482
      %v3484 = vsel %vm769, %v3480, 0.0
      %3485 = vadd.xlane.f32.xlu0 %v3484
      %v3486 = vpop.xlane.xlu0 %3485
      %v3487 = vrcp.pop 8.0
      %v3488 = vmul.f32 %v3483, %v3487
      %v3489 = vmul.f32 %v3486, %v3487
      %v3490 = vsub.f32 %v3479, %v3488
      %v3491 = vsub.f32 %v3480, %v3489
      %v3492 = vmul.f32 %v3490, %v3490
      %v3493 = vmul.f32 %v3491, %v3491
      %v3494 = vsel %vm769, %v3492, 0.0
      %3495 = vadd.xlane.f32.xlu0 %v3494
      %v3496 = vpop.xlane.xlu0 %3495
      %v3497 = vsel %vm769, %v3493, 0.0
      %3498 = vadd.xlane.f32.xlu0 %v3497
      %v3499 = vpop.xlane.xlu0 %3498
      %v3500 = vmul.f32 %v3496, %v3487
      %v3501 = vmul.f32 %v3499, %v3487
      %v3502 = vadd.f32 %v3500, 1e-05
      %v3503 = vadd.f32 %v3501, 1e-05
      %v3504 = vrsqrt.pop %v3502
      %v3505 = vrsqrt.pop %v3503
      %v3506 = vmul.f32 %v3490, %v3504
      %v3507 = vmul.f32 %v3491, %v3505
      %v3509 = vlaneseq
      %v3510 = vshrl.u32 %v3509, 7
      %v3511 = vsub.s32 0, %v3510
      %v3512 = vrot.slane %v3386, %v3511
      %v3514 = vmul.f32 %v3506, %v3512
      %v3515 = vmul.f32 %v3507, %v3512
      %v3517 = vlaneseq
      %v3518 = vshrl.u32 %v3517, 7
      %v3519 = vsub.s32 0, %v3518
      %v3520 = vrot.slane %v3387, %v3519
      %v3522 = vadd.f32 %v3514, %v3520
      %v3523 = vadd.f32 %v3515, %v3520
      %v3524 = vld [vmem:[%s742] sm:$0xff]
      %v3525 = vld [vmem:[%s742 + $0x8] sm:$0xff]
      %v3526 = vld [vmem:[%s16] sm:$0x1]
      %v3528 = vlaneseq
      %v3529 = vshrl.u32 %v3528, 7
      %v3530 = vsub.s32 0, %v3529
      %v3531 = vrot.slane %v3526, %v3530
      %v3533 = vmul.f32 %v3524, %v3531
      %v3534 = vmul.f32 %v3525, %v3531
      %vm3535 = vcmask 15360
      %v3536 = vsel %vm3535, %v3533, 0.0
      %3537 = vadd.xlane.f32.xlu0 %v3536
      %v3538 = vpop.xlane.xlu0 %3537
      %v3539 = vsel %vm3535, %v3534, 0.0
      %3540 = vadd.xlane.f32.xlu0 %v3539
      %v3541 = vpop.xlane.xlu0 %3540
      %v3542 = vld [vmem:[#allocation2] sm:$0x1]
      %v3544 = vlaneseq
      %v3545 = vshrl.u32 %v3544, 7
      %v3546 = vsub.s32 0, %v3545
      %v3547 = vrot.slane %v3542, %v3546
      %v3549 = vadd.f32 %v3538, %v3547
      %v3550 = vadd.f32 %v3541, %v3547
      %v3551 = vld [vmem:[%s18] sm:$0xff]
      %v3552 = vld [vmem:[%s18 + $0x8] sm:$0x1]
      %3554 = vset.pattern.permute.xlu0 0
      %3555 = vperm.xlu0 %3554, %v3549
      %v3556 = vpop.permute.xlu0 %3555
      %3559 = vset.pattern.permute.xlu0 0
      %3560 = vperm.xlu0 %3559, %v3550
      %v3561 = vpop.permute.xlu0 %3560
      %v3563 = vlaneseq
      %v3564 = vshrl.u32 %v3563, 7
      %v3565 = vsub.s32 0, %v3564
      %v3566 = vrot.slane %v3552, %v3565
      %v3567 = vmul.f32 %v3556, %v3566
      %v3568 = vmul.f32 %v3561, %v3566
      %v3570 = vsel %vm769, %v3522, 0
      %v3573 = vsel %vm769, %v3523, 0
      %3575 = vmatprep.subr.mxu0 0.0
      %3576 = vmatpush1.msra.mxu0 %v3551
      %3577 = vmatprep.subr.mxu0 0.0
      %3578 = vmatpush1.msra.mxu0 0.0
      %3579 = vmatprep.subr.mxu0 0.0
      %3580 = vmatpush1.msra.mxu0 0.0
      %3581 = vmatprep.subr.mxu0 0.0
      %3582 = vmatpush1.msra.mxu0 0.0
      %3583 = vmatprep.subr.mxu0 0.0
      %3584 = vmatpush1.msra.mxu0 0.0
      %3585 = vmatprep.subr.mxu0 0.0
      %3586 = vmatpush1.msra.mxu0 0.0
      %3587 = vmatprep.subr.mxu0 0.0
      %3588 = vmatpush1.msra.mxu0 0.0
      %3589 = vmatprep.subr.mxu0 0.0
      %3590 = vmatpush1.msra.mxu0 0.0
      %3591 = vmatprep.subr.mxu0 0.0
      %3592 = vmatpush1.msra.mxu0 0.0
      %3593 = vmatprep.subr.mxu0 0.0
      %3594 = vmatpush1.msra.mxu0 0.0
      %3595 = vmatprep.subr.mxu0 0.0
      %3596 = vmatpush1.msra.mxu0 0.0
      %3597 = vmatprep.subr.mxu0 0.0
      %3598 = vmatpush1.msra.mxu0 0.0
      %3599 = vmatprep.subr.mxu0 0.0
      %3600 = vmatpush1.msra.mxu0 0.0
      %3601 = vmatprep.subr.mxu0 0.0
      %3602 = vmatpush1.msra.mxu0 0.0
      %3603 = vmatprep.subr.mxu0 0.0
      %3604 = vmatpush1.msra.mxu0 0.0
      %3605 = vmatprep.subr.mxu0 0.0
      %3606 = vmatpush1.msra.mxu0 0.0
      %3607 = vmatprep.subr.mxu0 0.0
      %3608 = vmatpush1.msra.mxu0 0.0
      %3609 = vmatprep.subr.mxu0 0.0
      %3610 = vmatpush1.msra.mxu0 0.0
      %3611 = vmatprep.subr.mxu0 0.0
      %3612 = vmatpush1.msra.mxu0 0.0
      %3613 = vmatprep.subr.mxu0 0.0
      %3614 = vmatpush1.msra.mxu0 0.0
      %3615 = vmatprep.subr.mxu0 0.0
      %3616 = vmatpush1.msra.mxu0 0.0
      %3617 = vmatprep.subr.mxu0 0.0
      %3618 = vmatpush1.msra.mxu0 0.0
      %3619 = vmatprep.subr.mxu0 0.0
      %3620 = vmatpush1.msra.mxu0 0.0
      %3621 = vmatprep.subr.mxu0 0.0
      %3622 = vmatpush1.msra.mxu0 0.0
      %3623 = vmatprep.subr.mxu0 0.0
      %3624 = vmatpush1.msra.mxu0 0.0
      %3625 = vmatprep.subr.mxu0 0.0
      %3626 = vmatpush1.msra.mxu0 0.0
      %3627 = vmatprep.subr.mxu0 0.0
      %3628 = vmatpush1.msra.mxu0 0.0
      %3629 = vmatprep.subr.mxu0 0.0
      %3630 = vmatpush1.msra.mxu0 0.0
      %3631 = vmatprep.subr.mxu0 0.0
      %3632 = vmatpush1.msra.mxu0 0.0
      %3633 = vmatprep.subr.mxu0 0.0
      %3634 = vmatpush1.msra.mxu0 0.0
      %3635 = vmatprep.subr.mxu0 0.0
      %3636 = vmatpush1.msra.mxu0 0.0
      %3637 = vmatprep.subr.mxu0 0.0
      %3638 = vmatpush1.msra.mxu0 0.0
      %3639 = vmatprep.mubr.f32.mxu0 0.0
      %3640 = vmatmul.mubr.f32.gmra.mrb[0].mxu0 %v3570
      %v3641 = vpop.f32.mrb[0].mxu0
      %v3642 = vadd.f32 %v3567, %v3641
      %v3643 = vpop.f32.mrb[0].mxu0
      %3644 = vmatprep.mubr.f32.mxu0 0.0
      %3645 = vmatmul.mubr.f32.gmra.mrb[0].mxu0 %v3573
      %v3646 = vpop.f32.mrb[0].mxu0
      %v3647 = vadd.f32 %v3568, %v3646
      %v3648 = vpop.f32.mrb[0].mxu0
      %3649 = vdwg.mxu0
      %v3650 = vld [vmem:[%s19] sm:$0x1]
      %v3652 = vlaneseq
      %v3653 = vshrl.u32 %v3652, 7
      %v3654 = vsub.s32 0, %v3653
      %v3655 = vrot.slane %v3650, %v3654
      %v3657 = vadd.f32 %v3642, %v3655
      %v3658 = vadd.f32 %v3647, %v3655
      %v3659 = vmax.f32 %v3657, 0.0
      %v3660 = vmax.f32 %v3658, 0.0
      %v3661 = vld [vmem:[%s20] sm:$0x1]
      %v3663 = vlaneseq
      %v3664 = vshrl.u32 %v3663, 7
      %v3665 = vsub.s32 0, %v3664
      %v3666 = vrot.slane %v3661, %v3665
      %v3668 = vmul.f32 %v3659, %v3666
      %v3669 = vmul.f32 %v3660, %v3666
      %vm3670 = vcmask 80896
      %v3671 = vsel %vm3670, %v3668, 0.0
      %3672 = vadd.xlane.f32.xlu0 %v3671
      %v3673 = vpop.xlane.xlu0 %3672
      %v3674 = vsel %vm3670, %v3669, 0.0
      %3675 = vadd.xlane.f32.xlu0 %v3674
      %v3676 = vpop.xlane.xlu0 %3675
      %v3677 = vld [vmem:[#allocation3] sm:$0x1]
      %v3679 = vlaneseq
      %v3680 = vshrl.u32 %v3679, 7
      %v3681 = vsub.s32 0, %v3680
      %v3682 = vrot.slane %v3677, %v3681
      %v3684 = vadd.f32 %v3673, %v3682
      %v3685 = vadd.f32 %v3676, %v3682
      %vm3686 = vcmask 7168
      %3687 = vst.msk [vmem:[%s747] sm:$0xff] %vm3686, %v3684
      %3688 = vst.msk [vmem:[%s747 + $0x8] sm:$0xff] %vm3686, %v3685
      %p3689 = scmp.lt.s32.totalorder %s37, 1
      %s3690 = scalar_select %p3689, %s37, 1
      %s3691 = smul.addr %s3690, 2
      %s3692 = smul.addr %s3691, 8
      %s3693 = scalar_lea.vmem %s22, %s3692
      // Predicated region
      $region109: #{_lambda_.3} parent=107 // pred_check
        %p3694 = pneg %p537
      $region110: #{_lambda_.3} parent=107 // pred_check_branch
        %3696 = sbr.rel (%p3694) target = $region112
      $region111: #{_lambda_.3} parent=107 // pred_region
        _
      $region112: #{_lambda_.3} parent=107 // pred_fallthru
        _
    $region108: #{_lambda_.3} parent=5 // pred_fallthru
      _
    %p3697 = scmp.le.s32.totalorder 2, %s32
    // Predicated region
    $region113: #{_lambda_.3} parent=5 // pred_check
      %p3698 = pneg %p3697
    $region114: #{_lambda_.3} parent=5 // pred_check_branch
      %3700 = sbr.rel (%p3698) target = $region116
    $region115: #{_lambda_.3} parent=5 // pred_region
      %s3701 = ssub.s32 %s32, 2
      // Predicated region
      $region117: #{_lambda_.3} parent=115 // pred_check
        %p3702 = pneg %p543
      $region118: #{_lambda_.3} parent=115 // pred_check_branch
        %3704 = sbr.rel (%p3702) target = $region120
      $region119: #{_lambda_.3} parent=115 // pred_region
        %p3705 = scmp.lt.s32.totalorder %s38, 1
        %s3706 = scalar_select %p3705, %s38, 1
        %s3707 = smul.addr %s3706, 2
        %s3708 = smul.addr %s3707, 8
        %s3709 = scalar_lea.vmem %s22, %s3708
      $region120: #{_lambda_.3} parent=115 // pred_fallthru
        _
    $region116: #{_lambda_.3} parent=5 // pred_fallthru
      _
  $region6: #{_lambda_.3} parent=0 // loop_footer
    %s36 = sadd.s32 1, %s32
  $region7: #{_lambda_.3} parent=0 // loop_footer_branch
    %31 = sbr.rel target = $region3
  $region8: #{_lambda_.3} parent=0 // loop_exit
    _

</llo_original>
